<compile_context>
chip_gen: v7x
topology: tpu7x:2x2x1
jax: 0.10.0
libtpu: 0.0.40
codegen_flags: <defaults>
</compile_context>

<pallas_src>
import functools

import jax
import jax.numpy as jnp
from jax import lax
from jax.experimental import pallas as pl
from jax.experimental.pallas import tpu as pltpu


_KSIZE = 31    # conv kernel size
_PAD = 15      # 'same' padding of the PyTorch convs
_PAD_AL = 16   # sublane-aligned padding used for in-kernel layouts


# ----------------------------------------------------------------------------
# Elementwise helpers.
# ----------------------------------------------------------------------------
def _gelu(x):
    # tanh-approximation GELU (EUP tanh).
    # TODO(synk): PyTorch nn.GELU() default is exact erf; this matches
    #             nn.GELU(approximate='tanh') (max abs deviation ~1e-3).
    c = 0.7978845608028654  # sqrt(2/pi)
    return 0.5 * x * (1.0 + jnp.tanh(c * (x + 0.044715 * x * x * x)))


def _sigmoid(x):
    # exp (EUP) + approximate EUP reciprocal: keeps the divide off the VALU since this sits on
    # the serial LSTM critical path.  (approx recip can overshoot 1 by ~2^-12; acceptable
    # drift for a noise generator.)
    return pl.reciprocal(1.0 + jnp.exp(-x), approx=True)


def _vmem_limit(bytes_needed):
    # Explicit per-kernel VMEM budget from the resident buffers, clamped to 64 MiB so the
    # value is valid on v7x (64 MiB physical) as well as v5e/v6e (128 MiB).
    return int(min(64 * 2**20, max(32 * 2**20, int(bytes_needed) + 16 * 2**20)))


# ----------------------------------------------------------------------------
# Kernel 1: CNN frontend + LSTM layer-0 input projection, fused.  Grid over batch.
#   conv1: C_in = 1 -> 31 rank-1 VPU updates on shifted views of the raw padded signal
#          (in-kernel im2col; no (B, T, 31) patch tensor in HBM).
#   conv2: 31 plain (T,32)@(32,64) MXU matmuls (no tap grouping / lane concats).
#   then:  gate pre-activations for LSTM layer 0 over all T at once, stored bf16.
# ----------------------------------------------------------------------------
def _frontend_kernel(x_ref, w1_ref, b1_ref, w2_ref, b2_ref, wih0_ref, bih0_ref,
                     gates_ref, y1pad_ref):
    T = gates_ref.shape[0]
    c1 = w1_ref.shape[1]
    c2 = w2_ref.shape[2]
    off0 = _PAD_AL - _PAD                                   # = 1 (aligned pad shift)

    # ---- Conv1 (+ GELU): 31 rank-1 updates, all on the VPU. ----
    acc1 = jnp.zeros((T, c1), jnp.float32)
    for k in range(_KSIZE):                                 # static unroll
        acc1 = acc1 + x_ref[off0 + k:off0 + k + T, :] * w1_ref[k:k + 1, :]
    y1 = _gelu(acc1 + b1_ref[...])                          # (T, 32) f32

    # Zero-padded conv1 activations; valid region starts at the sublane-aligned offset 16.
    y1pad_ref[...] = jnp.zeros_like(y1pad_ref)
    y1pad_ref[_PAD_AL:_PAD_AL + T, :] = y1

    # ---- Conv2 (+ GELU): one small MXU matmul per tap, no concats. ----
    acc2 = jnp.zeros((T, c2), jnp.float32)
    for k in range(_KSIZE):                                 # static unroll
        acc2 = acc2 + jnp.dot(y1pad_ref[off0 + k:off0 + k + T, :].astype(jnp.bfloat16),
                              w2_ref[k], preferred_element_type=jnp.float32)
    y2 = _gelu(acc2 + b2_ref[...])                          # (T, 64) f32

    # ---- Fused LSTM layer-0 input projection (all timesteps, both directions), bf16 out. ----
    gates_ref[...] = (jnp.dot(y2.astype(jnp.bfloat16), wih0_ref[...],
                              preferred_element_type=jnp.float32)
                      + bih0_ref[...]).astype(jnp.bfloat16)


def conv_frontend(x_pad, w1, b1, w2, b2, wih0, bih0):
    """x_pad: (B, T + 2*_PAD_AL, 1) f32 -> layer-0 gate pre-activations (T, B*8H) bf16."""
    B, Tp, _ = x_pad.shape
    T = Tp - 2 * _PAD_AL
    c1 = w1.shape[1]
    c2 = w2.shape[2]
    g8h = wih0.shape[1]
    est = 2 * (Tp * 128 * 4 + T * g8h * 2) + Tp * c1 * 4 + 2 * T * c2 * 4
    return pl.pallas_call(
        _frontend_kernel,
        out_shape=jax.ShapeDtypeStruct((T, B * g8h), jnp.bfloat16),
        grid=(B,),
        in_specs=[
            pl.BlockSpec((None, Tp, 1), lambda b: (b, 0, 0)),
            pl.BlockSpec((_KSIZE, c1), lambda b: (0, 0)),
            pl.BlockSpec((1, c1), lambda b: (0, 0)),
            pl.BlockSpec((_KSIZE, c1, c2), lambda b: (0, 0, 0)),
            pl.BlockSpec((1, c2), lambda b: (0, 0)),
            pl.BlockSpec(wih0.shape, lambda b: (0, 0)),
            pl.BlockSpec((1, g8h), lambda b: (0, 0)),
        ],
        out_specs=pl.BlockSpec((T, g8h), lambda b: (0, b)),
        scratch_shapes=[pltpu.VMEM((Tp, c1), jnp.float32)],
        compiler_params=pltpu.CompilerParams(
            dimension_semantics=("parallel",),
            vmem_limit_bytes=_vmem_limit(est)),
    )(x_pad, w1, b1, w2, b2, wih0, bih0)


# ----------------------------------------------------------------------------
# Kernel 2: fused bidirectional LSTM layer (both directions in one recurrence).
#   gates_ref : (T, B, 8H) bf16, STEP-ORDERED (fwd columns at index s, bwd at T-1-s),
#               so the serial loop loads exactly one row per step — no direction select.
#   wblk_ref  : (2H, 8H) block-diagonal recurrent weights (fwd rows 0..H-1, bwd rows H..2H-1).
#   state     : h_cat / c_cat of shape (B, 2H) = [fwd | bwd], f32.
#   hseq_ref  : (T, B, 2H) bf16 scratch, written in NATURAL time order:
#               hseq[t] = [h_fwd(t) | h_bwd(t)]  == the layer's lstm_out.
# Gate column layout (each block H wide): [i_f i_b f_f f_b g_f g_b o_f o_b].
# ----------------------------------------------------------------------------
def _bidir_recurrence(gates_ref, wblk_ref, h0_ref, c0_ref, hseq_ref):
    T = gates_ref.shape[0]
    H = h0_ref.shape[1] // 2
    w_blk = wblk_ref[...]                                   # loop-resident bf16 weights

    def step(s, carry):
        h_cat, c_cat = carry                                # (B, 2H) f32
        # Single step-ordered row load; only the h@W_hh matmul stays in the recurrence.
        gates = gates_ref[s].astype(jnp.float32) + jnp.dot(
            h_cat.astype(jnp.bfloat16), w_blk, preferred_element_type=jnp.float32)
        sif = _sigmoid(gates[:, 0:4 * H])                   # i & f of both dirs: one EUP pass
        ii = sif[:, 0:2 * H]
        ff = sif[:, 2 * H:4 * H]
        gg = jnp.tanh(gates[:, 4 * H:6 * H])
        oo = _sigmoid(gates[:, 6 * H:8 * H])
        c_new = ff * c_cat + ii * gg
        h_new = oo * jnp.tanh(c_new)
        # Natural-order stores (not on the loop-carried dependency chain).
        rs = T - 1 - s
        hseq_ref[s, :, 0:H] = h_new[:, 0:H].astype(jnp.bfloat16)
        hseq_ref[rs, :, H:2 * H] = h_new[:, H:2 * H].astype(jnp.bfloat16)
        return (h_new, c_new)

    return lax.fori_loop(0, T, step, (h0_ref[...], c0_ref[...]))


def _write_final_state(hT_ref, cT_ref, h_fin, c_fin, H):
    hT_ref[0] = h_fin[:, 0:H]
    hT_ref[1] = h_fin[:, H:2 * H]
    cT_ref[0] = c_fin[:, 0:H]
    cT_ref[1] = c_fin[:, H:2 * H]


def _lstm_project_kernel(gates_ref, wblk_ref, h0_ref, c0_ref, wnext_ref, bnext_ref,
                         gates_next_ref, hT_ref, cT_ref, hseq_ref):
    B = h0_ref.shape[0]
    H = h0_ref.shape[1] // 2
    h_fin, c_fin = _bidir_recurrence(gates_ref, wblk_ref, h0_ref, c0_ref, hseq_ref)
    _write_final_state(hT_ref, cT_ref, h_fin, c_fin, H)
    # Epilogue: next layer's input projection over all T at once (hoisted out of its loop).
    # hseq already holds [h_fwd | h_bwd] contiguously -> no lane concats.
    wnext = wnext_ref[...]
    bnext = bnext_ref[...]
    g8h = wnext.shape[1]
    for b in range(B):                                      # static unroll, B is small
        proj = jnp.dot(hseq_ref[:, b, :], wnext,
                       preferred_element_type=jnp.float32) + bnext       # (T, 8H) f32
        gates_next_ref[:, b * g8h:(b + 1) * g8h] = proj.astype(jnp.bfloat16)


def _lstm_head_kernel(gates_ref, wblk_ref, h0_ref, c0_ref,
                      w1_ref, b1_ref, w2_ref, b2_ref,
                      y_ref, hT_ref, cT_ref, hseq_ref):
    B = h0_ref.shape[0]
    H = h0_ref.shape[1] // 2
    h_fin, c_fin = _bidir_recurrence(gates_ref, wblk_ref, h0_ref, c0_ref, hseq_ref)
    _write_final_state(hT_ref, cT_ref, h_fin, c_fin, H)
    # Epilogue: fused MLP head  Linear(2H->64) + GELU + Linear(64->1) + Tanh.
    w1 = w1_ref[...]
    b1 = b1_ref[...]
    w2 = w2_ref[...]                                        # (1, 64) f32 row vector
    b2 = b2_ref[...]                                        # (1, 1)  f32
    for b in range(B):                                      # static unroll
        h1 = _gelu(jnp.dot(hseq_ref[:, b, :], w1,
                           preferred_element_type=jnp.float32) + b1)      # (T, 64)
        # 64 -> 1 as a VPU/XLU lane reduction (avoids a 1-lane-wide MXU matmul).
        y_b = jnp.tanh(jnp.sum(h1 * w2, axis=-1, keepdims=True) + b2)     # (T, 1)
        # TODO(synk): make this lane-dense ((B, T) row store) once a cheap in-kernel
        #             (T,1)->(1,T) relayout is available; (T, B) + wrapper transpose for now.
        y_ref[:, b:b + 1] = y_b


def lstm_bidir_project(gates_step, w_hh_blk, h0_cat, c0_cat, w_ih_next, b_next):
    """One fused bidirectional layer; returns (natural-order next-layer gates, hT, cT)."""
    T, B, g8h = gates_step.shape
    H = g8h // 8
    g8h_next = w_ih_next.shape[1]
    vmem = pl.BlockSpec(memory_space=pltpu.MemorySpace.VMEM)
    est = T * B * (g8h + g8h_next) * 2 + T * B * 2 * H * 2
    gates_next, hT, cT = pl.pallas_call(
        _lstm_project_kernel,
        out_shape=(
            jax.ShapeDtypeStruct((T, B * g8h_next), jnp.bfloat16),
            jax.ShapeDtypeStruct((2, B, H), jnp.float32),
            jax.ShapeDtypeStruct((2, B, H), jnp.float32),
        ),
        in_specs=[vmem] * 6,
        out_specs=(vmem, vmem, vmem),
        scratch_shapes=[pltpu.VMEM((T, B, 2 * H), jnp.bfloat16)],
        compiler_params=pltpu.CompilerParams(vmem_limit_bytes=_vmem_limit(est)),
    )(gates_step, w_hh_blk, h0_cat, c0_cat, w_ih_next, b_next)
    return gates_next.reshape(T, B, g8h_next), hT, cT


def lstm_bidir_head(gates_step, w_hh_blk, h0_cat, c0_cat, w1, b1, w2, b2):
    """Last fused bidirectional layer with the MLP head fused into its epilogue."""
    T, B, g8h = gates_step.shape
    H = g8h // 8
    vmem = pl.BlockSpec(memory_space=pltpu.MemorySpace.VMEM)
    est = T * B * g8h * 2 + T * B * 2 * H * 2 + T * B * 4
    return pl.pallas_call(
        _lstm_head_kernel,
        out_shape=(
            jax.ShapeDtypeStruct((T, B), jnp.float32),
            jax.ShapeDtypeStruct((2, B, H), jnp.float32),
            jax.ShapeDtypeStruct((2, B, H), jnp.float32),
        ),
        in_specs=[vmem] * 8,
        out_specs=(vmem, vmem, vmem),
        scratch_shapes=[pltpu.VMEM((T, B, 2 * H), jnp.bfloat16)],
        compiler_params=pltpu.CompilerParams(vmem_limit_bytes=_vmem_limit(est)),
    )(gates_step, w_hh_blk, h0_cat, c0_cat, w1, b1, w2, b2)


# ----------------------------------------------------------------------------
# Parameter construction (deterministic, PyTorch-style uniform fan-in init),
# pre-packed into the fused layouts the kernels expect.
# ----------------------------------------------------------------------------
def init_params(key, input_channels=1, hidden_size=32, num_layers=2):
    # TODO(synk): the fused VPU-reduction head assumes input_channels == 1 (as the module uses).
    assert input_channels == 1
    H = hidden_size
    K = _KSIZE

    def uni(k, shape, bound):
        return jax.random.uniform(k, shape, jnp.float32, -bound, bound)

    keys = iter(jax.random.split(key, 64))
    p = {"hidden_size": H, "num_layers": num_layers}

    # conv1: Conv1d(1 -> 32, k=31, pad=15); weight stored (K, 32) since C_in == 1 (VPU taps).
    k1 = 1.0 / jnp.sqrt(float(input_channels * K))
    p["conv1_w"] = uni(next(keys), (K, 32), k1)
    p["conv1_b"] = uni(next(keys), (1, 32), k1)

    # conv2: Conv1d(32 -> 64, k=31, pad=15); stored (K, 32, 64), one small matmul per tap.
    k2 = 1.0 / jnp.sqrt(32.0 * K)
    p["conv2_w"] = uni(next(keys), (K, 32, 64), k2).astype(jnp.bfloat16)
    p["conv2_b"] = uni(next(keys), (1, 64), k2)

    # Bidirectional LSTM, both directions fused per layer:
    #   gate columns interleaved [i_f i_b f_f f_b g_f g_b o_f o_b] (each H wide),
    #   W_hh packed block-diagonally so one (B,2H)@(2H,8H) matmul serves both directions.
    kH = 1.0 / jnp.sqrt(float(H))

    def gate_fuse(wf, wb):
        blocks = []
        for g in range(4):
            blocks += [wf[..., g * H:(g + 1) * H], wb[..., g * H:(g + 1) * H]]
        return jnp.concatenate(blocks, axis=-1)

    p["lstm"] = []
    for layer in range(num_layers):
        d_in = 64 if layer == 0 else 2 * H
        wih_f = uni(next(keys), (d_in, 4 * H), kH)
        wih_b = uni(next(keys), (d_in, 4 * H), kH)
        whh_f = uni(next(keys), (H, 4 * H), kH)
        whh_b = uni(next(keys), (H, 4 * H), kH)
        b_f = uni(next(keys), (1, 4 * H), kH) + uni(next(keys), (1, 4 * H), kH)   # b_ih + b_hh
        b_b = uni(next(keys), (1, 4 * H), kH) + uni(next(keys), (1, 4 * H), kH)
        w_hh_blk = jnp.concatenate(
            [gate_fuse(whh_f, jnp.zeros_like(whh_b)),
             gate_fuse(jnp.zeros_like(whh_f), whh_b)], axis=0)                     # (2H, 8H)
        p["lstm"].append({
            "w_ih_fused": gate_fuse(wih_f, wih_b).astype(jnp.bfloat16),            # (d_in, 8H)
            "b_fused": gate_fuse(b_f, b_b),                                        # (1, 8H) f32
            "w_hh_blk": w_hh_blk.astype(jnp.bfloat16),                             # (2H, 8H)
        })

    # output head: Linear(2H -> 64) + GELU + Linear(64 -> 1) + Tanh
    ko1 = 1.0 / jnp.sqrt(2.0 * H)
    p["out1_w"] = uni(next(keys), (2 * H, 64), ko1).astype(jnp.bfloat16)
    p["out1_b"] = uni(next(keys), (1, 64), ko1)
    ko2 = 1.0 / jnp.sqrt(64.0)
    p["out2_w"] = uni(next(keys), (1, 64), ko2)     # row vector, consumed as a VPU reduction
    p["out2_b"] = uni(next(keys), (1, 1), ko2)
    return p


# ----------------------------------------------------------------------------
# Full forward pass (mirrors NoiseGenerator.forward).
# ----------------------------------------------------------------------------
def _to_step_order(gates, H):
    """Forward-direction gate columns keep natural time order; backward-direction columns are
    time-reversed, so the fused recurrence loads exactly one row per serial step.
    TODO(synk): fuse this flip+select into the producing kernel's epilogue."""
    fwd_col = ((jnp.arange(gates.shape[-1]) // H) % 2) == 0
    return jnp.where(fwd_col, gates, gates[::-1])


def noise_generator_forward(params, x, hidden=None):
    """x: (B, T) float32 audio. Returns (y (B, T), (h_n, c_n)) like the PyTorch module."""
    B, T = x.shape
    H = params["hidden_size"]
    L = params["num_layers"]

    if hidden is None:
        h0 = jnp.zeros((L * 2, B, H), jnp.float32)
        c0 = jnp.zeros((L * 2, B, H), jnp.float32)
    else:
        h0, c0 = hidden

    # Raw signal, zero-padded to a sublane-aligned window; im2col happens inside the kernel.
    x_pad = jnp.pad(x.astype(jnp.float32), ((0, 0), (_PAD_AL, _PAD_AL)))[..., None]

    # Fused frontend: conv1 + GELU + conv2 + GELU + LSTM-layer-0 input projection (bf16 out).
    lp0 = params["lstm"][0]
    gates = conv_frontend(x_pad, params["conv1_w"], params["conv1_b"],
                          params["conv2_w"], params["conv2_b"],
                          lp0["w_ih_fused"], lp0["b_fused"])
    gates = gates.reshape(T, B, 8 * H)          # free reshape (trailing-dim split)

    h_fin, c_fin = [], []
    y_tm = None
    for layer in range(L):
        lp = params["lstm"][layer]
        gates_step = _to_step_order(gates, H)
        h0_cat = jnp.concatenate([h0[2 * layer], h0[2 * layer + 1]], axis=-1)   # (B, 2H)
        c0_cat = jnp.concatenate([c0[2 * layer], c0[2 * layer + 1]], axis=-1)
        if layer + 1 < L:
            nxt = params["lstm"][layer + 1]
            gates, hT, cT = lstm_bidir_project(gates_step, lp["w_hh_blk"], h0_cat, c0_cat,
                                               nxt["w_ih_fused"], nxt["b_fused"])
        else:
            y_tm, hT, cT = lstm_bidir_head(gates_step, lp["w_hh_blk"], h0_cat, c0_cat,
                                           params["out1_w"], params["out1_b"],
                                           params["out2_w"], params["out2_b"])
        h_fin.append(hT)
        c_fin.append(cT)

    y = jnp.transpose(y_tm)                     # (B, T): tiny one-off XLA transpose
    h_n = jnp.concatenate(h_fin, axis=0)        # (2L, B, H), PyTorch layer/direction order
    c_n = jnp.concatenate(c_fin, axis=0)
    return y, (h_n, c_n)


if __name__ == "__main__":
    B, T = 2, 16
    hidden_size, num_layers = 32, 2

    params = init_params(jax.random.PRNGKey(0),
                         input_channels=1,
                         hidden_size=hidden_size,
                         num_layers=num_layers)
    x = jax.random.normal(jax.random.PRNGKey(0), (B, T), jnp.float32)

    fwd = jax.jit(functools.partial(noise_generator_forward, params))
    y, (h_n, c_n) = fwd(x)
    jax.block_until_ready((y, h_n, c_n))

    assert y.shape == (B, T) and y.dtype == jnp.float32
    assert h_n.shape == (num_layers * 2, B, hidden_size)
    assert c_n.shape == (num_layers * 2, B, hidden_size)
    assert bool(jnp.all(jnp.isfinite(y)))
    assert bool(jnp.all(jnp.abs(y) <= 1.0))  # tanh output range
    print("KERNEL_OK")
</pallas_src>

<mosaic_0001>
module attributes {stable_mosaic.version = 11 : i64} {
  func.func @_frontend_kernel(%arg0: i32, %arg1: memref<1x48x1xf32, #tpu.memory_space<vmem>>, %arg2: memref<31x32xf32, #tpu.memory_space<vmem>>, %arg3: memref<1x32xf32, #tpu.memory_space<vmem>>, %arg4: memref<31x32x64xbf16, #tpu.memory_space<vmem>>, %arg5: memref<1x64xf32, #tpu.memory_space<vmem>>, %arg6: memref<64x256xbf16, #tpu.memory_space<vmem>>, %arg7: memref<1x256xf32, #tpu.memory_space<vmem>>, %arg8: memref<16x256xbf16, #tpu.memory_space<vmem>>, %arg9: memref<48x32xf32, #tpu.memory_space<vmem>>) attributes {dimension_semantics = [#tpu.dimension_semantics<parallel>], iteration_bounds = array<i64: 2>, scalar_prefetch = 0 : i64, scratch_operands = 1 : i64, tpu.core_type = #tpu.core_type<tc>, window_params = [{transform_indices = @transform_0, window_bounds = array<i64: 1, 48, 1>}, {pipeline_mode = #tpu.pipeline_mode<synchronous>, transform_indices = @transform_1, window_bounds = array<i64: 31, 32>}, {pipeline_mode = #tpu.pipeline_mode<synchronous>, transform_indices = @transform_2, window_bounds = array<i64: 1, 32>}, {pipeline_mode = #tpu.pipeline_mode<synchronous>, transform_indices = @transform_3, window_bounds = array<i64: 31, 32, 64>}, {pipeline_mode = #tpu.pipeline_mode<synchronous>, transform_indices = @transform_4, window_bounds = array<i64: 1, 64>}, {pipeline_mode = #tpu.pipeline_mode<synchronous>, transform_indices = @transform_5, window_bounds = array<i64: 64, 256>}, {pipeline_mode = #tpu.pipeline_mode<synchronous>, transform_indices = @transform_6, window_bounds = array<i64: 1, 256>}, {transform_indices = @transform_7, window_bounds = array<i64: 16, 256>}]} {
    %cst = arith.constant 0.000000e+00 : f32
    %0 = vector.broadcast %cst : f32 to vector<16x32xf32>
    %c0 = arith.constant 0 : index
    %c1 = arith.constant 1 : index
    %c0_0 = arith.constant 0 : index
    %1 = vector.load %arg1[%c0, %c1, %c0_0] : memref<1x48x1xf32, #tpu.memory_space<vmem>>, vector<1x16x1xf32>
    %2 = vector.shape_cast %1 : vector<1x16x1xf32> to vector<16x1xf32>
    %c0_1 = arith.constant 0 : index
    %c0_2 = arith.constant 0 : index
    %3 = vector.load %arg2[%c0_1, %c0_2] : memref<31x32xf32, #tpu.memory_space<vmem>>, vector<1x32xf32>
    %4 = vector.broadcast %2 : vector<16x1xf32> to vector<16x32xf32>
    %5 = vector.broadcast %3 : vector<1x32xf32> to vector<16x32xf32>
    %6 = arith.mulf %4, %5 : vector<16x32xf32>
    %7 = arith.addf %0, %6 : vector<16x32xf32>
    %c0_3 = arith.constant 0 : index
    %c2 = arith.constant 2 : index
    %c0_4 = arith.constant 0 : index
    %8 = vector.load %arg1[%c0_3, %c2, %c0_4] : memref<1x48x1xf32, #tpu.memory_space<vmem>>, vector<1x16x1xf32>
    %9 = vector.shape_cast %8 : vector<1x16x1xf32> to vector<16x1xf32>
    %c1_5 = arith.constant 1 : index
    %c0_6 = arith.constant 0 : index
    %10 = vector.load %arg2[%c1_5, %c0_6] : memref<31x32xf32, #tpu.memory_space<vmem>>, vector<1x32xf32>
    %11 = vector.broadcast %9 : vector<16x1xf32> to vector<16x32xf32>
    %12 = vector.broadcast %10 : vector<1x32xf32> to vector<16x32xf32>
    %13 = arith.mulf %11, %12 : vector<16x32xf32>
    %14 = arith.addf %7, %13 : vector<16x32xf32>
    %c0_7 = arith.constant 0 : index
    %c3 = arith.constant 3 : index
    %c0_8 = arith.constant 0 : index
    %15 = vector.load %arg1[%c0_7, %c3, %c0_8] : memref<1x48x1xf32, #tpu.memory_space<vmem>>, vector<1x16x1xf32>
    %16 = vector.shape_cast %15 : vector<1x16x1xf32> to vector<16x1xf32>
    %c2_9 = arith.constant 2 : index
    %c0_10 = arith.constant 0 : index
    %17 = vector.load %arg2[%c2_9, %c0_10] : memref<31x32xf32, #tpu.memory_space<vmem>>, vector<1x32xf32>
    %18 = vector.broadcast %16 : vector<16x1xf32> to vector<16x32xf32>
    %19 = vector.broadcast %17 : vector<1x32xf32> to vector<16x32xf32>
    %20 = arith.mulf %18, %19 : vector<16x32xf32>
    %21 = arith.addf %14, %20 : vector<16x32xf32>
    %c0_11 = arith.constant 0 : index
    %c4 = arith.constant 4 : index
    %c0_12 = arith.constant 0 : index
    %22 = vector.load %arg1[%c0_11, %c4, %c0_12] : memref<1x48x1xf32, #tpu.memory_space<vmem>>, vector<1x16x1xf32>
    %23 = vector.shape_cast %22 : vector<1x16x1xf32> to vector<16x1xf32>
    %c3_13 = arith.constant 3 : index
    %c0_14 = arith.constant 0 : index
    %24 = vector.load %arg2[%c3_13, %c0_14] : memref<31x32xf32, #tpu.memory_space<vmem>>, vector<1x32xf32>
    %25 = vector.broadcast %23 : vector<16x1xf32> to vector<16x32xf32>
    %26 = vector.broadcast %24 : vector<1x32xf32> to vector<16x32xf32>
    %27 = arith.mulf %25, %26 : vector<16x32xf32>
    %28 = arith.addf %21, %27 : vector<16x32xf32>
    %c0_15 = arith.constant 0 : index
    %c5 = arith.constant 5 : index
    %c0_16 = arith.constant 0 : index
    %29 = vector.load %arg1[%c0_15, %c5, %c0_16] : memref<1x48x1xf32, #tpu.memory_space<vmem>>, vector<1x16x1xf32>
    %30 = vector.shape_cast %29 : vector<1x16x1xf32> to vector<16x1xf32>
    %c4_17 = arith.constant 4 : index
    %c0_18 = arith.constant 0 : index
    %31 = vector.load %arg2[%c4_17, %c0_18] : memref<31x32xf32, #tpu.memory_space<vmem>>, vector<1x32xf32>
    %32 = vector.broadcast %30 : vector<16x1xf32> to vector<16x32xf32>
    %33 = vector.broadcast %31 : vector<1x32xf32> to vector<16x32xf32>
    %34 = arith.mulf %32, %33 : vector<16x32xf32>
    %35 = arith.addf %28, %34 : vector<16x32xf32>
    %c0_19 = arith.constant 0 : index
    %c6 = arith.constant 6 : index
    %c0_20 = arith.constant 0 : index
    %36 = vector.load %arg1[%c0_19, %c6, %c0_20] : memref<1x48x1xf32, #tpu.memory_space<vmem>>, vector<1x16x1xf32>
    %37 = vector.shape_cast %36 : vector<1x16x1xf32> to vector<16x1xf32>
    %c5_21 = arith.constant 5 : index
    %c0_22 = arith.constant 0 : index
    %38 = vector.load %arg2[%c5_21, %c0_22] : memref<31x32xf32, #tpu.memory_space<vmem>>, vector<1x32xf32>
    %39 = vector.broadcast %37 : vector<16x1xf32> to vector<16x32xf32>
    %40 = vector.broadcast %38 : vector<1x32xf32> to vector<16x32xf32>
    %41 = arith.mulf %39, %40 : vector<16x32xf32>
    %42 = arith.addf %35, %41 : vector<16x32xf32>
    %c0_23 = arith.constant 0 : index
    %c7 = arith.constant 7 : index
    %c0_24 = arith.constant 0 : index
    %43 = vector.load %arg1[%c0_23, %c7, %c0_24] : memref<1x48x1xf32, #tpu.memory_space<vmem>>, vector<1x16x1xf32>
    %44 = vector.shape_cast %43 : vector<1x16x1xf32> to vector<16x1xf32>
    %c6_25 = arith.constant 6 : index
    %c0_26 = arith.constant 0 : index
    %45 = vector.load %arg2[%c6_25, %c0_26] : memref<31x32xf32, #tpu.memory_space<vmem>>, vector<1x32xf32>
    %46 = vector.broadcast %44 : vector<16x1xf32> to vector<16x32xf32>
    %47 = vector.broadcast %45 : vector<1x32xf32> to vector<16x32xf32>
    %48 = arith.mulf %46, %47 : vector<16x32xf32>
    %49 = arith.addf %42, %48 : vector<16x32xf32>
    %c0_27 = arith.constant 0 : index
    %c8 = arith.constant 8 : index
    %c0_28 = arith.constant 0 : index
    %50 = vector.load %arg1[%c0_27, %c8, %c0_28] : memref<1x48x1xf32, #tpu.memory_space<vmem>>, vector<1x16x1xf32>
    %51 = vector.shape_cast %50 : vector<1x16x1xf32> to vector<16x1xf32>
    %c7_29 = arith.constant 7 : index
    %c0_30 = arith.constant 0 : index
    %52 = vector.load %arg2[%c7_29, %c0_30] : memref<31x32xf32, #tpu.memory_space<vmem>>, vector<1x32xf32>
    %53 = vector.broadcast %51 : vector<16x1xf32> to vector<16x32xf32>
    %54 = vector.broadcast %52 : vector<1x32xf32> to vector<16x32xf32>
    %55 = arith.mulf %53, %54 : vector<16x32xf32>
    %56 = arith.addf %49, %55 : vector<16x32xf32>
    %c0_31 = arith.constant 0 : index
    %c9 = arith.constant 9 : index
    %c0_32 = arith.constant 0 : index
    %57 = vector.load %arg1[%c0_31, %c9, %c0_32] : memref<1x48x1xf32, #tpu.memory_space<vmem>>, vector<1x16x1xf32>
    %58 = vector.shape_cast %57 : vector<1x16x1xf32> to vector<16x1xf32>
    %c8_33 = arith.constant 8 : index
    %c0_34 = arith.constant 0 : index
    %59 = vector.load %arg2[%c8_33, %c0_34] : memref<31x32xf32, #tpu.memory_space<vmem>>, vector<1x32xf32>
    %60 = vector.broadcast %58 : vector<16x1xf32> to vector<16x32xf32>
    %61 = vector.broadcast %59 : vector<1x32xf32> to vector<16x32xf32>
    %62 = arith.mulf %60, %61 : vector<16x32xf32>
    %63 = arith.addf %56, %62 : vector<16x32xf32>
    %c0_35 = arith.constant 0 : index
    %c10 = arith.constant 10 : index
    %c0_36 = arith.constant 0 : index
    %64 = vector.load %arg1[%c0_35, %c10, %c0_36] : memref<1x48x1xf32, #tpu.memory_space<vmem>>, vector<1x16x1xf32>
    %65 = vector.shape_cast %64 : vector<1x16x1xf32> to vector<16x1xf32>
    %c9_37 = arith.constant 9 : index
    %c0_38 = arith.constant 0 : index
    %66 = vector.load %arg2[%c9_37, %c0_38] : memref<31x32xf32, #tpu.memory_space<vmem>>, vector<1x32xf32>
    %67 = vector.broadcast %65 : vector<16x1xf32> to vector<16x32xf32>
    %68 = vector.broadcast %66 : vector<1x32xf32> to vector<16x32xf32>
    %69 = arith.mulf %67, %68 : vector<16x32xf32>
    %70 = arith.addf %63, %69 : vector<16x32xf32>
    %c0_39 = arith.constant 0 : index
    %c11 = arith.constant 11 : index
    %c0_40 = arith.constant 0 : index
    %71 = vector.load %arg1[%c0_39, %c11, %c0_40] : memref<1x48x1xf32, #tpu.memory_space<vmem>>, vector<1x16x1xf32>
    %72 = vector.shape_cast %71 : vector<1x16x1xf32> to vector<16x1xf32>
    %c10_41 = arith.constant 10 : index
    %c0_42 = arith.constant 0 : index
    %73 = vector.load %arg2[%c10_41, %c0_42] : memref<31x32xf32, #tpu.memory_space<vmem>>, vector<1x32xf32>
    %74 = vector.broadcast %72 : vector<16x1xf32> to vector<16x32xf32>
    %75 = vector.broadcast %73 : vector<1x32xf32> to vector<16x32xf32>
    %76 = arith.mulf %74, %75 : vector<16x32xf32>
    %77 = arith.addf %70, %76 : vector<16x32xf32>
    %c0_43 = arith.constant 0 : index
    %c12 = arith.constant 12 : index
    %c0_44 = arith.constant 0 : index
    %78 = vector.load %arg1[%c0_43, %c12, %c0_44] : memref<1x48x1xf32, #tpu.memory_space<vmem>>, vector<1x16x1xf32>
    %79 = vector.shape_cast %78 : vector<1x16x1xf32> to vector<16x1xf32>
    %c11_45 = arith.constant 11 : index
    %c0_46 = arith.constant 0 : index
    %80 = vector.load %arg2[%c11_45, %c0_46] : memref<31x32xf32, #tpu.memory_space<vmem>>, vector<1x32xf32>
    %81 = vector.broadcast %79 : vector<16x1xf32> to vector<16x32xf32>
    %82 = vector.broadcast %80 : vector<1x32xf32> to vector<16x32xf32>
    %83 = arith.mulf %81, %82 : vector<16x32xf32>
    %84 = arith.addf %77, %83 : vector<16x32xf32>
    %c0_47 = arith.constant 0 : index
    %c13 = arith.constant 13 : index
    %c0_48 = arith.constant 0 : index
    %85 = vector.load %arg1[%c0_47, %c13, %c0_48] : memref<1x48x1xf32, #tpu.memory_space<vmem>>, vector<1x16x1xf32>
    %86 = vector.shape_cast %85 : vector<1x16x1xf32> to vector<16x1xf32>
    %c12_49 = arith.constant 12 : index
    %c0_50 = arith.constant 0 : index
    %87 = vector.load %arg2[%c12_49, %c0_50] : memref<31x32xf32, #tpu.memory_space<vmem>>, vector<1x32xf32>
    %88 = vector.broadcast %86 : vector<16x1xf32> to vector<16x32xf32>
    %89 = vector.broadcast %87 : vector<1x32xf32> to vector<16x32xf32>
    %90 = arith.mulf %88, %89 : vector<16x32xf32>
    %91 = arith.addf %84, %90 : vector<16x32xf32>
    %c0_51 = arith.constant 0 : index
    %c14 = arith.constant 14 : index
    %c0_52 = arith.constant 0 : index
    %92 = vector.load %arg1[%c0_51, %c14, %c0_52] : memref<1x48x1xf32, #tpu.memory_space<vmem>>, vector<1x16x1xf32>
    %93 = vector.shape_cast %92 : vector<1x16x1xf32> to vector<16x1xf32>
    %c13_53 = arith.constant 13 : index
    %c0_54 = arith.constant 0 : index
    %94 = vector.load %arg2[%c13_53, %c0_54] : memref<31x32xf32, #tpu.memory_space<vmem>>, vector<1x32xf32>
    %95 = vector.broadcast %93 : vector<16x1xf32> to vector<16x32xf32>
    %96 = vector.broadcast %94 : vector<1x32xf32> to vector<16x32xf32>
    %97 = arith.mulf %95, %96 : vector<16x32xf32>
    %98 = arith.addf %91, %97 : vector<16x32xf32>
    %c0_55 = arith.constant 0 : index
    %c15 = arith.constant 15 : index
    %c0_56 = arith.constant 0 : index
    %99 = vector.load %arg1[%c0_55, %c15, %c0_56] : memref<1x48x1xf32, #tpu.memory_space<vmem>>, vector<1x16x1xf32>
    %100 = vector.shape_cast %99 : vector<1x16x1xf32> to vector<16x1xf32>
    %c14_57 = arith.constant 14 : index
    %c0_58 = arith.constant 0 : index
    %101 = vector.load %arg2[%c14_57, %c0_58] : memref<31x32xf32, #tpu.memory_space<vmem>>, vector<1x32xf32>
    %102 = vector.broadcast %100 : vector<16x1xf32> to vector<16x32xf32>
    %103 = vector.broadcast %101 : vector<1x32xf32> to vector<16x32xf32>
    %104 = arith.mulf %102, %103 : vector<16x32xf32>
    %105 = arith.addf %98, %104 : vector<16x32xf32>
    %c0_59 = arith.constant 0 : index
    %c16 = arith.constant 16 : index
    %c0_60 = arith.constant 0 : index
    %106 = vector.load %arg1[%c0_59, %c16, %c0_60] : memref<1x48x1xf32, #tpu.memory_space<vmem>>, vector<1x16x1xf32>
    %107 = vector.shape_cast %106 : vector<1x16x1xf32> to vector<16x1xf32>
    %c15_61 = arith.constant 15 : index
    %c0_62 = arith.constant 0 : index
    %108 = vector.load %arg2[%c15_61, %c0_62] : memref<31x32xf32, #tpu.memory_space<vmem>>, vector<1x32xf32>
    %109 = vector.broadcast %107 : vector<16x1xf32> to vector<16x32xf32>
    %110 = vector.broadcast %108 : vector<1x32xf32> to vector<16x32xf32>
    %111 = arith.mulf %109, %110 : vector<16x32xf32>
    %112 = arith.addf %105, %111 : vector<16x32xf32>
    %c0_63 = arith.constant 0 : index
    %c17 = arith.constant 17 : index
    %c0_64 = arith.constant 0 : index
    %113 = vector.load %arg1[%c0_63, %c17, %c0_64] : memref<1x48x1xf32, #tpu.memory_space<vmem>>, vector<1x16x1xf32>
    %114 = vector.shape_cast %113 : vector<1x16x1xf32> to vector<16x1xf32>
    %c16_65 = arith.constant 16 : index
    %c0_66 = arith.constant 0 : index
    %115 = vector.load %arg2[%c16_65, %c0_66] : memref<31x32xf32, #tpu.memory_space<vmem>>, vector<1x32xf32>
    %116 = vector.broadcast %114 : vector<16x1xf32> to vector<16x32xf32>
    %117 = vector.broadcast %115 : vector<1x32xf32> to vector<16x32xf32>
    %118 = arith.mulf %116, %117 : vector<16x32xf32>
    %119 = arith.addf %112, %118 : vector<16x32xf32>
    %c0_67 = arith.constant 0 : index
    %c18 = arith.constant 18 : index
    %c0_68 = arith.constant 0 : index
    %120 = vector.load %arg1[%c0_67, %c18, %c0_68] : memref<1x48x1xf32, #tpu.memory_space<vmem>>, vector<1x16x1xf32>
    %121 = vector.shape_cast %120 : vector<1x16x1xf32> to vector<16x1xf32>
    %c17_69 = arith.constant 17 : index
    %c0_70 = arith.constant 0 : index
    %122 = vector.load %arg2[%c17_69, %c0_70] : memref<31x32xf32, #tpu.memory_space<vmem>>, vector<1x32xf32>
    %123 = vector.broadcast %121 : vector<16x1xf32> to vector<16x32xf32>
    %124 = vector.broadcast %122 : vector<1x32xf32> to vector<16x32xf32>
    %125 = arith.mulf %123, %124 : vector<16x32xf32>
    %126 = arith.addf %119, %125 : vector<16x32xf32>
    %c0_71 = arith.constant 0 : index
    %c19 = arith.constant 19 : index
    %c0_72 = arith.constant 0 : index
    %127 = vector.load %arg1[%c0_71, %c19, %c0_72] : memref<1x48x1xf32, #tpu.memory_space<vmem>>, vector<1x16x1xf32>
    %128 = vector.shape_cast %127 : vector<1x16x1xf32> to vector<16x1xf32>
    %c18_73 = arith.constant 18 : index
    %c0_74 = arith.constant 0 : index
    %129 = vector.load %arg2[%c18_73, %c0_74] : memref<31x32xf32, #tpu.memory_space<vmem>>, vector<1x32xf32>
    %130 = vector.broadcast %128 : vector<16x1xf32> to vector<16x32xf32>
    %131 = vector.broadcast %129 : vector<1x32xf32> to vector<16x32xf32>
    %132 = arith.mulf %130, %131 : vector<16x32xf32>
    %133 = arith.addf %126, %132 : vector<16x32xf32>
    %c0_75 = arith.constant 0 : index
    %c20 = arith.constant 20 : index
    %c0_76 = arith.constant 0 : index
    %134 = vector.load %arg1[%c0_75, %c20, %c0_76] : memref<1x48x1xf32, #tpu.memory_space<vmem>>, vector<1x16x1xf32>
    %135 = vector.shape_cast %134 : vector<1x16x1xf32> to vector<16x1xf32>
    %c19_77 = arith.constant 19 : index
    %c0_78 = arith.constant 0 : index
    %136 = vector.load %arg2[%c19_77, %c0_78] : memref<31x32xf32, #tpu.memory_space<vmem>>, vector<1x32xf32>
    %137 = vector.broadcast %135 : vector<16x1xf32> to vector<16x32xf32>
    %138 = vector.broadcast %136 : vector<1x32xf32> to vector<16x32xf32>
    %139 = arith.mulf %137, %138 : vector<16x32xf32>
    %140 = arith.addf %133, %139 : vector<16x32xf32>
    %c0_79 = arith.constant 0 : index
    %c21 = arith.constant 21 : index
    %c0_80 = arith.constant 0 : index
    %141 = vector.load %arg1[%c0_79, %c21, %c0_80] : memref<1x48x1xf32, #tpu.memory_space<vmem>>, vector<1x16x1xf32>
    %142 = vector.shape_cast %141 : vector<1x16x1xf32> to vector<16x1xf32>
    %c20_81 = arith.constant 20 : index
    %c0_82 = arith.constant 0 : index
    %143 = vector.load %arg2[%c20_81, %c0_82] : memref<31x32xf32, #tpu.memory_space<vmem>>, vector<1x32xf32>
    %144 = vector.broadcast %142 : vector<16x1xf32> to vector<16x32xf32>
    %145 = vector.broadcast %143 : vector<1x32xf32> to vector<16x32xf32>
    %146 = arith.mulf %144, %145 : vector<16x32xf32>
    %147 = arith.addf %140, %146 : vector<16x32xf32>
    %c0_83 = arith.constant 0 : index
    %c22 = arith.constant 22 : index
    %c0_84 = arith.constant 0 : index
    %148 = vector.load %arg1[%c0_83, %c22, %c0_84] : memref<1x48x1xf32, #tpu.memory_space<vmem>>, vector<1x16x1xf32>
    %149 = vector.shape_cast %148 : vector<1x16x1xf32> to vector<16x1xf32>
    %c21_85 = arith.constant 21 : index
    %c0_86 = arith.constant 0 : index
    %150 = vector.load %arg2[%c21_85, %c0_86] : memref<31x32xf32, #tpu.memory_space<vmem>>, vector<1x32xf32>
    %151 = vector.broadcast %149 : vector<16x1xf32> to vector<16x32xf32>
    %152 = vector.broadcast %150 : vector<1x32xf32> to vector<16x32xf32>
    %153 = arith.mulf %151, %152 : vector<16x32xf32>
    %154 = arith.addf %147, %153 : vector<16x32xf32>
    %c0_87 = arith.constant 0 : index
    %c23 = arith.constant 23 : index
    %c0_88 = arith.constant 0 : index
    %155 = vector.load %arg1[%c0_87, %c23, %c0_88] : memref<1x48x1xf32, #tpu.memory_space<vmem>>, vector<1x16x1xf32>
    %156 = vector.shape_cast %155 : vector<1x16x1xf32> to vector<16x1xf32>
    %c22_89 = arith.constant 22 : index
    %c0_90 = arith.constant 0 : index
    %157 = vector.load %arg2[%c22_89, %c0_90] : memref<31x32xf32, #tpu.memory_space<vmem>>, vector<1x32xf32>
    %158 = vector.broadcast %156 : vector<16x1xf32> to vector<16x32xf32>
    %159 = vector.broadcast %157 : vector<1x32xf32> to vector<16x32xf32>
    %160 = arith.mulf %158, %159 : vector<16x32xf32>
    %161 = arith.addf %154, %160 : vector<16x32xf32>
    %c0_91 = arith.constant 0 : index
    %c24 = arith.constant 24 : index
    %c0_92 = arith.constant 0 : index
    %162 = vector.load %arg1[%c0_91, %c24, %c0_92] : memref<1x48x1xf32, #tpu.memory_space<vmem>>, vector<1x16x1xf32>
    %163 = vector.shape_cast %162 : vector<1x16x1xf32> to vector<16x1xf32>
    %c23_93 = arith.constant 23 : index
    %c0_94 = arith.constant 0 : index
    %164 = vector.load %arg2[%c23_93, %c0_94] : memref<31x32xf32, #tpu.memory_space<vmem>>, vector<1x32xf32>
    %165 = vector.broadcast %163 : vector<16x1xf32> to vector<16x32xf32>
    %166 = vector.broadcast %164 : vector<1x32xf32> to vector<16x32xf32>
    %167 = arith.mulf %165, %166 : vector<16x32xf32>
    %168 = arith.addf %161, %167 : vector<16x32xf32>
    %c0_95 = arith.constant 0 : index
    %c25 = arith.constant 25 : index
    %c0_96 = arith.constant 0 : index
    %169 = vector.load %arg1[%c0_95, %c25, %c0_96] : memref<1x48x1xf32, #tpu.memory_space<vmem>>, vector<1x16x1xf32>
    %170 = vector.shape_cast %169 : vector<1x16x1xf32> to vector<16x1xf32>
    %c24_97 = arith.constant 24 : index
    %c0_98 = arith.constant 0 : index
    %171 = vector.load %arg2[%c24_97, %c0_98] : memref<31x32xf32, #tpu.memory_space<vmem>>, vector<1x32xf32>
    %172 = vector.broadcast %170 : vector<16x1xf32> to vector<16x32xf32>
    %173 = vector.broadcast %171 : vector<1x32xf32> to vector<16x32xf32>
    %174 = arith.mulf %172, %173 : vector<16x32xf32>
    %175 = arith.addf %168, %174 : vector<16x32xf32>
    %c0_99 = arith.constant 0 : index
    %c26 = arith.constant 26 : index
    %c0_100 = arith.constant 0 : index
    %176 = vector.load %arg1[%c0_99, %c26, %c0_100] : memref<1x48x1xf32, #tpu.memory_space<vmem>>, vector<1x16x1xf32>
    %177 = vector.shape_cast %176 : vector<1x16x1xf32> to vector<16x1xf32>
    %c25_101 = arith.constant 25 : index
    %c0_102 = arith.constant 0 : index
    %178 = vector.load %arg2[%c25_101, %c0_102] : memref<31x32xf32, #tpu.memory_space<vmem>>, vector<1x32xf32>
    %179 = vector.broadcast %177 : vector<16x1xf32> to vector<16x32xf32>
    %180 = vector.broadcast %178 : vector<1x32xf32> to vector<16x32xf32>
    %181 = arith.mulf %179, %180 : vector<16x32xf32>
    %182 = arith.addf %175, %181 : vector<16x32xf32>
    %c0_103 = arith.constant 0 : index
    %c27 = arith.constant 27 : index
    %c0_104 = arith.constant 0 : index
    %183 = vector.load %arg1[%c0_103, %c27, %c0_104] : memref<1x48x1xf32, #tpu.memory_space<vmem>>, vector<1x16x1xf32>
    %184 = vector.shape_cast %183 : vector<1x16x1xf32> to vector<16x1xf32>
    %c26_105 = arith.constant 26 : index
    %c0_106 = arith.constant 0 : index
    %185 = vector.load %arg2[%c26_105, %c0_106] : memref<31x32xf32, #tpu.memory_space<vmem>>, vector<1x32xf32>
    %186 = vector.broadcast %184 : vector<16x1xf32> to vector<16x32xf32>
    %187 = vector.broadcast %185 : vector<1x32xf32> to vector<16x32xf32>
    %188 = arith.mulf %186, %187 : vector<16x32xf32>
    %189 = arith.addf %182, %188 : vector<16x32xf32>
    %c0_107 = arith.constant 0 : index
    %c28 = arith.constant 28 : index
    %c0_108 = arith.constant 0 : index
    %190 = vector.load %arg1[%c0_107, %c28, %c0_108] : memref<1x48x1xf32, #tpu.memory_space<vmem>>, vector<1x16x1xf32>
    %191 = vector.shape_cast %190 : vector<1x16x1xf32> to vector<16x1xf32>
    %c27_109 = arith.constant 27 : index
    %c0_110 = arith.constant 0 : index
    %192 = vector.load %arg2[%c27_109, %c0_110] : memref<31x32xf32, #tpu.memory_space<vmem>>, vector<1x32xf32>
    %193 = vector.broadcast %191 : vector<16x1xf32> to vector<16x32xf32>
    %194 = vector.broadcast %192 : vector<1x32xf32> to vector<16x32xf32>
    %195 = arith.mulf %193, %194 : vector<16x32xf32>
    %196 = arith.addf %189, %195 : vector<16x32xf32>
    %c0_111 = arith.constant 0 : index
    %c29 = arith.constant 29 : index
    %c0_112 = arith.constant 0 : index
    %197 = vector.load %arg1[%c0_111, %c29, %c0_112] : memref<1x48x1xf32, #tpu.memory_space<vmem>>, vector<1x16x1xf32>
    %198 = vector.shape_cast %197 : vector<1x16x1xf32> to vector<16x1xf32>
    %c28_113 = arith.constant 28 : index
    %c0_114 = arith.constant 0 : index
    %199 = vector.load %arg2[%c28_113, %c0_114] : memref<31x32xf32, #tpu.memory_space<vmem>>, vector<1x32xf32>
    %200 = vector.broadcast %198 : vector<16x1xf32> to vector<16x32xf32>
    %201 = vector.broadcast %199 : vector<1x32xf32> to vector<16x32xf32>
    %202 = arith.mulf %200, %201 : vector<16x32xf32>
    %203 = arith.addf %196, %202 : vector<16x32xf32>
    %c0_115 = arith.constant 0 : index
    %c30 = arith.constant 30 : index
    %c0_116 = arith.constant 0 : index
    %204 = vector.load %arg1[%c0_115, %c30, %c0_116] : memref<1x48x1xf32, #tpu.memory_space<vmem>>, vector<1x16x1xf32>
    %205 = vector.shape_cast %204 : vector<1x16x1xf32> to vector<16x1xf32>
    %c29_117 = arith.constant 29 : index
    %c0_118 = arith.constant 0 : index
    %206 = vector.load %arg2[%c29_117, %c0_118] : memref<31x32xf32, #tpu.memory_space<vmem>>, vector<1x32xf32>
    %207 = vector.broadcast %205 : vector<16x1xf32> to vector<16x32xf32>
    %208 = vector.broadcast %206 : vector<1x32xf32> to vector<16x32xf32>
    %209 = arith.mulf %207, %208 : vector<16x32xf32>
    %210 = arith.addf %203, %209 : vector<16x32xf32>
    %c0_119 = arith.constant 0 : index
    %c31 = arith.constant 31 : index
    %c0_120 = arith.constant 0 : index
    %211 = vector.load %arg1[%c0_119, %c31, %c0_120] : memref<1x48x1xf32, #tpu.memory_space<vmem>>, vector<1x16x1xf32>
    %212 = vector.shape_cast %211 : vector<1x16x1xf32> to vector<16x1xf32>
    %c30_121 = arith.constant 30 : index
    %c0_122 = arith.constant 0 : index
    %213 = vector.load %arg2[%c30_121, %c0_122] : memref<31x32xf32, #tpu.memory_space<vmem>>, vector<1x32xf32>
    %214 = vector.broadcast %212 : vector<16x1xf32> to vector<16x32xf32>
    %215 = vector.broadcast %213 : vector<1x32xf32> to vector<16x32xf32>
    %216 = arith.mulf %214, %215 : vector<16x32xf32>
    %217 = arith.addf %210, %216 : vector<16x32xf32>
    %c0_123 = arith.constant 0 : index
    %c0_124 = arith.constant 0 : index
    %218 = vector.load %arg3[%c0_123, %c0_124] : memref<1x32xf32, #tpu.memory_space<vmem>>, vector<1x32xf32>
    %219 = vector.broadcast %218 : vector<1x32xf32> to vector<16x32xf32>
    %220 = arith.addf %217, %219 : vector<16x32xf32>
    %cst_125 = arith.constant 5.000000e-01 : f32
    %221 = vector.broadcast %cst_125 : f32 to vector<16x32xf32>
    %222 = arith.mulf %221, %220 : vector<16x32xf32>
    %cst_126 = arith.constant 4.471500e-02 : f32
    %223 = vector.broadcast %cst_126 : f32 to vector<16x32xf32>
    %224 = arith.mulf %223, %220 : vector<16x32xf32>
    %225 = arith.mulf %224, %220 : vector<16x32xf32>
    %226 = arith.mulf %225, %220 : vector<16x32xf32>
    %227 = arith.addf %220, %226 : vector<16x32xf32>
    %cst_127 = arith.constant 0.797884583 : f32
    %228 = vector.broadcast %cst_127 : f32 to vector<16x32xf32>
    %229 = arith.mulf %228, %227 : vector<16x32xf32>
    %230 = math.tanh %229 : vector<16x32xf32>
    %cst_128 = arith.constant 1.000000e+00 : f32
    %231 = vector.broadcast %cst_128 : f32 to vector<16x32xf32>
    %232 = arith.addf %231, %230 : vector<16x32xf32>
    %233 = arith.mulf %222, %232 : vector<16x32xf32>
    %cst_129 = arith.constant 0.000000e+00 : f32
    %234 = vector.broadcast %cst_129 : f32 to vector<48x32xf32>
    %c0_130 = arith.constant 0 : index
    %c0_131 = arith.constant 0 : index
    %235 = vector.load %arg9[%c0_130, %c0_131] : memref<48x32xf32, #tpu.memory_space<vmem>>, vector<48x32xf32>
    tpu.vector_store %arg9[%c0_130, %c0_131], %234 {strides = array<i32>} : memref<48x32xf32, #tpu.memory_space<vmem>>, vector<48x32xf32>,
    %c16_132 = arith.constant 16 : index
    %c0_133 = arith.constant 0 : index
    %236 = vector.load %arg9[%c16_132, %c0_133] : memref<48x32xf32, #tpu.memory_space<vmem>>, vector<16x32xf32>
    tpu.vector_store %arg9[%c16_132, %c0_133], %233 {strides = array<i32>} : memref<48x32xf32, #tpu.memory_space<vmem>>, vector<16x32xf32>,
    %cst_134 = arith.constant 0.000000e+00 : f32
    %237 = vector.broadcast %cst_134 : f32 to vector<16x64xf32>
    %c1_135 = arith.constant 1 : index
    %c0_136 = arith.constant 0 : index
    %238 = vector.load %arg9[%c1_135, %c0_136] : memref<48x32xf32, #tpu.memory_space<vmem>>, vector<16x32xf32>
    %239 = arith.truncf %238 : vector<16x32xf32> to vector<16x32xbf16>
    %c0_137 = arith.constant 0 : index
    %c0_138 = arith.constant 0 : index
    %c0_139 = arith.constant 0 : index
    %240 = vector.load %arg4[%c0_137, %c0_138, %c0_139] : memref<31x32x64xbf16, #tpu.memory_space<vmem>>, vector<1x32x64xbf16>
    %241 = vector.shape_cast %240 : vector<1x32x64xbf16> to vector<32x64xbf16>
    %cst_140 = arith.constant dense<0.000000e+00> : vector<16x64xf32>
    %242 = tpu.matmul %239, %241, %cst_140 {dimension_numbers = #tpu.dot_dimension_numbers<[1], [0], [0], [1], [0, 0, 1, 1], [], []>} : vector<16x32xbf16>, vector<32x64xbf16>, vector<16x64xf32> -> vector<16x64xf32>
    %243 = arith.addf %237, %242 : vector<16x64xf32>
    %c2_141 = arith.constant 2 : index
    %c0_142 = arith.constant 0 : index
    %244 = vector.load %arg9[%c2_141, %c0_142] : memref<48x32xf32, #tpu.memory_space<vmem>>, vector<16x32xf32>
    %245 = arith.truncf %244 : vector<16x32xf32> to vector<16x32xbf16>
    %c1_143 = arith.constant 1 : index
    %c0_144 = arith.constant 0 : index
    %c0_145 = arith.constant 0 : index
    %246 = vector.load %arg4[%c1_143, %c0_144, %c0_145] : memref<31x32x64xbf16, #tpu.memory_space<vmem>>, vector<1x32x64xbf16>
    %247 = vector.shape_cast %246 : vector<1x32x64xbf16> to vector<32x64xbf16>
    %cst_146 = arith.constant dense<0.000000e+00> : vector<16x64xf32>
    %248 = tpu.matmul %245, %247, %cst_146 {dimension_numbers = #tpu.dot_dimension_numbers<[1], [0], [0], [1], [0, 0, 1, 1], [], []>} : vector<16x32xbf16>, vector<32x64xbf16>, vector<16x64xf32> -> vector<16x64xf32>
    %249 = arith.addf %243, %248 : vector<16x64xf32>
    %c3_147 = arith.constant 3 : index
    %c0_148 = arith.constant 0 : index
    %250 = vector.load %arg9[%c3_147, %c0_148] : memref<48x32xf32, #tpu.memory_space<vmem>>, vector<16x32xf32>
    %251 = arith.truncf %250 : vector<16x32xf32> to vector<16x32xbf16>
    %c2_149 = arith.constant 2 : index
    %c0_150 = arith.constant 0 : index
    %c0_151 = arith.constant 0 : index
    %252 = vector.load %arg4[%c2_149, %c0_150, %c0_151] : memref<31x32x64xbf16, #tpu.memory_space<vmem>>, vector<1x32x64xbf16>
    %253 = vector.shape_cast %252 : vector<1x32x64xbf16> to vector<32x64xbf16>
    %cst_152 = arith.constant dense<0.000000e+00> : vector<16x64xf32>
    %254 = tpu.matmul %251, %253, %cst_152 {dimension_numbers = #tpu.dot_dimension_numbers<[1], [0], [0], [1], [0, 0, 1, 1], [], []>} : vector<16x32xbf16>, vector<32x64xbf16>, vector<16x64xf32> -> vector<16x64xf32>
    %255 = arith.addf %249, %254 : vector<16x64xf32>
    %c4_153 = arith.constant 4 : index
    %c0_154 = arith.constant 0 : index
    %256 = vector.load %arg9[%c4_153, %c0_154] : memref<48x32xf32, #tpu.memory_space<vmem>>, vector<16x32xf32>
    %257 = arith.truncf %256 : vector<16x32xf32> to vector<16x32xbf16>
    %c3_155 = arith.constant 3 : index
    %c0_156 = arith.constant 0 : index
    %c0_157 = arith.constant 0 : index
    %258 = vector.load %arg4[%c3_155, %c0_156, %c0_157] : memref<31x32x64xbf16, #tpu.memory_space<vmem>>, vector<1x32x64xbf16>
    %259 = vector.shape_cast %258 : vector<1x32x64xbf16> to vector<32x64xbf16>
    %cst_158 = arith.constant dense<0.000000e+00> : vector<16x64xf32>
    %260 = tpu.matmul %257, %259, %cst_158 {dimension_numbers = #tpu.dot_dimension_numbers<[1], [0], [0], [1], [0, 0, 1, 1], [], []>} : vector<16x32xbf16>, vector<32x64xbf16>, vector<16x64xf32> -> vector<16x64xf32>
    %261 = arith.addf %255, %260 : vector<16x64xf32>
    %c5_159 = arith.constant 5 : index
    %c0_160 = arith.constant 0 : index
    %262 = vector.load %arg9[%c5_159, %c0_160] : memref<48x32xf32, #tpu.memory_space<vmem>>, vector<16x32xf32>
    %263 = arith.truncf %262 : vector<16x32xf32> to vector<16x32xbf16>
    %c4_161 = arith.constant 4 : index
    %c0_162 = arith.constant 0 : index
    %c0_163 = arith.constant 0 : index
    %264 = vector.load %arg4[%c4_161, %c0_162, %c0_163] : memref<31x32x64xbf16, #tpu.memory_space<vmem>>, vector<1x32x64xbf16>
    %265 = vector.shape_cast %264 : vector<1x32x64xbf16> to vector<32x64xbf16>
    %cst_164 = arith.constant dense<0.000000e+00> : vector<16x64xf32>
    %266 = tpu.matmul %263, %265, %cst_164 {dimension_numbers = #tpu.dot_dimension_numbers<[1], [0], [0], [1], [0, 0, 1, 1], [], []>} : vector<16x32xbf16>, vector<32x64xbf16>, vector<16x64xf32> -> vector<16x64xf32>
    %267 = arith.addf %261, %266 : vector<16x64xf32>
    %c6_165 = arith.constant 6 : index
    %c0_166 = arith.constant 0 : index
    %268 = vector.load %arg9[%c6_165, %c0_166] : memref<48x32xf32, #tpu.memory_space<vmem>>, vector<16x32xf32>
    %269 = arith.truncf %268 : vector<16x32xf32> to vector<16x32xbf16>
    %c5_167 = arith.constant 5 : index
    %c0_168 = arith.constant 0 : index
    %c0_169 = arith.constant 0 : index
    %270 = vector.load %arg4[%c5_167, %c0_168, %c0_169] : memref<31x32x64xbf16, #tpu.memory_space<vmem>>, vector<1x32x64xbf16>
    %271 = vector.shape_cast %270 : vector<1x32x64xbf16> to vector<32x64xbf16>
    %cst_170 = arith.constant dense<0.000000e+00> : vector<16x64xf32>
    %272 = tpu.matmul %269, %271, %cst_170 {dimension_numbers = #tpu.dot_dimension_numbers<[1], [0], [0], [1], [0, 0, 1, 1], [], []>} : vector<16x32xbf16>, vector<32x64xbf16>, vector<16x64xf32> -> vector<16x64xf32>
    %273 = arith.addf %267, %272 : vector<16x64xf32>
    %c7_171 = arith.constant 7 : index
    %c0_172 = arith.constant 0 : index
    %274 = vector.load %arg9[%c7_171, %c0_172] : memref<48x32xf32, #tpu.memory_space<vmem>>, vector<16x32xf32>
    %275 = arith.truncf %274 : vector<16x32xf32> to vector<16x32xbf16>
    %c6_173 = arith.constant 6 : index
    %c0_174 = arith.constant 0 : index
    %c0_175 = arith.constant 0 : index
    %276 = vector.load %arg4[%c6_173, %c0_174, %c0_175] : memref<31x32x64xbf16, #tpu.memory_space<vmem>>, vector<1x32x64xbf16>
    %277 = vector.shape_cast %276 : vector<1x32x64xbf16> to vector<32x64xbf16>
    %cst_176 = arith.constant dense<0.000000e+00> : vector<16x64xf32>
    %278 = tpu.matmul %275, %277, %cst_176 {dimension_numbers = #tpu.dot_dimension_numbers<[1], [0], [0], [1], [0, 0, 1, 1], [], []>} : vector<16x32xbf16>, vector<32x64xbf16>, vector<16x64xf32> -> vector<16x64xf32>
    %279 = arith.addf %273, %278 : vector<16x64xf32>
    %c8_177 = arith.constant 8 : index
    %c0_178 = arith.constant 0 : index
    %280 = vector.load %arg9[%c8_177, %c0_178] : memref<48x32xf32, #tpu.memory_space<vmem>>, vector<16x32xf32>
    %281 = arith.truncf %280 : vector<16x32xf32> to vector<16x32xbf16>
    %c7_179 = arith.constant 7 : index
    %c0_180 = arith.constant 0 : index
    %c0_181 = arith.constant 0 : index
    %282 = vector.load %arg4[%c7_179, %c0_180, %c0_181] : memref<31x32x64xbf16, #tpu.memory_space<vmem>>, vector<1x32x64xbf16>
    %283 = vector.shape_cast %282 : vector<1x32x64xbf16> to vector<32x64xbf16>
    %cst_182 = arith.constant dense<0.000000e+00> : vector<16x64xf32>
    %284 = tpu.matmul %281, %283, %cst_182 {dimension_numbers = #tpu.dot_dimension_numbers<[1], [0], [0], [1], [0, 0, 1, 1], [], []>} : vector<16x32xbf16>, vector<32x64xbf16>, vector<16x64xf32> -> vector<16x64xf32>
    %285 = arith.addf %279, %284 : vector<16x64xf32>
    %c9_183 = arith.constant 9 : index
    %c0_184 = arith.constant 0 : index
    %286 = vector.load %arg9[%c9_183, %c0_184] : memref<48x32xf32, #tpu.memory_space<vmem>>, vector<16x32xf32>
    %287 = arith.truncf %286 : vector<16x32xf32> to vector<16x32xbf16>
    %c8_185 = arith.constant 8 : index
    %c0_186 = arith.constant 0 : index
    %c0_187 = arith.constant 0 : index
    %288 = vector.load %arg4[%c8_185, %c0_186, %c0_187] : memref<31x32x64xbf16, #tpu.memory_space<vmem>>, vector<1x32x64xbf16>
    %289 = vector.shape_cast %288 : vector<1x32x64xbf16> to vector<32x64xbf16>
    %cst_188 = arith.constant dense<0.000000e+00> : vector<16x64xf32>
    %290 = tpu.matmul %287, %289, %cst_188 {dimension_numbers = #tpu.dot_dimension_numbers<[1], [0], [0], [1], [0, 0, 1, 1], [], []>} : vector<16x32xbf16>, vector<32x64xbf16>, vector<16x64xf32> -> vector<16x64xf32>
    %291 = arith.addf %285, %290 : vector<16x64xf32>
    %c10_189 = arith.constant 10 : index
    %c0_190 = arith.constant 0 : index
    %292 = vector.load %arg9[%c10_189, %c0_190] : memref<48x32xf32, #tpu.memory_space<vmem>>, vector<16x32xf32>
    %293 = arith.truncf %292 : vector<16x32xf32> to vector<16x32xbf16>
    %c9_191 = arith.constant 9 : index
    %c0_192 = arith.constant 0 : index
    %c0_193 = arith.constant 0 : index
    %294 = vector.load %arg4[%c9_191, %c0_192, %c0_193] : memref<31x32x64xbf16, #tpu.memory_space<vmem>>, vector<1x32x64xbf16>
    %295 = vector.shape_cast %294 : vector<1x32x64xbf16> to vector<32x64xbf16>
    %cst_194 = arith.constant dense<0.000000e+00> : vector<16x64xf32>
    %296 = tpu.matmul %293, %295, %cst_194 {dimension_numbers = #tpu.dot_dimension_numbers<[1], [0], [0], [1], [0, 0, 1, 1], [], []>} : vector<16x32xbf16>, vector<32x64xbf16>, vector<16x64xf32> -> vector<16x64xf32>
    %297 = arith.addf %291, %296 : vector<16x64xf32>
    %c11_195 = arith.constant 11 : index
    %c0_196 = arith.constant 0 : index
    %298 = vector.load %arg9[%c11_195, %c0_196] : memref<48x32xf32, #tpu.memory_space<vmem>>, vector<16x32xf32>
    %299 = arith.truncf %298 : vector<16x32xf32> to vector<16x32xbf16>
    %c10_197 = arith.constant 10 : index
    %c0_198 = arith.constant 0 : index
    %c0_199 = arith.constant 0 : index
    %300 = vector.load %arg4[%c10_197, %c0_198, %c0_199] : memref<31x32x64xbf16, #tpu.memory_space<vmem>>, vector<1x32x64xbf16>
    %301 = vector.shape_cast %300 : vector<1x32x64xbf16> to vector<32x64xbf16>
    %cst_200 = arith.constant dense<0.000000e+00> : vector<16x64xf32>
    %302 = tpu.matmul %299, %301, %cst_200 {dimension_numbers = #tpu.dot_dimension_numbers<[1], [0], [0], [1], [0, 0, 1, 1], [], []>} : vector<16x32xbf16>, vector<32x64xbf16>, vector<16x64xf32> -> vector<16x64xf32>
    %303 = arith.addf %297, %302 : vector<16x64xf32>
    %c12_201 = arith.constant 12 : index
    %c0_202 = arith.constant 0 : index
    %304 = vector.load %arg9[%c12_201, %c0_202] : memref<48x32xf32, #tpu.memory_space<vmem>>, vector<16x32xf32>
    %305 = arith.truncf %304 : vector<16x32xf32> to vector<16x32xbf16>
    %c11_203 = arith.constant 11 : index
    %c0_204 = arith.constant 0 : index
    %c0_205 = arith.constant 0 : index
    %306 = vector.load %arg4[%c11_203, %c0_204, %c0_205] : memref<31x32x64xbf16, #tpu.memory_space<vmem>>, vector<1x32x64xbf16>
    %307 = vector.shape_cast %306 : vector<1x32x64xbf16> to vector<32x64xbf16>
    %cst_206 = arith.constant dense<0.000000e+00> : vector<16x64xf32>
    %308 = tpu.matmul %305, %307, %cst_206 {dimension_numbers = #tpu.dot_dimension_numbers<[1], [0], [0], [1], [0, 0, 1, 1], [], []>} : vector<16x32xbf16>, vector<32x64xbf16>, vector<16x64xf32> -> vector<16x64xf32>
    %309 = arith.addf %303, %308 : vector<16x64xf32>
    %c13_207 = arith.constant 13 : index
    %c0_208 = arith.constant 0 : index
    %310 = vector.load %arg9[%c13_207, %c0_208] : memref<48x32xf32, #tpu.memory_space<vmem>>, vector<16x32xf32>
    %311 = arith.truncf %310 : vector<16x32xf32> to vector<16x32xbf16>
    %c12_209 = arith.constant 12 : index
    %c0_210 = arith.constant 0 : index
    %c0_211 = arith.constant 0 : index
    %312 = vector.load %arg4[%c12_209, %c0_210, %c0_211] : memref<31x32x64xbf16, #tpu.memory_space<vmem>>, vector<1x32x64xbf16>
    %313 = vector.shape_cast %312 : vector<1x32x64xbf16> to vector<32x64xbf16>
    %cst_212 = arith.constant dense<0.000000e+00> : vector<16x64xf32>
    %314 = tpu.matmul %311, %313, %cst_212 {dimension_numbers = #tpu.dot_dimension_numbers<[1], [0], [0], [1], [0, 0, 1, 1], [], []>} : vector<16x32xbf16>, vector<32x64xbf16>, vector<16x64xf32> -> vector<16x64xf32>
    %315 = arith.addf %309, %314 : vector<16x64xf32>
    %c14_213 = arith.constant 14 : index
    %c0_214 = arith.constant 0 : index
    %316 = vector.load %arg9[%c14_213, %c0_214] : memref<48x32xf32, #tpu.memory_space<vmem>>, vector<16x32xf32>
    %317 = arith.truncf %316 : vector<16x32xf32> to vector<16x32xbf16>
    %c13_215 = arith.constant 13 : index
    %c0_216 = arith.constant 0 : index
    %c0_217 = arith.constant 0 : index
    %318 = vector.load %arg4[%c13_215, %c0_216, %c0_217] : memref<31x32x64xbf16, #tpu.memory_space<vmem>>, vector<1x32x64xbf16>
    %319 = vector.shape_cast %318 : vector<1x32x64xbf16> to vector<32x64xbf16>
    %cst_218 = arith.constant dense<0.000000e+00> : vector<16x64xf32>
    %320 = tpu.matmul %317, %319, %cst_218 {dimension_numbers = #tpu.dot_dimension_numbers<[1], [0], [0], [1], [0, 0, 1, 1], [], []>} : vector<16x32xbf16>, vector<32x64xbf16>, vector<16x64xf32> -> vector<16x64xf32>
    %321 = arith.addf %315, %320 : vector<16x64xf32>
    %c15_219 = arith.constant 15 : index
    %c0_220 = arith.constant 0 : index
    %322 = vector.load %arg9[%c15_219, %c0_220] : memref<48x32xf32, #tpu.memory_space<vmem>>, vector<16x32xf32>
    %323 = arith.truncf %322 : vector<16x32xf32> to vector<16x32xbf16>
    %c14_221 = arith.constant 14 : index
    %c0_222 = arith.constant 0 : index
    %c0_223 = arith.constant 0 : index
    %324 = vector.load %arg4[%c14_221, %c0_222, %c0_223] : memref<31x32x64xbf16, #tpu.memory_space<vmem>>, vector<1x32x64xbf16>
    %325 = vector.shape_cast %324 : vector<1x32x64xbf16> to vector<32x64xbf16>
    %cst_224 = arith.constant dense<0.000000e+00> : vector<16x64xf32>
    %326 = tpu.matmul %323, %325, %cst_224 {dimension_numbers = #tpu.dot_dimension_numbers<[1], [0], [0], [1], [0, 0, 1, 1], [], []>} : vector<16x32xbf16>, vector<32x64xbf16>, vector<16x64xf32> -> vector<16x64xf32>
    %327 = arith.addf %321, %326 : vector<16x64xf32>
    %c16_225 = arith.constant 16 : index
    %c0_226 = arith.constant 0 : index
    %328 = vector.load %arg9[%c16_225, %c0_226] : memref<48x32xf32, #tpu.memory_space<vmem>>, vector<16x32xf32>
    %329 = arith.truncf %328 : vector<16x32xf32> to vector<16x32xbf16>
    %c15_227 = arith.constant 15 : index
    %c0_228 = arith.constant 0 : index
    %c0_229 = arith.constant 0 : index
    %330 = vector.load %arg4[%c15_227, %c0_228, %c0_229] : memref<31x32x64xbf16, #tpu.memory_space<vmem>>, vector<1x32x64xbf16>
    %331 = vector.shape_cast %330 : vector<1x32x64xbf16> to vector<32x64xbf16>
    %cst_230 = arith.constant dense<0.000000e+00> : vector<16x64xf32>
    %332 = tpu.matmul %329, %331, %cst_230 {dimension_numbers = #tpu.dot_dimension_numbers<[1], [0], [0], [1], [0, 0, 1, 1], [], []>} : vector<16x32xbf16>, vector<32x64xbf16>, vector<16x64xf32> -> vector<16x64xf32>
    %333 = arith.addf %327, %332 : vector<16x64xf32>
    %c17_231 = arith.constant 17 : index
    %c0_232 = arith.constant 0 : index
    %334 = vector.load %arg9[%c17_231, %c0_232] : memref<48x32xf32, #tpu.memory_space<vmem>>, vector<16x32xf32>
    %335 = arith.truncf %334 : vector<16x32xf32> to vector<16x32xbf16>
    %c16_233 = arith.constant 16 : index
    %c0_234 = arith.constant 0 : index
    %c0_235 = arith.constant 0 : index
    %336 = vector.load %arg4[%c16_233, %c0_234, %c0_235] : memref<31x32x64xbf16, #tpu.memory_space<vmem>>, vector<1x32x64xbf16>
    %337 = vector.shape_cast %336 : vector<1x32x64xbf16> to vector<32x64xbf16>
    %cst_236 = arith.constant dense<0.000000e+00> : vector<16x64xf32>
    %338 = tpu.matmul %335, %337, %cst_236 {dimension_numbers = #tpu.dot_dimension_numbers<[1], [0], [0], [1], [0, 0, 1, 1], [], []>} : vector<16x32xbf16>, vector<32x64xbf16>, vector<16x64xf32> -> vector<16x64xf32>
    %339 = arith.addf %333, %338 : vector<16x64xf32>
    %c18_237 = arith.constant 18 : index
    %c0_238 = arith.constant 0 : index
    %340 = vector.load %arg9[%c18_237, %c0_238] : memref<48x32xf32, #tpu.memory_space<vmem>>, vector<16x32xf32>
    %341 = arith.truncf %340 : vector<16x32xf32> to vector<16x32xbf16>
    %c17_239 = arith.constant 17 : index
    %c0_240 = arith.constant 0 : index
    %c0_241 = arith.constant 0 : index
    %342 = vector.load %arg4[%c17_239, %c0_240, %c0_241] : memref<31x32x64xbf16, #tpu.memory_space<vmem>>, vector<1x32x64xbf16>
    %343 = vector.shape_cast %342 : vector<1x32x64xbf16> to vector<32x64xbf16>
    %cst_242 = arith.constant dense<0.000000e+00> : vector<16x64xf32>
    %344 = tpu.matmul %341, %343, %cst_242 {dimension_numbers = #tpu.dot_dimension_numbers<[1], [0], [0], [1], [0, 0, 1, 1], [], []>} : vector<16x32xbf16>, vector<32x64xbf16>, vector<16x64xf32> -> vector<16x64xf32>
    %345 = arith.addf %339, %344 : vector<16x64xf32>
    %c19_243 = arith.constant 19 : index
    %c0_244 = arith.constant 0 : index
    %346 = vector.load %arg9[%c19_243, %c0_244] : memref<48x32xf32, #tpu.memory_space<vmem>>, vector<16x32xf32>
    %347 = arith.truncf %346 : vector<16x32xf32> to vector<16x32xbf16>
    %c18_245 = arith.constant 18 : index
    %c0_246 = arith.constant 0 : index
    %c0_247 = arith.constant 0 : index
    %348 = vector.load %arg4[%c18_245, %c0_246, %c0_247] : memref<31x32x64xbf16, #tpu.memory_space<vmem>>, vector<1x32x64xbf16>
    %349 = vector.shape_cast %348 : vector<1x32x64xbf16> to vector<32x64xbf16>
    %cst_248 = arith.constant dense<0.000000e+00> : vector<16x64xf32>
    %350 = tpu.matmul %347, %349, %cst_248 {dimension_numbers = #tpu.dot_dimension_numbers<[1], [0], [0], [1], [0, 0, 1, 1], [], []>} : vector<16x32xbf16>, vector<32x64xbf16>, vector<16x64xf32> -> vector<16x64xf32>
    %351 = arith.addf %345, %350 : vector<16x64xf32>
    %c20_249 = arith.constant 20 : index
    %c0_250 = arith.constant 0 : index
    %352 = vector.load %arg9[%c20_249, %c0_250] : memref<48x32xf32, #tpu.memory_space<vmem>>, vector<16x32xf32>
    %353 = arith.truncf %352 : vector<16x32xf32> to vector<16x32xbf16>
    %c19_251 = arith.constant 19 : index
    %c0_252 = arith.constant 0 : index
    %c0_253 = arith.constant 0 : index
    %354 = vector.load %arg4[%c19_251, %c0_252, %c0_253] : memref<31x32x64xbf16, #tpu.memory_space<vmem>>, vector<1x32x64xbf16>
    %355 = vector.shape_cast %354 : vector<1x32x64xbf16> to vector<32x64xbf16>
    %cst_254 = arith.constant dense<0.000000e+00> : vector<16x64xf32>
    %356 = tpu.matmul %353, %355, %cst_254 {dimension_numbers = #tpu.dot_dimension_numbers<[1], [0], [0], [1], [0, 0, 1, 1], [], []>} : vector<16x32xbf16>, vector<32x64xbf16>, vector<16x64xf32> -> vector<16x64xf32>
    %357 = arith.addf %351, %356 : vector<16x64xf32>
    %c21_255 = arith.constant 21 : index
    %c0_256 = arith.constant 0 : index
    %358 = vector.load %arg9[%c21_255, %c0_256] : memref<48x32xf32, #tpu.memory_space<vmem>>, vector<16x32xf32>
    %359 = arith.truncf %358 : vector<16x32xf32> to vector<16x32xbf16>
    %c20_257 = arith.constant 20 : index
    %c0_258 = arith.constant 0 : index
    %c0_259 = arith.constant 0 : index
    %360 = vector.load %arg4[%c20_257, %c0_258, %c0_259] : memref<31x32x64xbf16, #tpu.memory_space<vmem>>, vector<1x32x64xbf16>
    %361 = vector.shape_cast %360 : vector<1x32x64xbf16> to vector<32x64xbf16>
    %cst_260 = arith.constant dense<0.000000e+00> : vector<16x64xf32>
    %362 = tpu.matmul %359, %361, %cst_260 {dimension_numbers = #tpu.dot_dimension_numbers<[1], [0], [0], [1], [0, 0, 1, 1], [], []>} : vector<16x32xbf16>, vector<32x64xbf16>, vector<16x64xf32> -> vector<16x64xf32>
    %363 = arith.addf %357, %362 : vector<16x64xf32>
    %c22_261 = arith.constant 22 : index
    %c0_262 = arith.constant 0 : index
    %364 = vector.load %arg9[%c22_261, %c0_262] : memref<48x32xf32, #tpu.memory_space<vmem>>, vector<16x32xf32>
    %365 = arith.truncf %364 : vector<16x32xf32> to vector<16x32xbf16>
    %c21_263 = arith.constant 21 : index
    %c0_264 = arith.constant 0 : index
    %c0_265 = arith.constant 0 : index
    %366 = vector.load %arg4[%c21_263, %c0_264, %c0_265] : memref<31x32x64xbf16, #tpu.memory_space<vmem>>, vector<1x32x64xbf16>
    %367 = vector.shape_cast %366 : vector<1x32x64xbf16> to vector<32x64xbf16>
    %cst_266 = arith.constant dense<0.000000e+00> : vector<16x64xf32>
    %368 = tpu.matmul %365, %367, %cst_266 {dimension_numbers = #tpu.dot_dimension_numbers<[1], [0], [0], [1], [0, 0, 1, 1], [], []>} : vector<16x32xbf16>, vector<32x64xbf16>, vector<16x64xf32> -> vector<16x64xf32>
    %369 = arith.addf %363, %368 : vector<16x64xf32>
    %c23_267 = arith.constant 23 : index
    %c0_268 = arith.constant 0 : index
    %370 = vector.load %arg9[%c23_267, %c0_268] : memref<48x32xf32, #tpu.memory_space<vmem>>, vector<16x32xf32>
    %371 = arith.truncf %370 : vector<16x32xf32> to vector<16x32xbf16>
    %c22_269 = arith.constant 22 : index
    %c0_270 = arith.constant 0 : index
    %c0_271 = arith.constant 0 : index
    %372 = vector.load %arg4[%c22_269, %c0_270, %c0_271] : memref<31x32x64xbf16, #tpu.memory_space<vmem>>, vector<1x32x64xbf16>
    %373 = vector.shape_cast %372 : vector<1x32x64xbf16> to vector<32x64xbf16>
    %cst_272 = arith.constant dense<0.000000e+00> : vector<16x64xf32>
    %374 = tpu.matmul %371, %373, %cst_272 {dimension_numbers = #tpu.dot_dimension_numbers<[1], [0], [0], [1], [0, 0, 1, 1], [], []>} : vector<16x32xbf16>, vector<32x64xbf16>, vector<16x64xf32> -> vector<16x64xf32>
    %375 = arith.addf %369, %374 : vector<16x64xf32>
    %c24_273 = arith.constant 24 : index
    %c0_274 = arith.constant 0 : index
    %376 = vector.load %arg9[%c24_273, %c0_274] : memref<48x32xf32, #tpu.memory_space<vmem>>, vector<16x32xf32>
    %377 = arith.truncf %376 : vector<16x32xf32> to vector<16x32xbf16>
    %c23_275 = arith.constant 23 : index
    %c0_276 = arith.constant 0 : index
    %c0_277 = arith.constant 0 : index
    %378 = vector.load %arg4[%c23_275, %c0_276, %c0_277] : memref<31x32x64xbf16, #tpu.memory_space<vmem>>, vector<1x32x64xbf16>
    %379 = vector.shape_cast %378 : vector<1x32x64xbf16> to vector<32x64xbf16>
    %cst_278 = arith.constant dense<0.000000e+00> : vector<16x64xf32>
    %380 = tpu.matmul %377, %379, %cst_278 {dimension_numbers = #tpu.dot_dimension_numbers<[1], [0], [0], [1], [0, 0, 1, 1], [], []>} : vector<16x32xbf16>, vector<32x64xbf16>, vector<16x64xf32> -> vector<16x64xf32>
    %381 = arith.addf %375, %380 : vector<16x64xf32>
    %c25_279 = arith.constant 25 : index
    %c0_280 = arith.constant 0 : index
    %382 = vector.load %arg9[%c25_279, %c0_280] : memref<48x32xf32, #tpu.memory_space<vmem>>, vector<16x32xf32>
    %383 = arith.truncf %382 : vector<16x32xf32> to vector<16x32xbf16>
    %c24_281 = arith.constant 24 : index
    %c0_282 = arith.constant 0 : index
    %c0_283 = arith.constant 0 : index
    %384 = vector.load %arg4[%c24_281, %c0_282, %c0_283] : memref<31x32x64xbf16, #tpu.memory_space<vmem>>, vector<1x32x64xbf16>
    %385 = vector.shape_cast %384 : vector<1x32x64xbf16> to vector<32x64xbf16>
    %cst_284 = arith.constant dense<0.000000e+00> : vector<16x64xf32>
    %386 = tpu.matmul %383, %385, %cst_284 {dimension_numbers = #tpu.dot_dimension_numbers<[1], [0], [0], [1], [0, 0, 1, 1], [], []>} : vector<16x32xbf16>, vector<32x64xbf16>, vector<16x64xf32> -> vector<16x64xf32>
    %387 = arith.addf %381, %386 : vector<16x64xf32>
    %c26_285 = arith.constant 26 : index
    %c0_286 = arith.constant 0 : index
    %388 = vector.load %arg9[%c26_285, %c0_286] : memref<48x32xf32, #tpu.memory_space<vmem>>, vector<16x32xf32>
    %389 = arith.truncf %388 : vector<16x32xf32> to vector<16x32xbf16>
    %c25_287 = arith.constant 25 : index
    %c0_288 = arith.constant 0 : index
    %c0_289 = arith.constant 0 : index
    %390 = vector.load %arg4[%c25_287, %c0_288, %c0_289] : memref<31x32x64xbf16, #tpu.memory_space<vmem>>, vector<1x32x64xbf16>
    %391 = vector.shape_cast %390 : vector<1x32x64xbf16> to vector<32x64xbf16>
    %cst_290 = arith.constant dense<0.000000e+00> : vector<16x64xf32>
    %392 = tpu.matmul %389, %391, %cst_290 {dimension_numbers = #tpu.dot_dimension_numbers<[1], [0], [0], [1], [0, 0, 1, 1], [], []>} : vector<16x32xbf16>, vector<32x64xbf16>, vector<16x64xf32> -> vector<16x64xf32>
    %393 = arith.addf %387, %392 : vector<16x64xf32>
    %c27_291 = arith.constant 27 : index
    %c0_292 = arith.constant 0 : index
    %394 = vector.load %arg9[%c27_291, %c0_292] : memref<48x32xf32, #tpu.memory_space<vmem>>, vector<16x32xf32>
    %395 = arith.truncf %394 : vector<16x32xf32> to vector<16x32xbf16>
    %c26_293 = arith.constant 26 : index
    %c0_294 = arith.constant 0 : index
    %c0_295 = arith.constant 0 : index
    %396 = vector.load %arg4[%c26_293, %c0_294, %c0_295] : memref<31x32x64xbf16, #tpu.memory_space<vmem>>, vector<1x32x64xbf16>
    %397 = vector.shape_cast %396 : vector<1x32x64xbf16> to vector<32x64xbf16>
    %cst_296 = arith.constant dense<0.000000e+00> : vector<16x64xf32>
    %398 = tpu.matmul %395, %397, %cst_296 {dimension_numbers = #tpu.dot_dimension_numbers<[1], [0], [0], [1], [0, 0, 1, 1], [], []>} : vector<16x32xbf16>, vector<32x64xbf16>, vector<16x64xf32> -> vector<16x64xf32>
    %399 = arith.addf %393, %398 : vector<16x64xf32>
    %c28_297 = arith.constant 28 : index
    %c0_298 = arith.constant 0 : index
    %400 = vector.load %arg9[%c28_297, %c0_298] : memref<48x32xf32, #tpu.memory_space<vmem>>, vector<16x32xf32>
    %401 = arith.truncf %400 : vector<16x32xf32> to vector<16x32xbf16>
    %c27_299 = arith.constant 27 : index
    %c0_300 = arith.constant 0 : index
    %c0_301 = arith.constant 0 : index
    %402 = vector.load %arg4[%c27_299, %c0_300, %c0_301] : memref<31x32x64xbf16, #tpu.memory_space<vmem>>, vector<1x32x64xbf16>
    %403 = vector.shape_cast %402 : vector<1x32x64xbf16> to vector<32x64xbf16>
    %cst_302 = arith.constant dense<0.000000e+00> : vector<16x64xf32>
    %404 = tpu.matmul %401, %403, %cst_302 {dimension_numbers = #tpu.dot_dimension_numbers<[1], [0], [0], [1], [0, 0, 1, 1], [], []>} : vector<16x32xbf16>, vector<32x64xbf16>, vector<16x64xf32> -> vector<16x64xf32>
    %405 = arith.addf %399, %404 : vector<16x64xf32>
    %c29_303 = arith.constant 29 : index
    %c0_304 = arith.constant 0 : index
    %406 = vector.load %arg9[%c29_303, %c0_304] : memref<48x32xf32, #tpu.memory_space<vmem>>, vector<16x32xf32>
    %407 = arith.truncf %406 : vector<16x32xf32> to vector<16x32xbf16>
    %c28_305 = arith.constant 28 : index
    %c0_306 = arith.constant 0 : index
    %c0_307 = arith.constant 0 : index
    %408 = vector.load %arg4[%c28_305, %c0_306, %c0_307] : memref<31x32x64xbf16, #tpu.memory_space<vmem>>, vector<1x32x64xbf16>
    %409 = vector.shape_cast %408 : vector<1x32x64xbf16> to vector<32x64xbf16>
    %cst_308 = arith.constant dense<0.000000e+00> : vector<16x64xf32>
    %410 = tpu.matmul %407, %409, %cst_308 {dimension_numbers = #tpu.dot_dimension_numbers<[1], [0], [0], [1], [0, 0, 1, 1], [], []>} : vector<16x32xbf16>, vector<32x64xbf16>, vector<16x64xf32> -> vector<16x64xf32>
    %411 = arith.addf %405, %410 : vector<16x64xf32>
    %c30_309 = arith.constant 30 : index
    %c0_310 = arith.constant 0 : index
    %412 = vector.load %arg9[%c30_309, %c0_310] : memref<48x32xf32, #tpu.memory_space<vmem>>, vector<16x32xf32>
    %413 = arith.truncf %412 : vector<16x32xf32> to vector<16x32xbf16>
    %c29_311 = arith.constant 29 : index
    %c0_312 = arith.constant 0 : index
    %c0_313 = arith.constant 0 : index
    %414 = vector.load %arg4[%c29_311, %c0_312, %c0_313] : memref<31x32x64xbf16, #tpu.memory_space<vmem>>, vector<1x32x64xbf16>
    %415 = vector.shape_cast %414 : vector<1x32x64xbf16> to vector<32x64xbf16>
    %cst_314 = arith.constant dense<0.000000e+00> : vector<16x64xf32>
    %416 = tpu.matmul %413, %415, %cst_314 {dimension_numbers = #tpu.dot_dimension_numbers<[1], [0], [0], [1], [0, 0, 1, 1], [], []>} : vector<16x32xbf16>, vector<32x64xbf16>, vector<16x64xf32> -> vector<16x64xf32>
    %417 = arith.addf %411, %416 : vector<16x64xf32>
    %c31_315 = arith.constant 31 : index
    %c0_316 = arith.constant 0 : index
    %418 = vector.load %arg9[%c31_315, %c0_316] : memref<48x32xf32, #tpu.memory_space<vmem>>, vector<16x32xf32>
    %419 = arith.truncf %418 : vector<16x32xf32> to vector<16x32xbf16>
    %c30_317 = arith.constant 30 : index
    %c0_318 = arith.constant 0 : index
    %c0_319 = arith.constant 0 : index
    %420 = vector.load %arg4[%c30_317, %c0_318, %c0_319] : memref<31x32x64xbf16, #tpu.memory_space<vmem>>, vector<1x32x64xbf16>
    %421 = vector.shape_cast %420 : vector<1x32x64xbf16> to vector<32x64xbf16>
    %cst_320 = arith.constant dense<0.000000e+00> : vector<16x64xf32>
    %422 = tpu.matmul %419, %421, %cst_320 {dimension_numbers = #tpu.dot_dimension_numbers<[1], [0], [0], [1], [0, 0, 1, 1], [], []>} : vector<16x32xbf16>, vector<32x64xbf16>, vector<16x64xf32> -> vector<16x64xf32>
    %423 = arith.addf %417, %422 : vector<16x64xf32>
    %c0_321 = arith.constant 0 : index
    %c0_322 = arith.constant 0 : index
    %424 = vector.load %arg5[%c0_321, %c0_322] : memref<1x64xf32, #tpu.memory_space<vmem>>, vector<1x64xf32>
    %425 = vector.broadcast %424 : vector<1x64xf32> to vector<16x64xf32>
    %426 = arith.addf %423, %425 : vector<16x64xf32>
    %cst_323 = arith.constant 5.000000e-01 : f32
    %427 = vector.broadcast %cst_323 : f32 to vector<16x64xf32>
    %428 = arith.mulf %427, %426 : vector<16x64xf32>
    %cst_324 = arith.constant 4.471500e-02 : f32
    %429 = vector.broadcast %cst_324 : f32 to vector<16x64xf32>
    %430 = arith.mulf %429, %426 : vector<16x64xf32>
    %431 = arith.mulf %430, %426 : vector<16x64xf32>
    %432 = arith.mulf %431, %426 : vector<16x64xf32>
    %433 = arith.addf %426, %432 : vector<16x64xf32>
    %cst_325 = arith.constant 0.797884583 : f32
    %434 = vector.broadcast %cst_325 : f32 to vector<16x64xf32>
    %435 = arith.mulf %434, %433 : vector<16x64xf32>
    %436 = math.tanh %435 : vector<16x64xf32>
    %cst_326 = arith.constant 1.000000e+00 : f32
    %437 = vector.broadcast %cst_326 : f32 to vector<16x64xf32>
    %438 = arith.addf %437, %436 : vector<16x64xf32>
    %439 = arith.mulf %428, %438 : vector<16x64xf32>
    %440 = arith.truncf %439 : vector<16x64xf32> to vector<16x64xbf16>
    %c0_327 = arith.constant 0 : index
    %c0_328 = arith.constant 0 : index
    %441 = vector.load %arg6[%c0_327, %c0_328] : memref<64x256xbf16, #tpu.memory_space<vmem>>, vector<64x256xbf16>
    %cst_329 = arith.constant dense<0.000000e+00> : vector<16x256xf32>
    %442 = tpu.matmul %440, %441, %cst_329 {dimension_numbers = #tpu.dot_dimension_numbers<[1], [0], [0], [1], [0, 0, 1, 1], [], []>} : vector<16x64xbf16>, vector<64x256xbf16>, vector<16x256xf32> -> vector<16x256xf32>
    %c0_330 = arith.constant 0 : index
    %c0_331 = arith.constant 0 : index
    %443 = vector.load %arg7[%c0_330, %c0_331] : memref<1x256xf32, #tpu.memory_space<vmem>>, vector<1x256xf32>
    %444 = vector.broadcast %443 : vector<1x256xf32> to vector<16x256xf32>
    %445 = arith.addf %442, %444 : vector<16x256xf32>
    %446 = arith.truncf %445 : vector<16x256xf32> to vector<16x256xbf16>
    %c0_332 = arith.constant 0 : index
    %c0_333 = arith.constant 0 : index
    %447 = vector.load %arg8[%c0_332, %c0_333] : memref<16x256xbf16, #tpu.memory_space<vmem>>, vector<16x256xbf16>
    tpu.vector_store %arg8[%c0_332, %c0_333], %446 {strides = array<i32>} : memref<16x256xbf16, #tpu.memory_space<vmem>>, vector<16x256xbf16>,
    return
  }
  func.func @transform_0(%arg0: i32) -> (i32, i32, i32) {
    %c0_i32 = arith.constant 0 : i32
    %c0_i32_0 = arith.constant 0 : i32
    %c0_i32_1 = arith.constant 0 : i32
    return %arg0, %c0_i32, %c0_i32_0 : i32, i32, i32
  }
  func.func @transform_1(%arg0: i32) -> (i32, i32) {
    %c0_i32 = arith.constant 0 : i32
    %c0_i32_0 = arith.constant 0 : i32
    %c0_i32_1 = arith.constant 0 : i32
    return %c0_i32, %c0_i32_0 : i32, i32
  }
  func.func @transform_2(%arg0: i32) -> (i32, i32) {
    %c0_i32 = arith.constant 0 : i32
    %c0_i32_0 = arith.constant 0 : i32
    %c0_i32_1 = arith.constant 0 : i32
    return %c0_i32, %c0_i32_0 : i32, i32
  }
  func.func @transform_3(%arg0: i32) -> (i32, i32, i32) {
    %c0_i32 = arith.constant 0 : i32
    %c0_i32_0 = arith.constant 0 : i32
    %c0_i32_1 = arith.constant 0 : i32
    %c0_i32_2 = arith.constant 0 : i32
    return %c0_i32, %c0_i32_0, %c0_i32_1 : i32, i32, i32
  }
  func.func @transform_4(%arg0: i32) -> (i32, i32) {
    %c0_i32 = arith.constant 0 : i32
    %c0_i32_0 = arith.constant 0 : i32
    %c0_i32_1 = arith.constant 0 : i32
    return %c0_i32, %c0_i32_0 : i32, i32
  }
  func.func @transform_5(%arg0: i32) -> (i32, i32) {
    %c0_i32 = arith.constant 0 : i32
    %c0_i32_0 = arith.constant 0 : i32
    %c0_i32_1 = arith.constant 0 : i32
    return %c0_i32, %c0_i32_0 : i32, i32
  }
  func.func @transform_6(%arg0: i32) -> (i32, i32) {
    %c0_i32 = arith.constant 0 : i32
    %c0_i32_0 = arith.constant 0 : i32
    %c0_i32_1 = arith.constant 0 : i32
    return %c0_i32, %c0_i32_0 : i32, i32
  }
  func.func @transform_7(%arg0: i32) -> (i32, i32) {
    %c0_i32 = arith.constant 0 : i32
    %c0_i32_0 = arith.constant 0 : i32
    return %c0_i32, %arg0 : i32, i32
  }
}

module attributes {stable_mosaic.version = 11 : i64} {
  func.func @_lstm_project_kernel(%arg0: memref<16x2x256xbf16, #tpu.memory_space<vmem>>, %arg1: memref<64x256xbf16, #tpu.memory_space<vmem>>, %arg2: memref<2x64xf32, #tpu.memory_space<vmem>>, %arg3: memref<2x64xf32, #tpu.memory_space<vmem>>, %arg4: memref<64x256xbf16, #tpu.memory_space<vmem>>, %arg5: memref<1x256xf32, #tpu.memory_space<vmem>>, %arg6: memref<16x512xbf16, #tpu.memory_space<vmem>>, %arg7: memref<2x2x32xf32, #tpu.memory_space<vmem>>, %arg8: memref<2x2x32xf32, #tpu.memory_space<vmem>>, %arg9: memref<16x2x64xbf16, #tpu.memory_space<vmem>>) attributes {dimension_semantics = [], scalar_prefetch = 0 : i64, scratch_operands = 1 : i64, tpu.core_type = #tpu.core_type<tc>} {
    %c0 = arith.constant 0 : index
    %c0_0 = arith.constant 0 : index
    %0 = vector.load %arg1[%c0, %c0_0] : memref<64x256xbf16, #tpu.memory_space<vmem>>, vector<64x256xbf16>
    %c0_1 = arith.constant 0 : index
    %c0_2 = arith.constant 0 : index
    %1 = vector.load %arg2[%c0_1, %c0_2] : memref<2x64xf32, #tpu.memory_space<vmem>>, vector<2x64xf32>
    %c0_3 = arith.constant 0 : index
    %c0_4 = arith.constant 0 : index
    %2 = vector.load %arg3[%c0_3, %c0_4] : memref<2x64xf32, #tpu.memory_space<vmem>>, vector<2x64xf32>
    %c0_i32 = arith.constant 0 : i32
    %c16_i32 = arith.constant 16 : i32
    %3 = arith.addi %c0_i32, %c16_i32 : i32
    %c1_i32 = arith.constant 1 : i32
    %4:2 = scf.for %arg10 = %c0_i32 to %3 step %c1_i32 iter_args(%arg11 = %1, %arg12 = %2) -> (vector<2x64xf32>, vector<2x64xf32>)  : i32 {
      %37 = arith.index_cast %arg10 : i32 to index
      %c0_31 = arith.constant 0 : index
      %c0_32 = arith.constant 0 : index
      %38 = vector.load %arg0[%37, %c0_31, %c0_32] : memref<16x2x256xbf16, #tpu.memory_space<vmem>>, vector<1x2x256xbf16>
      %39 = vector.shape_cast %38 : vector<1x2x256xbf16> to vector<2x256xbf16>
      %40 = arith.extf %39 : vector<2x256xbf16> to vector<2x256xf32>
      %41 = arith.truncf %arg11 : vector<2x64xf32> to vector<2x64xbf16>
      %cst_33 = arith.constant dense<0.000000e+00> : vector<2x256xf32>
      %42 = tpu.matmul %41, %0, %cst_33 {dimension_numbers = #tpu.dot_dimension_numbers<[1], [0], [0], [1], [0, 0, 1, 1], [], []>} : vector<2x64xbf16>, vector<64x256xbf16>, vector<2x256xf32> -> vector<2x256xf32>
      %43 = arith.addf %40, %42 : vector<2x256xf32>
      %44 = vector.extract_strided_slice %43 {offsets = [0, 0], sizes = [2, 128], strides = [1, 1]} : vector<2x256xf32> to vector<2x128xf32>
      %cst_34 = arith.constant 0.000000e+00 : f32
      %45 = vector.broadcast %cst_34 : f32 to vector<2x128xf32>
      %46 = arith.subf %45, %44 : vector<2x128xf32>
      %47 = math.exp %46 : vector<2x128xf32>
      %cst_35 = arith.constant 1.000000e+00 : f32
      %48 = vector.broadcast %cst_35 : f32 to vector<2x128xf32>
      %49 = arith.addf %48, %47 : vector<2x128xf32>
      %50 = tpu.reciprocal %49 {approx = true} : vector<2x128xf32> -> vector<2x128xf32>
      %51 = vector.extract_strided_slice %50 {offsets = [0, 0], sizes = [2, 64], strides = [1, 1]} : vector<2x128xf32> to vector<2x64xf32>
      %52 = vector.extract_strided_slice %50 {offsets = [0, 64], sizes = [2, 64], strides = [1, 1]} : vector<2x128xf32> to vector<2x64xf32>
      %53 = vector.extract_strided_slice %43 {offsets = [0, 128], sizes = [2, 64], strides = [1, 1]} : vector<2x256xf32> to vector<2x64xf32>
      %54 = math.tanh %53 : vector<2x64xf32>
      %55 = vector.extract_strided_slice %43 {offsets = [0, 192], sizes = [2, 64], strides = [1, 1]} : vector<2x256xf32> to vector<2x64xf32>
      %cst_36 = arith.constant 0.000000e+00 : f32
      %56 = vector.broadcast %cst_36 : f32 to vector<2x64xf32>
      %57 = arith.subf %56, %55 : vector<2x64xf32>
      %58 = math.exp %57 : vector<2x64xf32>
      %cst_37 = arith.constant 1.000000e+00 : f32
      %59 = vector.broadcast %cst_37 : f32 to vector<2x64xf32>
      %60 = arith.addf %59, %58 : vector<2x64xf32>
      %61 = tpu.reciprocal %60 {approx = true} : vector<2x64xf32> -> vector<2x64xf32>
      %62 = arith.mulf %52, %arg12 : vector<2x64xf32>
      %63 = arith.mulf %51, %54 : vector<2x64xf32>
      %64 = arith.addf %62, %63 : vector<2x64xf32>
      %65 = math.tanh %64 : vector<2x64xf32>
      %66 = arith.mulf %61, %65 : vector<2x64xf32>
      %c15_i32 = arith.constant 15 : i32
      %67 = arith.subi %c15_i32, %arg10 : i32
      %68 = vector.extract_strided_slice %66 {offsets = [0, 0], sizes = [2, 32], strides = [1, 1]} : vector<2x64xf32> to vector<2x32xf32>
      %69 = arith.truncf %68 : vector<2x32xf32> to vector<2x32xbf16>
      %70 = arith.index_cast %arg10 : i32 to index
      %c0_38 = arith.constant 0 : index
      %c0_39 = arith.constant 0 : index
      %71 = vector.load %arg9[%70, %c0_38, %c0_39] : memref<16x2x64xbf16, #tpu.memory_space<vmem>>, vector<1x2x32xbf16>
      %72 = vector.shape_cast %71 : vector<1x2x32xbf16> to vector<2x32xbf16>
      %73 = vector.shape_cast %69 : vector<2x32xbf16> to vector<1x2x32xbf16>
      tpu.vector_store %arg9[%70, %c0_38, %c0_39], %73 {strides = array<i32>} : memref<16x2x64xbf16, #tpu.memory_space<vmem>>, vector<1x2x32xbf16>,
      %74 = vector.extract_strided_slice %66 {offsets = [0, 32], sizes = [2, 32], strides = [1, 1]} : vector<2x64xf32> to vector<2x32xf32>
      %75 = arith.truncf %74 : vector<2x32xf32> to vector<2x32xbf16>
      %76 = arith.index_cast %67 : i32 to index
      %c0_40 = arith.constant 0 : index
      %c32 = arith.constant 32 : index
      %77 = vector.load %arg9[%76, %c0_40, %c32] : memref<16x2x64xbf16, #tpu.memory_space<vmem>>, vector<1x2x32xbf16>
      %78 = vector.shape_cast %77 : vector<1x2x32xbf16> to vector<2x32xbf16>
      %79 = vector.shape_cast %75 : vector<2x32xbf16> to vector<1x2x32xbf16>
      tpu.vector_store %arg9[%76, %c0_40, %c32], %79 {strides = array<i32>} : memref<16x2x64xbf16, #tpu.memory_space<vmem>>, vector<1x2x32xbf16>,
      scf.yield %66, %64 : vector<2x64xf32>, vector<2x64xf32>
    }
    %c16_i32_5 = arith.constant 16 : i32
    %5 = vector.extract_strided_slice %4#0 {offsets = [0, 0], sizes = [2, 32], strides = [1, 1]} : vector<2x64xf32> to vector<2x32xf32>
    %c0_6 = arith.constant 0 : index
    %c0_7 = arith.constant 0 : index
    %c0_8 = arith.constant 0 : index
    %6 = vector.load %arg7[%c0_6, %c0_7, %c0_8] : memref<2x2x32xf32, #tpu.memory_space<vmem>>, vector<1x2x32xf32>
    %7 = vector.shape_cast %6 : vector<1x2x32xf32> to vector<2x32xf32>
    %8 = vector.shape_cast %5 : vector<2x32xf32> to vector<1x2x32xf32>
    tpu.vector_store %arg7[%c0_6, %c0_7, %c0_8], %8 {strides = array<i32>} : memref<2x2x32xf32, #tpu.memory_space<vmem>>, vector<1x2x32xf32>,
    %9 = vector.extract_strided_slice %4#0 {offsets = [0, 32], sizes = [2, 32], strides = [1, 1]} : vector<2x64xf32> to vector<2x32xf32>
    %c1 = arith.constant 1 : index
    %c0_9 = arith.constant 0 : index
    %c0_10 = arith.constant 0 : index
    %10 = vector.load %arg7[%c1, %c0_9, %c0_10] : memref<2x2x32xf32, #tpu.memory_space<vmem>>, vector<1x2x32xf32>
    %11 = vector.shape_cast %10 : vector<1x2x32xf32> to vector<2x32xf32>
    %12 = vector.shape_cast %9 : vector<2x32xf32> to vector<1x2x32xf32>
    tpu.vector_store %arg7[%c1, %c0_9, %c0_10], %12 {strides = array<i32>} : memref<2x2x32xf32, #tpu.memory_space<vmem>>, vector<1x2x32xf32>,
    %13 = vector.extract_strided_slice %4#1 {offsets = [0, 0], sizes = [2, 32], strides = [1, 1]} : vector<2x64xf32> to vector<2x32xf32>
    %c0_11 = arith.constant 0 : index
    %c0_12 = arith.constant 0 : index
    %c0_13 = arith.constant 0 : index
    %14 = vector.load %arg8[%c0_11, %c0_12, %c0_13] : memref<2x2x32xf32, #tpu.memory_space<vmem>>, vector<1x2x32xf32>
    %15 = vector.shape_cast %14 : vector<1x2x32xf32> to vector<2x32xf32>
    %16 = vector.shape_cast %13 : vector<2x32xf32> to vector<1x2x32xf32>
    tpu.vector_store %arg8[%c0_11, %c0_12, %c0_13], %16 {strides = array<i32>} : memref<2x2x32xf32, #tpu.memory_space<vmem>>, vector<1x2x32xf32>,
    %17 = vector.extract_strided_slice %4#1 {offsets = [0, 32], sizes = [2, 32], strides = [1, 1]} : vector<2x64xf32> to vector<2x32xf32>
    %c1_14 = arith.constant 1 : index
    %c0_15 = arith.constant 0 : index
    %c0_16 = arith.constant 0 : index
    %18 = vector.load %arg8[%c1_14, %c0_15, %c0_16] : memref<2x2x32xf32, #tpu.memory_space<vmem>>, vector<1x2x32xf32>
    %19 = vector.shape_cast %18 : vector<1x2x32xf32> to vector<2x32xf32>
    %20 = vector.shape_cast %17 : vector<2x32xf32> to vector<1x2x32xf32>
    tpu.vector_store %arg8[%c1_14, %c0_15, %c0_16], %20 {strides = array<i32>} : memref<2x2x32xf32, #tpu.memory_space<vmem>>, vector<1x2x32xf32>,
    %c0_17 = arith.constant 0 : index
    %c0_18 = arith.constant 0 : index
    %21 = vector.load %arg4[%c0_17, %c0_18] : memref<64x256xbf16, #tpu.memory_space<vmem>>, vector<64x256xbf16>
    %c0_19 = arith.constant 0 : index
    %c0_20 = arith.constant 0 : index
    %22 = vector.load %arg5[%c0_19, %c0_20] : memref<1x256xf32, #tpu.memory_space<vmem>>, vector<1x256xf32>
    %c0_21 = arith.constant 0 : index
    %c0_22 = arith.constant 0 : index
    %c0_23 = arith.constant 0 : index
    %23 = vector.load %arg9[%c0_21, %c0_22, %c0_23] : memref<16x2x64xbf16, #tpu.memory_space<vmem>>, vector<16x1x64xbf16>
    %24 = vector.shape_cast %23 : vector<16x1x64xbf16> to vector<16x64xbf16>
    %cst = arith.constant dense<0.000000e+00> : vector<16x256xf32>
    %25 = tpu.matmul %24, %21, %cst {dimension_numbers = #tpu.dot_dimension_numbers<[1], [0], [0], [1], [0, 0, 1, 1], [], []>} : vector<16x64xbf16>, vector<64x256xbf16>, vector<16x256xf32> -> vector<16x256xf32>
    %26 = vector.broadcast %22 : vector<1x256xf32> to vector<16x256xf32>
    %27 = arith.addf %25, %26 : vector<16x256xf32>
    %28 = arith.truncf %27 : vector<16x256xf32> to vector<16x256xbf16>
    %c0_24 = arith.constant 0 : index
    %c0_25 = arith.constant 0 : index
    %29 = vector.load %arg6[%c0_24, %c0_25] : memref<16x512xbf16, #tpu.memory_space<vmem>>, vector<16x256xbf16>
    tpu.vector_store %arg6[%c0_24, %c0_25], %28 {strides = array<i32>} : memref<16x512xbf16, #tpu.memory_space<vmem>>, vector<16x256xbf16>,
    %c0_26 = arith.constant 0 : index
    %c1_27 = arith.constant 1 : index
    %c0_28 = arith.constant 0 : index
    %30 = vector.load %arg9[%c0_26, %c1_27, %c0_28] : memref<16x2x64xbf16, #tpu.memory_space<vmem>>, vector<16x1x64xbf16>
    %31 = vector.shape_cast %30 : vector<16x1x64xbf16> to vector<16x64xbf16>
    %cst_29 = arith.constant dense<0.000000e+00> : vector<16x256xf32>
    %32 = tpu.matmul %31, %21, %cst_29 {dimension_numbers = #tpu.dot_dimension_numbers<[1], [0], [0], [1], [0, 0, 1, 1], [], []>} : vector<16x64xbf16>, vector<64x256xbf16>, vector<16x256xf32> -> vector<16x256xf32>
    %33 = vector.broadcast %22 : vector<1x256xf32> to vector<16x256xf32>
    %34 = arith.addf %32, %33 : vector<16x256xf32>
    %35 = arith.truncf %34 : vector<16x256xf32> to vector<16x256xbf16>
    %c0_30 = arith.constant 0 : index
    %c256 = arith.constant 256 : index
    %36 = vector.load %arg6[%c0_30, %c256] : memref<16x512xbf16, #tpu.memory_space<vmem>>, vector<16x256xbf16>
    tpu.vector_store %arg6[%c0_30, %c256], %35 {strides = array<i32>} : memref<16x512xbf16, #tpu.memory_space<vmem>>, vector<16x256xbf16>,
    return
  }
}

module attributes {stable_mosaic.version = 11 : i64} {
  func.func @_lstm_head_kernel(%arg0: memref<16x2x256xbf16, #tpu.memory_space<vmem>>, %arg1: memref<64x256xbf16, #tpu.memory_space<vmem>>, %arg2: memref<2x64xf32, #tpu.memory_space<vmem>>, %arg3: memref<2x64xf32, #tpu.memory_space<vmem>>, %arg4: memref<64x64xbf16, #tpu.memory_space<vmem>>, %arg5: memref<1x64xf32, #tpu.memory_space<vmem>>, %arg6: memref<1x64xf32, #tpu.memory_space<vmem>>, %arg7: memref<1x1xf32, #tpu.memory_space<vmem>>, %arg8: memref<16x2xf32, #tpu.memory_space<vmem>>, %arg9: memref<2x2x32xf32, #tpu.memory_space<vmem>>, %arg10: memref<2x2x32xf32, #tpu.memory_space<vmem>>, %arg11: memref<16x2x64xbf16, #tpu.memory_space<vmem>>) attributes {dimension_semantics = [], scalar_prefetch = 0 : i64, scratch_operands = 1 : i64, tpu.core_type = #tpu.core_type<tc>} {
    %c0 = arith.constant 0 : index
    %c0_0 = arith.constant 0 : index
    %0 = vector.load %arg1[%c0, %c0_0] : memref<64x256xbf16, #tpu.memory_space<vmem>>, vector<64x256xbf16>
    %c0_1 = arith.constant 0 : index
    %c0_2 = arith.constant 0 : index
    %1 = vector.load %arg2[%c0_1, %c0_2] : memref<2x64xf32, #tpu.memory_space<vmem>>, vector<2x64xf32>
    %c0_3 = arith.constant 0 : index
    %c0_4 = arith.constant 0 : index
    %2 = vector.load %arg3[%c0_3, %c0_4] : memref<2x64xf32, #tpu.memory_space<vmem>>, vector<2x64xf32>
    %c0_i32 = arith.constant 0 : i32
    %c16_i32 = arith.constant 16 : i32
    %3 = arith.addi %c0_i32, %c16_i32 : i32
    %c1_i32 = arith.constant 1 : i32
    %4:2 = scf.for %arg12 = %c0_i32 to %3 step %c1_i32 iter_args(%arg13 = %1, %arg14 = %2) -> (vector<2x64xf32>, vector<2x64xf32>)  : i32 {
      %77 = arith.index_cast %arg12 : i32 to index
      %c0_46 = arith.constant 0 : index
      %c0_47 = arith.constant 0 : index
      %78 = vector.load %arg0[%77, %c0_46, %c0_47] : memref<16x2x256xbf16, #tpu.memory_space<vmem>>, vector<1x2x256xbf16>
      %79 = vector.shape_cast %78 : vector<1x2x256xbf16> to vector<2x256xbf16>
      %80 = arith.extf %79 : vector<2x256xbf16> to vector<2x256xf32>
      %81 = arith.truncf %arg13 : vector<2x64xf32> to vector<2x64xbf16>
      %cst_48 = arith.constant dense<0.000000e+00> : vector<2x256xf32>
      %82 = tpu.matmul %81, %0, %cst_48 {dimension_numbers = #tpu.dot_dimension_numbers<[1], [0], [0], [1], [0, 0, 1, 1], [], []>} : vector<2x64xbf16>, vector<64x256xbf16>, vector<2x256xf32> -> vector<2x256xf32>
      %83 = arith.addf %80, %82 : vector<2x256xf32>
      %84 = vector.extract_strided_slice %83 {offsets = [0, 0], sizes = [2, 128], strides = [1, 1]} : vector<2x256xf32> to vector<2x128xf32>
      %cst_49 = arith.constant 0.000000e+00 : f32
      %85 = vector.broadcast %cst_49 : f32 to vector<2x128xf32>
      %86 = arith.subf %85, %84 : vector<2x128xf32>
      %87 = math.exp %86 : vector<2x128xf32>
      %cst_50 = arith.constant 1.000000e+00 : f32
      %88 = vector.broadcast %cst_50 : f32 to vector<2x128xf32>
      %89 = arith.addf %88, %87 : vector<2x128xf32>
      %90 = tpu.reciprocal %89 {approx = true} : vector<2x128xf32> -> vector<2x128xf32>
      %91 = vector.extract_strided_slice %90 {offsets = [0, 0], sizes = [2, 64], strides = [1, 1]} : vector<2x128xf32> to vector<2x64xf32>
      %92 = vector.extract_strided_slice %90 {offsets = [0, 64], sizes = [2, 64], strides = [1, 1]} : vector<2x128xf32> to vector<2x64xf32>
      %93 = vector.extract_strided_slice %83 {offsets = [0, 128], sizes = [2, 64], strides = [1, 1]} : vector<2x256xf32> to vector<2x64xf32>
      %94 = math.tanh %93 : vector<2x64xf32>
      %95 = vector.extract_strided_slice %83 {offsets = [0, 192], sizes = [2, 64], strides = [1, 1]} : vector<2x256xf32> to vector<2x64xf32>
      %cst_51 = arith.constant 0.000000e+00 : f32
      %96 = vector.broadcast %cst_51 : f32 to vector<2x64xf32>
      %97 = arith.subf %96, %95 : vector<2x64xf32>
      %98 = math.exp %97 : vector<2x64xf32>
      %cst_52 = arith.constant 1.000000e+00 : f32
      %99 = vector.broadcast %cst_52 : f32 to vector<2x64xf32>
      %100 = arith.addf %99, %98 : vector<2x64xf32>
      %101 = tpu.reciprocal %100 {approx = true} : vector<2x64xf32> -> vector<2x64xf32>
      %102 = arith.mulf %92, %arg14 : vector<2x64xf32>
      %103 = arith.mulf %91, %94 : vector<2x64xf32>
      %104 = arith.addf %102, %103 : vector<2x64xf32>
      %105 = math.tanh %104 : vector<2x64xf32>
      %106 = arith.mulf %101, %105 : vector<2x64xf32>
      %c15_i32 = arith.constant 15 : i32
      %107 = arith.subi %c15_i32, %arg12 : i32
      %108 = vector.extract_strided_slice %106 {offsets = [0, 0], sizes = [2, 32], strides = [1, 1]} : vector<2x64xf32> to vector<2x32xf32>
      %109 = arith.truncf %108 : vector<2x32xf32> to vector<2x32xbf16>
      %110 = arith.index_cast %arg12 : i32 to index
      %c0_53 = arith.constant 0 : index
      %c0_54 = arith.constant 0 : index
      %111 = vector.load %arg11[%110, %c0_53, %c0_54] : memref<16x2x64xbf16, #tpu.memory_space<vmem>>, vector<1x2x32xbf16>
      %112 = vector.shape_cast %111 : vector<1x2x32xbf16> to vector<2x32xbf16>
      %113 = vector.shape_cast %109 : vector<2x32xbf16> to vector<1x2x32xbf16>
      tpu.vector_store %arg11[%110, %c0_53, %c0_54], %113 {strides = array<i32>} : memref<16x2x64xbf16, #tpu.memory_space<vmem>>, vector<1x2x32xbf16>,
      %114 = vector.extract_strided_slice %106 {offsets = [0, 32], sizes = [2, 32], strides = [1, 1]} : vector<2x64xf32> to vector<2x32xf32>
      %115 = arith.truncf %114 : vector<2x32xf32> to vector<2x32xbf16>
      %116 = arith.index_cast %107 : i32 to index
      %c0_55 = arith.constant 0 : index
      %c32 = arith.constant 32 : index
      %117 = vector.load %arg11[%116, %c0_55, %c32] : memref<16x2x64xbf16, #tpu.memory_space<vmem>>, vector<1x2x32xbf16>
      %118 = vector.shape_cast %117 : vector<1x2x32xbf16> to vector<2x32xbf16>
      %119 = vector.shape_cast %115 : vector<2x32xbf16> to vector<1x2x32xbf16>
      tpu.vector_store %arg11[%116, %c0_55, %c32], %119 {strides = array<i32>} : memref<16x2x64xbf16, #tpu.memory_space<vmem>>, vector<1x2x32xbf16>,
      scf.yield %106, %104 : vector<2x64xf32>, vector<2x64xf32>
    }
    %c16_i32_5 = arith.constant 16 : i32
    %5 = vector.extract_strided_slice %4#0 {offsets = [0, 0], sizes = [2, 32], strides = [1, 1]} : vector<2x64xf32> to vector<2x32xf32>
    %c0_6 = arith.constant 0 : index
    %c0_7 = arith.constant 0 : index
    %c0_8 = arith.constant 0 : index
    %6 = vector.load %arg9[%c0_6, %c0_7, %c0_8] : memref<2x2x32xf32, #tpu.memory_space<vmem>>, vector<1x2x32xf32>
    %7 = vector.shape_cast %6 : vector<1x2x32xf32> to vector<2x32xf32>
    %8 = vector.shape_cast %5 : vector<2x32xf32> to vector<1x2x32xf32>
    tpu.vector_store %arg9[%c0_6, %c0_7, %c0_8], %8 {strides = array<i32>} : memref<2x2x32xf32, #tpu.memory_space<vmem>>, vector<1x2x32xf32>,
    %9 = vector.extract_strided_slice %4#0 {offsets = [0, 32], sizes = [2, 32], strides = [1, 1]} : vector<2x64xf32> to vector<2x32xf32>
    %c1 = arith.constant 1 : index
    %c0_9 = arith.constant 0 : index
    %c0_10 = arith.constant 0 : index
    %10 = vector.load %arg9[%c1, %c0_9, %c0_10] : memref<2x2x32xf32, #tpu.memory_space<vmem>>, vector<1x2x32xf32>
    %11 = vector.shape_cast %10 : vector<1x2x32xf32> to vector<2x32xf32>
    %12 = vector.shape_cast %9 : vector<2x32xf32> to vector<1x2x32xf32>
    tpu.vector_store %arg9[%c1, %c0_9, %c0_10], %12 {strides = array<i32>} : memref<2x2x32xf32, #tpu.memory_space<vmem>>, vector<1x2x32xf32>,
    %13 = vector.extract_strided_slice %4#1 {offsets = [0, 0], sizes = [2, 32], strides = [1, 1]} : vector<2x64xf32> to vector<2x32xf32>
    %c0_11 = arith.constant 0 : index
    %c0_12 = arith.constant 0 : index
    %c0_13 = arith.constant 0 : index
    %14 = vector.load %arg10[%c0_11, %c0_12, %c0_13] : memref<2x2x32xf32, #tpu.memory_space<vmem>>, vector<1x2x32xf32>
    %15 = vector.shape_cast %14 : vector<1x2x32xf32> to vector<2x32xf32>
    %16 = vector.shape_cast %13 : vector<2x32xf32> to vector<1x2x32xf32>
    tpu.vector_store %arg10[%c0_11, %c0_12, %c0_13], %16 {strides = array<i32>} : memref<2x2x32xf32, #tpu.memory_space<vmem>>, vector<1x2x32xf32>,
    %17 = vector.extract_strided_slice %4#1 {offsets = [0, 32], sizes = [2, 32], strides = [1, 1]} : vector<2x64xf32> to vector<2x32xf32>
    %c1_14 = arith.constant 1 : index
    %c0_15 = arith.constant 0 : index
    %c0_16 = arith.constant 0 : index
    %18 = vector.load %arg10[%c1_14, %c0_15, %c0_16] : memref<2x2x32xf32, #tpu.memory_space<vmem>>, vector<1x2x32xf32>
    %19 = vector.shape_cast %18 : vector<1x2x32xf32> to vector<2x32xf32>
    %20 = vector.shape_cast %17 : vector<2x32xf32> to vector<1x2x32xf32>
    tpu.vector_store %arg10[%c1_14, %c0_15, %c0_16], %20 {strides = array<i32>} : memref<2x2x32xf32, #tpu.memory_space<vmem>>, vector<1x2x32xf32>,
    %c0_17 = arith.constant 0 : index
    %c0_18 = arith.constant 0 : index
    %21 = vector.load %arg4[%c0_17, %c0_18] : memref<64x64xbf16, #tpu.memory_space<vmem>>, vector<64x64xbf16>
    %c0_19 = arith.constant 0 : index
    %c0_20 = arith.constant 0 : index
    %22 = vector.load %arg5[%c0_19, %c0_20] : memref<1x64xf32, #tpu.memory_space<vmem>>, vector<1x64xf32>
    %c0_21 = arith.constant 0 : index
    %c0_22 = arith.constant 0 : index
    %23 = vector.load %arg6[%c0_21, %c0_22] : memref<1x64xf32, #tpu.memory_space<vmem>>, vector<1x64xf32>
    %c0_23 = arith.constant 0 : index
    %c0_24 = arith.constant 0 : index
    %24 = vector.load %arg7[%c0_23, %c0_24] : memref<1x1xf32, #tpu.memory_space<vmem>>, vector<1x1xf32>
    %c0_25 = arith.constant 0 : index
    %c0_26 = arith.constant 0 : index
    %c0_27 = arith.constant 0 : index
    %25 = vector.load %arg11[%c0_25, %c0_26, %c0_27] : memref<16x2x64xbf16, #tpu.memory_space<vmem>>, vector<16x1x64xbf16>
    %26 = vector.shape_cast %25 : vector<16x1x64xbf16> to vector<16x64xbf16>
    %cst = arith.constant dense<0.000000e+00> : vector<16x64xf32>
    %27 = tpu.matmul %26, %21, %cst {dimension_numbers = #tpu.dot_dimension_numbers<[1], [0], [0], [1], [0, 0, 1, 1], [], []>} : vector<16x64xbf16>, vector<64x64xbf16>, vector<16x64xf32> -> vector<16x64xf32>
    %28 = vector.broadcast %22 : vector<1x64xf32> to vector<16x64xf32>
    %29 = arith.addf %27, %28 : vector<16x64xf32>
    %cst_28 = arith.constant 5.000000e-01 : f32
    %30 = vector.broadcast %cst_28 : f32 to vector<16x64xf32>
    %31 = arith.mulf %30, %29 : vector<16x64xf32>
    %cst_29 = arith.constant 4.471500e-02 : f32
    %32 = vector.broadcast %cst_29 : f32 to vector<16x64xf32>
    %33 = arith.mulf %32, %29 : vector<16x64xf32>
    %34 = arith.mulf %33, %29 : vector<16x64xf32>
    %35 = arith.mulf %34, %29 : vector<16x64xf32>
    %36 = arith.addf %29, %35 : vector<16x64xf32>
    %cst_30 = arith.constant 0.797884583 : f32
    %37 = vector.broadcast %cst_30 : f32 to vector<16x64xf32>
    %38 = arith.mulf %37, %36 : vector<16x64xf32>
    %39 = math.tanh %38 : vector<16x64xf32>
    %cst_31 = arith.constant 1.000000e+00 : f32
    %40 = vector.broadcast %cst_31 : f32 to vector<16x64xf32>
    %41 = arith.addf %40, %39 : vector<16x64xf32>
    %42 = arith.mulf %31, %41 : vector<16x64xf32>
    %43 = vector.broadcast %23 : vector<1x64xf32> to vector<16x64xf32>
    %44 = arith.mulf %42, %43 : vector<16x64xf32>
    %cst_32 = arith.constant dense<0.000000e+00> : vector<16xf32>
    %45 = vector.multi_reduction <add>, %44, %cst_32 [1] : vector<16x64xf32> to vector<16xf32>
    %46 = vector.shape_cast %45 : vector<16xf32> to vector<16x1xf32>
    %47 = vector.broadcast %24 : vector<1x1xf32> to vector<16x1xf32>
    %48 = arith.addf %46, %47 : vector<16x1xf32>
    %49 = math.tanh %48 : vector<16x1xf32>
    %c0_33 = arith.constant 0 : index
    %c0_34 = arith.constant 0 : index
    %50 = vector.load %arg8[%c0_33, %c0_34] : memref<16x2xf32, #tpu.memory_space<vmem>>, vector<16x1xf32>
    tpu.vector_store %arg8[%c0_33, %c0_34], %49 {strides = array<i32>} : memref<16x2xf32, #tpu.memory_space<vmem>>, vector<16x1xf32>,
    %c0_35 = arith.constant 0 : index
    %c1_36 = arith.constant 1 : index
    %c0_37 = arith.constant 0 : index
    %51 = vector.load %arg11[%c0_35, %c1_36, %c0_37] : memref<16x2x64xbf16, #tpu.memory_space<vmem>>, vector<16x1x64xbf16>
    %52 = vector.shape_cast %51 : vector<16x1x64xbf16> to vector<16x64xbf16>
    %cst_38 = arith.constant dense<0.000000e+00> : vector<16x64xf32>
    %53 = tpu.matmul %52, %21, %cst_38 {dimension_numbers = #tpu.dot_dimension_numbers<[1], [0], [0], [1], [0, 0, 1, 1], [], []>} : vector<16x64xbf16>, vector<64x64xbf16>, vector<16x64xf32> -> vector<16x64xf32>
    %54 = vector.broadcast %22 : vector<1x64xf32> to vector<16x64xf32>
    %55 = arith.addf %53, %54 : vector<16x64xf32>
    %cst_39 = arith.constant 5.000000e-01 : f32
    %56 = vector.broadcast %cst_39 : f32 to vector<16x64xf32>
    %57 = arith.mulf %56, %55 : vector<16x64xf32>
    %cst_40 = arith.constant 4.471500e-02 : f32
    %58 = vector.broadcast %cst_40 : f32 to vector<16x64xf32>
    %59 = arith.mulf %58, %55 : vector<16x64xf32>
    %60 = arith.mulf %59, %55 : vector<16x64xf32>
    %61 = arith.mulf %60, %55 : vector<16x64xf32>
    %62 = arith.addf %55, %61 : vector<16x64xf32>
    %cst_41 = arith.constant 0.797884583 : f32
    %63 = vector.broadcast %cst_41 : f32 to vector<16x64xf32>
    %64 = arith.mulf %63, %62 : vector<16x64xf32>
    %65 = math.tanh %64 : vector<16x64xf32>
    %cst_42 = arith.constant 1.000000e+00 : f32
    %66 = vector.broadcast %cst_42 : f32 to vector<16x64xf32>
    %67 = arith.addf %66, %65 : vector<16x64xf32>
    %68 = arith.mulf %57, %67 : vector<16x64xf32>
    %69 = vector.broadcast %23 : vector<1x64xf32> to vector<16x64xf32>
    %70 = arith.mulf %68, %69 : vector<16x64xf32>
    %cst_43 = arith.constant dense<0.000000e+00> : vector<16xf32>
    %71 = vector.multi_reduction <add>, %70, %cst_43 [1] : vector<16x64xf32> to vector<16xf32>
    %72 = vector.shape_cast %71 : vector<16xf32> to vector<16x1xf32>
    %73 = vector.broadcast %24 : vector<1x1xf32> to vector<16x1xf32>
    %74 = arith.addf %72, %73 : vector<16x1xf32>
    %75 = math.tanh %74 : vector<16x1xf32>
    %c0_44 = arith.constant 0 : index
    %c1_45 = arith.constant 1 : index
    %76 = vector.load %arg8[%c0_44, %c1_45] : memref<16x2xf32, #tpu.memory_space<vmem>>, vector<16x1xf32>
    tpu.vector_store %arg8[%c0_44, %c1_45], %75 {strides = array<i32>} : memref<16x2xf32, #tpu.memory_space<vmem>>, vector<16x1xf32>,
    return
  }
}

</mosaic_0001>

<llo_original>
// kernel: noise_generator_forward.4
$region0: #{noise_generator_forward.4}
  #allocation0 [shape = 'u32[]', space=smem, size = 0x4, offset = 0x4, fixed_abs, tag = 'smem constant byte address 0x4 - core index']
  #allocation1 [shape = 'u32[144,128]{1,0:T(1,128)}', space=vmem, size = 0x12000, scoped, tag = 'internal scratch']
  #allocation2 [shape = 'bf16[16,2,64]{2,1,0:T(2,128)(2,1)}', space=vmem, size = 0x2000, scoped, tag = 'scratch operand']
  %s0 = inlined_call_operand.vmem [shape: bf16[16,2,256], index: 0, kind: input, shape index: {}]
  %s1 = inlined_call_operand.vmem [shape: bf16[64,256], index: 1, kind: input, shape index: {}]
  %s2 = inlined_call_operand.vmem [shape: f32[2,64], index: 2, kind: input, shape index: {}, may-alias: {2,3}]
  %s3 = inlined_call_operand.vmem [shape: f32[2,64], index: 3, kind: input, shape index: {}, may-alias: {2,3}]
  %s4 = inlined_call_operand.vmem [shape: bf16[64,256], index: 4, kind: input, shape index: {}]
  %s5 = inlined_call_operand.vmem [shape: f32[1,256], index: 5, kind: input, shape index: {}]
  %s6 = inlined_call_operand.vmem [shape: bf16[16,512], index: 6, kind: output, shape index: {0}]
  %s7 = inlined_call_operand.vmem [shape: f32[2,2,32], index: 7, kind: output, shape index: {1}]
  %s8 = inlined_call_operand.vmem [shape: f32[2,2,32], index: 8, kind: output, shape index: {2}]
  %9 = xla_tuple %s6, %s7, %s8
  %s10 = sld [smem:[#allocation0]]
  $region57: #{noise_generator_forward.4} parent=0
    _
  %s12 = ssub.s32 1, %s10
  %s13 = scalar_select 0, %s12, %s10
  // Predicated region
  $region2: #{noise_generator_forward.4} parent=0 // pred_check
    _
  $region3: #{noise_generator_forward.4} parent=0 // pred_check_branch
    %15 = sbr.rel (0) target = $region5
  $region4: #{noise_generator_forward.4} parent=0 // pred_region
    _
  $region5: #{noise_generator_forward.4} parent=0 // pred_fallthru
    _
  // Predicated region
  $region6: #{noise_generator_forward.4} parent=0 // pred_check
    _
  $region7: #{noise_generator_forward.4} parent=0 // pred_check_branch
    %17 = sbr.rel (0) target = $region9
  $region8: #{noise_generator_forward.4} parent=0 // pred_region
    _
  $region9: #{noise_generator_forward.4} parent=0 // pred_fallthru
    _
  // Predicated region
  $region10: #{noise_generator_forward.4} parent=0 // pred_check
    _
  $region11: #{noise_generator_forward.4} parent=0 // pred_check_branch
    %19 = sbr.rel (0) target = $region13
  $region12: #{noise_generator_forward.4} parent=0 // pred_region
    _
  $region13: #{noise_generator_forward.4} parent=0 // pred_fallthru
    _
  // Predicated region
  $region14: #{noise_generator_forward.4} parent=0 // pred_check
    _
  $region15: #{noise_generator_forward.4} parent=0 // pred_check_branch
    %21 = sbr.rel (0) target = $region17
  $region16: #{noise_generator_forward.4} parent=0 // pred_region
    _
  $region17: #{noise_generator_forward.4} parent=0 // pred_fallthru
    _
  // Predicated region
  $region18: #{noise_generator_forward.4} parent=0 // pred_check
    _
  $region19: #{noise_generator_forward.4} parent=0 // pred_check_branch
    %23 = sbr.rel (0) target = $region21
  $region20: #{noise_generator_forward.4} parent=0 // pred_region
    _
  $region21: #{noise_generator_forward.4} parent=0 // pred_fallthru
    _
  // Predicated region
  $region22: #{noise_generator_forward.4} parent=0 // pred_check
    _
  $region23: #{noise_generator_forward.4} parent=0 // pred_check_branch
    %25 = sbr.rel (0) target = $region25
  $region24: #{noise_generator_forward.4} parent=0 // pred_region
    _
  $region25: #{noise_generator_forward.4} parent=0 // pred_fallthru
    _
  %v27 = vld [vmem:[%s1] sm:$0xff]
  %v28 = vld [vmem:[%s1 + $0x8] sm:$0xff]
  %v29 = vld [vmem:[%s1 + $0x10] sm:$0xff]
  %v30 = vld [vmem:[%s1 + $0x18] sm:$0xff]
  %v31 = vld [vmem:[%s1 + $0x20] sm:$0xff]
  %v32 = vld [vmem:[%s1 + $0x28] sm:$0xff]
  %v33 = vld [vmem:[%s1 + $0x30] sm:$0xff]
  %v34 = vld [vmem:[%s1 + $0x38] sm:$0xff]
  %v35 = vld [vmem:[%s2] sm:$0x3]
  %v36 = vld [vmem:[%s3] sm:$0x3]
  loop: start=0, step=1, limit=16
  $region26: #{noise_generator_forward.4} parent=0 // loop_pre_header
    _
  $region27: #{noise_generator_forward.4} parent=0 // loop_header
    %s38 = sphi 0, %s42
    %p39 = scmp.ge.s32.totalorder %s38, 16
    %v43 = vphi %v35, %v188
    %v44 = vphi %v36, %v206
  $region28: #{noise_generator_forward.4} parent=0 // loop_header_branch
    %41 = sbr.rel (%p39) target = $region32
  $region29: #{noise_generator_forward.4} parent=0 // loop_body
    %s45 = smul.u32 %s38, 2
    %s46 = scalar_lea.vmem %s0, %s45
    %v47 = vld [vmem:[%s46] sm:$0x3]
    %v48 = vunpack.c.l.bf16 %v47
    %v49 = vpack.c.bf16 %v43, %v43
    %v58 = vunpack.c.l.b16 %v27
    %v59 = vunpack.c.h.b16 %v27
    %v60 = vunpack.c.l.b16 %v28
    %v61 = vunpack.c.h.b16 %v28
    %v62 = vunpack.c.l.b16 %v29
    %v63 = vunpack.c.h.b16 %v29
    %v64 = vunpack.c.l.b16 %v30
    %v65 = vunpack.c.h.b16 %v30
    %v66 = vunpack.c.l.b16 %v31
    %v67 = vunpack.c.h.b16 %v31
    %v68 = vunpack.c.l.b16 %v32
    %v69 = vunpack.c.h.b16 %v32
    %v70 = vunpack.c.l.b16 %v33
    %v71 = vunpack.c.h.b16 %v33
    %v72 = vunpack.c.l.b16 %v34
    %v73 = vunpack.c.h.b16 %v34
    %v74 = vpack.c.b16 %v60, %v58
    %v75 = vpack.c.b16 %v61, %v59
    %v76 = vpack.c.b16 %v64, %v62
    %v77 = vpack.c.b16 %v65, %v63
    %v78 = vpack.c.b16 %v68, %v66
    %v79 = vpack.c.b16 %v69, %v67
    %v80 = vpack.c.b16 %v72, %v70
    %v81 = vpack.c.b16 %v73, %v71
    %vm90 = vcmask 523264
    %v92 = vsel %vm90, %v49, 0
    %94 = vmatprep.subr.bf16.mxu0 %v75
    %95 = vmatpush1.bf16.msra.mxu0 %v74
    %96 = vmatprep.subr.bf16.mxu0 %v77
    %97 = vmatpush1.bf16.msra.mxu0 %v76
    %98 = vmatprep.subr.bf16.mxu0 %v79
    %99 = vmatpush1.bf16.msra.mxu0 %v78
    %100 = vmatprep.subr.bf16.mxu0 %v81
    %101 = vmatpush1.bf16.msra.mxu0 %v80
    %102 = vmatprep.subr.bf16.mxu0 0
    %103 = vmatpush1.bf16.msra.mxu0 0
    %104 = vmatprep.subr.bf16.mxu0 0
    %105 = vmatpush1.bf16.msra.mxu0 0
    %106 = vmatprep.subr.bf16.mxu0 0
    %107 = vmatpush1.bf16.msra.mxu0 0
    %108 = vmatprep.subr.bf16.mxu0 0
    %109 = vmatpush1.bf16.msra.mxu0 0
    %110 = vmatprep.subr.bf16.mxu0 0
    %111 = vmatpush1.bf16.msra.mxu0 0
    %112 = vmatprep.subr.bf16.mxu0 0
    %113 = vmatpush1.bf16.msra.mxu0 0
    %114 = vmatprep.subr.bf16.mxu0 0
    %115 = vmatpush1.bf16.msra.mxu0 0
    %116 = vmatprep.subr.bf16.mxu0 0
    %117 = vmatpush1.bf16.msra.mxu0 0
    %118 = vmatprep.subr.bf16.mxu0 0
    %119 = vmatpush1.bf16.msra.mxu0 0
    %120 = vmatprep.subr.bf16.mxu0 0
    %121 = vmatpush1.bf16.msra.mxu0 0
    %122 = vmatprep.subr.bf16.mxu0 0
    %123 = vmatpush1.bf16.msra.mxu0 0
    %124 = vmatprep.subr.bf16.mxu0 0
    %125 = vmatpush1.bf16.msra.mxu0 0
    %126 = vmatprep.mubr.bf16.mxu0 0
    %127 = vmatmul.mubr.bf16.gmra.mrb[0].mxu0 %v92
    %v128 = vpop.f32.mrb[0].mxu0
    %v129 = vadd.f32 0.0, %v128
    %v130 = vpop.f32.mrb[0].mxu0
    %v131 = vadd.f32 0.0, %v130
    %v132 = vpop.f32.mrb[0].mxu0
    %v133 = vpop.f32.mrb[0].mxu0
    %134 = vdwg.mxu0
    %v137 = vcombine.low %v129, %v131
    %v139 = vunpack.c.l.s4 1983009808
    %v140 = vunpack.c.0.s8 %v139
    %v141 = vlaneseq
    %v142 = vshrl.u32 %v141, 7
    %v143 = vsub.s32 %v140, %v142
    %v144 = vrot.slane %v137, %v143
    %v146 = vadd.f32 %v48, %v144
    %v147 = vsub.f32 0.0, %v146
    %v148 = vmul.f32 %v147, 1.442695
    %v149 = vpow.pop %v148
    %v150 = vadd.f32 %v149, 1.0
    %v151 = vrcp.pop %v150
    %v153 = vrot.slane %v146, 2
    %v155 = vtanh.pop %v153
    %156 = vrot.lane.b32.xlu0 %v146, 64
    %v157 = vpop.permute.xlu0 %156
    %v158 = vrot.slane %v157, 2
    %v160 = vsub.f32 0.0, %v158
    %v161 = vmul.f32 %v160, 1.442695
    %v162 = vpow.pop %v161
    %v163 = vadd.f32 %v162, 1.0
    %v164 = vrcp.pop %v163
    %v167 = vunpack.c.l.s4 1983009808
    %v168 = vunpack.c.0.s8 %v167
    %v169 = vlaneseq
    %v170 = vshrl.u32 %v169, 7
    %v171 = vsub.s32 %v168, %v170
    %v172 = vrot.slane %v44, %v171
    %173 = vrot.lane.b32.xlu0 %v172, 64
    %v174 = vpop.permute.xlu0 %173
    %v176 = vmul.f32 %v151, %v174
    %v177 = vmul.f32 %v151, %v155
    %179 = vrot.lane.b32.xlu0 %v177, 64
    %v180 = vpop.permute.xlu0 %179
    %v182 = vadd.f32 %v176, %v180
    %v183 = vtanh.pop %v182
    %185 = vrot.lane.b32.xlu0 %v183, 64
    %v186 = vpop.permute.xlu0 %185
    %v188 = vmul.f32 %v164, %v186
    %s189 = ssub.s32 15, %s38
    %v190 = vpack.c.bf16 %v188, %v188
    %s191 = scalar_lea.vmem [#allocation2], %s38
    %vm192 = vcmask 253952
    %193 = vst.msk [vmem:[%s191] sm:$0x1] %vm192, %v190
    %s194 = scalar_lea.vmem [#allocation2], %s189
    %vm195 = vcmask 516352
    %196 = vst.msk [vmem:[%s194] sm:$0x1] %vm195, %v190
    %v199 = vunpack.c.l.s4 1983009808
    %v200 = vunpack.c.0.s8 %v199
    %v201 = vlaneseq
    %v202 = vshrl.u32 %v201, 7
    %v203 = vsub.s32 %v200, %v202
    %v204 = vrot.slane %v182, %v203
    %205 = vrot.lane.b32.xlu0 %v204, 64
    %v206 = vpop.permute.xlu0 %205
  $region30: #{noise_generator_forward.4} parent=0 // loop_footer
    %s42 = sadd.s32 1, %s38
  $region31: #{noise_generator_forward.4} parent=0 // loop_footer_branch
    %37 = sbr.rel target = $region27
  $region32: #{noise_generator_forward.4} parent=0 // loop_exit
    _
  %vm208 = vcmask 254976
  %209 = vst.msk [vmem:[%s7] sm:$0x3] %vm208, %v43
  %211 = vrot.lane.b32.xlu0 %v43, 96
  %v212 = vpop.permute.xlu0 %211
  %s214 = scalar_lea.vmem %s7, 2
  %215 = vst.msk [vmem:[%s214] sm:$0x3] %vm208, %v212
  %216 = vst.msk [vmem:[%s8] sm:$0x3] %vm208, %v44
  %218 = vrot.lane.b32.xlu0 %v44, 96
  %v219 = vpop.permute.xlu0 %218
  %s221 = scalar_lea.vmem %s8, 2
  %222 = vst.msk [vmem:[%s221] sm:$0x3] %vm208, %v219
  %v223 = vld [vmem:[%s4] sm:$0xff]
  %v224 = vld [vmem:[%s4 + $0x8] sm:$0xff]
  %v225 = vld [vmem:[%s4 + $0x10] sm:$0xff]
  %v226 = vld [vmem:[%s4 + $0x18] sm:$0xff]
  %v227 = vld [vmem:[%s4 + $0x20] sm:$0xff]
  %v228 = vld [vmem:[%s4 + $0x28] sm:$0xff]
  %v229 = vld [vmem:[%s4 + $0x30] sm:$0xff]
  %v230 = vld [vmem:[%s4 + $0x38] sm:$0xff]
  %v231 = vld [vmem:[%s5] sm:$0x3]
  %v232 = vld [vmem:[#allocation2] sm:$0x1]
  %v233 = vld [vmem:[#allocation2 + $0x1] sm:$0x1]
  %v234 = vld [vmem:[#allocation2 + $0x2] sm:$0x1]
  %v235 = vld [vmem:[#allocation2 + $0x3] sm:$0x1]
  %v236 = vld [vmem:[#allocation2 + $0x4] sm:$0x1]
  %v237 = vld [vmem:[#allocation2 + $0x5] sm:$0x1]
  %v238 = vld [vmem:[#allocation2 + $0x6] sm:$0x1]
  %v239 = vld [vmem:[#allocation2 + $0x7] sm:$0x1]
  %v240 = vld [vmem:[#allocation2 + $0x8] sm:$0x1]
  %v241 = vld [vmem:[#allocation2 + $0x9] sm:$0x1]
  %v242 = vld [vmem:[#allocation2 + $0xa] sm:$0x1]
  %v243 = vld [vmem:[#allocation2 + $0xb] sm:$0x1]
  %v244 = vld [vmem:[#allocation2 + $0xc] sm:$0x1]
  %v245 = vld [vmem:[#allocation2 + $0xd] sm:$0x1]
  %v246 = vld [vmem:[#allocation2 + $0xe] sm:$0x1]
  %v247 = vld [vmem:[#allocation2 + $0xf] sm:$0x1]
  %v249 = vlaneseq
  %v250 = vshrl.u32 %v249, 7
  %v251 = vsub.s32 0, %v250
  %v252 = vrot.slane %v231, %v251
  %v253 = vlaneseq
  %v254 = vshrl.u32 %v253, 7
  %v255 = vsub.s32 1, %v254
  %v256 = vrot.slane %v231, %v255
  %v276 = vunpack.c.l.s4 1966171168
  %v277 = vunpack.c.0.s8 %v276
  %v278 = vlaneseq
  %v279 = vshrl.u32 %v278, 7
  %v280 = vsub.s32 %v277, %v279
  %v281 = vrot.slane %v232, %v280
  %v283 = vunpack.c.l.s4 1966171168
  %v284 = vunpack.c.0.s8 %v283
  %v285 = vlaneseq
  %v286 = vshrl.u32 %v285, 7
  %v287 = vsub.s32 %v284, %v286
  %v288 = vrot.slane %v281, %v287
  %v290 = vunpack.c.l.s4 1966171168
  %v291 = vunpack.c.0.s8 %v290
  %v292 = vlaneseq
  %v293 = vshrl.u32 %v292, 7
  %v294 = vsub.s32 %v291, %v293
  %v295 = vrot.slane %v233, %v294
  %v297 = vunpack.c.l.s4 1966171168
  %v298 = vunpack.c.0.s8 %v297
  %v299 = vlaneseq
  %v300 = vshrl.u32 %v299, 7
  %v301 = vsub.s32 %v298, %v300
  %v302 = vrot.slane %v295, %v301
  %v304 = vunpack.c.l.s4 1966171168
  %v305 = vunpack.c.0.s8 %v304
  %v306 = vlaneseq
  %v307 = vshrl.u32 %v306, 7
  %v308 = vsub.s32 %v305, %v307
  %v309 = vrot.slane %v234, %v308
  %v311 = vunpack.c.l.s4 1966171168
  %v312 = vunpack.c.0.s8 %v311
  %v313 = vlaneseq
  %v314 = vshrl.u32 %v313, 7
  %v315 = vsub.s32 %v312, %v314
  %v316 = vrot.slane %v309, %v315
  %v318 = vunpack.c.l.s4 1966171168
  %v319 = vunpack.c.0.s8 %v318
  %v320 = vlaneseq
  %v321 = vshrl.u32 %v320, 7
  %v322 = vsub.s32 %v319, %v321
  %v323 = vrot.slane %v235, %v322
  %v325 = vunpack.c.l.s4 1966171168
  %v326 = vunpack.c.0.s8 %v325
  %v327 = vlaneseq
  %v328 = vshrl.u32 %v327, 7
  %v329 = vsub.s32 %v326, %v328
  %v330 = vrot.slane %v323, %v329
  %v332 = vunpack.c.l.s4 1966171168
  %v333 = vunpack.c.0.s8 %v332
  %v334 = vlaneseq
  %v335 = vshrl.u32 %v334, 7
  %v336 = vsub.s32 %v333, %v335
  %v337 = vrot.slane %v236, %v336
  %v339 = vunpack.c.l.s4 1966171168
  %v340 = vunpack.c.0.s8 %v339
  %v341 = vlaneseq
  %v342 = vshrl.u32 %v341, 7
  %v343 = vsub.s32 %v340, %v342
  %v344 = vrot.slane %v337, %v343
  %v346 = vunpack.c.l.s4 1966171168
  %v347 = vunpack.c.0.s8 %v346
  %v348 = vlaneseq
  %v349 = vshrl.u32 %v348, 7
  %v350 = vsub.s32 %v347, %v349
  %v351 = vrot.slane %v237, %v350
  %v353 = vunpack.c.l.s4 1966171168
  %v354 = vunpack.c.0.s8 %v353
  %v355 = vlaneseq
  %v356 = vshrl.u32 %v355, 7
  %v357 = vsub.s32 %v354, %v356
  %v358 = vrot.slane %v351, %v357
  %v360 = vunpack.c.l.s4 1966171168
  %v361 = vunpack.c.0.s8 %v360
  %v362 = vlaneseq
  %v363 = vshrl.u32 %v362, 7
  %v364 = vsub.s32 %v361, %v363
  %v365 = vrot.slane %v238, %v364
  %v367 = vunpack.c.l.s4 1966171168
  %v368 = vunpack.c.0.s8 %v367
  %v369 = vlaneseq
  %v370 = vshrl.u32 %v369, 7
  %v371 = vsub.s32 %v368, %v370
  %v372 = vrot.slane %v365, %v371
  %v374 = vunpack.c.l.s4 1966171168
  %v375 = vunpack.c.0.s8 %v374
  %v376 = vlaneseq
  %v377 = vshrl.u32 %v376, 7
  %v378 = vsub.s32 %v375, %v377
  %v379 = vrot.slane %v239, %v378
  %v381 = vunpack.c.l.s4 1966171168
  %v382 = vunpack.c.0.s8 %v381
  %v383 = vlaneseq
  %v384 = vshrl.u32 %v383, 7
  %v385 = vsub.s32 %v382, %v384
  %v386 = vrot.slane %v379, %v385
  %v388 = vunpack.c.l.s4 1966171168
  %v389 = vunpack.c.0.s8 %v388
  %v390 = vlaneseq
  %v391 = vshrl.u32 %v390, 7
  %v392 = vsub.s32 %v389, %v391
  %v393 = vrot.slane %v240, %v392
  %v395 = vunpack.c.l.s4 1966171168
  %v396 = vunpack.c.0.s8 %v395
  %v397 = vlaneseq
  %v398 = vshrl.u32 %v397, 7
  %v399 = vsub.s32 %v396, %v398
  %v400 = vrot.slane %v393, %v399
  %v402 = vunpack.c.l.s4 1966171168
  %v403 = vunpack.c.0.s8 %v402
  %v404 = vlaneseq
  %v405 = vshrl.u32 %v404, 7
  %v406 = vsub.s32 %v403, %v405
  %v407 = vrot.slane %v241, %v406
  %v409 = vunpack.c.l.s4 1966171168
  %v410 = vunpack.c.0.s8 %v409
  %v411 = vlaneseq
  %v412 = vshrl.u32 %v411, 7
  %v413 = vsub.s32 %v410, %v412
  %v414 = vrot.slane %v407, %v413
  %v416 = vunpack.c.l.s4 1966171168
  %v417 = vunpack.c.0.s8 %v416
  %v418 = vlaneseq
  %v419 = vshrl.u32 %v418, 7
  %v420 = vsub.s32 %v417, %v419
  %v421 = vrot.slane %v242, %v420
  %v423 = vunpack.c.l.s4 1966171168
  %v424 = vunpack.c.0.s8 %v423
  %v425 = vlaneseq
  %v426 = vshrl.u32 %v425, 7
  %v427 = vsub.s32 %v424, %v426
  %v428 = vrot.slane %v421, %v427
  %v430 = vunpack.c.l.s4 1966171168
  %v431 = vunpack.c.0.s8 %v430
  %v432 = vlaneseq
  %v433 = vshrl.u32 %v432, 7
  %v434 = vsub.s32 %v431, %v433
  %v435 = vrot.slane %v243, %v434
  %v437 = vunpack.c.l.s4 1966171168
  %v438 = vunpack.c.0.s8 %v437
  %v439 = vlaneseq
  %v440 = vshrl.u32 %v439, 7
  %v441 = vsub.s32 %v438, %v440
  %v442 = vrot.slane %v435, %v441
  %v444 = vunpack.c.l.s4 1966171168
  %v445 = vunpack.c.0.s8 %v444
  %v446 = vlaneseq
  %v447 = vshrl.u32 %v446, 7
  %v448 = vsub.s32 %v445, %v447
  %v449 = vrot.slane %v244, %v448
  %v451 = vunpack.c.l.s4 1966171168
  %v452 = vunpack.c.0.s8 %v451
  %v453 = vlaneseq
  %v454 = vshrl.u32 %v453, 7
  %v455 = vsub.s32 %v452, %v454
  %v456 = vrot.slane %v449, %v455
  %v458 = vunpack.c.l.s4 1966171168
  %v459 = vunpack.c.0.s8 %v458
  %v460 = vlaneseq
  %v461 = vshrl.u32 %v460, 7
  %v462 = vsub.s32 %v459, %v461
  %v463 = vrot.slane %v245, %v462
  %v465 = vunpack.c.l.s4 1966171168
  %v466 = vunpack.c.0.s8 %v465
  %v467 = vlaneseq
  %v468 = vshrl.u32 %v467, 7
  %v469 = vsub.s32 %v466, %v468
  %v470 = vrot.slane %v463, %v469
  %v472 = vunpack.c.l.s4 1966171168
  %v473 = vunpack.c.0.s8 %v472
  %v474 = vlaneseq
  %v475 = vshrl.u32 %v474, 7
  %v476 = vsub.s32 %v473, %v475
  %v477 = vrot.slane %v246, %v476
  %v479 = vunpack.c.l.s4 1966171168
  %v480 = vunpack.c.0.s8 %v479
  %v481 = vlaneseq
  %v482 = vshrl.u32 %v481, 7
  %v483 = vsub.s32 %v480, %v482
  %v484 = vrot.slane %v477, %v483
  %v486 = vunpack.c.l.s4 1966171168
  %v487 = vunpack.c.0.s8 %v486
  %v488 = vlaneseq
  %v489 = vshrl.u32 %v488, 7
  %v490 = vsub.s32 %v487, %v489
  %v491 = vrot.slane %v247, %v490
  %v493 = vunpack.c.l.s4 1966171168
  %v494 = vunpack.c.0.s8 %v493
  %v495 = vlaneseq
  %v496 = vshrl.u32 %v495, 7
  %v497 = vsub.s32 %v494, %v496
  %v498 = vrot.slane %v491, %v497
  %v499 = vunpack.c.l.b16 %v288
  %v500 = vunpack.c.l.b16 %v302
  %v501 = vunpack.c.l.b16 %v316
  %v502 = vunpack.c.l.b16 %v330
  %v503 = vunpack.c.l.b16 %v344
  %v504 = vunpack.c.l.b16 %v358
  %v505 = vunpack.c.l.b16 %v372
  %v506 = vunpack.c.l.b16 %v386
  %v507 = vunpack.c.l.b16 %v400
  %v508 = vunpack.c.l.b16 %v414
  %v509 = vunpack.c.l.b16 %v428
  %v510 = vunpack.c.l.b16 %v442
  %v511 = vunpack.c.l.b16 %v456
  %v512 = vunpack.c.l.b16 %v470
  %v513 = vunpack.c.l.b16 %v484
  %v514 = vunpack.c.l.b16 %v498
  %v515 = vrot.slane %v500, 7
  %vm516 = vcmask 1041409
  %v517 = vsel %vm516, %v515, %v499
  %v518 = vrot.slane %v501, 6
  %vm519 = vcmask 1042434
  %v520 = vsel %vm519, %v518, %v517
  %v521 = vrot.slane %v502, 5
  %vm522 = vcmask 1043459
  %v523 = vsel %vm522, %v521, %v520
  %v524 = vrot.slane %v503, 4
  %vm525 = vcmask 1044484
  %v526 = vsel %vm525, %v524, %v523
  %v527 = vrot.slane %v504, 3
  %vm528 = vcmask 1045509
  %v529 = vsel %vm528, %v527, %v526
  %v530 = vrot.slane %v505, 2
  %vm531 = vcmask 1046534
  %v532 = vsel %vm531, %v530, %v529
  %v533 = vrot.slane %v506, 1
  %vm534 = vcmask 1047559
  %v535 = vsel %vm534, %v533, %v532
  %v536 = vrot.slane %v508, 7
  %v537 = vsel %vm516, %v536, %v507
  %v538 = vrot.slane %v509, 6
  %v539 = vsel %vm519, %v538, %v537
  %v540 = vrot.slane %v510, 5
  %v541 = vsel %vm522, %v540, %v539
  %v542 = vrot.slane %v511, 4
  %v543 = vsel %vm525, %v542, %v541
  %v544 = vrot.slane %v512, 3
  %v545 = vsel %vm528, %v544, %v543
  %v546 = vrot.slane %v513, 2
  %v547 = vsel %vm531, %v546, %v545
  %v548 = vrot.slane %v514, 1
  %v549 = vsel %vm534, %v548, %v547
  %v550 = vpack.c.b16 %v549, %v535
  %v559 = vunpack.c.l.b16 %v223
  %v560 = vunpack.c.h.b16 %v223
  %v561 = vunpack.c.l.b16 %v224
  %v562 = vunpack.c.h.b16 %v224
  %v563 = vunpack.c.l.b16 %v225
  %v564 = vunpack.c.h.b16 %v225
  %v565 = vunpack.c.l.b16 %v226
  %v566 = vunpack.c.h.b16 %v226
  %v567 = vunpack.c.l.b16 %v227
  %v568 = vunpack.c.h.b16 %v227
  %v569 = vunpack.c.l.b16 %v228
  %v570 = vunpack.c.h.b16 %v228
  %v571 = vunpack.c.l.b16 %v229
  %v572 = vunpack.c.h.b16 %v229
  %v573 = vunpack.c.l.b16 %v230
  %v574 = vunpack.c.h.b16 %v230
  %v575 = vpack.c.b16 %v561, %v559
  %v576 = vpack.c.b16 %v562, %v560
  %v577 = vpack.c.b16 %v565, %v563
  %v578 = vpack.c.b16 %v566, %v564
  %v579 = vpack.c.b16 %v569, %v567
  %v580 = vpack.c.b16 %v570, %v568
  %v581 = vpack.c.b16 %v573, %v571
  %v582 = vpack.c.b16 %v574, %v572
  %vm591 = vcmask 523264
  %v593 = vsel %vm591, %v550, 0
  %595 = vmatprep.subr.bf16.mxu0 %v576
  %596 = vmatpush1.bf16.msra.mxu0 %v575
  %597 = vmatprep.subr.bf16.mxu0 %v578
  %598 = vmatpush1.bf16.msra.mxu0 %v577
  %599 = vmatprep.subr.bf16.mxu0 %v580
  %600 = vmatpush1.bf16.msra.mxu0 %v579
  %601 = vmatprep.subr.bf16.mxu0 %v582
  %602 = vmatpush1.bf16.msra.mxu0 %v581
  %603 = vmatprep.subr.bf16.mxu0 0
  %604 = vmatpush1.bf16.msra.mxu0 0
  %605 = vmatprep.subr.bf16.mxu0 0
  %606 = vmatpush1.bf16.msra.mxu0 0
  %607 = vmatprep.subr.bf16.mxu0 0
  %608 = vmatpush1.bf16.msra.mxu0 0
  %609 = vmatprep.subr.bf16.mxu0 0
  %610 = vmatpush1.bf16.msra.mxu0 0
  %611 = vmatprep.subr.bf16.mxu0 0
  %612 = vmatpush1.bf16.msra.mxu0 0
  %613 = vmatprep.subr.bf16.mxu0 0
  %614 = vmatpush1.bf16.msra.mxu0 0
  %615 = vmatprep.subr.bf16.mxu0 0
  %616 = vmatpush1.bf16.msra.mxu0 0
  %617 = vmatprep.subr.bf16.mxu0 0
  %618 = vmatpush1.bf16.msra.mxu0 0
  %619 = vmatprep.subr.bf16.mxu0 0
  %620 = vmatpush1.bf16.msra.mxu0 0
  %621 = vmatprep.subr.bf16.mxu0 0
  %622 = vmatpush1.bf16.msra.mxu0 0
  %623 = vmatprep.subr.bf16.mxu0 0
  %624 = vmatpush1.bf16.msra.mxu0 0
  %625 = vmatprep.subr.bf16.mxu0 0
  %626 = vmatpush1.bf16.msra.mxu0 0
  %627 = vmatprep.mubr.bf16.mxu0 0
  %628 = vmatmul.mubr.bf16.gmra.mrb[0].mxu0 %v593
  %v629 = vpop.f32.mrb[0].mxu0
  %v630 = vadd.f32 %v252, %v629
  %v631 = vpop.f32.mrb[0].mxu0
  %v632 = vadd.f32 %v256, %v631
  %v633 = vpop.f32.mrb[0].mxu0
  %v634 = vadd.f32 %v252, %v633
  %v635 = vpop.f32.mrb[0].mxu0
  %v636 = vadd.f32 %v256, %v635
  %637 = vdwg.mxu0
  %v638 = vpack.c.bf16 %v634, %v630
  %v639 = vpack.c.bf16 %v636, %v632
  %v642 = vunpack.c.l.b16 %v638
  %v643 = vunpack.c.l.b16 %v639
  %v644 = vunpack.c.h.b16 %v638
  %v645 = vunpack.c.h.b16 %v639
  %v646 = vpack.c.b16 %v643, %v642
  %v647 = vpack.c.b16 %v645, %v644
  %650 = vst [vmem:[%s6] sm:$0xff] %v646
  %651 = vst [vmem:[%s6 + $0x10] sm:$0xff] %v647
  %v652 = vld [vmem:[#allocation2] sm:$0x1]
  %v653 = vld [vmem:[#allocation2 + $0x1] sm:$0x1]
  %v654 = vld [vmem:[#allocation2 + $0x2] sm:$0x1]
  %v655 = vld [vmem:[#allocation2 + $0x3] sm:$0x1]
  %v656 = vld [vmem:[#allocation2 + $0x4] sm:$0x1]
  %v657 = vld [vmem:[#allocation2 + $0x5] sm:$0x1]
  %v658 = vld [vmem:[#allocation2 + $0x6] sm:$0x1]
  %v659 = vld [vmem:[#allocation2 + $0x7] sm:$0x1]
  %v660 = vld [vmem:[#allocation2 + $0x8] sm:$0x1]
  %v661 = vld [vmem:[#allocation2 + $0x9] sm:$0x1]
  %v662 = vld [vmem:[#allocation2 + $0xa] sm:$0x1]
  %v663 = vld [vmem:[#allocation2 + $0xb] sm:$0x1]
  %v664 = vld [vmem:[#allocation2 + $0xc] sm:$0x1]
  %v665 = vld [vmem:[#allocation2 + $0xd] sm:$0x1]
  %v666 = vld [vmem:[#allocation2 + $0xe] sm:$0x1]
  %v667 = vld [vmem:[#allocation2 + $0xf] sm:$0x1]
  %v685 = vunpack.c.l.s4 1966171168
  %v686 = vunpack.c.0.s8 %v685
  %v687 = vlaneseq
  %v688 = vshrl.u32 %v687, 7
  %v689 = vsub.s32 %v686, %v688
  %v690 = vrot.slane %v652, %v689
  %v692 = vunpack.c.l.s4 1966171168
  %v693 = vunpack.c.0.s8 %v692
  %v694 = vlaneseq
  %v695 = vshrl.u32 %v694, 7
  %v696 = vsub.s32 %v693, %v695
  %v697 = vrot.slane %v690, %v696
  %v699 = vunpack.c.l.s4 1966171168
  %v700 = vunpack.c.0.s8 %v699
  %v701 = vlaneseq
  %v702 = vshrl.u32 %v701, 7
  %v703 = vsub.s32 %v700, %v702
  %v704 = vrot.slane %v653, %v703
  %v706 = vunpack.c.l.s4 1966171168
  %v707 = vunpack.c.0.s8 %v706
  %v708 = vlaneseq
  %v709 = vshrl.u32 %v708, 7
  %v710 = vsub.s32 %v707, %v709
  %v711 = vrot.slane %v704, %v710
  %v713 = vunpack.c.l.s4 1966171168
  %v714 = vunpack.c.0.s8 %v713
  %v715 = vlaneseq
  %v716 = vshrl.u32 %v715, 7
  %v717 = vsub.s32 %v714, %v716
  %v718 = vrot.slane %v654, %v717
  %v720 = vunpack.c.l.s4 1966171168
  %v721 = vunpack.c.0.s8 %v720
  %v722 = vlaneseq
  %v723 = vshrl.u32 %v722, 7
  %v724 = vsub.s32 %v721, %v723
  %v725 = vrot.slane %v718, %v724
  %v727 = vunpack.c.l.s4 1966171168
  %v728 = vunpack.c.0.s8 %v727
  %v729 = vlaneseq
  %v730 = vshrl.u32 %v729, 7
  %v731 = vsub.s32 %v728, %v730
  %v732 = vrot.slane %v655, %v731
  %v734 = vunpack.c.l.s4 1966171168
  %v735 = vunpack.c.0.s8 %v734
  %v736 = vlaneseq
  %v737 = vshrl.u32 %v736, 7
  %v738 = vsub.s32 %v735, %v737
  %v739 = vrot.slane %v732, %v738
  %v741 = vunpack.c.l.s4 1966171168
  %v742 = vunpack.c.0.s8 %v741
  %v743 = vlaneseq
  %v744 = vshrl.u32 %v743, 7
  %v745 = vsub.s32 %v742, %v744
  %v746 = vrot.slane %v656, %v745
  %v748 = vunpack.c.l.s4 1966171168
  %v749 = vunpack.c.0.s8 %v748
  %v750 = vlaneseq
  %v751 = vshrl.u32 %v750, 7
  %v752 = vsub.s32 %v749, %v751
  %v753 = vrot.slane %v746, %v752
  %v755 = vunpack.c.l.s4 1966171168
  %v756 = vunpack.c.0.s8 %v755
  %v757 = vlaneseq
  %v758 = vshrl.u32 %v757, 7
  %v759 = vsub.s32 %v756, %v758
  %v760 = vrot.slane %v657, %v759
  %v762 = vunpack.c.l.s4 1966171168
  %v763 = vunpack.c.0.s8 %v762
  %v764 = vlaneseq
  %v765 = vshrl.u32 %v764, 7
  %v766 = vsub.s32 %v763, %v765
  %v767 = vrot.slane %v760, %v766
  %v769 = vunpack.c.l.s4 1966171168
  %v770 = vunpack.c.0.s8 %v769
  %v771 = vlaneseq
  %v772 = vshrl.u32 %v771, 7
  %v773 = vsub.s32 %v770, %v772
  %v774 = vrot.slane %v658, %v773
  %v776 = vunpack.c.l.s4 1966171168
  %v777 = vunpack.c.0.s8 %v776
  %v778 = vlaneseq
  %v779 = vshrl.u32 %v778, 7
  %v780 = vsub.s32 %v777, %v779
  %v781 = vrot.slane %v774, %v780
  %v783 = vunpack.c.l.s4 1966171168
  %v784 = vunpack.c.0.s8 %v783
  %v785 = vlaneseq
  %v786 = vshrl.u32 %v785, 7
  %v787 = vsub.s32 %v784, %v786
  %v788 = vrot.slane %v659, %v787
  %v790 = vunpack.c.l.s4 1966171168
  %v791 = vunpack.c.0.s8 %v790
  %v792 = vlaneseq
  %v793 = vshrl.u32 %v792, 7
  %v794 = vsub.s32 %v791, %v793
  %v795 = vrot.slane %v788, %v794
  %v797 = vunpack.c.l.s4 1966171168
  %v798 = vunpack.c.0.s8 %v797
  %v799 = vlaneseq
  %v800 = vshrl.u32 %v799, 7
  %v801 = vsub.s32 %v798, %v800
  %v802 = vrot.slane %v660, %v801
  %v804 = vunpack.c.l.s4 1966171168
  %v805 = vunpack.c.0.s8 %v804
  %v806 = vlaneseq
  %v807 = vshrl.u32 %v806, 7
  %v808 = vsub.s32 %v805, %v807
  %v809 = vrot.slane %v802, %v808
  %v811 = vunpack.c.l.s4 1966171168
  %v812 = vunpack.c.0.s8 %v811
  %v813 = vlaneseq
  %v814 = vshrl.u32 %v813, 7
  %v815 = vsub.s32 %v812, %v814
  %v816 = vrot.slane %v661, %v815
  %v818 = vunpack.c.l.s4 1966171168
  %v819 = vunpack.c.0.s8 %v818
  %v820 = vlaneseq
  %v821 = vshrl.u32 %v820, 7
  %v822 = vsub.s32 %v819, %v821
  %v823 = vrot.slane %v816, %v822
  %v825 = vunpack.c.l.s4 1966171168
  %v826 = vunpack.c.0.s8 %v825
  %v827 = vlaneseq
  %v828 = vshrl.u32 %v827, 7
  %v829 = vsub.s32 %v826, %v828
  %v830 = vrot.slane %v662, %v829
  %v832 = vunpack.c.l.s4 1966171168
  %v833 = vunpack.c.0.s8 %v832
  %v834 = vlaneseq
  %v835 = vshrl.u32 %v834, 7
  %v836 = vsub.s32 %v833, %v835
  %v837 = vrot.slane %v830, %v836
  %v839 = vunpack.c.l.s4 1966171168
  %v840 = vunpack.c.0.s8 %v839
  %v841 = vlaneseq
  %v842 = vshrl.u32 %v841, 7
  %v843 = vsub.s32 %v840, %v842
  %v844 = vrot.slane %v663, %v843
  %v846 = vunpack.c.l.s4 1966171168
  %v847 = vunpack.c.0.s8 %v846
  %v848 = vlaneseq
  %v849 = vshrl.u32 %v848, 7
  %v850 = vsub.s32 %v847, %v849
  %v851 = vrot.slane %v844, %v850
  %v853 = vunpack.c.l.s4 1966171168
  %v854 = vunpack.c.0.s8 %v853
  %v855 = vlaneseq
  %v856 = vshrl.u32 %v855, 7
  %v857 = vsub.s32 %v854, %v856
  %v858 = vrot.slane %v664, %v857
  %v860 = vunpack.c.l.s4 1966171168
  %v861 = vunpack.c.0.s8 %v860
  %v862 = vlaneseq
  %v863 = vshrl.u32 %v862, 7
  %v864 = vsub.s32 %v861, %v863
  %v865 = vrot.slane %v858, %v864
  %v867 = vunpack.c.l.s4 1966171168
  %v868 = vunpack.c.0.s8 %v867
  %v869 = vlaneseq
  %v870 = vshrl.u32 %v869, 7
  %v871 = vsub.s32 %v868, %v870
  %v872 = vrot.slane %v665, %v871
  %v874 = vunpack.c.l.s4 1966171168
  %v875 = vunpack.c.0.s8 %v874
  %v876 = vlaneseq
  %v877 = vshrl.u32 %v876, 7
  %v878 = vsub.s32 %v875, %v877
  %v879 = vrot.slane %v872, %v878
  %v881 = vunpack.c.l.s4 1966171168
  %v882 = vunpack.c.0.s8 %v881
  %v883 = vlaneseq
  %v884 = vshrl.u32 %v883, 7
  %v885 = vsub.s32 %v882, %v884
  %v886 = vrot.slane %v666, %v885
  %v888 = vunpack.c.l.s4 1966171168
  %v889 = vunpack.c.0.s8 %v888
  %v890 = vlaneseq
  %v891 = vshrl.u32 %v890, 7
  %v892 = vsub.s32 %v889, %v891
  %v893 = vrot.slane %v886, %v892
  %v895 = vunpack.c.l.s4 1966171168
  %v896 = vunpack.c.0.s8 %v895
  %v897 = vlaneseq
  %v898 = vshrl.u32 %v897, 7
  %v899 = vsub.s32 %v896, %v898
  %v900 = vrot.slane %v667, %v899
  %v902 = vunpack.c.l.s4 1966171168
  %v903 = vunpack.c.0.s8 %v902
  %v904 = vlaneseq
  %v905 = vshrl.u32 %v904, 7
  %v906 = vsub.s32 %v903, %v905
  %v907 = vrot.slane %v900, %v906
  %v908 = vunpack.c.l.b16 %v697
  %v909 = vunpack.c.l.b16 %v711
  %v910 = vunpack.c.l.b16 %v725
  %v911 = vunpack.c.l.b16 %v739
  %v912 = vunpack.c.l.b16 %v753
  %v913 = vunpack.c.l.b16 %v767
  %v914 = vunpack.c.l.b16 %v781
  %v915 = vunpack.c.l.b16 %v795
  %v916 = vunpack.c.l.b16 %v809
  %v917 = vunpack.c.l.b16 %v823
  %v918 = vunpack.c.l.b16 %v837
  %v919 = vunpack.c.l.b16 %v851
  %v920 = vunpack.c.l.b16 %v865
  %v921 = vunpack.c.l.b16 %v879
  %v922 = vunpack.c.l.b16 %v893
  %v923 = vunpack.c.l.b16 %v907
  %v924 = vrot.slane %v908, 1
  %v925 = vsel %vm516, %v909, %v924
  %v926 = vrot.slane %v910, 7
  %v927 = vsel %vm519, %v926, %v925
  %v928 = vrot.slane %v911, 6
  %v929 = vsel %vm522, %v928, %v927
  %v930 = vrot.slane %v912, 5
  %v931 = vsel %vm525, %v930, %v929
  %v932 = vrot.slane %v913, 4
  %v933 = vsel %vm528, %v932, %v931
  %v934 = vrot.slane %v914, 3
  %v935 = vsel %vm531, %v934, %v933
  %v936 = vrot.slane %v915, 2
  %v937 = vsel %vm534, %v936, %v935
  %v938 = vrot.slane %v916, 1
  %v939 = vsel %vm516, %v917, %v938
  %v940 = vrot.slane %v918, 7
  %v941 = vsel %vm519, %v940, %v939
  %v942 = vrot.slane %v919, 6
  %v943 = vsel %vm522, %v942, %v941
  %v944 = vrot.slane %v920, 5
  %v945 = vsel %vm525, %v944, %v943
  %v946 = vrot.slane %v921, 4
  %v947 = vsel %vm528, %v946, %v945
  %v948 = vrot.slane %v922, 3
  %v949 = vsel %vm531, %v948, %v947
  %v950 = vrot.slane %v923, 2
  %v951 = vsel %vm534, %v950, %v949
  %v952 = vpack.c.b16 %v951, %v937
  %v954 = vsel %vm591, %v952, 0
  %956 = vmatprep.subr.bf16.mxu0 %v576
  %957 = vmatpush1.bf16.msra.mxu0 %v575
  %958 = vmatprep.subr.bf16.mxu0 %v578
  %959 = vmatpush1.bf16.msra.mxu0 %v577
  %960 = vmatprep.subr.bf16.mxu0 %v580
  %961 = vmatpush1.bf16.msra.mxu0 %v579
  %962 = vmatprep.subr.bf16.mxu0 %v582
  %963 = vmatpush1.bf16.msra.mxu0 %v581
  %964 = vmatprep.subr.bf16.mxu0 0
  %965 = vmatpush1.bf16.msra.mxu0 0
  %966 = vmatprep.subr.bf16.mxu0 0
  %967 = vmatpush1.bf16.msra.mxu0 0
  %968 = vmatprep.subr.bf16.mxu0 0
  %969 = vmatpush1.bf16.msra.mxu0 0
  %970 = vmatprep.subr.bf16.mxu0 0
  %971 = vmatpush1.bf16.msra.mxu0 0
  %972 = vmatprep.subr.bf16.mxu0 0
  %973 = vmatpush1.bf16.msra.mxu0 0
  %974 = vmatprep.subr.bf16.mxu0 0
  %975 = vmatpush1.bf16.msra.mxu0 0
  %976 = vmatprep.subr.bf16.mxu0 0
  %977 = vmatpush1.bf16.msra.mxu0 0
  %978 = vmatprep.subr.bf16.mxu0 0
  %979 = vmatpush1.bf16.msra.mxu0 0
  %980 = vmatprep.subr.bf16.mxu0 0
  %981 = vmatpush1.bf16.msra.mxu0 0
  %982 = vmatprep.subr.bf16.mxu0 0
  %983 = vmatpush1.bf16.msra.mxu0 0
  %984 = vmatprep.subr.bf16.mxu0 0
  %985 = vmatpush1.bf16.msra.mxu0 0
  %986 = vmatprep.subr.bf16.mxu0 0
  %987 = vmatpush1.bf16.msra.mxu0 0
  %988 = vmatprep.mubr.bf16.mxu0 0
  %989 = vmatmul.mubr.bf16.gmra.mrb[0].mxu0 %v954
  %v990 = vpop.f32.mrb[0].mxu0
  %v991 = vadd.f32 %v252, %v990
  %v992 = vpop.f32.mrb[0].mxu0
  %v993 = vadd.f32 %v256, %v992
  %v994 = vpop.f32.mrb[0].mxu0
  %v995 = vadd.f32 %v252, %v994
  %v996 = vpop.f32.mrb[0].mxu0
  %v997 = vadd.f32 %v256, %v996
  %998 = vdwg.mxu0
  %v999 = vpack.c.bf16 %v995, %v991
  %v1000 = vpack.c.bf16 %v997, %v993
  %v1003 = vunpack.c.l.b16 %v999
  %v1004 = vunpack.c.l.b16 %v1000
  %v1005 = vunpack.c.h.b16 %v999
  %v1006 = vunpack.c.h.b16 %v1000
  %v1007 = vpack.c.b16 %v1004, %v1003
  %v1008 = vpack.c.b16 %v1006, %v1005
  %1011 = vst [vmem:[%s6 + $0x8] sm:$0xff] %v1007
  %1012 = vst [vmem:[%s6 + $0x18] sm:$0xff] %v1008
  // Predicated region
  $region33: #{noise_generator_forward.4} parent=0 // pred_check
    _
  $region34: #{noise_generator_forward.4} parent=0 // pred_check_branch
    %1014 = sbr.rel (0) target = $region36
  $region35: #{noise_generator_forward.4} parent=0 // pred_region
    _
  $region36: #{noise_generator_forward.4} parent=0 // pred_fallthru
    _
  // Predicated region
  $region37: #{noise_generator_forward.4} parent=0 // pred_check
    _
  $region38: #{noise_generator_forward.4} parent=0 // pred_check_branch
    %1016 = sbr.rel (0) target = $region40
  $region39: #{noise_generator_forward.4} parent=0 // pred_region
    _
  $region40: #{noise_generator_forward.4} parent=0 // pred_fallthru
    _
  // Predicated region
  $region41: #{noise_generator_forward.4} parent=0 // pred_check
    _
  $region42: #{noise_generator_forward.4} parent=0 // pred_check_branch
    %1018 = sbr.rel (0) target = $region44
  $region43: #{noise_generator_forward.4} parent=0 // pred_region
    _
  $region44: #{noise_generator_forward.4} parent=0 // pred_fallthru
    _
  // Predicated region
  $region45: #{noise_generator_forward.4} parent=0 // pred_check
    _
  $region46: #{noise_generator_forward.4} parent=0 // pred_check_branch
    %1020 = sbr.rel (0) target = $region48
  $region47: #{noise_generator_forward.4} parent=0 // pred_region
    _
  $region48: #{noise_generator_forward.4} parent=0 // pred_fallthru
    _
  // Predicated region
  $region49: #{noise_generator_forward.4} parent=0 // pred_check
    _
  $region50: #{noise_generator_forward.4} parent=0 // pred_check_branch
    %1022 = sbr.rel (0) target = $region52
  $region51: #{noise_generator_forward.4} parent=0 // pred_region
    _
  $region52: #{noise_generator_forward.4} parent=0 // pred_fallthru
    _
  // Predicated region
  $region53: #{noise_generator_forward.4} parent=0 // pred_check
    _
  $region54: #{noise_generator_forward.4} parent=0 // pred_check_branch
    %1024 = sbr.rel (0) target = $region56
  $region55: #{noise_generator_forward.4} parent=0 // pred_region
    _
  $region56: #{noise_generator_forward.4} parent=0 // pred_fallthru
    _

// kernel: noise_generator_forward.5
$region0: #{noise_generator_forward.5}
  #allocation0 [shape = 'u32[]', space=smem, size = 0x4, offset = 0x4, fixed_abs, tag = 'smem constant byte address 0x4 - core index']
  #allocation1 [shape = 'u32[144,128]{1,0:T(1,128)}', space=vmem, size = 0x12000, scoped, tag = 'internal scratch']
  #allocation2 [shape = 'bf16[16,2,64]{2,1,0:T(2,128)(2,1)}', space=vmem, size = 0x2000, scoped, tag = 'scratch operand']
  #allocation3 [shape = 'f32[1,1]{1,0:T(1,128)S(1)}', space=vmem, size = 0x200, scoped, tag = 'scoped memory for noise_generator_forward.5']
  %s0 = inlined_call_operand.vmem [shape: bf16[16,2,256], index: 0, kind: input, shape index: {}]
  %s1 = inlined_call_operand.vmem [shape: bf16[64,256], index: 1, kind: input, shape index: {}]
  %s2 = inlined_call_operand.vmem [shape: f32[2,64], index: 2, kind: input, shape index: {}, may-alias: {2,3}]
  %s3 = inlined_call_operand.vmem [shape: f32[2,64], index: 3, kind: input, shape index: {}, may-alias: {2,3}]
  %s4 = inlined_call_operand.vmem [shape: bf16[64,64], index: 4, kind: input, shape index: {}]
  %s5 = inlined_call_operand.vmem [shape: f32[1,64], index: 5, kind: input, shape index: {}]
  %s6 = inlined_call_operand.vmem [shape: f32[1,64], index: 6, kind: input, shape index: {}]
  %s7 = inlined_call_operand.<no memory space> [shape: f32[1,1], index: 7, kind: input, shape index: {}]
  %s8 = inlined_call_operand.vmem [shape: f32[16,2], index: 8, kind: output, shape index: {0}]
  %s9 = inlined_call_operand.vmem [shape: f32[2,2,32], index: 9, kind: output, shape index: {1}]
  %s10 = inlined_call_operand.vmem [shape: f32[2,2,32], index: 10, kind: output, shape index: {2}]
  %11 = xla_tuple %s8, %s9, %s10
  %s12 = sld [smem:[#allocation0]]
  $region65: #{noise_generator_forward.5} parent=0
    _
  %s14 = ssub.s32 1, %s12
  %s15 = scalar_select 0, %s14, %s12
  %v16 = vstv %s7
  %17 = vst [vmem:[#allocation3] sm:$0x1] %v16
  // Predicated region
  $region2: #{noise_generator_forward.5} parent=0 // pred_check
    _
  $region3: #{noise_generator_forward.5} parent=0 // pred_check_branch
    %19 = sbr.rel (0) target = $region5
  $region4: #{noise_generator_forward.5} parent=0 // pred_region
    _
  $region5: #{noise_generator_forward.5} parent=0 // pred_fallthru
    _
  // Predicated region
  $region6: #{noise_generator_forward.5} parent=0 // pred_check
    _
  $region7: #{noise_generator_forward.5} parent=0 // pred_check_branch
    %21 = sbr.rel (0) target = $region9
  $region8: #{noise_generator_forward.5} parent=0 // pred_region
    _
  $region9: #{noise_generator_forward.5} parent=0 // pred_fallthru
    _
  // Predicated region
  $region10: #{noise_generator_forward.5} parent=0 // pred_check
    _
  $region11: #{noise_generator_forward.5} parent=0 // pred_check_branch
    %23 = sbr.rel (0) target = $region13
  $region12: #{noise_generator_forward.5} parent=0 // pred_region
    _
  $region13: #{noise_generator_forward.5} parent=0 // pred_fallthru
    _
  // Predicated region
  $region14: #{noise_generator_forward.5} parent=0 // pred_check
    _
  $region15: #{noise_generator_forward.5} parent=0 // pred_check_branch
    %25 = sbr.rel (0) target = $region17
  $region16: #{noise_generator_forward.5} parent=0 // pred_region
    _
  $region17: #{noise_generator_forward.5} parent=0 // pred_fallthru
    _
  // Predicated region
  $region18: #{noise_generator_forward.5} parent=0 // pred_check
    _
  $region19: #{noise_generator_forward.5} parent=0 // pred_check_branch
    %27 = sbr.rel (0) target = $region21
  $region20: #{noise_generator_forward.5} parent=0 // pred_region
    _
  $region21: #{noise_generator_forward.5} parent=0 // pred_fallthru
    _
  // Predicated region
  $region22: #{noise_generator_forward.5} parent=0 // pred_check
    _
  $region23: #{noise_generator_forward.5} parent=0 // pred_check_branch
    %29 = sbr.rel (0) target = $region25
  $region24: #{noise_generator_forward.5} parent=0 // pred_region
    _
  $region25: #{noise_generator_forward.5} parent=0 // pred_fallthru
    _
  // Predicated region
  $region26: #{noise_generator_forward.5} parent=0 // pred_check
    _
  $region27: #{noise_generator_forward.5} parent=0 // pred_check_branch
    %31 = sbr.rel (0) target = $region29
  $region28: #{noise_generator_forward.5} parent=0 // pred_region
    _
  $region29: #{noise_generator_forward.5} parent=0 // pred_fallthru
    _
  // Predicated region
  $region30: #{noise_generator_forward.5} parent=0 // pred_check
    _
  $region31: #{noise_generator_forward.5} parent=0 // pred_check_branch
    %33 = sbr.rel (0) target = $region33
  $region32: #{noise_generator_forward.5} parent=0 // pred_region
    _
  $region33: #{noise_generator_forward.5} parent=0 // pred_fallthru
    _
  %v35 = vld [vmem:[%s1] sm:$0xff]
  %v36 = vld [vmem:[%s1 + $0x8] sm:$0xff]
  %v37 = vld [vmem:[%s1 + $0x10] sm:$0xff]
  %v38 = vld [vmem:[%s1 + $0x18] sm:$0xff]
  %v39 = vld [vmem:[%s1 + $0x20] sm:$0xff]
  %v40 = vld [vmem:[%s1 + $0x28] sm:$0xff]
  %v41 = vld [vmem:[%s1 + $0x30] sm:$0xff]
  %v42 = vld [vmem:[%s1 + $0x38] sm:$0xff]
  %v43 = vld [vmem:[%s2] sm:$0x3]
  %v44 = vld [vmem:[%s3] sm:$0x3]
  loop: start=0, step=1, limit=16
  $region34: #{noise_generator_forward.5} parent=0 // loop_pre_header
    _
  $region35: #{noise_generator_forward.5} parent=0 // loop_header
    %s46 = sphi 0, %s50
    %p47 = scmp.ge.s32.totalorder %s46, 16
    %v51 = vphi %v43, %v196
    %v52 = vphi %v44, %v214
  $region36: #{noise_generator_forward.5} parent=0 // loop_header_branch
    %49 = sbr.rel (%p47) target = $region40
  $region37: #{noise_generator_forward.5} parent=0 // loop_body
    %s53 = smul.u32 %s46, 2
    %s54 = scalar_lea.vmem %s0, %s53
    %v55 = vld [vmem:[%s54] sm:$0x3]
    %v56 = vunpack.c.l.bf16 %v55
    %v57 = vpack.c.bf16 %v51, %v51
    %v66 = vunpack.c.l.b16 %v35
    %v67 = vunpack.c.h.b16 %v35
    %v68 = vunpack.c.l.b16 %v36
    %v69 = vunpack.c.h.b16 %v36
    %v70 = vunpack.c.l.b16 %v37
    %v71 = vunpack.c.h.b16 %v37
    %v72 = vunpack.c.l.b16 %v38
    %v73 = vunpack.c.h.b16 %v38
    %v74 = vunpack.c.l.b16 %v39
    %v75 = vunpack.c.h.b16 %v39
    %v76 = vunpack.c.l.b16 %v40
    %v77 = vunpack.c.h.b16 %v40
    %v78 = vunpack.c.l.b16 %v41
    %v79 = vunpack.c.h.b16 %v41
    %v80 = vunpack.c.l.b16 %v42
    %v81 = vunpack.c.h.b16 %v42
    %v82 = vpack.c.b16 %v68, %v66
    %v83 = vpack.c.b16 %v69, %v67
    %v84 = vpack.c.b16 %v72, %v70
    %v85 = vpack.c.b16 %v73, %v71
    %v86 = vpack.c.b16 %v76, %v74
    %v87 = vpack.c.b16 %v77, %v75
    %v88 = vpack.c.b16 %v80, %v78
    %v89 = vpack.c.b16 %v81, %v79
    %vm98 = vcmask 523264
    %v100 = vsel %vm98, %v57, 0
    %102 = vmatprep.subr.bf16.mxu0 %v83
    %103 = vmatpush1.bf16.msra.mxu0 %v82
    %104 = vmatprep.subr.bf16.mxu0 %v85
    %105 = vmatpush1.bf16.msra.mxu0 %v84
    %106 = vmatprep.subr.bf16.mxu0 %v87
    %107 = vmatpush1.bf16.msra.mxu0 %v86
    %108 = vmatprep.subr.bf16.mxu0 %v89
    %109 = vmatpush1.bf16.msra.mxu0 %v88
    %110 = vmatprep.subr.bf16.mxu0 0
    %111 = vmatpush1.bf16.msra.mxu0 0
    %112 = vmatprep.subr.bf16.mxu0 0
    %113 = vmatpush1.bf16.msra.mxu0 0
    %114 = vmatprep.subr.bf16.mxu0 0
    %115 = vmatpush1.bf16.msra.mxu0 0
    %116 = vmatprep.subr.bf16.mxu0 0
    %117 = vmatpush1.bf16.msra.mxu0 0
    %118 = vmatprep.subr.bf16.mxu0 0
    %119 = vmatpush1.bf16.msra.mxu0 0
    %120 = vmatprep.subr.bf16.mxu0 0
    %121 = vmatpush1.bf16.msra.mxu0 0
    %122 = vmatprep.subr.bf16.mxu0 0
    %123 = vmatpush1.bf16.msra.mxu0 0
    %124 = vmatprep.subr.bf16.mxu0 0
    %125 = vmatpush1.bf16.msra.mxu0 0
    %126 = vmatprep.subr.bf16.mxu0 0
    %127 = vmatpush1.bf16.msra.mxu0 0
    %128 = vmatprep.subr.bf16.mxu0 0
    %129 = vmatpush1.bf16.msra.mxu0 0
    %130 = vmatprep.subr.bf16.mxu0 0
    %131 = vmatpush1.bf16.msra.mxu0 0
    %132 = vmatprep.subr.bf16.mxu0 0
    %133 = vmatpush1.bf16.msra.mxu0 0
    %134 = vmatprep.mubr.bf16.mxu0 0
    %135 = vmatmul.mubr.bf16.gmra.mrb[0].mxu0 %v100
    %v136 = vpop.f32.mrb[0].mxu0
    %v137 = vadd.f32 0.0, %v136
    %v138 = vpop.f32.mrb[0].mxu0
    %v139 = vadd.f32 0.0, %v138
    %v140 = vpop.f32.mrb[0].mxu0
    %v141 = vpop.f32.mrb[0].mxu0
    %142 = vdwg.mxu0
    %v145 = vcombine.low %v137, %v139
    %v147 = vunpack.c.l.s4 1983009808
    %v148 = vunpack.c.0.s8 %v147
    %v149 = vlaneseq
    %v150 = vshrl.u32 %v149, 7
    %v151 = vsub.s32 %v148, %v150
    %v152 = vrot.slane %v145, %v151
    %v154 = vadd.f32 %v56, %v152
    %v155 = vsub.f32 0.0, %v154
    %v156 = vmul.f32 %v155, 1.442695
    %v157 = vpow.pop %v156
    %v158 = vadd.f32 %v157, 1.0
    %v159 = vrcp.pop %v158
    %v161 = vrot.slane %v154, 2
    %v163 = vtanh.pop %v161
    %164 = vrot.lane.b32.xlu0 %v154, 64
    %v165 = vpop.permute.xlu0 %164
    %v166 = vrot.slane %v165, 2
    %v168 = vsub.f32 0.0, %v166
    %v169 = vmul.f32 %v168, 1.442695
    %v170 = vpow.pop %v169
    %v171 = vadd.f32 %v170, 1.0
    %v172 = vrcp.pop %v171
    %v175 = vunpack.c.l.s4 1983009808
    %v176 = vunpack.c.0.s8 %v175
    %v177 = vlaneseq
    %v178 = vshrl.u32 %v177, 7
    %v179 = vsub.s32 %v176, %v178
    %v180 = vrot.slane %v52, %v179
    %181 = vrot.lane.b32.xlu0 %v180, 64
    %v182 = vpop.permute.xlu0 %181
    %v184 = vmul.f32 %v159, %v182
    %v185 = vmul.f32 %v159, %v163
    %187 = vrot.lane.b32.xlu0 %v185, 64
    %v188 = vpop.permute.xlu0 %187
    %v190 = vadd.f32 %v184, %v188
    %v191 = vtanh.pop %v190
    %193 = vrot.lane.b32.xlu0 %v191, 64
    %v194 = vpop.permute.xlu0 %193
    %v196 = vmul.f32 %v172, %v194
    %s197 = ssub.s32 15, %s46
    %v198 = vpack.c.bf16 %v196, %v196
    %s199 = scalar_lea.vmem [#allocation2], %s46
    %vm200 = vcmask 253952
    %201 = vst.msk [vmem:[%s199] sm:$0x1] %vm200, %v198
    %s202 = scalar_lea.vmem [#allocation2], %s197
    %vm203 = vcmask 516352
    %204 = vst.msk [vmem:[%s202] sm:$0x1] %vm203, %v198
    %v207 = vunpack.c.l.s4 1983009808
    %v208 = vunpack.c.0.s8 %v207
    %v209 = vlaneseq
    %v210 = vshrl.u32 %v209, 7
    %v211 = vsub.s32 %v208, %v210
    %v212 = vrot.slane %v190, %v211
    %213 = vrot.lane.b32.xlu0 %v212, 64
    %v214 = vpop.permute.xlu0 %213
  $region38: #{noise_generator_forward.5} parent=0 // loop_footer
    %s50 = sadd.s32 1, %s46
  $region39: #{noise_generator_forward.5} parent=0 // loop_footer_branch
    %45 = sbr.rel target = $region35
  $region40: #{noise_generator_forward.5} parent=0 // loop_exit
    _
  %vm216 = vcmask 254976
  %217 = vst.msk [vmem:[%s9] sm:$0x3] %vm216, %v51
  %219 = vrot.lane.b32.xlu0 %v51, 96
  %v220 = vpop.permute.xlu0 %219
  %s222 = scalar_lea.vmem %s9, 2
  %223 = vst.msk [vmem:[%s222] sm:$0x3] %vm216, %v220
  %224 = vst.msk [vmem:[%s10] sm:$0x3] %vm216, %v52
  %226 = vrot.lane.b32.xlu0 %v52, 96
  %v227 = vpop.permute.xlu0 %226
  %s229 = scalar_lea.vmem %s10, 2
  %230 = vst.msk [vmem:[%s229] sm:$0x3] %vm216, %v227
  %v231 = vld [vmem:[%s4] sm:$0xf]
  %v232 = vld [vmem:[%s4 + $0x4] sm:$0xf]
  %v233 = vld [vmem:[%s4 + $0x8] sm:$0xf]
  %v234 = vld [vmem:[%s4 + $0xc] sm:$0xf]
  %v235 = vld [vmem:[%s4 + $0x10] sm:$0xf]
  %v236 = vld [vmem:[%s4 + $0x14] sm:$0xf]
  %v237 = vld [vmem:[%s4 + $0x18] sm:$0xf]
  %v238 = vld [vmem:[%s4 + $0x1c] sm:$0xf]
  %v239 = vld [vmem:[%s5] sm:$0x1]
  %v240 = vld [vmem:[%s6] sm:$0x1]
  %v241 = vld [vmem:[#allocation3] sm:$0x1]
  %v242 = vld [vmem:[#allocation2] sm:$0x1]
  %v243 = vld [vmem:[#allocation2 + $0x1] sm:$0x1]
  %v244 = vld [vmem:[#allocation2 + $0x2] sm:$0x1]
  %v245 = vld [vmem:[#allocation2 + $0x3] sm:$0x1]
  %v246 = vld [vmem:[#allocation2 + $0x4] sm:$0x1]
  %v247 = vld [vmem:[#allocation2 + $0x5] sm:$0x1]
  %v248 = vld [vmem:[#allocation2 + $0x6] sm:$0x1]
  %v249 = vld [vmem:[#allocation2 + $0x7] sm:$0x1]
  %v250 = vld [vmem:[#allocation2 + $0x8] sm:$0x1]
  %v251 = vld [vmem:[#allocation2 + $0x9] sm:$0x1]
  %v252 = vld [vmem:[#allocation2 + $0xa] sm:$0x1]
  %v253 = vld [vmem:[#allocation2 + $0xb] sm:$0x1]
  %v254 = vld [vmem:[#allocation2 + $0xc] sm:$0x1]
  %v255 = vld [vmem:[#allocation2 + $0xd] sm:$0x1]
  %v256 = vld [vmem:[#allocation2 + $0xe] sm:$0x1]
  %v257 = vld [vmem:[#allocation2 + $0xf] sm:$0x1]
  %v259 = vlaneseq
  %v260 = vshrl.u32 %v259, 7
  %v261 = vsub.s32 0, %v260
  %v262 = vrot.slane %v239, %v261
  %v281 = vunpack.c.l.s4 1966171168
  %v282 = vunpack.c.0.s8 %v281
  %v283 = vlaneseq
  %v284 = vshrl.u32 %v283, 7
  %v285 = vsub.s32 %v282, %v284
  %v286 = vrot.slane %v242, %v285
  %v288 = vunpack.c.l.s4 1966171168
  %v289 = vunpack.c.0.s8 %v288
  %v290 = vlaneseq
  %v291 = vshrl.u32 %v290, 7
  %v292 = vsub.s32 %v289, %v291
  %v293 = vrot.slane %v286, %v292
  %v295 = vunpack.c.l.s4 1966171168
  %v296 = vunpack.c.0.s8 %v295
  %v297 = vlaneseq
  %v298 = vshrl.u32 %v297, 7
  %v299 = vsub.s32 %v296, %v298
  %v300 = vrot.slane %v243, %v299
  %v302 = vunpack.c.l.s4 1966171168
  %v303 = vunpack.c.0.s8 %v302
  %v304 = vlaneseq
  %v305 = vshrl.u32 %v304, 7
  %v306 = vsub.s32 %v303, %v305
  %v307 = vrot.slane %v300, %v306
  %v309 = vunpack.c.l.s4 1966171168
  %v310 = vunpack.c.0.s8 %v309
  %v311 = vlaneseq
  %v312 = vshrl.u32 %v311, 7
  %v313 = vsub.s32 %v310, %v312
  %v314 = vrot.slane %v244, %v313
  %v316 = vunpack.c.l.s4 1966171168
  %v317 = vunpack.c.0.s8 %v316
  %v318 = vlaneseq
  %v319 = vshrl.u32 %v318, 7
  %v320 = vsub.s32 %v317, %v319
  %v321 = vrot.slane %v314, %v320
  %v323 = vunpack.c.l.s4 1966171168
  %v324 = vunpack.c.0.s8 %v323
  %v325 = vlaneseq
  %v326 = vshrl.u32 %v325, 7
  %v327 = vsub.s32 %v324, %v326
  %v328 = vrot.slane %v245, %v327
  %v330 = vunpack.c.l.s4 1966171168
  %v331 = vunpack.c.0.s8 %v330
  %v332 = vlaneseq
  %v333 = vshrl.u32 %v332, 7
  %v334 = vsub.s32 %v331, %v333
  %v335 = vrot.slane %v328, %v334
  %v337 = vunpack.c.l.s4 1966171168
  %v338 = vunpack.c.0.s8 %v337
  %v339 = vlaneseq
  %v340 = vshrl.u32 %v339, 7
  %v341 = vsub.s32 %v338, %v340
  %v342 = vrot.slane %v246, %v341
  %v344 = vunpack.c.l.s4 1966171168
  %v345 = vunpack.c.0.s8 %v344
  %v346 = vlaneseq
  %v347 = vshrl.u32 %v346, 7
  %v348 = vsub.s32 %v345, %v347
  %v349 = vrot.slane %v342, %v348
  %v351 = vunpack.c.l.s4 1966171168
  %v352 = vunpack.c.0.s8 %v351
  %v353 = vlaneseq
  %v354 = vshrl.u32 %v353, 7
  %v355 = vsub.s32 %v352, %v354
  %v356 = vrot.slane %v247, %v355
  %v358 = vunpack.c.l.s4 1966171168
  %v359 = vunpack.c.0.s8 %v358
  %v360 = vlaneseq
  %v361 = vshrl.u32 %v360, 7
  %v362 = vsub.s32 %v359, %v361
  %v363 = vrot.slane %v356, %v362
  %v365 = vunpack.c.l.s4 1966171168
  %v366 = vunpack.c.0.s8 %v365
  %v367 = vlaneseq
  %v368 = vshrl.u32 %v367, 7
  %v369 = vsub.s32 %v366, %v368
  %v370 = vrot.slane %v248, %v369
  %v372 = vunpack.c.l.s4 1966171168
  %v373 = vunpack.c.0.s8 %v372
  %v374 = vlaneseq
  %v375 = vshrl.u32 %v374, 7
  %v376 = vsub.s32 %v373, %v375
  %v377 = vrot.slane %v370, %v376
  %v379 = vunpack.c.l.s4 1966171168
  %v380 = vunpack.c.0.s8 %v379
  %v381 = vlaneseq
  %v382 = vshrl.u32 %v381, 7
  %v383 = vsub.s32 %v380, %v382
  %v384 = vrot.slane %v249, %v383
  %v386 = vunpack.c.l.s4 1966171168
  %v387 = vunpack.c.0.s8 %v386
  %v388 = vlaneseq
  %v389 = vshrl.u32 %v388, 7
  %v390 = vsub.s32 %v387, %v389
  %v391 = vrot.slane %v384, %v390
  %v393 = vunpack.c.l.s4 1966171168
  %v394 = vunpack.c.0.s8 %v393
  %v395 = vlaneseq
  %v396 = vshrl.u32 %v395, 7
  %v397 = vsub.s32 %v394, %v396
  %v398 = vrot.slane %v250, %v397
  %v400 = vunpack.c.l.s4 1966171168
  %v401 = vunpack.c.0.s8 %v400
  %v402 = vlaneseq
  %v403 = vshrl.u32 %v402, 7
  %v404 = vsub.s32 %v401, %v403
  %v405 = vrot.slane %v398, %v404
  %v407 = vunpack.c.l.s4 1966171168
  %v408 = vunpack.c.0.s8 %v407
  %v409 = vlaneseq
  %v410 = vshrl.u32 %v409, 7
  %v411 = vsub.s32 %v408, %v410
  %v412 = vrot.slane %v251, %v411
  %v414 = vunpack.c.l.s4 1966171168
  %v415 = vunpack.c.0.s8 %v414
  %v416 = vlaneseq
  %v417 = vshrl.u32 %v416, 7
  %v418 = vsub.s32 %v415, %v417
  %v419 = vrot.slane %v412, %v418
  %v421 = vunpack.c.l.s4 1966171168
  %v422 = vunpack.c.0.s8 %v421
  %v423 = vlaneseq
  %v424 = vshrl.u32 %v423, 7
  %v425 = vsub.s32 %v422, %v424
  %v426 = vrot.slane %v252, %v425
  %v428 = vunpack.c.l.s4 1966171168
  %v429 = vunpack.c.0.s8 %v428
  %v430 = vlaneseq
  %v431 = vshrl.u32 %v430, 7
  %v432 = vsub.s32 %v429, %v431
  %v433 = vrot.slane %v426, %v432
  %v435 = vunpack.c.l.s4 1966171168
  %v436 = vunpack.c.0.s8 %v435
  %v437 = vlaneseq
  %v438 = vshrl.u32 %v437, 7
  %v439 = vsub.s32 %v436, %v438
  %v440 = vrot.slane %v253, %v439
  %v442 = vunpack.c.l.s4 1966171168
  %v443 = vunpack.c.0.s8 %v442
  %v444 = vlaneseq
  %v445 = vshrl.u32 %v444, 7
  %v446 = vsub.s32 %v443, %v445
  %v447 = vrot.slane %v440, %v446
  %v449 = vunpack.c.l.s4 1966171168
  %v450 = vunpack.c.0.s8 %v449
  %v451 = vlaneseq
  %v452 = vshrl.u32 %v451, 7
  %v453 = vsub.s32 %v450, %v452
  %v454 = vrot.slane %v254, %v453
  %v456 = vunpack.c.l.s4 1966171168
  %v457 = vunpack.c.0.s8 %v456
  %v458 = vlaneseq
  %v459 = vshrl.u32 %v458, 7
  %v460 = vsub.s32 %v457, %v459
  %v461 = vrot.slane %v454, %v460
  %v463 = vunpack.c.l.s4 1966171168
  %v464 = vunpack.c.0.s8 %v463
  %v465 = vlaneseq
  %v466 = vshrl.u32 %v465, 7
  %v467 = vsub.s32 %v464, %v466
  %v468 = vrot.slane %v255, %v467
  %v470 = vunpack.c.l.s4 1966171168
  %v471 = vunpack.c.0.s8 %v470
  %v472 = vlaneseq
  %v473 = vshrl.u32 %v472, 7
  %v474 = vsub.s32 %v471, %v473
  %v475 = vrot.slane %v468, %v474
  %v477 = vunpack.c.l.s4 1966171168
  %v478 = vunpack.c.0.s8 %v477
  %v479 = vlaneseq
  %v480 = vshrl.u32 %v479, 7
  %v481 = vsub.s32 %v478, %v480
  %v482 = vrot.slane %v256, %v481
  %v484 = vunpack.c.l.s4 1966171168
  %v485 = vunpack.c.0.s8 %v484
  %v486 = vlaneseq
  %v487 = vshrl.u32 %v486, 7
  %v488 = vsub.s32 %v485, %v487
  %v489 = vrot.slane %v482, %v488
  %v491 = vunpack.c.l.s4 1966171168
  %v492 = vunpack.c.0.s8 %v491
  %v493 = vlaneseq
  %v494 = vshrl.u32 %v493, 7
  %v495 = vsub.s32 %v492, %v494
  %v496 = vrot.slane %v257, %v495
  %v498 = vunpack.c.l.s4 1966171168
  %v499 = vunpack.c.0.s8 %v498
  %v500 = vlaneseq
  %v501 = vshrl.u32 %v500, 7
  %v502 = vsub.s32 %v499, %v501
  %v503 = vrot.slane %v496, %v502
  %v504 = vunpack.c.l.b16 %v293
  %v505 = vunpack.c.l.b16 %v307
  %v506 = vunpack.c.l.b16 %v321
  %v507 = vunpack.c.l.b16 %v335
  %v508 = vunpack.c.l.b16 %v349
  %v509 = vunpack.c.l.b16 %v363
  %v510 = vunpack.c.l.b16 %v377
  %v511 = vunpack.c.l.b16 %v391
  %v512 = vunpack.c.l.b16 %v405
  %v513 = vunpack.c.l.b16 %v419
  %v514 = vunpack.c.l.b16 %v433
  %v515 = vunpack.c.l.b16 %v447
  %v516 = vunpack.c.l.b16 %v461
  %v517 = vunpack.c.l.b16 %v475
  %v518 = vunpack.c.l.b16 %v489
  %v519 = vunpack.c.l.b16 %v503
  %v520 = vrot.slane %v505, 7
  %vm521 = vcmask 1041409
  %v522 = vsel %vm521, %v520, %v504
  %v523 = vrot.slane %v506, 6
  %vm524 = vcmask 1042434
  %v525 = vsel %vm524, %v523, %v522
  %v526 = vrot.slane %v507, 5
  %vm527 = vcmask 1043459
  %v528 = vsel %vm527, %v526, %v525
  %v529 = vrot.slane %v508, 4
  %vm530 = vcmask 1044484
  %v531 = vsel %vm530, %v529, %v528
  %v532 = vrot.slane %v509, 3
  %vm533 = vcmask 1045509
  %v534 = vsel %vm533, %v532, %v531
  %v535 = vrot.slane %v510, 2
  %vm536 = vcmask 1046534
  %v537 = vsel %vm536, %v535, %v534
  %v538 = vrot.slane %v511, 1
  %vm539 = vcmask 1047559
  %v540 = vsel %vm539, %v538, %v537
  %v541 = vrot.slane %v513, 7
  %v542 = vsel %vm521, %v541, %v512
  %v543 = vrot.slane %v514, 6
  %v544 = vsel %vm524, %v543, %v542
  %v545 = vrot.slane %v515, 5
  %v546 = vsel %vm527, %v545, %v544
  %v547 = vrot.slane %v516, 4
  %v548 = vsel %vm530, %v547, %v546
  %v549 = vrot.slane %v517, 3
  %v550 = vsel %vm533, %v549, %v548
  %v551 = vrot.slane %v518, 2
  %v552 = vsel %vm536, %v551, %v550
  %v553 = vrot.slane %v519, 1
  %v554 = vsel %vm539, %v553, %v552
  %v555 = vpack.c.b16 %v554, %v540
  %v564 = vunpack.c.l.b16 %v231
  %v565 = vunpack.c.l.b16 %v232
  %v566 = vunpack.c.l.b16 %v233
  %v567 = vunpack.c.l.b16 %v234
  %v568 = vunpack.c.l.b16 %v235
  %v569 = vunpack.c.l.b16 %v236
  %v570 = vunpack.c.l.b16 %v237
  %v571 = vunpack.c.l.b16 %v238
  %v572 = vpack.c.b16 %v565, %v564
  %v573 = vpack.c.b16 %v567, %v566
  %v574 = vpack.c.b16 %v569, %v568
  %v575 = vpack.c.b16 %v571, %v570
  %vm580 = vcmask 523264
  %v582 = vsel %vm580, %v555, 0
  %584 = vmatprep.subr.bf16.mxu0 0
  %585 = vmatpush1.bf16.msra.mxu0 %v572
  %586 = vmatprep.subr.bf16.mxu0 0
  %587 = vmatpush1.bf16.msra.mxu0 %v573
  %588 = vmatprep.subr.bf16.mxu0 0
  %589 = vmatpush1.bf16.msra.mxu0 %v574
  %590 = vmatprep.subr.bf16.mxu0 0
  %591 = vmatpush1.bf16.msra.mxu0 %v575
  %592 = vmatprep.subr.bf16.mxu0 0
  %593 = vmatpush1.bf16.msra.mxu0 0
  %594 = vmatprep.subr.bf16.mxu0 0
  %595 = vmatpush1.bf16.msra.mxu0 0
  %596 = vmatprep.subr.bf16.mxu0 0
  %597 = vmatpush1.bf16.msra.mxu0 0
  %598 = vmatprep.subr.bf16.mxu0 0
  %599 = vmatpush1.bf16.msra.mxu0 0
  %600 = vmatprep.subr.bf16.mxu0 0
  %601 = vmatpush1.bf16.msra.mxu0 0
  %602 = vmatprep.subr.bf16.mxu0 0
  %603 = vmatpush1.bf16.msra.mxu0 0
  %604 = vmatprep.subr.bf16.mxu0 0
  %605 = vmatpush1.bf16.msra.mxu0 0
  %606 = vmatprep.subr.bf16.mxu0 0
  %607 = vmatpush1.bf16.msra.mxu0 0
  %608 = vmatprep.subr.bf16.mxu0 0
  %609 = vmatpush1.bf16.msra.mxu0 0
  %610 = vmatprep.subr.bf16.mxu0 0
  %611 = vmatpush1.bf16.msra.mxu0 0
  %612 = vmatprep.subr.bf16.mxu0 0
  %613 = vmatpush1.bf16.msra.mxu0 0
  %614 = vmatprep.subr.bf16.mxu0 0
  %615 = vmatpush1.bf16.msra.mxu0 0
  %616 = vmatprep.mubr.bf16.mxu0 0
  %617 = vmatmul.mubr.bf16.gmra.mrb[0].mxu0 %v582
  %v618 = vpop.f32.mrb[0].mxu0
  %v619 = vadd.f32 %v262, %v618
  %v620 = vpop.f32.mrb[0].mxu0
  %v621 = vpop.f32.mrb[0].mxu0
  %v622 = vadd.f32 %v262, %v621
  %v623 = vpop.f32.mrb[0].mxu0
  %624 = vdwg.mxu0
  %v625 = vmul.f32 %v619, 0.5
  %v626 = vmul.f32 %v622, 0.5
  %v627 = vmul.f32 %v619, 0.044715
  %v628 = vmul.f32 %v622, 0.044715
  %v629 = vmul.f32 %v627, %v619
  %v630 = vmul.f32 %v628, %v622
  %v631 = vmul.f32 %v629, %v619
  %v632 = vmul.f32 %v630, %v622
  %v633 = vadd.f32 %v619, %v631
  %v634 = vadd.f32 %v622, %v632
  %v635 = vmul.f32 %v633, 0.7978846
  %v636 = vmul.f32 %v634, 0.7978846
  %v637 = vtanh.pop %v635
  %v638 = vtanh.pop %v636
  %v639 = vadd.f32 %v637, 1.0
  %v640 = vadd.f32 %v638, 1.0
  %v641 = vmul.f32 %v625, %v639
  %v642 = vmul.f32 %v626, %v640
  %v644 = vlaneseq
  %v645 = vshrl.u32 %v644, 7
  %v646 = vsub.s32 0, %v645
  %v647 = vrot.slane %v240, %v646
  %v649 = vmul.f32 %v641, %v647
  %v650 = vmul.f32 %v642, %v647
  %v651 = vsel %vm580, %v649, 0.0
  %652 = vadd.xlane.f32.xlu0 %v651
  %v653 = vpop.xlane.xlu0 %652
  %v654 = vsel %vm580, %v650, 0.0
  %655 = vadd.xlane.f32.xlu0 %v654
  %v656 = vpop.xlane.xlu0 %655
  %v658 = vlaneseq
  %v659 = vshrl.u32 %v658, 7
  %v660 = vsub.s32 0, %v659
  %v661 = vrot.slane %v241, %v660
  %v663 = vadd.f32 %v653, %v661
  %v664 = vadd.f32 %v656, %v661
  %v665 = vtanh.pop %v663
  %v666 = vtanh.pop %v664
  %vm667 = vcmask 7168
  %668 = vst.msk [vmem:[%s8] sm:$0xff] %vm667, %v665
  %669 = vst.msk [vmem:[%s8 + $0x8] sm:$0xff] %vm667, %v666
  %v670 = vld [vmem:[#allocation2] sm:$0x1]
  %v671 = vld [vmem:[#allocation2 + $0x1] sm:$0x1]
  %v672 = vld [vmem:[#allocation2 + $0x2] sm:$0x1]
  %v673 = vld [vmem:[#allocation2 + $0x3] sm:$0x1]
  %v674 = vld [vmem:[#allocation2 + $0x4] sm:$0x1]
  %v675 = vld [vmem:[#allocation2 + $0x5] sm:$0x1]
  %v676 = vld [vmem:[#allocation2 + $0x6] sm:$0x1]
  %v677 = vld [vmem:[#allocation2 + $0x7] sm:$0x1]
  %v678 = vld [vmem:[#allocation2 + $0x8] sm:$0x1]
  %v679 = vld [vmem:[#allocation2 + $0x9] sm:$0x1]
  %v680 = vld [vmem:[#allocation2 + $0xa] sm:$0x1]
  %v681 = vld [vmem:[#allocation2 + $0xb] sm:$0x1]
  %v682 = vld [vmem:[#allocation2 + $0xc] sm:$0x1]
  %v683 = vld [vmem:[#allocation2 + $0xd] sm:$0x1]
  %v684 = vld [vmem:[#allocation2 + $0xe] sm:$0x1]
  %v685 = vld [vmem:[#allocation2 + $0xf] sm:$0x1]
  %v703 = vunpack.c.l.s4 1966171168
  %v704 = vunpack.c.0.s8 %v703
  %v705 = vlaneseq
  %v706 = vshrl.u32 %v705, 7
  %v707 = vsub.s32 %v704, %v706
  %v708 = vrot.slane %v670, %v707
  %v710 = vunpack.c.l.s4 1966171168
  %v711 = vunpack.c.0.s8 %v710
  %v712 = vlaneseq
  %v713 = vshrl.u32 %v712, 7
  %v714 = vsub.s32 %v711, %v713
  %v715 = vrot.slane %v708, %v714
  %v717 = vunpack.c.l.s4 1966171168
  %v718 = vunpack.c.0.s8 %v717
  %v719 = vlaneseq
  %v720 = vshrl.u32 %v719, 7
  %v721 = vsub.s32 %v718, %v720
  %v722 = vrot.slane %v671, %v721
  %v724 = vunpack.c.l.s4 1966171168
  %v725 = vunpack.c.0.s8 %v724
  %v726 = vlaneseq
  %v727 = vshrl.u32 %v726, 7
  %v728 = vsub.s32 %v725, %v727
  %v729 = vrot.slane %v722, %v728
  %v731 = vunpack.c.l.s4 1966171168
  %v732 = vunpack.c.0.s8 %v731
  %v733 = vlaneseq
  %v734 = vshrl.u32 %v733, 7
  %v735 = vsub.s32 %v732, %v734
  %v736 = vrot.slane %v672, %v735
  %v738 = vunpack.c.l.s4 1966171168
  %v739 = vunpack.c.0.s8 %v738
  %v740 = vlaneseq
  %v741 = vshrl.u32 %v740, 7
  %v742 = vsub.s32 %v739, %v741
  %v743 = vrot.slane %v736, %v742
  %v745 = vunpack.c.l.s4 1966171168
  %v746 = vunpack.c.0.s8 %v745
  %v747 = vlaneseq
  %v748 = vshrl.u32 %v747, 7
  %v749 = vsub.s32 %v746, %v748
  %v750 = vrot.slane %v673, %v749
  %v752 = vunpack.c.l.s4 1966171168
  %v753 = vunpack.c.0.s8 %v752
  %v754 = vlaneseq
  %v755 = vshrl.u32 %v754, 7
  %v756 = vsub.s32 %v753, %v755
  %v757 = vrot.slane %v750, %v756
  %v759 = vunpack.c.l.s4 1966171168
  %v760 = vunpack.c.0.s8 %v759
  %v761 = vlaneseq
  %v762 = vshrl.u32 %v761, 7
  %v763 = vsub.s32 %v760, %v762
  %v764 = vrot.slane %v674, %v763
  %v766 = vunpack.c.l.s4 1966171168
  %v767 = vunpack.c.0.s8 %v766
  %v768 = vlaneseq
  %v769 = vshrl.u32 %v768, 7
  %v770 = vsub.s32 %v767, %v769
  %v771 = vrot.slane %v764, %v770
  %v773 = vunpack.c.l.s4 1966171168
  %v774 = vunpack.c.0.s8 %v773
  %v775 = vlaneseq
  %v776 = vshrl.u32 %v775, 7
  %v777 = vsub.s32 %v774, %v776
  %v778 = vrot.slane %v675, %v777
  %v780 = vunpack.c.l.s4 1966171168
  %v781 = vunpack.c.0.s8 %v780
  %v782 = vlaneseq
  %v783 = vshrl.u32 %v782, 7
  %v784 = vsub.s32 %v781, %v783
  %v785 = vrot.slane %v778, %v784
  %v787 = vunpack.c.l.s4 1966171168
  %v788 = vunpack.c.0.s8 %v787
  %v789 = vlaneseq
  %v790 = vshrl.u32 %v789, 7
  %v791 = vsub.s32 %v788, %v790
  %v792 = vrot.slane %v676, %v791
  %v794 = vunpack.c.l.s4 1966171168
  %v795 = vunpack.c.0.s8 %v794
  %v796 = vlaneseq
  %v797 = vshrl.u32 %v796, 7
  %v798 = vsub.s32 %v795, %v797
  %v799 = vrot.slane %v792, %v798
  %v801 = vunpack.c.l.s4 1966171168
  %v802 = vunpack.c.0.s8 %v801
  %v803 = vlaneseq
  %v804 = vshrl.u32 %v803, 7
  %v805 = vsub.s32 %v802, %v804
  %v806 = vrot.slane %v677, %v805
  %v808 = vunpack.c.l.s4 1966171168
  %v809 = vunpack.c.0.s8 %v808
  %v810 = vlaneseq
  %v811 = vshrl.u32 %v810, 7
  %v812 = vsub.s32 %v809, %v811
  %v813 = vrot.slane %v806, %v812
  %v815 = vunpack.c.l.s4 1966171168
  %v816 = vunpack.c.0.s8 %v815
  %v817 = vlaneseq
  %v818 = vshrl.u32 %v817, 7
  %v819 = vsub.s32 %v816, %v818
  %v820 = vrot.slane %v678, %v819
  %v822 = vunpack.c.l.s4 1966171168
  %v823 = vunpack.c.0.s8 %v822
  %v824 = vlaneseq
  %v825 = vshrl.u32 %v824, 7
  %v826 = vsub.s32 %v823, %v825
  %v827 = vrot.slane %v820, %v826
  %v829 = vunpack.c.l.s4 1966171168
  %v830 = vunpack.c.0.s8 %v829
  %v831 = vlaneseq
  %v832 = vshrl.u32 %v831, 7
  %v833 = vsub.s32 %v830, %v832
  %v834 = vrot.slane %v679, %v833
  %v836 = vunpack.c.l.s4 1966171168
  %v837 = vunpack.c.0.s8 %v836
  %v838 = vlaneseq
  %v839 = vshrl.u32 %v838, 7
  %v840 = vsub.s32 %v837, %v839
  %v841 = vrot.slane %v834, %v840
  %v843 = vunpack.c.l.s4 1966171168
  %v844 = vunpack.c.0.s8 %v843
  %v845 = vlaneseq
  %v846 = vshrl.u32 %v845, 7
  %v847 = vsub.s32 %v844, %v846
  %v848 = vrot.slane %v680, %v847
  %v850 = vunpack.c.l.s4 1966171168
  %v851 = vunpack.c.0.s8 %v850
  %v852 = vlaneseq
  %v853 = vshrl.u32 %v852, 7
  %v854 = vsub.s32 %v851, %v853
  %v855 = vrot.slane %v848, %v854
  %v857 = vunpack.c.l.s4 1966171168
  %v858 = vunpack.c.0.s8 %v857
  %v859 = vlaneseq
  %v860 = vshrl.u32 %v859, 7
  %v861 = vsub.s32 %v858, %v860
  %v862 = vrot.slane %v681, %v861
  %v864 = vunpack.c.l.s4 1966171168
  %v865 = vunpack.c.0.s8 %v864
  %v866 = vlaneseq
  %v867 = vshrl.u32 %v866, 7
  %v868 = vsub.s32 %v865, %v867
  %v869 = vrot.slane %v862, %v868
  %v871 = vunpack.c.l.s4 1966171168
  %v872 = vunpack.c.0.s8 %v871
  %v873 = vlaneseq
  %v874 = vshrl.u32 %v873, 7
  %v875 = vsub.s32 %v872, %v874
  %v876 = vrot.slane %v682, %v875
  %v878 = vunpack.c.l.s4 1966171168
  %v879 = vunpack.c.0.s8 %v878
  %v880 = vlaneseq
  %v881 = vshrl.u32 %v880, 7
  %v882 = vsub.s32 %v879, %v881
  %v883 = vrot.slane %v876, %v882
  %v885 = vunpack.c.l.s4 1966171168
  %v886 = vunpack.c.0.s8 %v885
  %v887 = vlaneseq
  %v888 = vshrl.u32 %v887, 7
  %v889 = vsub.s32 %v886, %v888
  %v890 = vrot.slane %v683, %v889
  %v892 = vunpack.c.l.s4 1966171168
  %v893 = vunpack.c.0.s8 %v892
  %v894 = vlaneseq
  %v895 = vshrl.u32 %v894, 7
  %v896 = vsub.s32 %v893, %v895
  %v897 = vrot.slane %v890, %v896
  %v899 = vunpack.c.l.s4 1966171168
  %v900 = vunpack.c.0.s8 %v899
  %v901 = vlaneseq
  %v902 = vshrl.u32 %v901, 7
  %v903 = vsub.s32 %v900, %v902
  %v904 = vrot.slane %v684, %v903
  %v906 = vunpack.c.l.s4 1966171168
  %v907 = vunpack.c.0.s8 %v906
  %v908 = vlaneseq
  %v909 = vshrl.u32 %v908, 7
  %v910 = vsub.s32 %v907, %v909
  %v911 = vrot.slane %v904, %v910
  %v913 = vunpack.c.l.s4 1966171168
  %v914 = vunpack.c.0.s8 %v913
  %v915 = vlaneseq
  %v916 = vshrl.u32 %v915, 7
  %v917 = vsub.s32 %v914, %v916
  %v918 = vrot.slane %v685, %v917
  %v920 = vunpack.c.l.s4 1966171168
  %v921 = vunpack.c.0.s8 %v920
  %v922 = vlaneseq
  %v923 = vshrl.u32 %v922, 7
  %v924 = vsub.s32 %v921, %v923
  %v925 = vrot.slane %v918, %v924
  %v926 = vunpack.c.l.b16 %v715
  %v927 = vunpack.c.l.b16 %v729
  %v928 = vunpack.c.l.b16 %v743
  %v929 = vunpack.c.l.b16 %v757
  %v930 = vunpack.c.l.b16 %v771
  %v931 = vunpack.c.l.b16 %v785
  %v932 = vunpack.c.l.b16 %v799
  %v933 = vunpack.c.l.b16 %v813
  %v934 = vunpack.c.l.b16 %v827
  %v935 = vunpack.c.l.b16 %v841
  %v936 = vunpack.c.l.b16 %v855
  %v937 = vunpack.c.l.b16 %v869
  %v938 = vunpack.c.l.b16 %v883
  %v939 = vunpack.c.l.b16 %v897
  %v940 = vunpack.c.l.b16 %v911
  %v941 = vunpack.c.l.b16 %v925
  %v942 = vrot.slane %v926, 1
  %v943 = vsel %vm521, %v927, %v942
  %v944 = vrot.slane %v928, 7
  %v945 = vsel %vm524, %v944, %v943
  %v946 = vrot.slane %v929, 6
  %v947 = vsel %vm527, %v946, %v945
  %v948 = vrot.slane %v930, 5
  %v949 = vsel %vm530, %v948, %v947
  %v950 = vrot.slane %v931, 4
  %v951 = vsel %vm533, %v950, %v949
  %v952 = vrot.slane %v932, 3
  %v953 = vsel %vm536, %v952, %v951
  %v954 = vrot.slane %v933, 2
  %v955 = vsel %vm539, %v954, %v953
  %v956 = vrot.slane %v934, 1
  %v957 = vsel %vm521, %v935, %v956
  %v958 = vrot.slane %v936, 7
  %v959 = vsel %vm524, %v958, %v957
  %v960 = vrot.slane %v937, 6
  %v961 = vsel %vm527, %v960, %v959
  %v962 = vrot.slane %v938, 5
  %v963 = vsel %vm530, %v962, %v961
  %v964 = vrot.slane %v939, 4
  %v965 = vsel %vm533, %v964, %v963
  %v966 = vrot.slane %v940, 3
  %v967 = vsel %vm536, %v966, %v965
  %v968 = vrot.slane %v941, 2
  %v969 = vsel %vm539, %v968, %v967
  %v970 = vpack.c.b16 %v969, %v955
  %v972 = vsel %vm580, %v970, 0
  %974 = vmatprep.subr.bf16.mxu0 0
  %975 = vmatpush1.bf16.msra.mxu0 %v572
  %976 = vmatprep.subr.bf16.mxu0 0
  %977 = vmatpush1.bf16.msra.mxu0 %v573
  %978 = vmatprep.subr.bf16.mxu0 0
  %979 = vmatpush1.bf16.msra.mxu0 %v574
  %980 = vmatprep.subr.bf16.mxu0 0
  %981 = vmatpush1.bf16.msra.mxu0 %v575
  %982 = vmatprep.subr.bf16.mxu0 0
  %983 = vmatpush1.bf16.msra.mxu0 0
  %984 = vmatprep.subr.bf16.mxu0 0
  %985 = vmatpush1.bf16.msra.mxu0 0
  %986 = vmatprep.subr.bf16.mxu0 0
  %987 = vmatpush1.bf16.msra.mxu0 0
  %988 = vmatprep.subr.bf16.mxu0 0
  %989 = vmatpush1.bf16.msra.mxu0 0
  %990 = vmatprep.subr.bf16.mxu0 0
  %991 = vmatpush1.bf16.msra.mxu0 0
  %992 = vmatprep.subr.bf16.mxu0 0
  %993 = vmatpush1.bf16.msra.mxu0 0
  %994 = vmatprep.subr.bf16.mxu0 0
  %995 = vmatpush1.bf16.msra.mxu0 0
  %996 = vmatprep.subr.bf16.mxu0 0
  %997 = vmatpush1.bf16.msra.mxu0 0
  %998 = vmatprep.subr.bf16.mxu0 0
  %999 = vmatpush1.bf16.msra.mxu0 0
  %1000 = vmatprep.subr.bf16.mxu0 0
  %1001 = vmatpush1.bf16.msra.mxu0 0
  %1002 = vmatprep.subr.bf16.mxu0 0
  %1003 = vmatpush1.bf16.msra.mxu0 0
  %1004 = vmatprep.subr.bf16.mxu0 0
  %1005 = vmatpush1.bf16.msra.mxu0 0
  %1006 = vmatprep.mubr.bf16.mxu0 0
  %1007 = vmatmul.mubr.bf16.gmra.mrb[0].mxu0 %v972
  %v1008 = vpop.f32.mrb[0].mxu0
  %v1009 = vadd.f32 %v262, %v1008
  %v1010 = vpop.f32.mrb[0].mxu0
  %v1011 = vpop.f32.mrb[0].mxu0
  %v1012 = vadd.f32 %v262, %v1011
  %v1013 = vpop.f32.mrb[0].mxu0
  %1014 = vdwg.mxu0
  %v1015 = vmul.f32 %v1009, 0.5
  %v1016 = vmul.f32 %v1012, 0.5
  %v1017 = vmul.f32 %v1009, 0.044715
  %v1018 = vmul.f32 %v1012, 0.044715
  %v1019 = vmul.f32 %v1017, %v1009
  %v1020 = vmul.f32 %v1018, %v1012
  %v1021 = vmul.f32 %v1019, %v1009
  %v1022 = vmul.f32 %v1020, %v1012
  %v1023 = vadd.f32 %v1009, %v1021
  %v1024 = vadd.f32 %v1012, %v1022
  %v1025 = vmul.f32 %v1023, 0.7978846
  %v1026 = vmul.f32 %v1024, 0.7978846
  %v1027 = vtanh.pop %v1025
  %v1028 = vtanh.pop %v1026
  %v1029 = vadd.f32 %v1027, 1.0
  %v1030 = vadd.f32 %v1028, 1.0
  %v1031 = vmul.f32 %v1015, %v1029
  %v1032 = vmul.f32 %v1016, %v1030
  %v1033 = vmul.f32 %v1031, %v647
  %v1034 = vmul.f32 %v1032, %v647
  %v1035 = vsel %vm580, %v1033, 0.0
  %1036 = vadd.xlane.f32.xlu0 %v1035
  %v1037 = vpop.xlane.xlu0 %1036
  %v1038 = vsel %vm580, %v1034, 0.0
  %1039 = vadd.xlane.f32.xlu0 %v1038
  %v1040 = vpop.xlane.xlu0 %1039
  %v1041 = vadd.f32 %v1037, %v661
  %v1042 = vadd.f32 %v1040, %v661
  %v1043 = vtanh.pop %v1041
  %v1044 = vtanh.pop %v1042
  %1047 = vrot.lane.b32.xlu0 %v1043, 1
  %v1048 = vpop.permute.xlu0 %1047
  %1049 = vrot.lane.b32.xlu0 %v1044, 1
  %v1050 = vpop.permute.xlu0 %1049
  %vm1053 = vcmask 15368
  %1054 = vst.msk [vmem:[%s8] sm:$0xff] %vm1053, %v1048
  %1055 = vst.msk [vmem:[%s8 + $0x8] sm:$0xff] %vm1053, %v1050
  // Predicated region
  $region41: #{noise_generator_forward.5} parent=0 // pred_check
    _
  $region42: #{noise_generator_forward.5} parent=0 // pred_check_branch
    %1057 = sbr.rel (0) target = $region44
  $region43: #{noise_generator_forward.5} parent=0 // pred_region
    _
  $region44: #{noise_generator_forward.5} parent=0 // pred_fallthru
    _
  // Predicated region
  $region45: #{noise_generator_forward.5} parent=0 // pred_check
    _
  $region46: #{noise_generator_forward.5} parent=0 // pred_check_branch
    %1059 = sbr.rel (0) target = $region48
  $region47: #{noise_generator_forward.5} parent=0 // pred_region
    _
  $region48: #{noise_generator_forward.5} parent=0 // pred_fallthru
    _
  // Predicated region
  $region49: #{noise_generator_forward.5} parent=0 // pred_check
    _
  $region50: #{noise_generator_forward.5} parent=0 // pred_check_branch
    %1061 = sbr.rel (0) target = $region52
  $region51: #{noise_generator_forward.5} parent=0 // pred_region
    _
  $region52: #{noise_generator_forward.5} parent=0 // pred_fallthru
    _
  // Predicated region
  $region53: #{noise_generator_forward.5} parent=0 // pred_check
    _
  $region54: #{noise_generator_forward.5} parent=0 // pred_check_branch
    %1063 = sbr.rel (0) target = $region56
  $region55: #{noise_generator_forward.5} parent=0 // pred_region
    _
  $region56: #{noise_generator_forward.5} parent=0 // pred_fallthru
    _
  // Predicated region
  $region57: #{noise_generator_forward.5} parent=0 // pred_check
    _
  $region58: #{noise_generator_forward.5} parent=0 // pred_check_branch
    %1065 = sbr.rel (0) target = $region60
  $region59: #{noise_generator_forward.5} parent=0 // pred_region
    _
  $region60: #{noise_generator_forward.5} parent=0 // pred_fallthru
    _
  // Predicated region
  $region61: #{noise_generator_forward.5} parent=0 // pred_check
    _
  $region62: #{noise_generator_forward.5} parent=0 // pred_check_branch
    %1067 = sbr.rel (0) target = $region64
  $region63: #{noise_generator_forward.5} parent=0 // pred_region
    _
  $region64: #{noise_generator_forward.5} parent=0 // pred_fallthru
    _

// kernel: noise_generator_forward.3
$region0: #{noise_generator_forward.3}
  #allocation0 [shape = 'u32[]', space=smem, size = 0x4, offset = 0x4, fixed_abs, tag = 'smem constant byte address 0x4 - core index']
  #allocation1 [shape = 'u32[144,128]{1,0:T(1,128)}', space=vmem, size = 0x12000, scoped, tag = 'internal scratch']
  #allocation2 [shape = 'f32[48,32]{1,0:T(8,128)}', space=vmem, size = 0x6000, scoped, tag = 'scratch operand']
  %s0 = inlined_call_operand.vmem [shape: f32[2,48,1], index: 0, kind: input, shape index: {}]
  %s1 = inlined_call_operand.vmem [shape: f32[31,32], index: 1, kind: input, shape index: {}]
  %s2 = inlined_call_operand.vmem [shape: f32[1,32], index: 2, kind: input, shape index: {}]
  %s3 = inlined_call_operand.hbm [shape: bf16[31,32,64], index: 3, kind: input, shape index: {}]
  %s4 = inlined_call_operand.vmem [shape: f32[1,64], index: 4, kind: input, shape index: {}]
  %s5 = inlined_call_operand.vmem [shape: bf16[64,256], index: 5, kind: input, shape index: {}]
  %s6 = inlined_call_operand.vmem [shape: f32[1,256], index: 6, kind: input, shape index: {}]
  %s7 = inlined_call_operand.vmem [shape: bf16[16,512], index: 7, kind: output, shape index: {}]
  %s8 = sld [smem:[#allocation0]]
  $region99: #{noise_generator_forward.3} parent=0
    _
  %s10 = ssub.s32 1, %s8
  %s11 = scalar_select 0, %s10, %s8
  $region1: #{noise_generator_forward.3} parent=0
    #allocation3 [shape = 'u8[253952]{0}', space=vmem, size = 0x3e000, scoped, tag = 'input window, operand 3, single buffered']
    #allocation4 [shape = 's32[2]{0}', space=sflag, size = 0x8, scoped, tag = 'scoped memory for noise_generator_forward.3']
    #allocation5 [shape = 'u8[16384]{0}', space=vmem, size = 0x4000, scoped, tag = 'output window, operand 0']
    %12 = vsyncpa [#allocation4], 0
    loop: start=0, step=1, limit=4
    $region2: #{noise_generator_forward.3} parent=1 // loop_pre_header
      _
    $region3: #{noise_generator_forward.3} parent=1 // loop_header
      %s14 = sphi 0, %s18
      %p15 = scmp.ge.s32.totalorder %s14, 4
      %s24 = sphi 0, %s26
      %s27 = sphi 0, %s24
      %s28 = sphi 0, %s27
      %s44 = sphi 0, %s28
      %s48 = sphi 0, %s48
      %s50 = sphi 0, %s48
      %s51 = sphi 0, %s50
      %s65 = sphi 0, %s51
      %s69 = sphi 0, %s69
      %s71 = sphi 0, %s69
      %s72 = sphi 0, %s71
      %s86 = sphi 0, %s72
      %s90 = sphi 0, %s90
      %s92 = sphi 0, %s90
      %s93 = sphi 0, %s92
      %s107 = sphi 0, %s93
      %s111 = sphi 0, %s111
      %s113 = sphi 0, %s111
      %s114 = sphi 0, %s113
      %s128 = sphi 0, %s114
      %s132 = sphi 0, %s132
      %s134 = sphi 0, %s132
      %s135 = sphi 0, %s134
      %s149 = sphi 0, %s135
      %s153 = sphi 0, %s153
      %s155 = sphi 0, %s153
      %s156 = sphi 0, %s155
      %s170 = sphi 0, %s156
      %s176 = sphi 0, %s178
      %s179 = sphi 0, %s176
      %s180 = sphi 0, %s179
      %s196 = sphi 0, %s180
    $region4: #{noise_generator_forward.3} parent=1 // loop_header_branch
      %17 = sbr.rel (%p15) target = $region8
    $region5: #{noise_generator_forward.3} parent=1 // loop_body
      %s19 = ssub.s32 %s14, 1
      %s20 = ssub.s32 %s14, 2
      %s21 = sadd.s32 %s14, 1
      %s22 = ssub.s32 %s14, %s21
      %p23 = scmp.eq.s32.totalorder %s22, 0
      %s25 = sadd.s32 %s24, 1
      %s26 = scalar_select %p23, %s24, %s25
      %p29 = pneg %p23
      %p30 = scmp.eq.s32.totalorder %s14, 1
      %p31 = por %p29, %p30
      %p32 = scmp.ne.s32.totalorder %s24, %s27
      %p33 = scmp.eq.s32.totalorder %s14, 0
      %p34 = por %p32, %p33
      %p35 = scmp.ne.s32.totalorder %s24, %s27
      %p36 = scmp.eq.s32.totalorder %s19, 1
      %p37 = por %p35, %p36
      %p38 = scmp.ne.s32.totalorder %s27, %s28
      %p39 = scmp.eq.s32.totalorder %s19, 0
      %p40 = por %p38, %p39
      %p41 = scmp.ne.s32.totalorder %s27, %s28
      %p42 = scmp.eq.s32.totalorder %s20, 1
      %p43 = por %p41, %p42
      %p45 = scmp.ne.s32.totalorder %s28, %s44
      %p46 = scmp.eq.s32.totalorder %s20, 0
      %p47 = por %p45, %p46
      %s49 = sadd.s32 %s48, 1
      %p52 = scmp.eq.s32.totalorder %s14, 1
      %p53 = scmp.ne.s32.totalorder %s48, %s50
      %p54 = scmp.eq.s32.totalorder %s14, 0
      %p55 = por %p53, %p54
      %p56 = scmp.ne.s32.totalorder %s48, %s50
      %p57 = scmp.eq.s32.totalorder %s19, 1
      %p58 = por %p56, %p57
      %p59 = scmp.ne.s32.totalorder %s50, %s51
      %p60 = scmp.eq.s32.totalorder %s19, 0
      %p61 = por %p59, %p60
      %p62 = scmp.ne.s32.totalorder %s50, %s51
      %p63 = scmp.eq.s32.totalorder %s20, 1
      %p64 = por %p62, %p63
      %p66 = scmp.ne.s32.totalorder %s51, %s65
      %p67 = scmp.eq.s32.totalorder %s20, 0
      %p68 = por %p66, %p67
      %s70 = sadd.s32 %s69, 1
      %p73 = scmp.eq.s32.totalorder %s14, 1
      %p74 = scmp.ne.s32.totalorder %s69, %s71
      %p75 = scmp.eq.s32.totalorder %s14, 0
      %p76 = por %p74, %p75
      %p77 = scmp.ne.s32.totalorder %s69, %s71
      %p78 = scmp.eq.s32.totalorder %s19, 1
      %p79 = por %p77, %p78
      %p80 = scmp.ne.s32.totalorder %s71, %s72
      %p81 = scmp.eq.s32.totalorder %s19, 0
      %p82 = por %p80, %p81
      %p83 = scmp.ne.s32.totalorder %s71, %s72
      %p84 = scmp.eq.s32.totalorder %s20, 1
      %p85 = por %p83, %p84
      %p87 = scmp.ne.s32.totalorder %s72, %s86
      %p88 = scmp.eq.s32.totalorder %s20, 0
      %p89 = por %p87, %p88
      %s91 = sadd.s32 %s90, 1
      %p94 = scmp.eq.s32.totalorder %s14, 1
      %p95 = scmp.ne.s32.totalorder %s90, %s92
      %p96 = scmp.eq.s32.totalorder %s14, 0
      %p97 = por %p95, %p96
      %p98 = scmp.ne.s32.totalorder %s90, %s92
      %p99 = scmp.eq.s32.totalorder %s19, 1
      %p100 = por %p98, %p99
      %p101 = scmp.ne.s32.totalorder %s92, %s93
      %p102 = scmp.eq.s32.totalorder %s19, 0
      %p103 = por %p101, %p102
      %p104 = scmp.ne.s32.totalorder %s92, %s93
      %p105 = scmp.eq.s32.totalorder %s20, 1
      %p106 = por %p104, %p105
      %p108 = scmp.ne.s32.totalorder %s93, %s107
      %p109 = scmp.eq.s32.totalorder %s20, 0
      %p110 = por %p108, %p109
      %s112 = sadd.s32 %s111, 1
      %p115 = scmp.eq.s32.totalorder %s14, 1
      %p116 = scmp.ne.s32.totalorder %s111, %s113
      %p117 = scmp.eq.s32.totalorder %s14, 0
      %p118 = por %p116, %p117
      %p119 = scmp.ne.s32.totalorder %s111, %s113
      %p120 = scmp.eq.s32.totalorder %s19, 1
      %p121 = por %p119, %p120
      %p122 = scmp.ne.s32.totalorder %s113, %s114
      %p123 = scmp.eq.s32.totalorder %s19, 0
      %p124 = por %p122, %p123
      %p125 = scmp.ne.s32.totalorder %s113, %s114
      %p126 = scmp.eq.s32.totalorder %s20, 1
      %p127 = por %p125, %p126
      %p129 = scmp.ne.s32.totalorder %s114, %s128
      %p130 = scmp.eq.s32.totalorder %s20, 0
      %p131 = por %p129, %p130
      %s133 = sadd.s32 %s132, 1
      %p136 = scmp.eq.s32.totalorder %s14, 1
      %p137 = scmp.ne.s32.totalorder %s132, %s134
      %p138 = scmp.eq.s32.totalorder %s14, 0
      %p139 = por %p137, %p138
      %p140 = scmp.ne.s32.totalorder %s132, %s134
      %p141 = scmp.eq.s32.totalorder %s19, 1
      %p142 = por %p140, %p141
      %p143 = scmp.ne.s32.totalorder %s134, %s135
      %p144 = scmp.eq.s32.totalorder %s19, 0
      %p145 = por %p143, %p144
      %p146 = scmp.ne.s32.totalorder %s134, %s135
      %p147 = scmp.eq.s32.totalorder %s20, 1
      %p148 = por %p146, %p147
      %p150 = scmp.ne.s32.totalorder %s135, %s149
      %p151 = scmp.eq.s32.totalorder %s20, 0
      %p152 = por %p150, %p151
      %s154 = sadd.s32 %s153, 1
      %p157 = scmp.eq.s32.totalorder %s14, 1
      %p158 = scmp.ne.s32.totalorder %s153, %s155
      %p159 = scmp.eq.s32.totalorder %s14, 0
      %p160 = por %p158, %p159
      %p161 = scmp.ne.s32.totalorder %s153, %s155
      %p162 = scmp.eq.s32.totalorder %s19, 1
      %p163 = por %p161, %p162
      %p164 = scmp.ne.s32.totalorder %s155, %s156
      %p165 = scmp.eq.s32.totalorder %s19, 0
      %p166 = por %p164, %p165
      %p167 = scmp.ne.s32.totalorder %s155, %s156
      %p168 = scmp.eq.s32.totalorder %s20, 1
      %p169 = por %p167, %p168
      %p171 = scmp.ne.s32.totalorder %s156, %s170
      %p172 = scmp.eq.s32.totalorder %s20, 0
      %p173 = por %p171, %p172
      %s174 = ssub.s32 %s14, %s21
      %p175 = scmp.eq.s32.totalorder %s174, 0
      %s177 = sadd.s32 %s176, 1
      %s178 = scalar_select %p175, %s176, %s177
      %p181 = pneg %p175
      %p182 = scmp.eq.s32.totalorder %s14, 1
      %p183 = por %p181, %p182
      %p184 = scmp.ne.s32.totalorder %s176, %s179
      %p185 = scmp.eq.s32.totalorder %s14, 0
      %p186 = por %p184, %p185
      %p187 = scmp.ne.s32.totalorder %s176, %s179
      %p188 = scmp.eq.s32.totalorder %s19, 1
      %p189 = por %p187, %p188
      %p190 = scmp.ne.s32.totalorder %s179, %s180
      %p191 = scmp.eq.s32.totalorder %s19, 0
      %p192 = por %p190, %p191
      %p193 = scmp.ne.s32.totalorder %s179, %s180
      %p194 = scmp.eq.s32.totalorder %s20, 1
      %p195 = por %p193, %p194
      %p197 = scmp.ne.s32.totalorder %s180, %s196
      %p198 = scmp.eq.s32.totalorder %s20, 0
      %p199 = por %p197, %p198
      %p200 = scmp.le.s32.totalorder 1, %s14
      %p201 = scmp.lt.s32.totalorder %s14, 3
      %p202 = pnand %p200, %p201
      %p203 = pneg %p202
      // Predicated region
      $region9: #{noise_generator_forward.3} parent=5 // pred_check
        _
      $region10: #{noise_generator_forward.3} parent=5 // pred_check_branch
        %205 = sbr.rel (%p202) target = $region12
      $region11: #{noise_generator_forward.3} parent=5 // pred_region
        %s206 = ssub.s32 %s14, 1
        // Predicated region
        $region13: #{noise_generator_forward.3} parent=11 // pred_check
          %p207 = pneg %p61
        $region14: #{noise_generator_forward.3} parent=11 // pred_check_branch
          %209 = sbr.rel (%p207) target = $region16
        $region15: #{noise_generator_forward.3} parent=11 // pred_region
          _
        $region16: #{noise_generator_forward.3} parent=11 // pred_fallthru
          _
        // Predicated region
        $region17: #{noise_generator_forward.3} parent=11 // pred_check
          %p210 = pneg %p82
        $region18: #{noise_generator_forward.3} parent=11 // pred_check_branch
          %212 = sbr.rel (%p210) target = $region20
        $region19: #{noise_generator_forward.3} parent=11 // pred_region
          _
        $region20: #{noise_generator_forward.3} parent=11 // pred_fallthru
          _
        // Predicated region
        $region21: #{noise_generator_forward.3} parent=11 // pred_check
          %p213 = pneg %p103
        $region22: #{noise_generator_forward.3} parent=11 // pred_check_branch
          %215 = sbr.rel (%p213) target = $region24
        $region23: #{noise_generator_forward.3} parent=11 // pred_region
          %s217 = ssub.s32 7936, 7936
          %218 = vsyncadd [#allocation4], %s217
          %s219 = sshll.u32 [#allocation3], 4
          %s220 = int_to_ptr.vmem [resolvable:$true] %s219
          %225 = dma.hbm_to_vmem [thread:$0]  %s3, 7936, %s220, [#allocation4], 64, 64, 4
        $region24: #{noise_generator_forward.3} parent=11 // pred_fallthru
          _
        // Predicated region
        $region25: #{noise_generator_forward.3} parent=11 // pred_check
          %p226 = pneg %p124
        $region26: #{noise_generator_forward.3} parent=11 // pred_check_branch
          %228 = sbr.rel (%p226) target = $region28
        $region27: #{noise_generator_forward.3} parent=11 // pred_region
          _
        $region28: #{noise_generator_forward.3} parent=11 // pred_fallthru
          _
        // Predicated region
        $region29: #{noise_generator_forward.3} parent=11 // pred_check
          %p229 = pneg %p145
        $region30: #{noise_generator_forward.3} parent=11 // pred_check_branch
          %231 = sbr.rel (%p229) target = $region32
        $region31: #{noise_generator_forward.3} parent=11 // pred_region
          _
        $region32: #{noise_generator_forward.3} parent=11 // pred_fallthru
          _
        // Predicated region
        $region33: #{noise_generator_forward.3} parent=11 // pred_check
          %p232 = pneg %p166
        $region34: #{noise_generator_forward.3} parent=11 // pred_check_branch
          %234 = sbr.rel (%p232) target = $region36
        $region35: #{noise_generator_forward.3} parent=11 // pred_region
          _
        $region36: #{noise_generator_forward.3} parent=11 // pred_fallthru
          _
      $region12: #{noise_generator_forward.3} parent=5 // pred_fallthru
        _
      %p235 = scmp.lt.s32.totalorder %s14, 2
      // Predicated region
      $region37: #{noise_generator_forward.3} parent=5 // pred_check
        %p236 = pneg %p235
      $region38: #{noise_generator_forward.3} parent=5 // pred_check_branch
        %238 = sbr.rel (%p236) target = $region40
      $region39: #{noise_generator_forward.3} parent=5 // pred_region
        // Predicated region
        $region41: #{noise_generator_forward.3} parent=39 // pred_check
          %p239 = pneg %p34
        $region42: #{noise_generator_forward.3} parent=39 // pred_check_branch
          %241 = sbr.rel (%p239) target = $region44
        $region43: #{noise_generator_forward.3} parent=39 // pred_region
          %p242 = scmp.lt.s32.totalorder %s14, 1
          %s243 = scalar_select %p242, %s14, 1
          %s244 = smul.addr %s243, 6
          %s245 = smul.addr %s244, 8
          %s246 = scalar_lea.vmem %s0, %s245
        $region44: #{noise_generator_forward.3} parent=39 // pred_fallthru
          _
      $region40: #{noise_generator_forward.3} parent=5 // pred_fallthru
        _
      %p247 = scmp.le.s32.totalorder 1, %s14
      %p248 = scmp.lt.s32.totalorder %s14, 3
      %p249 = pnand %p247, %p248
      %p250 = pneg %p249
      // Predicated region
      $region45: #{noise_generator_forward.3} parent=5 // pred_check
        _
      $region46: #{noise_generator_forward.3} parent=5 // pred_check_branch
        %252 = sbr.rel (%p249) target = $region48
      $region47: #{noise_generator_forward.3} parent=5 // pred_region
        %s253 = ssub.s32 %s14, 1
        // Predicated region
        $region49: #{noise_generator_forward.3} parent=47 // pred_check
          %p254 = pneg %p103
        $region50: #{noise_generator_forward.3} parent=47 // pred_check_branch
          %256 = sbr.rel (%p254) target = $region52
        $region51: #{noise_generator_forward.3} parent=47 // pred_region
          %257 = dma.done [#allocation4], 7936
        $region52: #{noise_generator_forward.3} parent=47 // pred_fallthru
          _
        %p258 = scmp.lt.s32.totalorder %s19, 1
        %s259 = scalar_select %p258, %s19, 1
        %s260 = smul.addr %s259, 6
        %s261 = smul.addr %s260, 8
        %s262 = scalar_lea.vmem %s0, %s261
        %p263 = pneg %p40
        %p264 = pneg %p37
        %p265 = pneg %p61
        %p266 = pneg %p58
        %p267 = pneg %p82
        %p268 = pneg %p79
        %p269 = pneg %p103
        %p270 = pneg %p100
        %p271 = pneg %p124
        %p272 = pneg %p121
        %p273 = pneg %p145
        %p274 = pneg %p142
        %p275 = pneg %p166
        %p276 = pneg %p163
        %p277 = pneg %p192
        %p278 = pneg %p189
        %s279 = sand.u32 %s179, 1
        %s280 = sand.u32 %s179, 1
        %s281 = smul.addr %s280, 16
        %s282 = scalar_lea.vmem [#allocation5], %s281
        %p283 = scmp.lt.s32.totalorder %s19, 1
        %s284 = scalar_select %p283, %s19, 1
        %s285 = smul.addr %s284, 6
        %s286 = smul.addr %s285, 8
        %s287 = scalar_lea.vmem %s0, %s286
        %s288 = smul.u32 2, %s19
        %v290 = vld [vmem:[%s287 + $0x1] sm:$0xff]
        %v291 = vld [vmem:[%s287 + $0x9] sm:$0xff]
        %v292 = vld [vmem:[%s1] sm:$0x1]
        %294 = vset.pattern.permute.xlu0 0
        %295 = vperm.xlu0 %294, %v290
        %v296 = vpop.permute.xlu0 %295
        %299 = vset.pattern.permute.xlu0 0
        %300 = vperm.xlu0 %299, %v291
        %v301 = vpop.permute.xlu0 %300
        %v303 = vlaneseq
        %v304 = vshrl.u32 %v303, 7
        %v305 = vsub.s32 0, %v304
        %v306 = vrot.slane %v292, %v305
        %v307 = vmul.f32 %v296, %v306
        %v308 = vmul.f32 %v301, %v306
        %v309 = vadd.f32 %v307, 0.0
        %v310 = vadd.f32 %v308, 0.0
        %v311 = vld [vmem:[%s287 + $0x2] sm:$0xff]
        %v312 = vld [vmem:[%s287 + $0xa] sm:$0xff]
        %v313 = vld [vmem:[%s1 + $0x1] sm:$0x1]
        %315 = vset.pattern.permute.xlu0 0
        %316 = vperm.xlu0 %315, %v311
        %v317 = vpop.permute.xlu0 %316
        %320 = vset.pattern.permute.xlu0 0
        %321 = vperm.xlu0 %320, %v312
        %v322 = vpop.permute.xlu0 %321
        %v324 = vlaneseq
        %v325 = vshrl.u32 %v324, 7
        %v326 = vsub.s32 0, %v325
        %v327 = vrot.slane %v313, %v326
        %v328 = vmul.f32 %v317, %v327
        %v329 = vmul.f32 %v322, %v327
        %v330 = vadd.f32 %v309, %v328
        %v331 = vadd.f32 %v310, %v329
        %v332 = vld [vmem:[%s287 + $0x3] sm:$0xff]
        %v333 = vld [vmem:[%s287 + $0xb] sm:$0xff]
        %v334 = vld [vmem:[%s1 + $0x2] sm:$0x1]
        %336 = vset.pattern.permute.xlu0 0
        %337 = vperm.xlu0 %336, %v332
        %v338 = vpop.permute.xlu0 %337
        %341 = vset.pattern.permute.xlu0 0
        %342 = vperm.xlu0 %341, %v333
        %v343 = vpop.permute.xlu0 %342
        %v345 = vlaneseq
        %v346 = vshrl.u32 %v345, 7
        %v347 = vsub.s32 0, %v346
        %v348 = vrot.slane %v334, %v347
        %v349 = vmul.f32 %v338, %v348
        %v350 = vmul.f32 %v343, %v348
        %v351 = vadd.f32 %v330, %v349
        %v352 = vadd.f32 %v331, %v350
        %v353 = vld [vmem:[%s287 + $0x4] sm:$0xff]
        %v354 = vld [vmem:[%s287 + $0xc] sm:$0xff]
        %v355 = vld [vmem:[%s1 + $0x3] sm:$0x1]
        %357 = vset.pattern.permute.xlu0 0
        %358 = vperm.xlu0 %357, %v353
        %v359 = vpop.permute.xlu0 %358
        %362 = vset.pattern.permute.xlu0 0
        %363 = vperm.xlu0 %362, %v354
        %v364 = vpop.permute.xlu0 %363
        %v366 = vlaneseq
        %v367 = vshrl.u32 %v366, 7
        %v368 = vsub.s32 0, %v367
        %v369 = vrot.slane %v355, %v368
        %v370 = vmul.f32 %v359, %v369
        %v371 = vmul.f32 %v364, %v369
        %v372 = vadd.f32 %v351, %v370
        %v373 = vadd.f32 %v352, %v371
        %v374 = vld [vmem:[%s287 + $0x5] sm:$0xff]
        %v375 = vld [vmem:[%s287 + $0xd] sm:$0xff]
        %v376 = vld [vmem:[%s1 + $0x4] sm:$0x1]
        %378 = vset.pattern.permute.xlu0 0
        %379 = vperm.xlu0 %378, %v374
        %v380 = vpop.permute.xlu0 %379
        %383 = vset.pattern.permute.xlu0 0
        %384 = vperm.xlu0 %383, %v375
        %v385 = vpop.permute.xlu0 %384
        %v387 = vlaneseq
        %v388 = vshrl.u32 %v387, 7
        %v389 = vsub.s32 0, %v388
        %v390 = vrot.slane %v376, %v389
        %v391 = vmul.f32 %v380, %v390
        %v392 = vmul.f32 %v385, %v390
        %v393 = vadd.f32 %v372, %v391
        %v394 = vadd.f32 %v373, %v392
        %v395 = vld [vmem:[%s287 + $0x6] sm:$0xff]
        %v396 = vld [vmem:[%s287 + $0xe] sm:$0xff]
        %v397 = vld [vmem:[%s1 + $0x5] sm:$0x1]
        %399 = vset.pattern.permute.xlu0 0
        %400 = vperm.xlu0 %399, %v395
        %v401 = vpop.permute.xlu0 %400
        %404 = vset.pattern.permute.xlu0 0
        %405 = vperm.xlu0 %404, %v396
        %v406 = vpop.permute.xlu0 %405
        %v408 = vlaneseq
        %v409 = vshrl.u32 %v408, 7
        %v410 = vsub.s32 0, %v409
        %v411 = vrot.slane %v397, %v410
        %v412 = vmul.f32 %v401, %v411
        %v413 = vmul.f32 %v406, %v411
        %v414 = vadd.f32 %v393, %v412
        %v415 = vadd.f32 %v394, %v413
        %v416 = vld [vmem:[%s287 + $0x7] sm:$0xff]
        %v417 = vld [vmem:[%s287 + $0xf] sm:$0xff]
        %v418 = vld [vmem:[%s1 + $0x6] sm:$0x1]
        %420 = vset.pattern.permute.xlu0 0
        %421 = vperm.xlu0 %420, %v416
        %v422 = vpop.permute.xlu0 %421
        %425 = vset.pattern.permute.xlu0 0
        %426 = vperm.xlu0 %425, %v417
        %v427 = vpop.permute.xlu0 %426
        %v429 = vlaneseq
        %v430 = vshrl.u32 %v429, 7
        %v431 = vsub.s32 0, %v430
        %v432 = vrot.slane %v418, %v431
        %v433 = vmul.f32 %v422, %v432
        %v434 = vmul.f32 %v427, %v432
        %v435 = vadd.f32 %v414, %v433
        %v436 = vadd.f32 %v415, %v434
        %v437 = vld [vmem:[%s287 + $0x8] sm:$0xff]
        %v438 = vld [vmem:[%s287 + $0x10] sm:$0xff]
        %v439 = vld [vmem:[%s1 + $0x7] sm:$0x1]
        %441 = vset.pattern.permute.xlu0 0
        %442 = vperm.xlu0 %441, %v437
        %v443 = vpop.permute.xlu0 %442
        %446 = vset.pattern.permute.xlu0 0
        %447 = vperm.xlu0 %446, %v438
        %v448 = vpop.permute.xlu0 %447
        %v450 = vlaneseq
        %v451 = vshrl.u32 %v450, 7
        %v452 = vsub.s32 0, %v451
        %v453 = vrot.slane %v439, %v452
        %v454 = vmul.f32 %v443, %v453
        %v455 = vmul.f32 %v448, %v453
        %v456 = vadd.f32 %v435, %v454
        %v457 = vadd.f32 %v436, %v455
        %v458 = vld [vmem:[%s287 + $0x9] sm:$0xff]
        %v459 = vld [vmem:[%s287 + $0x11] sm:$0xff]
        %v460 = vld [vmem:[%s1 + $0x8] sm:$0x1]
        %462 = vset.pattern.permute.xlu0 0
        %463 = vperm.xlu0 %462, %v458
        %v464 = vpop.permute.xlu0 %463
        %467 = vset.pattern.permute.xlu0 0
        %468 = vperm.xlu0 %467, %v459
        %v469 = vpop.permute.xlu0 %468
        %v471 = vlaneseq
        %v472 = vshrl.u32 %v471, 7
        %v473 = vsub.s32 0, %v472
        %v474 = vrot.slane %v460, %v473
        %v475 = vmul.f32 %v464, %v474
        %v476 = vmul.f32 %v469, %v474
        %v477 = vadd.f32 %v456, %v475
        %v478 = vadd.f32 %v457, %v476
        %v479 = vld [vmem:[%s287 + $0xa] sm:$0xff]
        %v480 = vld [vmem:[%s287 + $0x12] sm:$0xff]
        %v481 = vld [vmem:[%s1 + $0x9] sm:$0x1]
        %483 = vset.pattern.permute.xlu0 0
        %484 = vperm.xlu0 %483, %v479
        %v485 = vpop.permute.xlu0 %484
        %488 = vset.pattern.permute.xlu0 0
        %489 = vperm.xlu0 %488, %v480
        %v490 = vpop.permute.xlu0 %489
        %v492 = vlaneseq
        %v493 = vshrl.u32 %v492, 7
        %v494 = vsub.s32 0, %v493
        %v495 = vrot.slane %v481, %v494
        %v496 = vmul.f32 %v485, %v495
        %v497 = vmul.f32 %v490, %v495
        %v498 = vadd.f32 %v477, %v496
        %v499 = vadd.f32 %v478, %v497
        %v500 = vld [vmem:[%s287 + $0xb] sm:$0xff]
        %v501 = vld [vmem:[%s287 + $0x13] sm:$0xff]
        %v502 = vld [vmem:[%s1 + $0xa] sm:$0x1]
        %504 = vset.pattern.permute.xlu0 0
        %505 = vperm.xlu0 %504, %v500
        %v506 = vpop.permute.xlu0 %505
        %509 = vset.pattern.permute.xlu0 0
        %510 = vperm.xlu0 %509, %v501
        %v511 = vpop.permute.xlu0 %510
        %v513 = vlaneseq
        %v514 = vshrl.u32 %v513, 7
        %v515 = vsub.s32 0, %v514
        %v516 = vrot.slane %v502, %v515
        %v517 = vmul.f32 %v506, %v516
        %v518 = vmul.f32 %v511, %v516
        %v519 = vadd.f32 %v498, %v517
        %v520 = vadd.f32 %v499, %v518
        %v521 = vld [vmem:[%s287 + $0xc] sm:$0xff]
        %v522 = vld [vmem:[%s287 + $0x14] sm:$0xff]
        %v523 = vld [vmem:[%s1 + $0xb] sm:$0x1]
        %525 = vset.pattern.permute.xlu0 0
        %526 = vperm.xlu0 %525, %v521
        %v527 = vpop.permute.xlu0 %526
        %530 = vset.pattern.permute.xlu0 0
        %531 = vperm.xlu0 %530, %v522
        %v532 = vpop.permute.xlu0 %531
        %v534 = vlaneseq
        %v535 = vshrl.u32 %v534, 7
        %v536 = vsub.s32 0, %v535
        %v537 = vrot.slane %v523, %v536
        %v538 = vmul.f32 %v527, %v537
        %v539 = vmul.f32 %v532, %v537
        %v540 = vadd.f32 %v519, %v538
        %v541 = vadd.f32 %v520, %v539
        %v542 = vld [vmem:[%s287 + $0xd] sm:$0xff]
        %v543 = vld [vmem:[%s287 + $0x15] sm:$0xff]
        %v544 = vld [vmem:[%s1 + $0xc] sm:$0x1]
        %546 = vset.pattern.permute.xlu0 0
        %547 = vperm.xlu0 %546, %v542
        %v548 = vpop.permute.xlu0 %547
        %551 = vset.pattern.permute.xlu0 0
        %552 = vperm.xlu0 %551, %v543
        %v553 = vpop.permute.xlu0 %552
        %v555 = vlaneseq
        %v556 = vshrl.u32 %v555, 7
        %v557 = vsub.s32 0, %v556
        %v558 = vrot.slane %v544, %v557
        %v559 = vmul.f32 %v548, %v558
        %v560 = vmul.f32 %v553, %v558
        %v561 = vadd.f32 %v540, %v559
        %v562 = vadd.f32 %v541, %v560
        %v563 = vld [vmem:[%s287 + $0xe] sm:$0xff]
        %v564 = vld [vmem:[%s287 + $0x16] sm:$0xff]
        %v565 = vld [vmem:[%s1 + $0xd] sm:$0x1]
        %567 = vset.pattern.permute.xlu0 0
        %568 = vperm.xlu0 %567, %v563
        %v569 = vpop.permute.xlu0 %568
        %572 = vset.pattern.permute.xlu0 0
        %573 = vperm.xlu0 %572, %v564
        %v574 = vpop.permute.xlu0 %573
        %v576 = vlaneseq
        %v577 = vshrl.u32 %v576, 7
        %v578 = vsub.s32 0, %v577
        %v579 = vrot.slane %v565, %v578
        %v580 = vmul.f32 %v569, %v579
        %v581 = vmul.f32 %v574, %v579
        %v582 = vadd.f32 %v561, %v580
        %v583 = vadd.f32 %v562, %v581
        %v584 = vld [vmem:[%s287 + $0xf] sm:$0xff]
        %v585 = vld [vmem:[%s287 + $0x17] sm:$0xff]
        %v586 = vld [vmem:[%s1 + $0xe] sm:$0x1]
        %588 = vset.pattern.permute.xlu0 0
        %589 = vperm.xlu0 %588, %v584
        %v590 = vpop.permute.xlu0 %589
        %593 = vset.pattern.permute.xlu0 0
        %594 = vperm.xlu0 %593, %v585
        %v595 = vpop.permute.xlu0 %594
        %v597 = vlaneseq
        %v598 = vshrl.u32 %v597, 7
        %v599 = vsub.s32 0, %v598
        %v600 = vrot.slane %v586, %v599
        %v601 = vmul.f32 %v590, %v600
        %v602 = vmul.f32 %v595, %v600
        %v603 = vadd.f32 %v582, %v601
        %v604 = vadd.f32 %v583, %v602
        %v605 = vld [vmem:[%s287 + $0x10] sm:$0xff]
        %v606 = vld [vmem:[%s287 + $0x18] sm:$0xff]
        %v607 = vld [vmem:[%s1 + $0xf] sm:$0x1]
        %609 = vset.pattern.permute.xlu0 0
        %610 = vperm.xlu0 %609, %v605
        %v611 = vpop.permute.xlu0 %610
        %614 = vset.pattern.permute.xlu0 0
        %615 = vperm.xlu0 %614, %v606
        %v616 = vpop.permute.xlu0 %615
        %v618 = vlaneseq
        %v619 = vshrl.u32 %v618, 7
        %v620 = vsub.s32 0, %v619
        %v621 = vrot.slane %v607, %v620
        %v622 = vmul.f32 %v611, %v621
        %v623 = vmul.f32 %v616, %v621
        %v624 = vadd.f32 %v603, %v622
        %v625 = vadd.f32 %v604, %v623
        %v626 = vld [vmem:[%s287 + $0x11] sm:$0xff]
        %v627 = vld [vmem:[%s287 + $0x19] sm:$0xff]
        %v628 = vld [vmem:[%s1 + $0x10] sm:$0x1]
        %630 = vset.pattern.permute.xlu0 0
        %631 = vperm.xlu0 %630, %v626
        %v632 = vpop.permute.xlu0 %631
        %635 = vset.pattern.permute.xlu0 0
        %636 = vperm.xlu0 %635, %v627
        %v637 = vpop.permute.xlu0 %636
        %v639 = vlaneseq
        %v640 = vshrl.u32 %v639, 7
        %v641 = vsub.s32 0, %v640
        %v642 = vrot.slane %v628, %v641
        %v643 = vmul.f32 %v632, %v642
        %v644 = vmul.f32 %v637, %v642
        %v645 = vadd.f32 %v624, %v643
        %v646 = vadd.f32 %v625, %v644
        %v647 = vld [vmem:[%s287 + $0x12] sm:$0xff]
        %v648 = vld [vmem:[%s287 + $0x1a] sm:$0xff]
        %v649 = vld [vmem:[%s1 + $0x11] sm:$0x1]
        %651 = vset.pattern.permute.xlu0 0
        %652 = vperm.xlu0 %651, %v647
        %v653 = vpop.permute.xlu0 %652
        %656 = vset.pattern.permute.xlu0 0
        %657 = vperm.xlu0 %656, %v648
        %v658 = vpop.permute.xlu0 %657
        %v660 = vlaneseq
        %v661 = vshrl.u32 %v660, 7
        %v662 = vsub.s32 0, %v661
        %v663 = vrot.slane %v649, %v662
        %v664 = vmul.f32 %v653, %v663
        %v665 = vmul.f32 %v658, %v663
        %v666 = vadd.f32 %v645, %v664
        %v667 = vadd.f32 %v646, %v665
        %v668 = vld [vmem:[%s287 + $0x13] sm:$0xff]
        %v669 = vld [vmem:[%s287 + $0x1b] sm:$0xff]
        %v670 = vld [vmem:[%s1 + $0x12] sm:$0x1]
        %672 = vset.pattern.permute.xlu0 0
        %673 = vperm.xlu0 %672, %v668
        %v674 = vpop.permute.xlu0 %673
        %677 = vset.pattern.permute.xlu0 0
        %678 = vperm.xlu0 %677, %v669
        %v679 = vpop.permute.xlu0 %678
        %v681 = vlaneseq
        %v682 = vshrl.u32 %v681, 7
        %v683 = vsub.s32 0, %v682
        %v684 = vrot.slane %v670, %v683
        %v685 = vmul.f32 %v674, %v684
        %v686 = vmul.f32 %v679, %v684
        %v687 = vadd.f32 %v666, %v685
        %v688 = vadd.f32 %v667, %v686
        %v689 = vld [vmem:[%s287 + $0x14] sm:$0xff]
        %v690 = vld [vmem:[%s287 + $0x1c] sm:$0xff]
        %v691 = vld [vmem:[%s1 + $0x13] sm:$0x1]
        %693 = vset.pattern.permute.xlu0 0
        %694 = vperm.xlu0 %693, %v689
        %v695 = vpop.permute.xlu0 %694
        %698 = vset.pattern.permute.xlu0 0
        %699 = vperm.xlu0 %698, %v690
        %v700 = vpop.permute.xlu0 %699
        %v702 = vlaneseq
        %v703 = vshrl.u32 %v702, 7
        %v704 = vsub.s32 0, %v703
        %v705 = vrot.slane %v691, %v704
        %v706 = vmul.f32 %v695, %v705
        %v707 = vmul.f32 %v700, %v705
        %v708 = vadd.f32 %v687, %v706
        %v709 = vadd.f32 %v688, %v707
        %v710 = vld [vmem:[%s287 + $0x15] sm:$0xff]
        %v711 = vld [vmem:[%s287 + $0x1d] sm:$0xff]
        %v712 = vld [vmem:[%s1 + $0x14] sm:$0x1]
        %714 = vset.pattern.permute.xlu0 0
        %715 = vperm.xlu0 %714, %v710
        %v716 = vpop.permute.xlu0 %715
        %719 = vset.pattern.permute.xlu0 0
        %720 = vperm.xlu0 %719, %v711
        %v721 = vpop.permute.xlu0 %720
        %v723 = vlaneseq
        %v724 = vshrl.u32 %v723, 7
        %v725 = vsub.s32 0, %v724
        %v726 = vrot.slane %v712, %v725
        %v727 = vmul.f32 %v716, %v726
        %v728 = vmul.f32 %v721, %v726
        %v729 = vadd.f32 %v708, %v727
        %v730 = vadd.f32 %v709, %v728
        %v731 = vld [vmem:[%s287 + $0x16] sm:$0xff]
        %v732 = vld [vmem:[%s287 + $0x1e] sm:$0xff]
        %v733 = vld [vmem:[%s1 + $0x15] sm:$0x1]
        %735 = vset.pattern.permute.xlu0 0
        %736 = vperm.xlu0 %735, %v731
        %v737 = vpop.permute.xlu0 %736
        %740 = vset.pattern.permute.xlu0 0
        %741 = vperm.xlu0 %740, %v732
        %v742 = vpop.permute.xlu0 %741
        %v744 = vlaneseq
        %v745 = vshrl.u32 %v744, 7
        %v746 = vsub.s32 0, %v745
        %v747 = vrot.slane %v733, %v746
        %v748 = vmul.f32 %v737, %v747
        %v749 = vmul.f32 %v742, %v747
        %v750 = vadd.f32 %v729, %v748
        %v751 = vadd.f32 %v730, %v749
        %v752 = vld [vmem:[%s287 + $0x17] sm:$0xff]
        %v753 = vld [vmem:[%s287 + $0x1f] sm:$0xff]
        %v754 = vld [vmem:[%s1 + $0x16] sm:$0x1]
        %756 = vset.pattern.permute.xlu0 0
        %757 = vperm.xlu0 %756, %v752
        %v758 = vpop.permute.xlu0 %757
        %761 = vset.pattern.permute.xlu0 0
        %762 = vperm.xlu0 %761, %v753
        %v763 = vpop.permute.xlu0 %762
        %v765 = vlaneseq
        %v766 = vshrl.u32 %v765, 7
        %v767 = vsub.s32 0, %v766
        %v768 = vrot.slane %v754, %v767
        %v769 = vmul.f32 %v758, %v768
        %v770 = vmul.f32 %v763, %v768
        %v771 = vadd.f32 %v750, %v769
        %v772 = vadd.f32 %v751, %v770
        %v773 = vld [vmem:[%s287 + $0x18] sm:$0xff]
        %v774 = vld [vmem:[%s287 + $0x20] sm:$0xff]
        %v775 = vld [vmem:[%s1 + $0x17] sm:$0x1]
        %777 = vset.pattern.permute.xlu0 0
        %778 = vperm.xlu0 %777, %v773
        %v779 = vpop.permute.xlu0 %778
        %782 = vset.pattern.permute.xlu0 0
        %783 = vperm.xlu0 %782, %v774
        %v784 = vpop.permute.xlu0 %783
        %v786 = vlaneseq
        %v787 = vshrl.u32 %v786, 7
        %v788 = vsub.s32 0, %v787
        %v789 = vrot.slane %v775, %v788
        %v790 = vmul.f32 %v779, %v789
        %v791 = vmul.f32 %v784, %v789
        %v792 = vadd.f32 %v771, %v790
        %v793 = vadd.f32 %v772, %v791
        %v794 = vld [vmem:[%s287 + $0x19] sm:$0xff]
        %v795 = vld [vmem:[%s287 + $0x21] sm:$0xff]
        %v796 = vld [vmem:[%s1 + $0x18] sm:$0x1]
        %798 = vset.pattern.permute.xlu0 0
        %799 = vperm.xlu0 %798, %v794
        %v800 = vpop.permute.xlu0 %799
        %803 = vset.pattern.permute.xlu0 0
        %804 = vperm.xlu0 %803, %v795
        %v805 = vpop.permute.xlu0 %804
        %v807 = vlaneseq
        %v808 = vshrl.u32 %v807, 7
        %v809 = vsub.s32 0, %v808
        %v810 = vrot.slane %v796, %v809
        %v811 = vmul.f32 %v800, %v810
        %v812 = vmul.f32 %v805, %v810
        %v813 = vadd.f32 %v792, %v811
        %v814 = vadd.f32 %v793, %v812
        %v815 = vld [vmem:[%s287 + $0x1a] sm:$0xff]
        %v816 = vld [vmem:[%s287 + $0x22] sm:$0xff]
        %v817 = vld [vmem:[%s1 + $0x19] sm:$0x1]
        %819 = vset.pattern.permute.xlu0 0
        %820 = vperm.xlu0 %819, %v815
        %v821 = vpop.permute.xlu0 %820
        %824 = vset.pattern.permute.xlu0 0
        %825 = vperm.xlu0 %824, %v816
        %v826 = vpop.permute.xlu0 %825
        %v828 = vlaneseq
        %v829 = vshrl.u32 %v828, 7
        %v830 = vsub.s32 0, %v829
        %v831 = vrot.slane %v817, %v830
        %v832 = vmul.f32 %v821, %v831
        %v833 = vmul.f32 %v826, %v831
        %v834 = vadd.f32 %v813, %v832
        %v835 = vadd.f32 %v814, %v833
        %v836 = vld [vmem:[%s287 + $0x1b] sm:$0xff]
        %v837 = vld [vmem:[%s287 + $0x23] sm:$0xff]
        %v838 = vld [vmem:[%s1 + $0x1a] sm:$0x1]
        %840 = vset.pattern.permute.xlu0 0
        %841 = vperm.xlu0 %840, %v836
        %v842 = vpop.permute.xlu0 %841
        %845 = vset.pattern.permute.xlu0 0
        %846 = vperm.xlu0 %845, %v837
        %v847 = vpop.permute.xlu0 %846
        %v849 = vlaneseq
        %v850 = vshrl.u32 %v849, 7
        %v851 = vsub.s32 0, %v850
        %v852 = vrot.slane %v838, %v851
        %v853 = vmul.f32 %v842, %v852
        %v854 = vmul.f32 %v847, %v852
        %v855 = vadd.f32 %v834, %v853
        %v856 = vadd.f32 %v835, %v854
        %v857 = vld [vmem:[%s287 + $0x1c] sm:$0xff]
        %v858 = vld [vmem:[%s287 + $0x24] sm:$0xff]
        %v859 = vld [vmem:[%s1 + $0x1b] sm:$0x1]
        %861 = vset.pattern.permute.xlu0 0
        %862 = vperm.xlu0 %861, %v857
        %v863 = vpop.permute.xlu0 %862
        %866 = vset.pattern.permute.xlu0 0
        %867 = vperm.xlu0 %866, %v858
        %v868 = vpop.permute.xlu0 %867
        %v870 = vlaneseq
        %v871 = vshrl.u32 %v870, 7
        %v872 = vsub.s32 0, %v871
        %v873 = vrot.slane %v859, %v872
        %v874 = vmul.f32 %v863, %v873
        %v875 = vmul.f32 %v868, %v873
        %v876 = vadd.f32 %v855, %v874
        %v877 = vadd.f32 %v856, %v875
        %v878 = vld [vmem:[%s287 + $0x1d] sm:$0xff]
        %v879 = vld [vmem:[%s287 + $0x25] sm:$0xff]
        %v880 = vld [vmem:[%s1 + $0x1c] sm:$0x1]
        %882 = vset.pattern.permute.xlu0 0
        %883 = vperm.xlu0 %882, %v878
        %v884 = vpop.permute.xlu0 %883
        %887 = vset.pattern.permute.xlu0 0
        %888 = vperm.xlu0 %887, %v879
        %v889 = vpop.permute.xlu0 %888
        %v891 = vlaneseq
        %v892 = vshrl.u32 %v891, 7
        %v893 = vsub.s32 0, %v892
        %v894 = vrot.slane %v880, %v893
        %v895 = vmul.f32 %v884, %v894
        %v896 = vmul.f32 %v889, %v894
        %v897 = vadd.f32 %v876, %v895
        %v898 = vadd.f32 %v877, %v896
        %v899 = vld [vmem:[%s287 + $0x1e] sm:$0xff]
        %v900 = vld [vmem:[%s287 + $0x26] sm:$0xff]
        %v901 = vld [vmem:[%s1 + $0x1d] sm:$0x1]
        %903 = vset.pattern.permute.xlu0 0
        %904 = vperm.xlu0 %903, %v899
        %v905 = vpop.permute.xlu0 %904
        %908 = vset.pattern.permute.xlu0 0
        %909 = vperm.xlu0 %908, %v900
        %v910 = vpop.permute.xlu0 %909
        %v912 = vlaneseq
        %v913 = vshrl.u32 %v912, 7
        %v914 = vsub.s32 0, %v913
        %v915 = vrot.slane %v901, %v914
        %v916 = vmul.f32 %v905, %v915
        %v917 = vmul.f32 %v910, %v915
        %v918 = vadd.f32 %v897, %v916
        %v919 = vadd.f32 %v898, %v917
        %v920 = vld [vmem:[%s287 + $0x1f] sm:$0xff]
        %v921 = vld [vmem:[%s287 + $0x27] sm:$0xff]
        %v922 = vld [vmem:[%s1 + $0x1e] sm:$0x1]
        %924 = vset.pattern.permute.xlu0 0
        %925 = vperm.xlu0 %924, %v920
        %v926 = vpop.permute.xlu0 %925
        %929 = vset.pattern.permute.xlu0 0
        %930 = vperm.xlu0 %929, %v921
        %v931 = vpop.permute.xlu0 %930
        %v933 = vlaneseq
        %v934 = vshrl.u32 %v933, 7
        %v935 = vsub.s32 0, %v934
        %v936 = vrot.slane %v922, %v935
        %v937 = vmul.f32 %v926, %v936
        %v938 = vmul.f32 %v931, %v936
        %v939 = vadd.f32 %v918, %v937
        %v940 = vadd.f32 %v919, %v938
        %v941 = vld [vmem:[%s2] sm:$0x1]
        %v943 = vlaneseq
        %v944 = vshrl.u32 %v943, 7
        %v945 = vsub.s32 0, %v944
        %v946 = vrot.slane %v941, %v945
        %v948 = vadd.f32 %v939, %v946
        %v949 = vadd.f32 %v940, %v946
        %v950 = vmul.f32 %v948, 0.5
        %v951 = vmul.f32 %v949, 0.5
        %v952 = vmul.f32 %v948, 0.044715
        %v953 = vmul.f32 %v949, 0.044715
        %v954 = vmul.f32 %v952, %v948
        %v955 = vmul.f32 %v953, %v949
        %v956 = vmul.f32 %v954, %v948
        %v957 = vmul.f32 %v955, %v949
        %v958 = vadd.f32 %v948, %v956
        %v959 = vadd.f32 %v949, %v957
        %v960 = vmul.f32 %v958, 0.7978846
        %v961 = vmul.f32 %v959, 0.7978846
        %v962 = vtanh.pop %v960
        %v963 = vtanh.pop %v961
        %v964 = vadd.f32 %v962, 1.0
        %v965 = vadd.f32 %v963, 1.0
        %v966 = vmul.f32 %v950, %v964
        %v967 = vmul.f32 %v951, %v965
        %vm968 = vcmask 261120
        %969 = vst.msk [vmem:[#allocation2] sm:$0xff] %vm968, 0.0
        %970 = vst.msk [vmem:[#allocation2 + $0x8] sm:$0xff] %vm968, 0.0
        %971 = vst.msk [vmem:[#allocation2 + $0x10] sm:$0xff] %vm968, 0.0
        %972 = vst.msk [vmem:[#allocation2 + $0x18] sm:$0xff] %vm968, 0.0
        %973 = vst.msk [vmem:[#allocation2 + $0x20] sm:$0xff] %vm968, 0.0
        %974 = vst.msk [vmem:[#allocation2 + $0x28] sm:$0xff] %vm968, 0.0
        %975 = vst.msk [vmem:[#allocation2 + $0x10] sm:$0xff] %vm968, %v966
        %976 = vst.msk [vmem:[#allocation2 + $0x18] sm:$0xff] %vm968, %v967
        %v977 = vld [vmem:[#allocation2 + $0x1] sm:$0xff]
        %v978 = vld [vmem:[#allocation2 + $0x9] sm:$0xff]
        %v979 = vpack.c.bf16 %v978, %v977
        %v980 = vld [vmem:[#allocation3] sm:$0xf]
        %v981 = vld [vmem:[#allocation3 + $0x4] sm:$0xf]
        %v982 = vld [vmem:[#allocation3 + $0x8] sm:$0xf]
        %v983 = vld [vmem:[#allocation3 + $0xc] sm:$0xf]
        %v984 = vld [vmem:[#allocation2 + $0x2] sm:$0xff]
        %v985 = vld [vmem:[#allocation2 + $0xa] sm:$0xff]
        %v986 = vpack.c.bf16 %v985, %v984
        %s987 = scalar_lea.vmem [#allocation3], 16
        %v988 = vld [vmem:[%s987] sm:$0xf]
        %v989 = vld [vmem:[%s987 + $0x4] sm:$0xf]
        %v990 = vld [vmem:[%s987 + $0x8] sm:$0xf]
        %v991 = vld [vmem:[%s987 + $0xc] sm:$0xf]
        %v996 = vunpack.c.l.b16 %v988
        %v997 = vunpack.c.l.b16 %v989
        %v998 = vunpack.c.l.b16 %v990
        %v999 = vunpack.c.l.b16 %v991
        %v1000 = vpack.c.b16 %v997, %v996
        %v1001 = vpack.c.b16 %v999, %v998
        %v1005 = vsel %vm968, %v986, 0
        %1007 = vmatprep.subr.bf16.mxu0 0
        %1008 = vmatpush1.bf16.msra.mxu0 %v1000
        %1009 = vmatprep.subr.bf16.mxu0 0
        %1010 = vmatpush1.bf16.msra.mxu0 %v1001
        %1011 = vmatprep.subr.bf16.mxu0 0
        %1012 = vmatpush1.bf16.msra.mxu0 0
        %1013 = vmatprep.subr.bf16.mxu0 0
        %1014 = vmatpush1.bf16.msra.mxu0 0
        %1015 = vmatprep.subr.bf16.mxu0 0
        %1016 = vmatpush1.bf16.msra.mxu0 0
        %1017 = vmatprep.subr.bf16.mxu0 0
        %1018 = vmatpush1.bf16.msra.mxu0 0
        %1019 = vmatprep.subr.bf16.mxu0 0
        %1020 = vmatpush1.bf16.msra.mxu0 0
        %1021 = vmatprep.subr.bf16.mxu0 0
        %1022 = vmatpush1.bf16.msra.mxu0 0
        %1023 = vmatprep.subr.bf16.mxu0 0
        %1024 = vmatpush1.bf16.msra.mxu0 0
        %1025 = vmatprep.subr.bf16.mxu0 0
        %1026 = vmatpush1.bf16.msra.mxu0 0
        %1027 = vmatprep.subr.bf16.mxu0 0
        %1028 = vmatpush1.bf16.msra.mxu0 0
        %1029 = vmatprep.subr.bf16.mxu0 0
        %1030 = vmatpush1.bf16.msra.mxu0 0
        %1031 = vmatprep.subr.bf16.mxu0 0
        %1032 = vmatpush1.bf16.msra.mxu0 0
        %1033 = vmatprep.subr.bf16.mxu0 0
        %1034 = vmatpush1.bf16.msra.mxu0 0
        %1035 = vmatprep.subr.bf16.mxu0 0
        %1036 = vmatpush1.bf16.msra.mxu0 0
        %1037 = vmatprep.subr.bf16.mxu0 0
        %1038 = vmatpush1.bf16.msra.mxu0 0
        %1039 = vmatprep.mubr.bf16.mxu0 0
        %1040 = vmatmul.mubr.bf16.gmra.mrb[0].mxu0 %v1005
        %v1041 = vpop.f32.mrb[0].mxu0
        %v1042 = vadd.f32 0.0, %v1041
        %v1043 = vpop.f32.mrb[0].mxu0
        %v1044 = vpop.f32.mrb[0].mxu0
        %v1045 = vadd.f32 0.0, %v1044
        %v1046 = vpop.f32.mrb[0].mxu0
        %1047 = vdwg.mxu0
        %v1052 = vunpack.c.l.b16 %v980
        %v1053 = vunpack.c.l.b16 %v981
        %v1054 = vunpack.c.l.b16 %v982
        %v1055 = vunpack.c.l.b16 %v983
        %v1056 = vpack.c.b16 %v1053, %v1052
        %v1057 = vpack.c.b16 %v1055, %v1054
        %v1061 = vsel %vm968, %v979, 0
        %1063 = vmatprep.subr.bf16.mxu0 0
        %1064 = vmatpush1.bf16.msra.mxu0 %v1056
        %1065 = vmatprep.subr.bf16.mxu0 0
        %1066 = vmatpush1.bf16.msra.mxu0 %v1057
        %1067 = vmatprep.subr.bf16.mxu0 0
        %1068 = vmatpush1.bf16.msra.mxu0 0
        %1069 = vmatprep.subr.bf16.mxu0 0
        %1070 = vmatpush1.bf16.msra.mxu0 0
        %1071 = vmatprep.subr.bf16.mxu0 0
        %1072 = vmatpush1.bf16.msra.mxu0 0
        %1073 = vmatprep.subr.bf16.mxu0 0
        %1074 = vmatpush1.bf16.msra.mxu0 0
        %1075 = vmatprep.subr.bf16.mxu0 0
        %1076 = vmatpush1.bf16.msra.mxu0 0
        %1077 = vmatprep.subr.bf16.mxu0 0
        %1078 = vmatpush1.bf16.msra.mxu0 0
        %1079 = vmatprep.subr.bf16.mxu0 0
        %1080 = vmatpush1.bf16.msra.mxu0 0
        %1081 = vmatprep.subr.bf16.mxu0 0
        %1082 = vmatpush1.bf16.msra.mxu0 0
        %1083 = vmatprep.subr.bf16.mxu0 0
        %1084 = vmatpush1.bf16.msra.mxu0 0
        %1085 = vmatprep.subr.bf16.mxu0 0
        %1086 = vmatpush1.bf16.msra.mxu0 0
        %1087 = vmatprep.subr.bf16.mxu0 0
        %1088 = vmatpush1.bf16.msra.mxu0 0
        %1089 = vmatprep.subr.bf16.mxu0 0
        %1090 = vmatpush1.bf16.msra.mxu0 0
        %1091 = vmatprep.subr.bf16.mxu0 0
        %1092 = vmatpush1.bf16.msra.mxu0 0
        %1093 = vmatprep.subr.bf16.mxu0 0
        %1094 = vmatpush1.bf16.msra.mxu0 0
        %1095 = vmatprep.mubr.bf16.mxu0 0
        %1096 = vmatmul.mubr.bf16.gmra.mrb[0].mxu0 %v1061
        %v1097 = vpop.f32.mrb[0].mxu0
        %v1098 = vadd.f32 %v1042, %v1097
        %v1099 = vpop.f32.mrb[0].mxu0
        %v1100 = vpop.f32.mrb[0].mxu0
        %v1101 = vadd.f32 %v1045, %v1100
        %v1102 = vpop.f32.mrb[0].mxu0
        %1103 = vdwg.mxu0
        %v1104 = vld [vmem:[#allocation2 + $0x3] sm:$0xff]
        %v1105 = vld [vmem:[#allocation2 + $0xb] sm:$0xff]
        %v1106 = vpack.c.bf16 %v1105, %v1104
        %s1107 = scalar_lea.vmem [#allocation3], 32
        %v1108 = vld [vmem:[%s1107] sm:$0xf]
        %v1109 = vld [vmem:[%s1107 + $0x4] sm:$0xf]
        %v1110 = vld [vmem:[%s1107 + $0x8] sm:$0xf]
        %v1111 = vld [vmem:[%s1107 + $0xc] sm:$0xf]
        %v1116 = vunpack.c.l.b16 %v1108
        %v1117 = vunpack.c.l.b16 %v1109
        %v1118 = vunpack.c.l.b16 %v1110
        %v1119 = vunpack.c.l.b16 %v1111
        %v1120 = vpack.c.b16 %v1117, %v1116
        %v1121 = vpack.c.b16 %v1119, %v1118
        %v1125 = vsel %vm968, %v1106, 0
        %1127 = vmatprep.subr.bf16.mxu0 0
        %1128 = vmatpush1.bf16.msra.mxu0 %v1120
        %1129 = vmatprep.subr.bf16.mxu0 0
        %1130 = vmatpush1.bf16.msra.mxu0 %v1121
        %1131 = vmatprep.subr.bf16.mxu0 0
        %1132 = vmatpush1.bf16.msra.mxu0 0
        %1133 = vmatprep.subr.bf16.mxu0 0
        %1134 = vmatpush1.bf16.msra.mxu0 0
        %1135 = vmatprep.subr.bf16.mxu0 0
        %1136 = vmatpush1.bf16.msra.mxu0 0
        %1137 = vmatprep.subr.bf16.mxu0 0
        %1138 = vmatpush1.bf16.msra.mxu0 0
        %1139 = vmatprep.subr.bf16.mxu0 0
        %1140 = vmatpush1.bf16.msra.mxu0 0
        %1141 = vmatprep.subr.bf16.mxu0 0
        %1142 = vmatpush1.bf16.msra.mxu0 0
        %1143 = vmatprep.subr.bf16.mxu0 0
        %1144 = vmatpush1.bf16.msra.mxu0 0
        %1145 = vmatprep.subr.bf16.mxu0 0
        %1146 = vmatpush1.bf16.msra.mxu0 0
        %1147 = vmatprep.subr.bf16.mxu0 0
        %1148 = vmatpush1.bf16.msra.mxu0 0
        %1149 = vmatprep.subr.bf16.mxu0 0
        %1150 = vmatpush1.bf16.msra.mxu0 0
        %1151 = vmatprep.subr.bf16.mxu0 0
        %1152 = vmatpush1.bf16.msra.mxu0 0
        %1153 = vmatprep.subr.bf16.mxu0 0
        %1154 = vmatpush1.bf16.msra.mxu0 0
        %1155 = vmatprep.subr.bf16.mxu0 0
        %1156 = vmatpush1.bf16.msra.mxu0 0
        %1157 = vmatprep.subr.bf16.mxu0 0
        %1158 = vmatpush1.bf16.msra.mxu0 0
        %1159 = vmatprep.mubr.bf16.mxu0 0
        %1160 = vmatmul.mubr.bf16.gmra.mrb[0].mxu0 %v1125
        %v1161 = vpop.f32.mrb[0].mxu0
        %v1162 = vadd.f32 0.0, %v1161
        %v1163 = vpop.f32.mrb[0].mxu0
        %v1164 = vpop.f32.mrb[0].mxu0
        %v1165 = vadd.f32 0.0, %v1164
        %v1166 = vpop.f32.mrb[0].mxu0
        %1167 = vdwg.mxu0
        %v1168 = vadd.f32 %v1098, %v1162
        %v1169 = vadd.f32 %v1101, %v1165
        %v1170 = vld [vmem:[#allocation2 + $0x4] sm:$0xff]
        %v1171 = vld [vmem:[#allocation2 + $0xc] sm:$0xff]
        %v1172 = vpack.c.bf16 %v1171, %v1170
        %s1173 = scalar_lea.vmem [#allocation3], 48
        %v1174 = vld [vmem:[%s1173] sm:$0xf]
        %v1175 = vld [vmem:[%s1173 + $0x4] sm:$0xf]
        %v1176 = vld [vmem:[%s1173 + $0x8] sm:$0xf]
        %v1177 = vld [vmem:[%s1173 + $0xc] sm:$0xf]
        %v1182 = vunpack.c.l.b16 %v1174
        %v1183 = vunpack.c.l.b16 %v1175
        %v1184 = vunpack.c.l.b16 %v1176
        %v1185 = vunpack.c.l.b16 %v1177
        %v1186 = vpack.c.b16 %v1183, %v1182
        %v1187 = vpack.c.b16 %v1185, %v1184
        %v1191 = vsel %vm968, %v1172, 0
        %1193 = vmatprep.subr.bf16.mxu0 0
        %1194 = vmatpush1.bf16.msra.mxu0 %v1186
        %1195 = vmatprep.subr.bf16.mxu0 0
        %1196 = vmatpush1.bf16.msra.mxu0 %v1187
        %1197 = vmatprep.subr.bf16.mxu0 0
        %1198 = vmatpush1.bf16.msra.mxu0 0
        %1199 = vmatprep.subr.bf16.mxu0 0
        %1200 = vmatpush1.bf16.msra.mxu0 0
        %1201 = vmatprep.subr.bf16.mxu0 0
        %1202 = vmatpush1.bf16.msra.mxu0 0
        %1203 = vmatprep.subr.bf16.mxu0 0
        %1204 = vmatpush1.bf16.msra.mxu0 0
        %1205 = vmatprep.subr.bf16.mxu0 0
        %1206 = vmatpush1.bf16.msra.mxu0 0
        %1207 = vmatprep.subr.bf16.mxu0 0
        %1208 = vmatpush1.bf16.msra.mxu0 0
        %1209 = vmatprep.subr.bf16.mxu0 0
        %1210 = vmatpush1.bf16.msra.mxu0 0
        %1211 = vmatprep.subr.bf16.mxu0 0
        %1212 = vmatpush1.bf16.msra.mxu0 0
        %1213 = vmatprep.subr.bf16.mxu0 0
        %1214 = vmatpush1.bf16.msra.mxu0 0
        %1215 = vmatprep.subr.bf16.mxu0 0
        %1216 = vmatpush1.bf16.msra.mxu0 0
        %1217 = vmatprep.subr.bf16.mxu0 0
        %1218 = vmatpush1.bf16.msra.mxu0 0
        %1219 = vmatprep.subr.bf16.mxu0 0
        %1220 = vmatpush1.bf16.msra.mxu0 0
        %1221 = vmatprep.subr.bf16.mxu0 0
        %1222 = vmatpush1.bf16.msra.mxu0 0
        %1223 = vmatprep.subr.bf16.mxu0 0
        %1224 = vmatpush1.bf16.msra.mxu0 0
        %1225 = vmatprep.mubr.bf16.mxu0 0
        %1226 = vmatmul.mubr.bf16.gmra.mrb[0].mxu0 %v1191
        %v1227 = vpop.f32.mrb[0].mxu0
        %v1228 = vadd.f32 0.0, %v1227
        %v1229 = vpop.f32.mrb[0].mxu0
        %v1230 = vpop.f32.mrb[0].mxu0
        %v1231 = vadd.f32 0.0, %v1230
        %v1232 = vpop.f32.mrb[0].mxu0
        %1233 = vdwg.mxu0
        %v1234 = vadd.f32 %v1168, %v1228
        %v1235 = vadd.f32 %v1169, %v1231
        %v1236 = vld [vmem:[#allocation2 + $0x5] sm:$0xff]
        %v1237 = vld [vmem:[#allocation2 + $0xd] sm:$0xff]
        %v1238 = vpack.c.bf16 %v1237, %v1236
        %s1239 = scalar_lea.vmem [#allocation3], 64
        %v1240 = vld [vmem:[%s1239] sm:$0xf]
        %v1241 = vld [vmem:[%s1239 + $0x4] sm:$0xf]
        %v1242 = vld [vmem:[%s1239 + $0x8] sm:$0xf]
        %v1243 = vld [vmem:[%s1239 + $0xc] sm:$0xf]
        %v1248 = vunpack.c.l.b16 %v1240
        %v1249 = vunpack.c.l.b16 %v1241
        %v1250 = vunpack.c.l.b16 %v1242
        %v1251 = vunpack.c.l.b16 %v1243
        %v1252 = vpack.c.b16 %v1249, %v1248
        %v1253 = vpack.c.b16 %v1251, %v1250
        %v1257 = vsel %vm968, %v1238, 0
        %1259 = vmatprep.subr.bf16.mxu0 0
        %1260 = vmatpush1.bf16.msra.mxu0 %v1252
        %1261 = vmatprep.subr.bf16.mxu0 0
        %1262 = vmatpush1.bf16.msra.mxu0 %v1253
        %1263 = vmatprep.subr.bf16.mxu0 0
        %1264 = vmatpush1.bf16.msra.mxu0 0
        %1265 = vmatprep.subr.bf16.mxu0 0
        %1266 = vmatpush1.bf16.msra.mxu0 0
        %1267 = vmatprep.subr.bf16.mxu0 0
        %1268 = vmatpush1.bf16.msra.mxu0 0
        %1269 = vmatprep.subr.bf16.mxu0 0
        %1270 = vmatpush1.bf16.msra.mxu0 0
        %1271 = vmatprep.subr.bf16.mxu0 0
        %1272 = vmatpush1.bf16.msra.mxu0 0
        %1273 = vmatprep.subr.bf16.mxu0 0
        %1274 = vmatpush1.bf16.msra.mxu0 0
        %1275 = vmatprep.subr.bf16.mxu0 0
        %1276 = vmatpush1.bf16.msra.mxu0 0
        %1277 = vmatprep.subr.bf16.mxu0 0
        %1278 = vmatpush1.bf16.msra.mxu0 0
        %1279 = vmatprep.subr.bf16.mxu0 0
        %1280 = vmatpush1.bf16.msra.mxu0 0
        %1281 = vmatprep.subr.bf16.mxu0 0
        %1282 = vmatpush1.bf16.msra.mxu0 0
        %1283 = vmatprep.subr.bf16.mxu0 0
        %1284 = vmatpush1.bf16.msra.mxu0 0
        %1285 = vmatprep.subr.bf16.mxu0 0
        %1286 = vmatpush1.bf16.msra.mxu0 0
        %1287 = vmatprep.subr.bf16.mxu0 0
        %1288 = vmatpush1.bf16.msra.mxu0 0
        %1289 = vmatprep.subr.bf16.mxu0 0
        %1290 = vmatpush1.bf16.msra.mxu0 0
        %1291 = vmatprep.mubr.bf16.mxu0 0
        %1292 = vmatmul.mubr.bf16.gmra.mrb[0].mxu0 %v1257
        %v1293 = vpop.f32.mrb[0].mxu0
        %v1294 = vadd.f32 0.0, %v1293
        %v1295 = vpop.f32.mrb[0].mxu0
        %v1296 = vpop.f32.mrb[0].mxu0
        %v1297 = vadd.f32 0.0, %v1296
        %v1298 = vpop.f32.mrb[0].mxu0
        %1299 = vdwg.mxu0
        %v1300 = vadd.f32 %v1234, %v1294
        %v1301 = vadd.f32 %v1235, %v1297
        %v1302 = vld [vmem:[#allocation2 + $0x6] sm:$0xff]
        %v1303 = vld [vmem:[#allocation2 + $0xe] sm:$0xff]
        %v1304 = vpack.c.bf16 %v1303, %v1302
        %s1305 = scalar_lea.vmem [#allocation3], 80
        %v1306 = vld [vmem:[%s1305] sm:$0xf]
        %v1307 = vld [vmem:[%s1305 + $0x4] sm:$0xf]
        %v1308 = vld [vmem:[%s1305 + $0x8] sm:$0xf]
        %v1309 = vld [vmem:[%s1305 + $0xc] sm:$0xf]
        %v1314 = vunpack.c.l.b16 %v1306
        %v1315 = vunpack.c.l.b16 %v1307
        %v1316 = vunpack.c.l.b16 %v1308
        %v1317 = vunpack.c.l.b16 %v1309
        %v1318 = vpack.c.b16 %v1315, %v1314
        %v1319 = vpack.c.b16 %v1317, %v1316
        %v1323 = vsel %vm968, %v1304, 0
        %1325 = vmatprep.subr.bf16.mxu0 0
        %1326 = vmatpush1.bf16.msra.mxu0 %v1318
        %1327 = vmatprep.subr.bf16.mxu0 0
        %1328 = vmatpush1.bf16.msra.mxu0 %v1319
        %1329 = vmatprep.subr.bf16.mxu0 0
        %1330 = vmatpush1.bf16.msra.mxu0 0
        %1331 = vmatprep.subr.bf16.mxu0 0
        %1332 = vmatpush1.bf16.msra.mxu0 0
        %1333 = vmatprep.subr.bf16.mxu0 0
        %1334 = vmatpush1.bf16.msra.mxu0 0
        %1335 = vmatprep.subr.bf16.mxu0 0
        %1336 = vmatpush1.bf16.msra.mxu0 0
        %1337 = vmatprep.subr.bf16.mxu0 0
        %1338 = vmatpush1.bf16.msra.mxu0 0
        %1339 = vmatprep.subr.bf16.mxu0 0
        %1340 = vmatpush1.bf16.msra.mxu0 0
        %1341 = vmatprep.subr.bf16.mxu0 0
        %1342 = vmatpush1.bf16.msra.mxu0 0
        %1343 = vmatprep.subr.bf16.mxu0 0
        %1344 = vmatpush1.bf16.msra.mxu0 0
        %1345 = vmatprep.subr.bf16.mxu0 0
        %1346 = vmatpush1.bf16.msra.mxu0 0
        %1347 = vmatprep.subr.bf16.mxu0 0
        %1348 = vmatpush1.bf16.msra.mxu0 0
        %1349 = vmatprep.subr.bf16.mxu0 0
        %1350 = vmatpush1.bf16.msra.mxu0 0
        %1351 = vmatprep.subr.bf16.mxu0 0
        %1352 = vmatpush1.bf16.msra.mxu0 0
        %1353 = vmatprep.subr.bf16.mxu0 0
        %1354 = vmatpush1.bf16.msra.mxu0 0
        %1355 = vmatprep.subr.bf16.mxu0 0
        %1356 = vmatpush1.bf16.msra.mxu0 0
        %1357 = vmatprep.mubr.bf16.mxu0 0
        %1358 = vmatmul.mubr.bf16.gmra.mrb[0].mxu0 %v1323
        %v1359 = vpop.f32.mrb[0].mxu0
        %v1360 = vadd.f32 0.0, %v1359
        %v1361 = vpop.f32.mrb[0].mxu0
        %v1362 = vpop.f32.mrb[0].mxu0
        %v1363 = vadd.f32 0.0, %v1362
        %v1364 = vpop.f32.mrb[0].mxu0
        %1365 = vdwg.mxu0
        %v1366 = vadd.f32 %v1300, %v1360
        %v1367 = vadd.f32 %v1301, %v1363
        %v1368 = vld [vmem:[#allocation2 + $0x7] sm:$0xff]
        %v1369 = vld [vmem:[#allocation2 + $0xf] sm:$0xff]
        %v1370 = vpack.c.bf16 %v1369, %v1368
        %s1371 = scalar_lea.vmem [#allocation3], 96
        %v1372 = vld [vmem:[%s1371] sm:$0xf]
        %v1373 = vld [vmem:[%s1371 + $0x4] sm:$0xf]
        %v1374 = vld [vmem:[%s1371 + $0x8] sm:$0xf]
        %v1375 = vld [vmem:[%s1371 + $0xc] sm:$0xf]
        %v1380 = vunpack.c.l.b16 %v1372
        %v1381 = vunpack.c.l.b16 %v1373
        %v1382 = vunpack.c.l.b16 %v1374
        %v1383 = vunpack.c.l.b16 %v1375
        %v1384 = vpack.c.b16 %v1381, %v1380
        %v1385 = vpack.c.b16 %v1383, %v1382
        %v1389 = vsel %vm968, %v1370, 0
        %1391 = vmatprep.subr.bf16.mxu0 0
        %1392 = vmatpush1.bf16.msra.mxu0 %v1384
        %1393 = vmatprep.subr.bf16.mxu0 0
        %1394 = vmatpush1.bf16.msra.mxu0 %v1385
        %1395 = vmatprep.subr.bf16.mxu0 0
        %1396 = vmatpush1.bf16.msra.mxu0 0
        %1397 = vmatprep.subr.bf16.mxu0 0
        %1398 = vmatpush1.bf16.msra.mxu0 0
        %1399 = vmatprep.subr.bf16.mxu0 0
        %1400 = vmatpush1.bf16.msra.mxu0 0
        %1401 = vmatprep.subr.bf16.mxu0 0
        %1402 = vmatpush1.bf16.msra.mxu0 0
        %1403 = vmatprep.subr.bf16.mxu0 0
        %1404 = vmatpush1.bf16.msra.mxu0 0
        %1405 = vmatprep.subr.bf16.mxu0 0
        %1406 = vmatpush1.bf16.msra.mxu0 0
        %1407 = vmatprep.subr.bf16.mxu0 0
        %1408 = vmatpush1.bf16.msra.mxu0 0
        %1409 = vmatprep.subr.bf16.mxu0 0
        %1410 = vmatpush1.bf16.msra.mxu0 0
        %1411 = vmatprep.subr.bf16.mxu0 0
        %1412 = vmatpush1.bf16.msra.mxu0 0
        %1413 = vmatprep.subr.bf16.mxu0 0
        %1414 = vmatpush1.bf16.msra.mxu0 0
        %1415 = vmatprep.subr.bf16.mxu0 0
        %1416 = vmatpush1.bf16.msra.mxu0 0
        %1417 = vmatprep.subr.bf16.mxu0 0
        %1418 = vmatpush1.bf16.msra.mxu0 0
        %1419 = vmatprep.subr.bf16.mxu0 0
        %1420 = vmatpush1.bf16.msra.mxu0 0
        %1421 = vmatprep.subr.bf16.mxu0 0
        %1422 = vmatpush1.bf16.msra.mxu0 0
        %1423 = vmatprep.mubr.bf16.mxu0 0
        %1424 = vmatmul.mubr.bf16.gmra.mrb[0].mxu0 %v1389
        %v1425 = vpop.f32.mrb[0].mxu0
        %v1426 = vadd.f32 0.0, %v1425
        %v1427 = vpop.f32.mrb[0].mxu0
        %v1428 = vpop.f32.mrb[0].mxu0
        %v1429 = vadd.f32 0.0, %v1428
        %v1430 = vpop.f32.mrb[0].mxu0
        %1431 = vdwg.mxu0
        %v1432 = vadd.f32 %v1366, %v1426
        %v1433 = vadd.f32 %v1367, %v1429
        %v1434 = vld [vmem:[#allocation2 + $0x8] sm:$0xff]
        %v1435 = vld [vmem:[#allocation2 + $0x10] sm:$0xff]
        %v1436 = vpack.c.bf16 %v1435, %v1434
        %s1437 = scalar_lea.vmem [#allocation3], 112
        %v1438 = vld [vmem:[%s1437] sm:$0xf]
        %v1439 = vld [vmem:[%s1437 + $0x4] sm:$0xf]
        %v1440 = vld [vmem:[%s1437 + $0x8] sm:$0xf]
        %v1441 = vld [vmem:[%s1437 + $0xc] sm:$0xf]
        %v1446 = vunpack.c.l.b16 %v1438
        %v1447 = vunpack.c.l.b16 %v1439
        %v1448 = vunpack.c.l.b16 %v1440
        %v1449 = vunpack.c.l.b16 %v1441
        %v1450 = vpack.c.b16 %v1447, %v1446
        %v1451 = vpack.c.b16 %v1449, %v1448
        %v1455 = vsel %vm968, %v1436, 0
        %1457 = vmatprep.subr.bf16.mxu0 0
        %1458 = vmatpush1.bf16.msra.mxu0 %v1450
        %1459 = vmatprep.subr.bf16.mxu0 0
        %1460 = vmatpush1.bf16.msra.mxu0 %v1451
        %1461 = vmatprep.subr.bf16.mxu0 0
        %1462 = vmatpush1.bf16.msra.mxu0 0
        %1463 = vmatprep.subr.bf16.mxu0 0
        %1464 = vmatpush1.bf16.msra.mxu0 0
        %1465 = vmatprep.subr.bf16.mxu0 0
        %1466 = vmatpush1.bf16.msra.mxu0 0
        %1467 = vmatprep.subr.bf16.mxu0 0
        %1468 = vmatpush1.bf16.msra.mxu0 0
        %1469 = vmatprep.subr.bf16.mxu0 0
        %1470 = vmatpush1.bf16.msra.mxu0 0
        %1471 = vmatprep.subr.bf16.mxu0 0
        %1472 = vmatpush1.bf16.msra.mxu0 0
        %1473 = vmatprep.subr.bf16.mxu0 0
        %1474 = vmatpush1.bf16.msra.mxu0 0
        %1475 = vmatprep.subr.bf16.mxu0 0
        %1476 = vmatpush1.bf16.msra.mxu0 0
        %1477 = vmatprep.subr.bf16.mxu0 0
        %1478 = vmatpush1.bf16.msra.mxu0 0
        %1479 = vmatprep.subr.bf16.mxu0 0
        %1480 = vmatpush1.bf16.msra.mxu0 0
        %1481 = vmatprep.subr.bf16.mxu0 0
        %1482 = vmatpush1.bf16.msra.mxu0 0
        %1483 = vmatprep.subr.bf16.mxu0 0
        %1484 = vmatpush1.bf16.msra.mxu0 0
        %1485 = vmatprep.subr.bf16.mxu0 0
        %1486 = vmatpush1.bf16.msra.mxu0 0
        %1487 = vmatprep.subr.bf16.mxu0 0
        %1488 = vmatpush1.bf16.msra.mxu0 0
        %1489 = vmatprep.mubr.bf16.mxu0 0
        %1490 = vmatmul.mubr.bf16.gmra.mrb[0].mxu0 %v1455
        %v1491 = vpop.f32.mrb[0].mxu0
        %v1492 = vadd.f32 0.0, %v1491
        %v1493 = vpop.f32.mrb[0].mxu0
        %v1494 = vpop.f32.mrb[0].mxu0
        %v1495 = vadd.f32 0.0, %v1494
        %v1496 = vpop.f32.mrb[0].mxu0
        %1497 = vdwg.mxu0
        %v1498 = vadd.f32 %v1432, %v1492
        %v1499 = vadd.f32 %v1433, %v1495
        %v1500 = vld [vmem:[#allocation2 + $0x9] sm:$0xff]
        %v1501 = vld [vmem:[#allocation2 + $0x11] sm:$0xff]
        %v1502 = vpack.c.bf16 %v1501, %v1500
        %s1503 = scalar_lea.vmem [#allocation3], 128
        %v1504 = vld [vmem:[%s1503] sm:$0xf]
        %v1505 = vld [vmem:[%s1503 + $0x4] sm:$0xf]
        %v1506 = vld [vmem:[%s1503 + $0x8] sm:$0xf]
        %v1507 = vld [vmem:[%s1503 + $0xc] sm:$0xf]
        %v1512 = vunpack.c.l.b16 %v1504
        %v1513 = vunpack.c.l.b16 %v1505
        %v1514 = vunpack.c.l.b16 %v1506
        %v1515 = vunpack.c.l.b16 %v1507
        %v1516 = vpack.c.b16 %v1513, %v1512
        %v1517 = vpack.c.b16 %v1515, %v1514
        %v1521 = vsel %vm968, %v1502, 0
        %1523 = vmatprep.subr.bf16.mxu0 0
        %1524 = vmatpush1.bf16.msra.mxu0 %v1516
        %1525 = vmatprep.subr.bf16.mxu0 0
        %1526 = vmatpush1.bf16.msra.mxu0 %v1517
        %1527 = vmatprep.subr.bf16.mxu0 0
        %1528 = vmatpush1.bf16.msra.mxu0 0
        %1529 = vmatprep.subr.bf16.mxu0 0
        %1530 = vmatpush1.bf16.msra.mxu0 0
        %1531 = vmatprep.subr.bf16.mxu0 0
        %1532 = vmatpush1.bf16.msra.mxu0 0
        %1533 = vmatprep.subr.bf16.mxu0 0
        %1534 = vmatpush1.bf16.msra.mxu0 0
        %1535 = vmatprep.subr.bf16.mxu0 0
        %1536 = vmatpush1.bf16.msra.mxu0 0
        %1537 = vmatprep.subr.bf16.mxu0 0
        %1538 = vmatpush1.bf16.msra.mxu0 0
        %1539 = vmatprep.subr.bf16.mxu0 0
        %1540 = vmatpush1.bf16.msra.mxu0 0
        %1541 = vmatprep.subr.bf16.mxu0 0
        %1542 = vmatpush1.bf16.msra.mxu0 0
        %1543 = vmatprep.subr.bf16.mxu0 0
        %1544 = vmatpush1.bf16.msra.mxu0 0
        %1545 = vmatprep.subr.bf16.mxu0 0
        %1546 = vmatpush1.bf16.msra.mxu0 0
        %1547 = vmatprep.subr.bf16.mxu0 0
        %1548 = vmatpush1.bf16.msra.mxu0 0
        %1549 = vmatprep.subr.bf16.mxu0 0
        %1550 = vmatpush1.bf16.msra.mxu0 0
        %1551 = vmatprep.subr.bf16.mxu0 0
        %1552 = vmatpush1.bf16.msra.mxu0 0
        %1553 = vmatprep.subr.bf16.mxu0 0
        %1554 = vmatpush1.bf16.msra.mxu0 0
        %1555 = vmatprep.mubr.bf16.mxu0 0
        %1556 = vmatmul.mubr.bf16.gmra.mrb[0].mxu0 %v1521
        %v1557 = vpop.f32.mrb[0].mxu0
        %v1558 = vadd.f32 0.0, %v1557
        %v1559 = vpop.f32.mrb[0].mxu0
        %v1560 = vpop.f32.mrb[0].mxu0
        %v1561 = vadd.f32 0.0, %v1560
        %v1562 = vpop.f32.mrb[0].mxu0
        %1563 = vdwg.mxu0
        %v1564 = vadd.f32 %v1498, %v1558
        %v1565 = vadd.f32 %v1499, %v1561
        %v1566 = vld [vmem:[#allocation2 + $0xa] sm:$0xff]
        %v1567 = vld [vmem:[#allocation2 + $0x12] sm:$0xff]
        %v1568 = vpack.c.bf16 %v1567, %v1566
        %s1569 = scalar_lea.vmem [#allocation3], 144
        %v1570 = vld [vmem:[%s1569] sm:$0xf]
        %v1571 = vld [vmem:[%s1569 + $0x4] sm:$0xf]
        %v1572 = vld [vmem:[%s1569 + $0x8] sm:$0xf]
        %v1573 = vld [vmem:[%s1569 + $0xc] sm:$0xf]
        %v1578 = vunpack.c.l.b16 %v1570
        %v1579 = vunpack.c.l.b16 %v1571
        %v1580 = vunpack.c.l.b16 %v1572
        %v1581 = vunpack.c.l.b16 %v1573
        %v1582 = vpack.c.b16 %v1579, %v1578
        %v1583 = vpack.c.b16 %v1581, %v1580
        %v1587 = vsel %vm968, %v1568, 0
        %1589 = vmatprep.subr.bf16.mxu0 0
        %1590 = vmatpush1.bf16.msra.mxu0 %v1582
        %1591 = vmatprep.subr.bf16.mxu0 0
        %1592 = vmatpush1.bf16.msra.mxu0 %v1583
        %1593 = vmatprep.subr.bf16.mxu0 0
        %1594 = vmatpush1.bf16.msra.mxu0 0
        %1595 = vmatprep.subr.bf16.mxu0 0
        %1596 = vmatpush1.bf16.msra.mxu0 0
        %1597 = vmatprep.subr.bf16.mxu0 0
        %1598 = vmatpush1.bf16.msra.mxu0 0
        %1599 = vmatprep.subr.bf16.mxu0 0
        %1600 = vmatpush1.bf16.msra.mxu0 0
        %1601 = vmatprep.subr.bf16.mxu0 0
        %1602 = vmatpush1.bf16.msra.mxu0 0
        %1603 = vmatprep.subr.bf16.mxu0 0
        %1604 = vmatpush1.bf16.msra.mxu0 0
        %1605 = vmatprep.subr.bf16.mxu0 0
        %1606 = vmatpush1.bf16.msra.mxu0 0
        %1607 = vmatprep.subr.bf16.mxu0 0
        %1608 = vmatpush1.bf16.msra.mxu0 0
        %1609 = vmatprep.subr.bf16.mxu0 0
        %1610 = vmatpush1.bf16.msra.mxu0 0
        %1611 = vmatprep.subr.bf16.mxu0 0
        %1612 = vmatpush1.bf16.msra.mxu0 0
        %1613 = vmatprep.subr.bf16.mxu0 0
        %1614 = vmatpush1.bf16.msra.mxu0 0
        %1615 = vmatprep.subr.bf16.mxu0 0
        %1616 = vmatpush1.bf16.msra.mxu0 0
        %1617 = vmatprep.subr.bf16.mxu0 0
        %1618 = vmatpush1.bf16.msra.mxu0 0
        %1619 = vmatprep.subr.bf16.mxu0 0
        %1620 = vmatpush1.bf16.msra.mxu0 0
        %1621 = vmatprep.mubr.bf16.mxu0 0
        %1622 = vmatmul.mubr.bf16.gmra.mrb[0].mxu0 %v1587
        %v1623 = vpop.f32.mrb[0].mxu0
        %v1624 = vadd.f32 0.0, %v1623
        %v1625 = vpop.f32.mrb[0].mxu0
        %v1626 = vpop.f32.mrb[0].mxu0
        %v1627 = vadd.f32 0.0, %v1626
        %v1628 = vpop.f32.mrb[0].mxu0
        %1629 = vdwg.mxu0
        %v1630 = vadd.f32 %v1564, %v1624
        %v1631 = vadd.f32 %v1565, %v1627
        %v1632 = vld [vmem:[#allocation2 + $0xb] sm:$0xff]
        %v1633 = vld [vmem:[#allocation2 + $0x13] sm:$0xff]
        %v1634 = vpack.c.bf16 %v1633, %v1632
        %s1635 = scalar_lea.vmem [#allocation3], 160
        %v1636 = vld [vmem:[%s1635] sm:$0xf]
        %v1637 = vld [vmem:[%s1635 + $0x4] sm:$0xf]
        %v1638 = vld [vmem:[%s1635 + $0x8] sm:$0xf]
        %v1639 = vld [vmem:[%s1635 + $0xc] sm:$0xf]
        %v1644 = vunpack.c.l.b16 %v1636
        %v1645 = vunpack.c.l.b16 %v1637
        %v1646 = vunpack.c.l.b16 %v1638
        %v1647 = vunpack.c.l.b16 %v1639
        %v1648 = vpack.c.b16 %v1645, %v1644
        %v1649 = vpack.c.b16 %v1647, %v1646
        %v1653 = vsel %vm968, %v1634, 0
        %1655 = vmatprep.subr.bf16.mxu0 0
        %1656 = vmatpush1.bf16.msra.mxu0 %v1648
        %1657 = vmatprep.subr.bf16.mxu0 0
        %1658 = vmatpush1.bf16.msra.mxu0 %v1649
        %1659 = vmatprep.subr.bf16.mxu0 0
        %1660 = vmatpush1.bf16.msra.mxu0 0
        %1661 = vmatprep.subr.bf16.mxu0 0
        %1662 = vmatpush1.bf16.msra.mxu0 0
        %1663 = vmatprep.subr.bf16.mxu0 0
        %1664 = vmatpush1.bf16.msra.mxu0 0
        %1665 = vmatprep.subr.bf16.mxu0 0
        %1666 = vmatpush1.bf16.msra.mxu0 0
        %1667 = vmatprep.subr.bf16.mxu0 0
        %1668 = vmatpush1.bf16.msra.mxu0 0
        %1669 = vmatprep.subr.bf16.mxu0 0
        %1670 = vmatpush1.bf16.msra.mxu0 0
        %1671 = vmatprep.subr.bf16.mxu0 0
        %1672 = vmatpush1.bf16.msra.mxu0 0
        %1673 = vmatprep.subr.bf16.mxu0 0
        %1674 = vmatpush1.bf16.msra.mxu0 0
        %1675 = vmatprep.subr.bf16.mxu0 0
        %1676 = vmatpush1.bf16.msra.mxu0 0
        %1677 = vmatprep.subr.bf16.mxu0 0
        %1678 = vmatpush1.bf16.msra.mxu0 0
        %1679 = vmatprep.subr.bf16.mxu0 0
        %1680 = vmatpush1.bf16.msra.mxu0 0
        %1681 = vmatprep.subr.bf16.mxu0 0
        %1682 = vmatpush1.bf16.msra.mxu0 0
        %1683 = vmatprep.subr.bf16.mxu0 0
        %1684 = vmatpush1.bf16.msra.mxu0 0
        %1685 = vmatprep.subr.bf16.mxu0 0
        %1686 = vmatpush1.bf16.msra.mxu0 0
        %1687 = vmatprep.mubr.bf16.mxu0 0
        %1688 = vmatmul.mubr.bf16.gmra.mrb[0].mxu0 %v1653
        %v1689 = vpop.f32.mrb[0].mxu0
        %v1690 = vadd.f32 0.0, %v1689
        %v1691 = vpop.f32.mrb[0].mxu0
        %v1692 = vpop.f32.mrb[0].mxu0
        %v1693 = vadd.f32 0.0, %v1692
        %v1694 = vpop.f32.mrb[0].mxu0
        %1695 = vdwg.mxu0
        %v1696 = vadd.f32 %v1630, %v1690
        %v1697 = vadd.f32 %v1631, %v1693
        %v1698 = vld [vmem:[#allocation2 + $0xc] sm:$0xff]
        %v1699 = vld [vmem:[#allocation2 + $0x14] sm:$0xff]
        %v1700 = vpack.c.bf16 %v1699, %v1698
        %s1701 = scalar_lea.vmem [#allocation3], 176
        %v1702 = vld [vmem:[%s1701] sm:$0xf]
        %v1703 = vld [vmem:[%s1701 + $0x4] sm:$0xf]
        %v1704 = vld [vmem:[%s1701 + $0x8] sm:$0xf]
        %v1705 = vld [vmem:[%s1701 + $0xc] sm:$0xf]
        %v1710 = vunpack.c.l.b16 %v1702
        %v1711 = vunpack.c.l.b16 %v1703
        %v1712 = vunpack.c.l.b16 %v1704
        %v1713 = vunpack.c.l.b16 %v1705
        %v1714 = vpack.c.b16 %v1711, %v1710
        %v1715 = vpack.c.b16 %v1713, %v1712
        %v1719 = vsel %vm968, %v1700, 0
        %1721 = vmatprep.subr.bf16.mxu0 0
        %1722 = vmatpush1.bf16.msra.mxu0 %v1714
        %1723 = vmatprep.subr.bf16.mxu0 0
        %1724 = vmatpush1.bf16.msra.mxu0 %v1715
        %1725 = vmatprep.subr.bf16.mxu0 0
        %1726 = vmatpush1.bf16.msra.mxu0 0
        %1727 = vmatprep.subr.bf16.mxu0 0
        %1728 = vmatpush1.bf16.msra.mxu0 0
        %1729 = vmatprep.subr.bf16.mxu0 0
        %1730 = vmatpush1.bf16.msra.mxu0 0
        %1731 = vmatprep.subr.bf16.mxu0 0
        %1732 = vmatpush1.bf16.msra.mxu0 0
        %1733 = vmatprep.subr.bf16.mxu0 0
        %1734 = vmatpush1.bf16.msra.mxu0 0
        %1735 = vmatprep.subr.bf16.mxu0 0
        %1736 = vmatpush1.bf16.msra.mxu0 0
        %1737 = vmatprep.subr.bf16.mxu0 0
        %1738 = vmatpush1.bf16.msra.mxu0 0
        %1739 = vmatprep.subr.bf16.mxu0 0
        %1740 = vmatpush1.bf16.msra.mxu0 0
        %1741 = vmatprep.subr.bf16.mxu0 0
        %1742 = vmatpush1.bf16.msra.mxu0 0
        %1743 = vmatprep.subr.bf16.mxu0 0
        %1744 = vmatpush1.bf16.msra.mxu0 0
        %1745 = vmatprep.subr.bf16.mxu0 0
        %1746 = vmatpush1.bf16.msra.mxu0 0
        %1747 = vmatprep.subr.bf16.mxu0 0
        %1748 = vmatpush1.bf16.msra.mxu0 0
        %1749 = vmatprep.subr.bf16.mxu0 0
        %1750 = vmatpush1.bf16.msra.mxu0 0
        %1751 = vmatprep.subr.bf16.mxu0 0
        %1752 = vmatpush1.bf16.msra.mxu0 0
        %1753 = vmatprep.mubr.bf16.mxu0 0
        %1754 = vmatmul.mubr.bf16.gmra.mrb[0].mxu0 %v1719
        %v1755 = vpop.f32.mrb[0].mxu0
        %v1756 = vadd.f32 0.0, %v1755
        %v1757 = vpop.f32.mrb[0].mxu0
        %v1758 = vpop.f32.mrb[0].mxu0
        %v1759 = vadd.f32 0.0, %v1758
        %v1760 = vpop.f32.mrb[0].mxu0
        %1761 = vdwg.mxu0
        %v1762 = vadd.f32 %v1696, %v1756
        %v1763 = vadd.f32 %v1697, %v1759
        %v1764 = vld [vmem:[#allocation2 + $0xd] sm:$0xff]
        %v1765 = vld [vmem:[#allocation2 + $0x15] sm:$0xff]
        %v1766 = vpack.c.bf16 %v1765, %v1764
        %s1767 = scalar_lea.vmem [#allocation3], 192
        %v1768 = vld [vmem:[%s1767] sm:$0xf]
        %v1769 = vld [vmem:[%s1767 + $0x4] sm:$0xf]
        %v1770 = vld [vmem:[%s1767 + $0x8] sm:$0xf]
        %v1771 = vld [vmem:[%s1767 + $0xc] sm:$0xf]
        %v1776 = vunpack.c.l.b16 %v1768
        %v1777 = vunpack.c.l.b16 %v1769
        %v1778 = vunpack.c.l.b16 %v1770
        %v1779 = vunpack.c.l.b16 %v1771
        %v1780 = vpack.c.b16 %v1777, %v1776
        %v1781 = vpack.c.b16 %v1779, %v1778
        %v1785 = vsel %vm968, %v1766, 0
        %1787 = vmatprep.subr.bf16.mxu0 0
        %1788 = vmatpush1.bf16.msra.mxu0 %v1780
        %1789 = vmatprep.subr.bf16.mxu0 0
        %1790 = vmatpush1.bf16.msra.mxu0 %v1781
        %1791 = vmatprep.subr.bf16.mxu0 0
        %1792 = vmatpush1.bf16.msra.mxu0 0
        %1793 = vmatprep.subr.bf16.mxu0 0
        %1794 = vmatpush1.bf16.msra.mxu0 0
        %1795 = vmatprep.subr.bf16.mxu0 0
        %1796 = vmatpush1.bf16.msra.mxu0 0
        %1797 = vmatprep.subr.bf16.mxu0 0
        %1798 = vmatpush1.bf16.msra.mxu0 0
        %1799 = vmatprep.subr.bf16.mxu0 0
        %1800 = vmatpush1.bf16.msra.mxu0 0
        %1801 = vmatprep.subr.bf16.mxu0 0
        %1802 = vmatpush1.bf16.msra.mxu0 0
        %1803 = vmatprep.subr.bf16.mxu0 0
        %1804 = vmatpush1.bf16.msra.mxu0 0
        %1805 = vmatprep.subr.bf16.mxu0 0
        %1806 = vmatpush1.bf16.msra.mxu0 0
        %1807 = vmatprep.subr.bf16.mxu0 0
        %1808 = vmatpush1.bf16.msra.mxu0 0
        %1809 = vmatprep.subr.bf16.mxu0 0
        %1810 = vmatpush1.bf16.msra.mxu0 0
        %1811 = vmatprep.subr.bf16.mxu0 0
        %1812 = vmatpush1.bf16.msra.mxu0 0
        %1813 = vmatprep.subr.bf16.mxu0 0
        %1814 = vmatpush1.bf16.msra.mxu0 0
        %1815 = vmatprep.subr.bf16.mxu0 0
        %1816 = vmatpush1.bf16.msra.mxu0 0
        %1817 = vmatprep.subr.bf16.mxu0 0
        %1818 = vmatpush1.bf16.msra.mxu0 0
        %1819 = vmatprep.mubr.bf16.mxu0 0
        %1820 = vmatmul.mubr.bf16.gmra.mrb[0].mxu0 %v1785
        %v1821 = vpop.f32.mrb[0].mxu0
        %v1822 = vadd.f32 0.0, %v1821
        %v1823 = vpop.f32.mrb[0].mxu0
        %v1824 = vpop.f32.mrb[0].mxu0
        %v1825 = vadd.f32 0.0, %v1824
        %v1826 = vpop.f32.mrb[0].mxu0
        %1827 = vdwg.mxu0
        %v1828 = vadd.f32 %v1762, %v1822
        %v1829 = vadd.f32 %v1763, %v1825
        %v1830 = vld [vmem:[#allocation2 + $0xe] sm:$0xff]
        %v1831 = vld [vmem:[#allocation2 + $0x16] sm:$0xff]
        %v1832 = vpack.c.bf16 %v1831, %v1830
        %s1833 = scalar_lea.vmem [#allocation3], 208
        %v1834 = vld [vmem:[%s1833] sm:$0xf]
        %v1835 = vld [vmem:[%s1833 + $0x4] sm:$0xf]
        %v1836 = vld [vmem:[%s1833 + $0x8] sm:$0xf]
        %v1837 = vld [vmem:[%s1833 + $0xc] sm:$0xf]
        %v1842 = vunpack.c.l.b16 %v1834
        %v1843 = vunpack.c.l.b16 %v1835
        %v1844 = vunpack.c.l.b16 %v1836
        %v1845 = vunpack.c.l.b16 %v1837
        %v1846 = vpack.c.b16 %v1843, %v1842
        %v1847 = vpack.c.b16 %v1845, %v1844
        %v1851 = vsel %vm968, %v1832, 0
        %1853 = vmatprep.subr.bf16.mxu0 0
        %1854 = vmatpush1.bf16.msra.mxu0 %v1846
        %1855 = vmatprep.subr.bf16.mxu0 0
        %1856 = vmatpush1.bf16.msra.mxu0 %v1847
        %1857 = vmatprep.subr.bf16.mxu0 0
        %1858 = vmatpush1.bf16.msra.mxu0 0
        %1859 = vmatprep.subr.bf16.mxu0 0
        %1860 = vmatpush1.bf16.msra.mxu0 0
        %1861 = vmatprep.subr.bf16.mxu0 0
        %1862 = vmatpush1.bf16.msra.mxu0 0
        %1863 = vmatprep.subr.bf16.mxu0 0
        %1864 = vmatpush1.bf16.msra.mxu0 0
        %1865 = vmatprep.subr.bf16.mxu0 0
        %1866 = vmatpush1.bf16.msra.mxu0 0
        %1867 = vmatprep.subr.bf16.mxu0 0
        %1868 = vmatpush1.bf16.msra.mxu0 0
        %1869 = vmatprep.subr.bf16.mxu0 0
        %1870 = vmatpush1.bf16.msra.mxu0 0
        %1871 = vmatprep.subr.bf16.mxu0 0
        %1872 = vmatpush1.bf16.msra.mxu0 0
        %1873 = vmatprep.subr.bf16.mxu0 0
        %1874 = vmatpush1.bf16.msra.mxu0 0
        %1875 = vmatprep.subr.bf16.mxu0 0
        %1876 = vmatpush1.bf16.msra.mxu0 0
        %1877 = vmatprep.subr.bf16.mxu0 0
        %1878 = vmatpush1.bf16.msra.mxu0 0
        %1879 = vmatprep.subr.bf16.mxu0 0
        %1880 = vmatpush1.bf16.msra.mxu0 0
        %1881 = vmatprep.subr.bf16.mxu0 0
        %1882 = vmatpush1.bf16.msra.mxu0 0
        %1883 = vmatprep.subr.bf16.mxu0 0
        %1884 = vmatpush1.bf16.msra.mxu0 0
        %1885 = vmatprep.mubr.bf16.mxu0 0
        %1886 = vmatmul.mubr.bf16.gmra.mrb[0].mxu0 %v1851
        %v1887 = vpop.f32.mrb[0].mxu0
        %v1888 = vadd.f32 0.0, %v1887
        %v1889 = vpop.f32.mrb[0].mxu0
        %v1890 = vpop.f32.mrb[0].mxu0
        %v1891 = vadd.f32 0.0, %v1890
        %v1892 = vpop.f32.mrb[0].mxu0
        %1893 = vdwg.mxu0
        %v1894 = vadd.f32 %v1828, %v1888
        %v1895 = vadd.f32 %v1829, %v1891
        %v1896 = vld [vmem:[#allocation2 + $0xf] sm:$0xff]
        %v1897 = vld [vmem:[#allocation2 + $0x17] sm:$0xff]
        %v1898 = vpack.c.bf16 %v1897, %v1896
        %s1899 = scalar_lea.vmem [#allocation3], 224
        %v1900 = vld [vmem:[%s1899] sm:$0xf]
        %v1901 = vld [vmem:[%s1899 + $0x4] sm:$0xf]
        %v1902 = vld [vmem:[%s1899 + $0x8] sm:$0xf]
        %v1903 = vld [vmem:[%s1899 + $0xc] sm:$0xf]
        %v1908 = vunpack.c.l.b16 %v1900
        %v1909 = vunpack.c.l.b16 %v1901
        %v1910 = vunpack.c.l.b16 %v1902
        %v1911 = vunpack.c.l.b16 %v1903
        %v1912 = vpack.c.b16 %v1909, %v1908
        %v1913 = vpack.c.b16 %v1911, %v1910
        %v1917 = vsel %vm968, %v1898, 0
        %1919 = vmatprep.subr.bf16.mxu0 0
        %1920 = vmatpush1.bf16.msra.mxu0 %v1912
        %1921 = vmatprep.subr.bf16.mxu0 0
        %1922 = vmatpush1.bf16.msra.mxu0 %v1913
        %1923 = vmatprep.subr.bf16.mxu0 0
        %1924 = vmatpush1.bf16.msra.mxu0 0
        %1925 = vmatprep.subr.bf16.mxu0 0
        %1926 = vmatpush1.bf16.msra.mxu0 0
        %1927 = vmatprep.subr.bf16.mxu0 0
        %1928 = vmatpush1.bf16.msra.mxu0 0
        %1929 = vmatprep.subr.bf16.mxu0 0
        %1930 = vmatpush1.bf16.msra.mxu0 0
        %1931 = vmatprep.subr.bf16.mxu0 0
        %1932 = vmatpush1.bf16.msra.mxu0 0
        %1933 = vmatprep.subr.bf16.mxu0 0
        %1934 = vmatpush1.bf16.msra.mxu0 0
        %1935 = vmatprep.subr.bf16.mxu0 0
        %1936 = vmatpush1.bf16.msra.mxu0 0
        %1937 = vmatprep.subr.bf16.mxu0 0
        %1938 = vmatpush1.bf16.msra.mxu0 0
        %1939 = vmatprep.subr.bf16.mxu0 0
        %1940 = vmatpush1.bf16.msra.mxu0 0
        %1941 = vmatprep.subr.bf16.mxu0 0
        %1942 = vmatpush1.bf16.msra.mxu0 0
        %1943 = vmatprep.subr.bf16.mxu0 0
        %1944 = vmatpush1.bf16.msra.mxu0 0
        %1945 = vmatprep.subr.bf16.mxu0 0
        %1946 = vmatpush1.bf16.msra.mxu0 0
        %1947 = vmatprep.subr.bf16.mxu0 0
        %1948 = vmatpush1.bf16.msra.mxu0 0
        %1949 = vmatprep.subr.bf16.mxu0 0
        %1950 = vmatpush1.bf16.msra.mxu0 0
        %1951 = vmatprep.mubr.bf16.mxu0 0
        %1952 = vmatmul.mubr.bf16.gmra.mrb[0].mxu0 %v1917
        %v1953 = vpop.f32.mrb[0].mxu0
        %v1954 = vadd.f32 0.0, %v1953
        %v1955 = vpop.f32.mrb[0].mxu0
        %v1956 = vpop.f32.mrb[0].mxu0
        %v1957 = vadd.f32 0.0, %v1956
        %v1958 = vpop.f32.mrb[0].mxu0
        %1959 = vdwg.mxu0
        %v1960 = vadd.f32 %v1894, %v1954
        %v1961 = vadd.f32 %v1895, %v1957
        %v1962 = vld [vmem:[#allocation2 + $0x10] sm:$0xff]
        %v1963 = vld [vmem:[#allocation2 + $0x18] sm:$0xff]
        %v1964 = vpack.c.bf16 %v1963, %v1962
        %s1965 = scalar_lea.vmem [#allocation3], 240
        %v1966 = vld [vmem:[%s1965] sm:$0xf]
        %v1967 = vld [vmem:[%s1965 + $0x4] sm:$0xf]
        %v1968 = vld [vmem:[%s1965 + $0x8] sm:$0xf]
        %v1969 = vld [vmem:[%s1965 + $0xc] sm:$0xf]
        %v1974 = vunpack.c.l.b16 %v1966
        %v1975 = vunpack.c.l.b16 %v1967
        %v1976 = vunpack.c.l.b16 %v1968
        %v1977 = vunpack.c.l.b16 %v1969
        %v1978 = vpack.c.b16 %v1975, %v1974
        %v1979 = vpack.c.b16 %v1977, %v1976
        %v1983 = vsel %vm968, %v1964, 0
        %1985 = vmatprep.subr.bf16.mxu0 0
        %1986 = vmatpush1.bf16.msra.mxu0 %v1978
        %1987 = vmatprep.subr.bf16.mxu0 0
        %1988 = vmatpush1.bf16.msra.mxu0 %v1979
        %1989 = vmatprep.subr.bf16.mxu0 0
        %1990 = vmatpush1.bf16.msra.mxu0 0
        %1991 = vmatprep.subr.bf16.mxu0 0
        %1992 = vmatpush1.bf16.msra.mxu0 0
        %1993 = vmatprep.subr.bf16.mxu0 0
        %1994 = vmatpush1.bf16.msra.mxu0 0
        %1995 = vmatprep.subr.bf16.mxu0 0
        %1996 = vmatpush1.bf16.msra.mxu0 0
        %1997 = vmatprep.subr.bf16.mxu0 0
        %1998 = vmatpush1.bf16.msra.mxu0 0
        %1999 = vmatprep.subr.bf16.mxu0 0
        %2000 = vmatpush1.bf16.msra.mxu0 0
        %2001 = vmatprep.subr.bf16.mxu0 0
        %2002 = vmatpush1.bf16.msra.mxu0 0
        %2003 = vmatprep.subr.bf16.mxu0 0
        %2004 = vmatpush1.bf16.msra.mxu0 0
        %2005 = vmatprep.subr.bf16.mxu0 0
        %2006 = vmatpush1.bf16.msra.mxu0 0
        %2007 = vmatprep.subr.bf16.mxu0 0
        %2008 = vmatpush1.bf16.msra.mxu0 0
        %2009 = vmatprep.subr.bf16.mxu0 0
        %2010 = vmatpush1.bf16.msra.mxu0 0
        %2011 = vmatprep.subr.bf16.mxu0 0
        %2012 = vmatpush1.bf16.msra.mxu0 0
        %2013 = vmatprep.subr.bf16.mxu0 0
        %2014 = vmatpush1.bf16.msra.mxu0 0
        %2015 = vmatprep.subr.bf16.mxu0 0
        %2016 = vmatpush1.bf16.msra.mxu0 0
        %2017 = vmatprep.mubr.bf16.mxu0 0
        %2018 = vmatmul.mubr.bf16.gmra.mrb[0].mxu0 %v1983
        %v2019 = vpop.f32.mrb[0].mxu0
        %v2020 = vadd.f32 0.0, %v2019
        %v2021 = vpop.f32.mrb[0].mxu0
        %v2022 = vpop.f32.mrb[0].mxu0
        %v2023 = vadd.f32 0.0, %v2022
        %v2024 = vpop.f32.mrb[0].mxu0
        %2025 = vdwg.mxu0
        %v2026 = vadd.f32 %v1960, %v2020
        %v2027 = vadd.f32 %v1961, %v2023
        %v2028 = vld [vmem:[#allocation2 + $0x11] sm:$0xff]
        %v2029 = vld [vmem:[#allocation2 + $0x19] sm:$0xff]
        %v2030 = vpack.c.bf16 %v2029, %v2028
        %s2031 = scalar_lea.vmem [#allocation3], 256
        %v2032 = vld [vmem:[%s2031] sm:$0xf]
        %v2033 = vld [vmem:[%s2031 + $0x4] sm:$0xf]
        %v2034 = vld [vmem:[%s2031 + $0x8] sm:$0xf]
        %v2035 = vld [vmem:[%s2031 + $0xc] sm:$0xf]
        %v2040 = vunpack.c.l.b16 %v2032
        %v2041 = vunpack.c.l.b16 %v2033
        %v2042 = vunpack.c.l.b16 %v2034
        %v2043 = vunpack.c.l.b16 %v2035
        %v2044 = vpack.c.b16 %v2041, %v2040
        %v2045 = vpack.c.b16 %v2043, %v2042
        %v2049 = vsel %vm968, %v2030, 0
        %2051 = vmatprep.subr.bf16.mxu0 0
        %2052 = vmatpush1.bf16.msra.mxu0 %v2044
        %2053 = vmatprep.subr.bf16.mxu0 0
        %2054 = vmatpush1.bf16.msra.mxu0 %v2045
        %2055 = vmatprep.subr.bf16.mxu0 0
        %2056 = vmatpush1.bf16.msra.mxu0 0
        %2057 = vmatprep.subr.bf16.mxu0 0
        %2058 = vmatpush1.bf16.msra.mxu0 0
        %2059 = vmatprep.subr.bf16.mxu0 0
        %2060 = vmatpush1.bf16.msra.mxu0 0
        %2061 = vmatprep.subr.bf16.mxu0 0
        %2062 = vmatpush1.bf16.msra.mxu0 0
        %2063 = vmatprep.subr.bf16.mxu0 0
        %2064 = vmatpush1.bf16.msra.mxu0 0
        %2065 = vmatprep.subr.bf16.mxu0 0
        %2066 = vmatpush1.bf16.msra.mxu0 0
        %2067 = vmatprep.subr.bf16.mxu0 0
        %2068 = vmatpush1.bf16.msra.mxu0 0
        %2069 = vmatprep.subr.bf16.mxu0 0
        %2070 = vmatpush1.bf16.msra.mxu0 0
        %2071 = vmatprep.subr.bf16.mxu0 0
        %2072 = vmatpush1.bf16.msra.mxu0 0
        %2073 = vmatprep.subr.bf16.mxu0 0
        %2074 = vmatpush1.bf16.msra.mxu0 0
        %2075 = vmatprep.subr.bf16.mxu0 0
        %2076 = vmatpush1.bf16.msra.mxu0 0
        %2077 = vmatprep.subr.bf16.mxu0 0
        %2078 = vmatpush1.bf16.msra.mxu0 0
        %2079 = vmatprep.subr.bf16.mxu0 0
        %2080 = vmatpush1.bf16.msra.mxu0 0
        %2081 = vmatprep.subr.bf16.mxu0 0
        %2082 = vmatpush1.bf16.msra.mxu0 0
        %2083 = vmatprep.mubr.bf16.mxu0 0
        %2084 = vmatmul.mubr.bf16.gmra.mrb[0].mxu0 %v2049
        %v2085 = vpop.f32.mrb[0].mxu0
        %v2086 = vadd.f32 0.0, %v2085
        %v2087 = vpop.f32.mrb[0].mxu0
        %v2088 = vpop.f32.mrb[0].mxu0
        %v2089 = vadd.f32 0.0, %v2088
        %v2090 = vpop.f32.mrb[0].mxu0
        %2091 = vdwg.mxu0
        %v2092 = vadd.f32 %v2026, %v2086
        %v2093 = vadd.f32 %v2027, %v2089
        %v2094 = vld [vmem:[#allocation2 + $0x12] sm:$0xff]
        %v2095 = vld [vmem:[#allocation2 + $0x1a] sm:$0xff]
        %v2096 = vpack.c.bf16 %v2095, %v2094
        %s2097 = scalar_lea.vmem [#allocation3], 272
        %v2098 = vld [vmem:[%s2097] sm:$0xf]
        %v2099 = vld [vmem:[%s2097 + $0x4] sm:$0xf]
        %v2100 = vld [vmem:[%s2097 + $0x8] sm:$0xf]
        %v2101 = vld [vmem:[%s2097 + $0xc] sm:$0xf]
        %v2106 = vunpack.c.l.b16 %v2098
        %v2107 = vunpack.c.l.b16 %v2099
        %v2108 = vunpack.c.l.b16 %v2100
        %v2109 = vunpack.c.l.b16 %v2101
        %v2110 = vpack.c.b16 %v2107, %v2106
        %v2111 = vpack.c.b16 %v2109, %v2108
        %v2115 = vsel %vm968, %v2096, 0
        %2117 = vmatprep.subr.bf16.mxu0 0
        %2118 = vmatpush1.bf16.msra.mxu0 %v2110
        %2119 = vmatprep.subr.bf16.mxu0 0
        %2120 = vmatpush1.bf16.msra.mxu0 %v2111
        %2121 = vmatprep.subr.bf16.mxu0 0
        %2122 = vmatpush1.bf16.msra.mxu0 0
        %2123 = vmatprep.subr.bf16.mxu0 0
        %2124 = vmatpush1.bf16.msra.mxu0 0
        %2125 = vmatprep.subr.bf16.mxu0 0
        %2126 = vmatpush1.bf16.msra.mxu0 0
        %2127 = vmatprep.subr.bf16.mxu0 0
        %2128 = vmatpush1.bf16.msra.mxu0 0
        %2129 = vmatprep.subr.bf16.mxu0 0
        %2130 = vmatpush1.bf16.msra.mxu0 0
        %2131 = vmatprep.subr.bf16.mxu0 0
        %2132 = vmatpush1.bf16.msra.mxu0 0
        %2133 = vmatprep.subr.bf16.mxu0 0
        %2134 = vmatpush1.bf16.msra.mxu0 0
        %2135 = vmatprep.subr.bf16.mxu0 0
        %2136 = vmatpush1.bf16.msra.mxu0 0
        %2137 = vmatprep.subr.bf16.mxu0 0
        %2138 = vmatpush1.bf16.msra.mxu0 0
        %2139 = vmatprep.subr.bf16.mxu0 0
        %2140 = vmatpush1.bf16.msra.mxu0 0
        %2141 = vmatprep.subr.bf16.mxu0 0
        %2142 = vmatpush1.bf16.msra.mxu0 0
        %2143 = vmatprep.subr.bf16.mxu0 0
        %2144 = vmatpush1.bf16.msra.mxu0 0
        %2145 = vmatprep.subr.bf16.mxu0 0
        %2146 = vmatpush1.bf16.msra.mxu0 0
        %2147 = vmatprep.subr.bf16.mxu0 0
        %2148 = vmatpush1.bf16.msra.mxu0 0
        %2149 = vmatprep.mubr.bf16.mxu0 0
        %2150 = vmatmul.mubr.bf16.gmra.mrb[0].mxu0 %v2115
        %v2151 = vpop.f32.mrb[0].mxu0
        %v2152 = vadd.f32 0.0, %v2151
        %v2153 = vpop.f32.mrb[0].mxu0
        %v2154 = vpop.f32.mrb[0].mxu0
        %v2155 = vadd.f32 0.0, %v2154
        %v2156 = vpop.f32.mrb[0].mxu0
        %2157 = vdwg.mxu0
        %v2158 = vadd.f32 %v2092, %v2152
        %v2159 = vadd.f32 %v2093, %v2155
        %v2160 = vld [vmem:[#allocation2 + $0x13] sm:$0xff]
        %v2161 = vld [vmem:[#allocation2 + $0x1b] sm:$0xff]
        %v2162 = vpack.c.bf16 %v2161, %v2160
        %s2163 = scalar_lea.vmem [#allocation3], 288
        %v2164 = vld [vmem:[%s2163] sm:$0xf]
        %v2165 = vld [vmem:[%s2163 + $0x4] sm:$0xf]
        %v2166 = vld [vmem:[%s2163 + $0x8] sm:$0xf]
        %v2167 = vld [vmem:[%s2163 + $0xc] sm:$0xf]
        %v2172 = vunpack.c.l.b16 %v2164
        %v2173 = vunpack.c.l.b16 %v2165
        %v2174 = vunpack.c.l.b16 %v2166
        %v2175 = vunpack.c.l.b16 %v2167
        %v2176 = vpack.c.b16 %v2173, %v2172
        %v2177 = vpack.c.b16 %v2175, %v2174
        %v2181 = vsel %vm968, %v2162, 0
        %2183 = vmatprep.subr.bf16.mxu0 0
        %2184 = vmatpush1.bf16.msra.mxu0 %v2176
        %2185 = vmatprep.subr.bf16.mxu0 0
        %2186 = vmatpush1.bf16.msra.mxu0 %v2177
        %2187 = vmatprep.subr.bf16.mxu0 0
        %2188 = vmatpush1.bf16.msra.mxu0 0
        %2189 = vmatprep.subr.bf16.mxu0 0
        %2190 = vmatpush1.bf16.msra.mxu0 0
        %2191 = vmatprep.subr.bf16.mxu0 0
        %2192 = vmatpush1.bf16.msra.mxu0 0
        %2193 = vmatprep.subr.bf16.mxu0 0
        %2194 = vmatpush1.bf16.msra.mxu0 0
        %2195 = vmatprep.subr.bf16.mxu0 0
        %2196 = vmatpush1.bf16.msra.mxu0 0
        %2197 = vmatprep.subr.bf16.mxu0 0
        %2198 = vmatpush1.bf16.msra.mxu0 0
        %2199 = vmatprep.subr.bf16.mxu0 0
        %2200 = vmatpush1.bf16.msra.mxu0 0
        %2201 = vmatprep.subr.bf16.mxu0 0
        %2202 = vmatpush1.bf16.msra.mxu0 0
        %2203 = vmatprep.subr.bf16.mxu0 0
        %2204 = vmatpush1.bf16.msra.mxu0 0
        %2205 = vmatprep.subr.bf16.mxu0 0
        %2206 = vmatpush1.bf16.msra.mxu0 0
        %2207 = vmatprep.subr.bf16.mxu0 0
        %2208 = vmatpush1.bf16.msra.mxu0 0
        %2209 = vmatprep.subr.bf16.mxu0 0
        %2210 = vmatpush1.bf16.msra.mxu0 0
        %2211 = vmatprep.subr.bf16.mxu0 0
        %2212 = vmatpush1.bf16.msra.mxu0 0
        %2213 = vmatprep.subr.bf16.mxu0 0
        %2214 = vmatpush1.bf16.msra.mxu0 0
        %2215 = vmatprep.mubr.bf16.mxu0 0
        %2216 = vmatmul.mubr.bf16.gmra.mrb[0].mxu0 %v2181
        %v2217 = vpop.f32.mrb[0].mxu0
        %v2218 = vadd.f32 0.0, %v2217
        %v2219 = vpop.f32.mrb[0].mxu0
        %v2220 = vpop.f32.mrb[0].mxu0
        %v2221 = vadd.f32 0.0, %v2220
        %v2222 = vpop.f32.mrb[0].mxu0
        %2223 = vdwg.mxu0
        %v2224 = vadd.f32 %v2158, %v2218
        %v2225 = vadd.f32 %v2159, %v2221
        %v2226 = vld [vmem:[#allocation2 + $0x14] sm:$0xff]
        %v2227 = vld [vmem:[#allocation2 + $0x1c] sm:$0xff]
        %v2228 = vpack.c.bf16 %v2227, %v2226
        %s2229 = scalar_lea.vmem [#allocation3], 304
        %v2230 = vld [vmem:[%s2229] sm:$0xf]
        %v2231 = vld [vmem:[%s2229 + $0x4] sm:$0xf]
        %v2232 = vld [vmem:[%s2229 + $0x8] sm:$0xf]
        %v2233 = vld [vmem:[%s2229 + $0xc] sm:$0xf]
        %v2238 = vunpack.c.l.b16 %v2230
        %v2239 = vunpack.c.l.b16 %v2231
        %v2240 = vunpack.c.l.b16 %v2232
        %v2241 = vunpack.c.l.b16 %v2233
        %v2242 = vpack.c.b16 %v2239, %v2238
        %v2243 = vpack.c.b16 %v2241, %v2240
        %v2247 = vsel %vm968, %v2228, 0
        %2249 = vmatprep.subr.bf16.mxu0 0
        %2250 = vmatpush1.bf16.msra.mxu0 %v2242
        %2251 = vmatprep.subr.bf16.mxu0 0
        %2252 = vmatpush1.bf16.msra.mxu0 %v2243
        %2253 = vmatprep.subr.bf16.mxu0 0
        %2254 = vmatpush1.bf16.msra.mxu0 0
        %2255 = vmatprep.subr.bf16.mxu0 0
        %2256 = vmatpush1.bf16.msra.mxu0 0
        %2257 = vmatprep.subr.bf16.mxu0 0
        %2258 = vmatpush1.bf16.msra.mxu0 0
        %2259 = vmatprep.subr.bf16.mxu0 0
        %2260 = vmatpush1.bf16.msra.mxu0 0
        %2261 = vmatprep.subr.bf16.mxu0 0
        %2262 = vmatpush1.bf16.msra.mxu0 0
        %2263 = vmatprep.subr.bf16.mxu0 0
        %2264 = vmatpush1.bf16.msra.mxu0 0
        %2265 = vmatprep.subr.bf16.mxu0 0
        %2266 = vmatpush1.bf16.msra.mxu0 0
        %2267 = vmatprep.subr.bf16.mxu0 0
        %2268 = vmatpush1.bf16.msra.mxu0 0
        %2269 = vmatprep.subr.bf16.mxu0 0
        %2270 = vmatpush1.bf16.msra.mxu0 0
        %2271 = vmatprep.subr.bf16.mxu0 0
        %2272 = vmatpush1.bf16.msra.mxu0 0
        %2273 = vmatprep.subr.bf16.mxu0 0
        %2274 = vmatpush1.bf16.msra.mxu0 0
        %2275 = vmatprep.subr.bf16.mxu0 0
        %2276 = vmatpush1.bf16.msra.mxu0 0
        %2277 = vmatprep.subr.bf16.mxu0 0
        %2278 = vmatpush1.bf16.msra.mxu0 0
        %2279 = vmatprep.subr.bf16.mxu0 0
        %2280 = vmatpush1.bf16.msra.mxu0 0
        %2281 = vmatprep.mubr.bf16.mxu0 0
        %2282 = vmatmul.mubr.bf16.gmra.mrb[0].mxu0 %v2247
        %v2283 = vpop.f32.mrb[0].mxu0
        %v2284 = vadd.f32 0.0, %v2283
        %v2285 = vpop.f32.mrb[0].mxu0
        %v2286 = vpop.f32.mrb[0].mxu0
        %v2287 = vadd.f32 0.0, %v2286
        %v2288 = vpop.f32.mrb[0].mxu0
        %2289 = vdwg.mxu0
        %v2290 = vadd.f32 %v2224, %v2284
        %v2291 = vadd.f32 %v2225, %v2287
        %v2292 = vld [vmem:[#allocation2 + $0x15] sm:$0xff]
        %v2293 = vld [vmem:[#allocation2 + $0x1d] sm:$0xff]
        %v2294 = vpack.c.bf16 %v2293, %v2292
        %s2295 = scalar_lea.vmem [#allocation3], 320
        %v2296 = vld [vmem:[%s2295] sm:$0xf]
        %v2297 = vld [vmem:[%s2295 + $0x4] sm:$0xf]
        %v2298 = vld [vmem:[%s2295 + $0x8] sm:$0xf]
        %v2299 = vld [vmem:[%s2295 + $0xc] sm:$0xf]
        %v2304 = vunpack.c.l.b16 %v2296
        %v2305 = vunpack.c.l.b16 %v2297
        %v2306 = vunpack.c.l.b16 %v2298
        %v2307 = vunpack.c.l.b16 %v2299
        %v2308 = vpack.c.b16 %v2305, %v2304
        %v2309 = vpack.c.b16 %v2307, %v2306
        %v2313 = vsel %vm968, %v2294, 0
        %2315 = vmatprep.subr.bf16.mxu0 0
        %2316 = vmatpush1.bf16.msra.mxu0 %v2308
        %2317 = vmatprep.subr.bf16.mxu0 0
        %2318 = vmatpush1.bf16.msra.mxu0 %v2309
        %2319 = vmatprep.subr.bf16.mxu0 0
        %2320 = vmatpush1.bf16.msra.mxu0 0
        %2321 = vmatprep.subr.bf16.mxu0 0
        %2322 = vmatpush1.bf16.msra.mxu0 0
        %2323 = vmatprep.subr.bf16.mxu0 0
        %2324 = vmatpush1.bf16.msra.mxu0 0
        %2325 = vmatprep.subr.bf16.mxu0 0
        %2326 = vmatpush1.bf16.msra.mxu0 0
        %2327 = vmatprep.subr.bf16.mxu0 0
        %2328 = vmatpush1.bf16.msra.mxu0 0
        %2329 = vmatprep.subr.bf16.mxu0 0
        %2330 = vmatpush1.bf16.msra.mxu0 0
        %2331 = vmatprep.subr.bf16.mxu0 0
        %2332 = vmatpush1.bf16.msra.mxu0 0
        %2333 = vmatprep.subr.bf16.mxu0 0
        %2334 = vmatpush1.bf16.msra.mxu0 0
        %2335 = vmatprep.subr.bf16.mxu0 0
        %2336 = vmatpush1.bf16.msra.mxu0 0
        %2337 = vmatprep.subr.bf16.mxu0 0
        %2338 = vmatpush1.bf16.msra.mxu0 0
        %2339 = vmatprep.subr.bf16.mxu0 0
        %2340 = vmatpush1.bf16.msra.mxu0 0
        %2341 = vmatprep.subr.bf16.mxu0 0
        %2342 = vmatpush1.bf16.msra.mxu0 0
        %2343 = vmatprep.subr.bf16.mxu0 0
        %2344 = vmatpush1.bf16.msra.mxu0 0
        %2345 = vmatprep.subr.bf16.mxu0 0
        %2346 = vmatpush1.bf16.msra.mxu0 0
        %2347 = vmatprep.mubr.bf16.mxu0 0
        %2348 = vmatmul.mubr.bf16.gmra.mrb[0].mxu0 %v2313
        %v2349 = vpop.f32.mrb[0].mxu0
        %v2350 = vadd.f32 0.0, %v2349
        %v2351 = vpop.f32.mrb[0].mxu0
        %v2352 = vpop.f32.mrb[0].mxu0
        %v2353 = vadd.f32 0.0, %v2352
        %v2354 = vpop.f32.mrb[0].mxu0
        %2355 = vdwg.mxu0
        %v2356 = vadd.f32 %v2290, %v2350
        %v2357 = vadd.f32 %v2291, %v2353
        %v2358 = vld [vmem:[#allocation2 + $0x16] sm:$0xff]
        %v2359 = vld [vmem:[#allocation2 + $0x1e] sm:$0xff]
        %v2360 = vpack.c.bf16 %v2359, %v2358
        %s2361 = scalar_lea.vmem [#allocation3], 336
        %v2362 = vld [vmem:[%s2361] sm:$0xf]
        %v2363 = vld [vmem:[%s2361 + $0x4] sm:$0xf]
        %v2364 = vld [vmem:[%s2361 + $0x8] sm:$0xf]
        %v2365 = vld [vmem:[%s2361 + $0xc] sm:$0xf]
        %v2370 = vunpack.c.l.b16 %v2362
        %v2371 = vunpack.c.l.b16 %v2363
        %v2372 = vunpack.c.l.b16 %v2364
        %v2373 = vunpack.c.l.b16 %v2365
        %v2374 = vpack.c.b16 %v2371, %v2370
        %v2375 = vpack.c.b16 %v2373, %v2372
        %v2379 = vsel %vm968, %v2360, 0
        %2381 = vmatprep.subr.bf16.mxu0 0
        %2382 = vmatpush1.bf16.msra.mxu0 %v2374
        %2383 = vmatprep.subr.bf16.mxu0 0
        %2384 = vmatpush1.bf16.msra.mxu0 %v2375
        %2385 = vmatprep.subr.bf16.mxu0 0
        %2386 = vmatpush1.bf16.msra.mxu0 0
        %2387 = vmatprep.subr.bf16.mxu0 0
        %2388 = vmatpush1.bf16.msra.mxu0 0
        %2389 = vmatprep.subr.bf16.mxu0 0
        %2390 = vmatpush1.bf16.msra.mxu0 0
        %2391 = vmatprep.subr.bf16.mxu0 0
        %2392 = vmatpush1.bf16.msra.mxu0 0
        %2393 = vmatprep.subr.bf16.mxu0 0
        %2394 = vmatpush1.bf16.msra.mxu0 0
        %2395 = vmatprep.subr.bf16.mxu0 0
        %2396 = vmatpush1.bf16.msra.mxu0 0
        %2397 = vmatprep.subr.bf16.mxu0 0
        %2398 = vmatpush1.bf16.msra.mxu0 0
        %2399 = vmatprep.subr.bf16.mxu0 0
        %2400 = vmatpush1.bf16.msra.mxu0 0
        %2401 = vmatprep.subr.bf16.mxu0 0
        %2402 = vmatpush1.bf16.msra.mxu0 0
        %2403 = vmatprep.subr.bf16.mxu0 0
        %2404 = vmatpush1.bf16.msra.mxu0 0
        %2405 = vmatprep.subr.bf16.mxu0 0
        %2406 = vmatpush1.bf16.msra.mxu0 0
        %2407 = vmatprep.subr.bf16.mxu0 0
        %2408 = vmatpush1.bf16.msra.mxu0 0
        %2409 = vmatprep.subr.bf16.mxu0 0
        %2410 = vmatpush1.bf16.msra.mxu0 0
        %2411 = vmatprep.subr.bf16.mxu0 0
        %2412 = vmatpush1.bf16.msra.mxu0 0
        %2413 = vmatprep.mubr.bf16.mxu0 0
        %2414 = vmatmul.mubr.bf16.gmra.mrb[0].mxu0 %v2379
        %v2415 = vpop.f32.mrb[0].mxu0
        %v2416 = vadd.f32 0.0, %v2415
        %v2417 = vpop.f32.mrb[0].mxu0
        %v2418 = vpop.f32.mrb[0].mxu0
        %v2419 = vadd.f32 0.0, %v2418
        %v2420 = vpop.f32.mrb[0].mxu0
        %2421 = vdwg.mxu0
        %v2422 = vadd.f32 %v2356, %v2416
        %v2423 = vadd.f32 %v2357, %v2419
        %v2424 = vld [vmem:[#allocation2 + $0x17] sm:$0xff]
        %v2425 = vld [vmem:[#allocation2 + $0x1f] sm:$0xff]
        %v2426 = vpack.c.bf16 %v2425, %v2424
        %s2427 = scalar_lea.vmem [#allocation3], 352
        %v2428 = vld [vmem:[%s2427] sm:$0xf]
        %v2429 = vld [vmem:[%s2427 + $0x4] sm:$0xf]
        %v2430 = vld [vmem:[%s2427 + $0x8] sm:$0xf]
        %v2431 = vld [vmem:[%s2427 + $0xc] sm:$0xf]
        %v2436 = vunpack.c.l.b16 %v2428
        %v2437 = vunpack.c.l.b16 %v2429
        %v2438 = vunpack.c.l.b16 %v2430
        %v2439 = vunpack.c.l.b16 %v2431
        %v2440 = vpack.c.b16 %v2437, %v2436
        %v2441 = vpack.c.b16 %v2439, %v2438
        %v2445 = vsel %vm968, %v2426, 0
        %2447 = vmatprep.subr.bf16.mxu0 0
        %2448 = vmatpush1.bf16.msra.mxu0 %v2440
        %2449 = vmatprep.subr.bf16.mxu0 0
        %2450 = vmatpush1.bf16.msra.mxu0 %v2441
        %2451 = vmatprep.subr.bf16.mxu0 0
        %2452 = vmatpush1.bf16.msra.mxu0 0
        %2453 = vmatprep.subr.bf16.mxu0 0
        %2454 = vmatpush1.bf16.msra.mxu0 0
        %2455 = vmatprep.subr.bf16.mxu0 0
        %2456 = vmatpush1.bf16.msra.mxu0 0
        %2457 = vmatprep.subr.bf16.mxu0 0
        %2458 = vmatpush1.bf16.msra.mxu0 0
        %2459 = vmatprep.subr.bf16.mxu0 0
        %2460 = vmatpush1.bf16.msra.mxu0 0
        %2461 = vmatprep.subr.bf16.mxu0 0
        %2462 = vmatpush1.bf16.msra.mxu0 0
        %2463 = vmatprep.subr.bf16.mxu0 0
        %2464 = vmatpush1.bf16.msra.mxu0 0
        %2465 = vmatprep.subr.bf16.mxu0 0
        %2466 = vmatpush1.bf16.msra.mxu0 0
        %2467 = vmatprep.subr.bf16.mxu0 0
        %2468 = vmatpush1.bf16.msra.mxu0 0
        %2469 = vmatprep.subr.bf16.mxu0 0
        %2470 = vmatpush1.bf16.msra.mxu0 0
        %2471 = vmatprep.subr.bf16.mxu0 0
        %2472 = vmatpush1.bf16.msra.mxu0 0
        %2473 = vmatprep.subr.bf16.mxu0 0
        %2474 = vmatpush1.bf16.msra.mxu0 0
        %2475 = vmatprep.subr.bf16.mxu0 0
        %2476 = vmatpush1.bf16.msra.mxu0 0
        %2477 = vmatprep.subr.bf16.mxu0 0
        %2478 = vmatpush1.bf16.msra.mxu0 0
        %2479 = vmatprep.mubr.bf16.mxu0 0
        %2480 = vmatmul.mubr.bf16.gmra.mrb[0].mxu0 %v2445
        %v2481 = vpop.f32.mrb[0].mxu0
        %v2482 = vadd.f32 0.0, %v2481
        %v2483 = vpop.f32.mrb[0].mxu0
        %v2484 = vpop.f32.mrb[0].mxu0
        %v2485 = vadd.f32 0.0, %v2484
        %v2486 = vpop.f32.mrb[0].mxu0
        %2487 = vdwg.mxu0
        %v2488 = vadd.f32 %v2422, %v2482
        %v2489 = vadd.f32 %v2423, %v2485
        %v2490 = vld [vmem:[#allocation2 + $0x18] sm:$0xff]
        %v2491 = vld [vmem:[#allocation2 + $0x20] sm:$0xff]
        %v2492 = vpack.c.bf16 %v2491, %v2490
        %s2493 = scalar_lea.vmem [#allocation3], 368
        %v2494 = vld [vmem:[%s2493] sm:$0xf]
        %v2495 = vld [vmem:[%s2493 + $0x4] sm:$0xf]
        %v2496 = vld [vmem:[%s2493 + $0x8] sm:$0xf]
        %v2497 = vld [vmem:[%s2493 + $0xc] sm:$0xf]
        %v2502 = vunpack.c.l.b16 %v2494
        %v2503 = vunpack.c.l.b16 %v2495
        %v2504 = vunpack.c.l.b16 %v2496
        %v2505 = vunpack.c.l.b16 %v2497
        %v2506 = vpack.c.b16 %v2503, %v2502
        %v2507 = vpack.c.b16 %v2505, %v2504
        %v2511 = vsel %vm968, %v2492, 0
        %2513 = vmatprep.subr.bf16.mxu0 0
        %2514 = vmatpush1.bf16.msra.mxu0 %v2506
        %2515 = vmatprep.subr.bf16.mxu0 0
        %2516 = vmatpush1.bf16.msra.mxu0 %v2507
        %2517 = vmatprep.subr.bf16.mxu0 0
        %2518 = vmatpush1.bf16.msra.mxu0 0
        %2519 = vmatprep.subr.bf16.mxu0 0
        %2520 = vmatpush1.bf16.msra.mxu0 0
        %2521 = vmatprep.subr.bf16.mxu0 0
        %2522 = vmatpush1.bf16.msra.mxu0 0
        %2523 = vmatprep.subr.bf16.mxu0 0
        %2524 = vmatpush1.bf16.msra.mxu0 0
        %2525 = vmatprep.subr.bf16.mxu0 0
        %2526 = vmatpush1.bf16.msra.mxu0 0
        %2527 = vmatprep.subr.bf16.mxu0 0
        %2528 = vmatpush1.bf16.msra.mxu0 0
        %2529 = vmatprep.subr.bf16.mxu0 0
        %2530 = vmatpush1.bf16.msra.mxu0 0
        %2531 = vmatprep.subr.bf16.mxu0 0
        %2532 = vmatpush1.bf16.msra.mxu0 0
        %2533 = vmatprep.subr.bf16.mxu0 0
        %2534 = vmatpush1.bf16.msra.mxu0 0
        %2535 = vmatprep.subr.bf16.mxu0 0
        %2536 = vmatpush1.bf16.msra.mxu0 0
        %2537 = vmatprep.subr.bf16.mxu0 0
        %2538 = vmatpush1.bf16.msra.mxu0 0
        %2539 = vmatprep.subr.bf16.mxu0 0
        %2540 = vmatpush1.bf16.msra.mxu0 0
        %2541 = vmatprep.subr.bf16.mxu0 0
        %2542 = vmatpush1.bf16.msra.mxu0 0
        %2543 = vmatprep.subr.bf16.mxu0 0
        %2544 = vmatpush1.bf16.msra.mxu0 0
        %2545 = vmatprep.mubr.bf16.mxu0 0
        %2546 = vmatmul.mubr.bf16.gmra.mrb[0].mxu0 %v2511
        %v2547 = vpop.f32.mrb[0].mxu0
        %v2548 = vadd.f32 0.0, %v2547
        %v2549 = vpop.f32.mrb[0].mxu0
        %v2550 = vpop.f32.mrb[0].mxu0
        %v2551 = vadd.f32 0.0, %v2550
        %v2552 = vpop.f32.mrb[0].mxu0
        %2553 = vdwg.mxu0
        %v2554 = vadd.f32 %v2488, %v2548
        %v2555 = vadd.f32 %v2489, %v2551
        %v2556 = vld [vmem:[#allocation2 + $0x19] sm:$0xff]
        %v2557 = vld [vmem:[#allocation2 + $0x21] sm:$0xff]
        %v2558 = vpack.c.bf16 %v2557, %v2556
        %s2559 = scalar_lea.vmem [#allocation3], 384
        %v2560 = vld [vmem:[%s2559] sm:$0xf]
        %v2561 = vld [vmem:[%s2559 + $0x4] sm:$0xf]
        %v2562 = vld [vmem:[%s2559 + $0x8] sm:$0xf]
        %v2563 = vld [vmem:[%s2559 + $0xc] sm:$0xf]
        %v2568 = vunpack.c.l.b16 %v2560
        %v2569 = vunpack.c.l.b16 %v2561
        %v2570 = vunpack.c.l.b16 %v2562
        %v2571 = vunpack.c.l.b16 %v2563
        %v2572 = vpack.c.b16 %v2569, %v2568
        %v2573 = vpack.c.b16 %v2571, %v2570
        %v2577 = vsel %vm968, %v2558, 0
        %2579 = vmatprep.subr.bf16.mxu0 0
        %2580 = vmatpush1.bf16.msra.mxu0 %v2572
        %2581 = vmatprep.subr.bf16.mxu0 0
        %2582 = vmatpush1.bf16.msra.mxu0 %v2573
        %2583 = vmatprep.subr.bf16.mxu0 0
        %2584 = vmatpush1.bf16.msra.mxu0 0
        %2585 = vmatprep.subr.bf16.mxu0 0
        %2586 = vmatpush1.bf16.msra.mxu0 0
        %2587 = vmatprep.subr.bf16.mxu0 0
        %2588 = vmatpush1.bf16.msra.mxu0 0
        %2589 = vmatprep.subr.bf16.mxu0 0
        %2590 = vmatpush1.bf16.msra.mxu0 0
        %2591 = vmatprep.subr.bf16.mxu0 0
        %2592 = vmatpush1.bf16.msra.mxu0 0
        %2593 = vmatprep.subr.bf16.mxu0 0
        %2594 = vmatpush1.bf16.msra.mxu0 0
        %2595 = vmatprep.subr.bf16.mxu0 0
        %2596 = vmatpush1.bf16.msra.mxu0 0
        %2597 = vmatprep.subr.bf16.mxu0 0
        %2598 = vmatpush1.bf16.msra.mxu0 0
        %2599 = vmatprep.subr.bf16.mxu0 0
        %2600 = vmatpush1.bf16.msra.mxu0 0
        %2601 = vmatprep.subr.bf16.mxu0 0
        %2602 = vmatpush1.bf16.msra.mxu0 0
        %2603 = vmatprep.subr.bf16.mxu0 0
        %2604 = vmatpush1.bf16.msra.mxu0 0
        %2605 = vmatprep.subr.bf16.mxu0 0
        %2606 = vmatpush1.bf16.msra.mxu0 0
        %2607 = vmatprep.subr.bf16.mxu0 0
        %2608 = vmatpush1.bf16.msra.mxu0 0
        %2609 = vmatprep.subr.bf16.mxu0 0
        %2610 = vmatpush1.bf16.msra.mxu0 0
        %2611 = vmatprep.mubr.bf16.mxu0 0
        %2612 = vmatmul.mubr.bf16.gmra.mrb[0].mxu0 %v2577
        %v2613 = vpop.f32.mrb[0].mxu0
        %v2614 = vadd.f32 0.0, %v2613
        %v2615 = vpop.f32.mrb[0].mxu0
        %v2616 = vpop.f32.mrb[0].mxu0
        %v2617 = vadd.f32 0.0, %v2616
        %v2618 = vpop.f32.mrb[0].mxu0
        %2619 = vdwg.mxu0
        %v2620 = vadd.f32 %v2554, %v2614
        %v2621 = vadd.f32 %v2555, %v2617
        %v2622 = vld [vmem:[#allocation2 + $0x1a] sm:$0xff]
        %v2623 = vld [vmem:[#allocation2 + $0x22] sm:$0xff]
        %v2624 = vpack.c.bf16 %v2623, %v2622
        %s2625 = scalar_lea.vmem [#allocation3], 400
        %v2626 = vld [vmem:[%s2625] sm:$0xf]
        %v2627 = vld [vmem:[%s2625 + $0x4] sm:$0xf]
        %v2628 = vld [vmem:[%s2625 + $0x8] sm:$0xf]
        %v2629 = vld [vmem:[%s2625 + $0xc] sm:$0xf]
        %v2634 = vunpack.c.l.b16 %v2626
        %v2635 = vunpack.c.l.b16 %v2627
        %v2636 = vunpack.c.l.b16 %v2628
        %v2637 = vunpack.c.l.b16 %v2629
        %v2638 = vpack.c.b16 %v2635, %v2634
        %v2639 = vpack.c.b16 %v2637, %v2636
        %v2643 = vsel %vm968, %v2624, 0
        %2645 = vmatprep.subr.bf16.mxu0 0
        %2646 = vmatpush1.bf16.msra.mxu0 %v2638
        %2647 = vmatprep.subr.bf16.mxu0 0
        %2648 = vmatpush1.bf16.msra.mxu0 %v2639
        %2649 = vmatprep.subr.bf16.mxu0 0
        %2650 = vmatpush1.bf16.msra.mxu0 0
        %2651 = vmatprep.subr.bf16.mxu0 0
        %2652 = vmatpush1.bf16.msra.mxu0 0
        %2653 = vmatprep.subr.bf16.mxu0 0
        %2654 = vmatpush1.bf16.msra.mxu0 0
        %2655 = vmatprep.subr.bf16.mxu0 0
        %2656 = vmatpush1.bf16.msra.mxu0 0
        %2657 = vmatprep.subr.bf16.mxu0 0
        %2658 = vmatpush1.bf16.msra.mxu0 0
        %2659 = vmatprep.subr.bf16.mxu0 0
        %2660 = vmatpush1.bf16.msra.mxu0 0
        %2661 = vmatprep.subr.bf16.mxu0 0
        %2662 = vmatpush1.bf16.msra.mxu0 0
        %2663 = vmatprep.subr.bf16.mxu0 0
        %2664 = vmatpush1.bf16.msra.mxu0 0
        %2665 = vmatprep.subr.bf16.mxu0 0
        %2666 = vmatpush1.bf16.msra.mxu0 0
        %2667 = vmatprep.subr.bf16.mxu0 0
        %2668 = vmatpush1.bf16.msra.mxu0 0
        %2669 = vmatprep.subr.bf16.mxu0 0
        %2670 = vmatpush1.bf16.msra.mxu0 0
        %2671 = vmatprep.subr.bf16.mxu0 0
        %2672 = vmatpush1.bf16.msra.mxu0 0
        %2673 = vmatprep.subr.bf16.mxu0 0
        %2674 = vmatpush1.bf16.msra.mxu0 0
        %2675 = vmatprep.subr.bf16.mxu0 0
        %2676 = vmatpush1.bf16.msra.mxu0 0
        %2677 = vmatprep.mubr.bf16.mxu0 0
        %2678 = vmatmul.mubr.bf16.gmra.mrb[0].mxu0 %v2643
        %v2679 = vpop.f32.mrb[0].mxu0
        %v2680 = vadd.f32 0.0, %v2679
        %v2681 = vpop.f32.mrb[0].mxu0
        %v2682 = vpop.f32.mrb[0].mxu0
        %v2683 = vadd.f32 0.0, %v2682
        %v2684 = vpop.f32.mrb[0].mxu0
        %2685 = vdwg.mxu0
        %v2686 = vadd.f32 %v2620, %v2680
        %v2687 = vadd.f32 %v2621, %v2683
        %v2688 = vld [vmem:[#allocation2 + $0x1b] sm:$0xff]
        %v2689 = vld [vmem:[#allocation2 + $0x23] sm:$0xff]
        %v2690 = vpack.c.bf16 %v2689, %v2688
        %s2691 = scalar_lea.vmem [#allocation3], 416
        %v2692 = vld [vmem:[%s2691] sm:$0xf]
        %v2693 = vld [vmem:[%s2691 + $0x4] sm:$0xf]
        %v2694 = vld [vmem:[%s2691 + $0x8] sm:$0xf]
        %v2695 = vld [vmem:[%s2691 + $0xc] sm:$0xf]
        %v2700 = vunpack.c.l.b16 %v2692
        %v2701 = vunpack.c.l.b16 %v2693
        %v2702 = vunpack.c.l.b16 %v2694
        %v2703 = vunpack.c.l.b16 %v2695
        %v2704 = vpack.c.b16 %v2701, %v2700
        %v2705 = vpack.c.b16 %v2703, %v2702
        %v2709 = vsel %vm968, %v2690, 0
        %2711 = vmatprep.subr.bf16.mxu0 0
        %2712 = vmatpush1.bf16.msra.mxu0 %v2704
        %2713 = vmatprep.subr.bf16.mxu0 0
        %2714 = vmatpush1.bf16.msra.mxu0 %v2705
        %2715 = vmatprep.subr.bf16.mxu0 0
        %2716 = vmatpush1.bf16.msra.mxu0 0
        %2717 = vmatprep.subr.bf16.mxu0 0
        %2718 = vmatpush1.bf16.msra.mxu0 0
        %2719 = vmatprep.subr.bf16.mxu0 0
        %2720 = vmatpush1.bf16.msra.mxu0 0
        %2721 = vmatprep.subr.bf16.mxu0 0
        %2722 = vmatpush1.bf16.msra.mxu0 0
        %2723 = vmatprep.subr.bf16.mxu0 0
        %2724 = vmatpush1.bf16.msra.mxu0 0
        %2725 = vmatprep.subr.bf16.mxu0 0
        %2726 = vmatpush1.bf16.msra.mxu0 0
        %2727 = vmatprep.subr.bf16.mxu0 0
        %2728 = vmatpush1.bf16.msra.mxu0 0
        %2729 = vmatprep.subr.bf16.mxu0 0
        %2730 = vmatpush1.bf16.msra.mxu0 0
        %2731 = vmatprep.subr.bf16.mxu0 0
        %2732 = vmatpush1.bf16.msra.mxu0 0
        %2733 = vmatprep.subr.bf16.mxu0 0
        %2734 = vmatpush1.bf16.msra.mxu0 0
        %2735 = vmatprep.subr.bf16.mxu0 0
        %2736 = vmatpush1.bf16.msra.mxu0 0
        %2737 = vmatprep.subr.bf16.mxu0 0
        %2738 = vmatpush1.bf16.msra.mxu0 0
        %2739 = vmatprep.subr.bf16.mxu0 0
        %2740 = vmatpush1.bf16.msra.mxu0 0
        %2741 = vmatprep.subr.bf16.mxu0 0
        %2742 = vmatpush1.bf16.msra.mxu0 0
        %2743 = vmatprep.mubr.bf16.mxu0 0
        %2744 = vmatmul.mubr.bf16.gmra.mrb[0].mxu0 %v2709
        %v2745 = vpop.f32.mrb[0].mxu0
        %v2746 = vadd.f32 0.0, %v2745
        %v2747 = vpop.f32.mrb[0].mxu0
        %v2748 = vpop.f32.mrb[0].mxu0
        %v2749 = vadd.f32 0.0, %v2748
        %v2750 = vpop.f32.mrb[0].mxu0
        %2751 = vdwg.mxu0
        %v2752 = vadd.f32 %v2686, %v2746
        %v2753 = vadd.f32 %v2687, %v2749
        %v2754 = vld [vmem:[#allocation2 + $0x1c] sm:$0xff]
        %v2755 = vld [vmem:[#allocation2 + $0x24] sm:$0xff]
        %v2756 = vpack.c.bf16 %v2755, %v2754
        %s2757 = scalar_lea.vmem [#allocation3], 432
        %v2758 = vld [vmem:[%s2757] sm:$0xf]
        %v2759 = vld [vmem:[%s2757 + $0x4] sm:$0xf]
        %v2760 = vld [vmem:[%s2757 + $0x8] sm:$0xf]
        %v2761 = vld [vmem:[%s2757 + $0xc] sm:$0xf]
        %v2766 = vunpack.c.l.b16 %v2758
        %v2767 = vunpack.c.l.b16 %v2759
        %v2768 = vunpack.c.l.b16 %v2760
        %v2769 = vunpack.c.l.b16 %v2761
        %v2770 = vpack.c.b16 %v2767, %v2766
        %v2771 = vpack.c.b16 %v2769, %v2768
        %v2775 = vsel %vm968, %v2756, 0
        %2777 = vmatprep.subr.bf16.mxu0 0
        %2778 = vmatpush1.bf16.msra.mxu0 %v2770
        %2779 = vmatprep.subr.bf16.mxu0 0
        %2780 = vmatpush1.bf16.msra.mxu0 %v2771
        %2781 = vmatprep.subr.bf16.mxu0 0
        %2782 = vmatpush1.bf16.msra.mxu0 0
        %2783 = vmatprep.subr.bf16.mxu0 0
        %2784 = vmatpush1.bf16.msra.mxu0 0
        %2785 = vmatprep.subr.bf16.mxu0 0
        %2786 = vmatpush1.bf16.msra.mxu0 0
        %2787 = vmatprep.subr.bf16.mxu0 0
        %2788 = vmatpush1.bf16.msra.mxu0 0
        %2789 = vmatprep.subr.bf16.mxu0 0
        %2790 = vmatpush1.bf16.msra.mxu0 0
        %2791 = vmatprep.subr.bf16.mxu0 0
        %2792 = vmatpush1.bf16.msra.mxu0 0
        %2793 = vmatprep.subr.bf16.mxu0 0
        %2794 = vmatpush1.bf16.msra.mxu0 0
        %2795 = vmatprep.subr.bf16.mxu0 0
        %2796 = vmatpush1.bf16.msra.mxu0 0
        %2797 = vmatprep.subr.bf16.mxu0 0
        %2798 = vmatpush1.bf16.msra.mxu0 0
        %2799 = vmatprep.subr.bf16.mxu0 0
        %2800 = vmatpush1.bf16.msra.mxu0 0
        %2801 = vmatprep.subr.bf16.mxu0 0
        %2802 = vmatpush1.bf16.msra.mxu0 0
        %2803 = vmatprep.subr.bf16.mxu0 0
        %2804 = vmatpush1.bf16.msra.mxu0 0
        %2805 = vmatprep.subr.bf16.mxu0 0
        %2806 = vmatpush1.bf16.msra.mxu0 0
        %2807 = vmatprep.subr.bf16.mxu0 0
        %2808 = vmatpush1.bf16.msra.mxu0 0
        %2809 = vmatprep.mubr.bf16.mxu0 0
        %2810 = vmatmul.mubr.bf16.gmra.mrb[0].mxu0 %v2775
        %v2811 = vpop.f32.mrb[0].mxu0
        %v2812 = vadd.f32 0.0, %v2811
        %v2813 = vpop.f32.mrb[0].mxu0
        %v2814 = vpop.f32.mrb[0].mxu0
        %v2815 = vadd.f32 0.0, %v2814
        %v2816 = vpop.f32.mrb[0].mxu0
        %2817 = vdwg.mxu0
        %v2818 = vadd.f32 %v2752, %v2812
        %v2819 = vadd.f32 %v2753, %v2815
        %v2820 = vld [vmem:[#allocation2 + $0x1d] sm:$0xff]
        %v2821 = vld [vmem:[#allocation2 + $0x25] sm:$0xff]
        %v2822 = vpack.c.bf16 %v2821, %v2820
        %s2823 = scalar_lea.vmem [#allocation3], 448
        %v2824 = vld [vmem:[%s2823] sm:$0xf]
        %v2825 = vld [vmem:[%s2823 + $0x4] sm:$0xf]
        %v2826 = vld [vmem:[%s2823 + $0x8] sm:$0xf]
        %v2827 = vld [vmem:[%s2823 + $0xc] sm:$0xf]
        %v2832 = vunpack.c.l.b16 %v2824
        %v2833 = vunpack.c.l.b16 %v2825
        %v2834 = vunpack.c.l.b16 %v2826
        %v2835 = vunpack.c.l.b16 %v2827
        %v2836 = vpack.c.b16 %v2833, %v2832
        %v2837 = vpack.c.b16 %v2835, %v2834
        %v2841 = vsel %vm968, %v2822, 0
        %2843 = vmatprep.subr.bf16.mxu0 0
        %2844 = vmatpush1.bf16.msra.mxu0 %v2836
        %2845 = vmatprep.subr.bf16.mxu0 0
        %2846 = vmatpush1.bf16.msra.mxu0 %v2837
        %2847 = vmatprep.subr.bf16.mxu0 0
        %2848 = vmatpush1.bf16.msra.mxu0 0
        %2849 = vmatprep.subr.bf16.mxu0 0
        %2850 = vmatpush1.bf16.msra.mxu0 0
        %2851 = vmatprep.subr.bf16.mxu0 0
        %2852 = vmatpush1.bf16.msra.mxu0 0
        %2853 = vmatprep.subr.bf16.mxu0 0
        %2854 = vmatpush1.bf16.msra.mxu0 0
        %2855 = vmatprep.subr.bf16.mxu0 0
        %2856 = vmatpush1.bf16.msra.mxu0 0
        %2857 = vmatprep.subr.bf16.mxu0 0
        %2858 = vmatpush1.bf16.msra.mxu0 0
        %2859 = vmatprep.subr.bf16.mxu0 0
        %2860 = vmatpush1.bf16.msra.mxu0 0
        %2861 = vmatprep.subr.bf16.mxu0 0
        %2862 = vmatpush1.bf16.msra.mxu0 0
        %2863 = vmatprep.subr.bf16.mxu0 0
        %2864 = vmatpush1.bf16.msra.mxu0 0
        %2865 = vmatprep.subr.bf16.mxu0 0
        %2866 = vmatpush1.bf16.msra.mxu0 0
        %2867 = vmatprep.subr.bf16.mxu0 0
        %2868 = vmatpush1.bf16.msra.mxu0 0
        %2869 = vmatprep.subr.bf16.mxu0 0
        %2870 = vmatpush1.bf16.msra.mxu0 0
        %2871 = vmatprep.subr.bf16.mxu0 0
        %2872 = vmatpush1.bf16.msra.mxu0 0
        %2873 = vmatprep.subr.bf16.mxu0 0
        %2874 = vmatpush1.bf16.msra.mxu0 0
        %2875 = vmatprep.mubr.bf16.mxu0 0
        %2876 = vmatmul.mubr.bf16.gmra.mrb[0].mxu0 %v2841
        %v2877 = vpop.f32.mrb[0].mxu0
        %v2878 = vadd.f32 0.0, %v2877
        %v2879 = vpop.f32.mrb[0].mxu0
        %v2880 = vpop.f32.mrb[0].mxu0
        %v2881 = vadd.f32 0.0, %v2880
        %v2882 = vpop.f32.mrb[0].mxu0
        %2883 = vdwg.mxu0
        %v2884 = vadd.f32 %v2818, %v2878
        %v2885 = vadd.f32 %v2819, %v2881
        %v2886 = vld [vmem:[#allocation2 + $0x1e] sm:$0xff]
        %v2887 = vld [vmem:[#allocation2 + $0x26] sm:$0xff]
        %v2888 = vpack.c.bf16 %v2887, %v2886
        %s2889 = scalar_lea.vmem [#allocation3], 464
        %v2890 = vld [vmem:[%s2889] sm:$0xf]
        %v2891 = vld [vmem:[%s2889 + $0x4] sm:$0xf]
        %v2892 = vld [vmem:[%s2889 + $0x8] sm:$0xf]
        %v2893 = vld [vmem:[%s2889 + $0xc] sm:$0xf]
        %v2898 = vunpack.c.l.b16 %v2890
        %v2899 = vunpack.c.l.b16 %v2891
        %v2900 = vunpack.c.l.b16 %v2892
        %v2901 = vunpack.c.l.b16 %v2893
        %v2902 = vpack.c.b16 %v2899, %v2898
        %v2903 = vpack.c.b16 %v2901, %v2900
        %v2907 = vsel %vm968, %v2888, 0
        %2909 = vmatprep.subr.bf16.mxu0 0
        %2910 = vmatpush1.bf16.msra.mxu0 %v2902
        %2911 = vmatprep.subr.bf16.mxu0 0
        %2912 = vmatpush1.bf16.msra.mxu0 %v2903
        %2913 = vmatprep.subr.bf16.mxu0 0
        %2914 = vmatpush1.bf16.msra.mxu0 0
        %2915 = vmatprep.subr.bf16.mxu0 0
        %2916 = vmatpush1.bf16.msra.mxu0 0
        %2917 = vmatprep.subr.bf16.mxu0 0
        %2918 = vmatpush1.bf16.msra.mxu0 0
        %2919 = vmatprep.subr.bf16.mxu0 0
        %2920 = vmatpush1.bf16.msra.mxu0 0
        %2921 = vmatprep.subr.bf16.mxu0 0
        %2922 = vmatpush1.bf16.msra.mxu0 0
        %2923 = vmatprep.subr.bf16.mxu0 0
        %2924 = vmatpush1.bf16.msra.mxu0 0
        %2925 = vmatprep.subr.bf16.mxu0 0
        %2926 = vmatpush1.bf16.msra.mxu0 0
        %2927 = vmatprep.subr.bf16.mxu0 0
        %2928 = vmatpush1.bf16.msra.mxu0 0
        %2929 = vmatprep.subr.bf16.mxu0 0
        %2930 = vmatpush1.bf16.msra.mxu0 0
        %2931 = vmatprep.subr.bf16.mxu0 0
        %2932 = vmatpush1.bf16.msra.mxu0 0
        %2933 = vmatprep.subr.bf16.mxu0 0
        %2934 = vmatpush1.bf16.msra.mxu0 0
        %2935 = vmatprep.subr.bf16.mxu0 0
        %2936 = vmatpush1.bf16.msra.mxu0 0
        %2937 = vmatprep.subr.bf16.mxu0 0
        %2938 = vmatpush1.bf16.msra.mxu0 0
        %2939 = vmatprep.subr.bf16.mxu0 0
        %2940 = vmatpush1.bf16.msra.mxu0 0
        %2941 = vmatprep.mubr.bf16.mxu0 0
        %2942 = vmatmul.mubr.bf16.gmra.mrb[0].mxu0 %v2907
        %v2943 = vpop.f32.mrb[0].mxu0
        %v2944 = vadd.f32 0.0, %v2943
        %v2945 = vpop.f32.mrb[0].mxu0
        %v2946 = vpop.f32.mrb[0].mxu0
        %v2947 = vadd.f32 0.0, %v2946
        %v2948 = vpop.f32.mrb[0].mxu0
        %2949 = vdwg.mxu0
        %v2950 = vadd.f32 %v2884, %v2944
        %v2951 = vadd.f32 %v2885, %v2947
        %v2952 = vld [vmem:[#allocation2 + $0x1f] sm:$0xff]
        %v2953 = vld [vmem:[#allocation2 + $0x27] sm:$0xff]
        %v2954 = vpack.c.bf16 %v2953, %v2952
        %s2955 = scalar_lea.vmem [#allocation3], 480
        %v2956 = vld [vmem:[%s2955] sm:$0xf]
        %v2957 = vld [vmem:[%s2955 + $0x4] sm:$0xf]
        %v2958 = vld [vmem:[%s2955 + $0x8] sm:$0xf]
        %v2959 = vld [vmem:[%s2955 + $0xc] sm:$0xf]
        %v2964 = vunpack.c.l.b16 %v2956
        %v2965 = vunpack.c.l.b16 %v2957
        %v2966 = vunpack.c.l.b16 %v2958
        %v2967 = vunpack.c.l.b16 %v2959
        %v2968 = vpack.c.b16 %v2965, %v2964
        %v2969 = vpack.c.b16 %v2967, %v2966
        %v2973 = vsel %vm968, %v2954, 0
        %2975 = vmatprep.subr.bf16.mxu0 0
        %2976 = vmatpush1.bf16.msra.mxu0 %v2968
        %2977 = vmatprep.subr.bf16.mxu0 0
        %2978 = vmatpush1.bf16.msra.mxu0 %v2969
        %2979 = vmatprep.subr.bf16.mxu0 0
        %2980 = vmatpush1.bf16.msra.mxu0 0
        %2981 = vmatprep.subr.bf16.mxu0 0
        %2982 = vmatpush1.bf16.msra.mxu0 0
        %2983 = vmatprep.subr.bf16.mxu0 0
        %2984 = vmatpush1.bf16.msra.mxu0 0
        %2985 = vmatprep.subr.bf16.mxu0 0
        %2986 = vmatpush1.bf16.msra.mxu0 0
        %2987 = vmatprep.subr.bf16.mxu0 0
        %2988 = vmatpush1.bf16.msra.mxu0 0
        %2989 = vmatprep.subr.bf16.mxu0 0
        %2990 = vmatpush1.bf16.msra.mxu0 0
        %2991 = vmatprep.subr.bf16.mxu0 0
        %2992 = vmatpush1.bf16.msra.mxu0 0
        %2993 = vmatprep.subr.bf16.mxu0 0
        %2994 = vmatpush1.bf16.msra.mxu0 0
        %2995 = vmatprep.subr.bf16.mxu0 0
        %2996 = vmatpush1.bf16.msra.mxu0 0
        %2997 = vmatprep.subr.bf16.mxu0 0
        %2998 = vmatpush1.bf16.msra.mxu0 0
        %2999 = vmatprep.subr.bf16.mxu0 0
        %3000 = vmatpush1.bf16.msra.mxu0 0
        %3001 = vmatprep.subr.bf16.mxu0 0
        %3002 = vmatpush1.bf16.msra.mxu0 0
        %3003 = vmatprep.subr.bf16.mxu0 0
        %3004 = vmatpush1.bf16.msra.mxu0 0
        %3005 = vmatprep.subr.bf16.mxu0 0
        %3006 = vmatpush1.bf16.msra.mxu0 0
        %3007 = vmatprep.mubr.bf16.mxu0 0
        %3008 = vmatmul.mubr.bf16.gmra.mrb[0].mxu0 %v2973
        %v3009 = vpop.f32.mrb[0].mxu0
        %v3010 = vadd.f32 0.0, %v3009
        %v3011 = vpop.f32.mrb[0].mxu0
        %v3012 = vpop.f32.mrb[0].mxu0
        %v3013 = vadd.f32 0.0, %v3012
        %v3014 = vpop.f32.mrb[0].mxu0
        %3015 = vdwg.mxu0
        %v3016 = vadd.f32 %v2950, %v3010
        %v3017 = vadd.f32 %v2951, %v3013
        %v3018 = vld [vmem:[%s4] sm:$0x1]
        %v3020 = vlaneseq
        %v3021 = vshrl.u32 %v3020, 7
        %v3022 = vsub.s32 0, %v3021
        %v3023 = vrot.slane %v3018, %v3022
        %v3025 = vadd.f32 %v3016, %v3023
        %v3026 = vadd.f32 %v3017, %v3023
        %v3027 = vmul.f32 %v3025, 0.5
        %v3028 = vmul.f32 %v3026, 0.5
        %v3029 = vmul.f32 %v3025, 0.044715
        %v3030 = vmul.f32 %v3026, 0.044715
        %v3031 = vmul.f32 %v3029, %v3025
        %v3032 = vmul.f32 %v3030, %v3026
        %v3033 = vmul.f32 %v3031, %v3025
        %v3034 = vmul.f32 %v3032, %v3026
        %v3035 = vadd.f32 %v3025, %v3033
        %v3036 = vadd.f32 %v3026, %v3034
        %v3037 = vmul.f32 %v3035, 0.7978846
        %v3038 = vmul.f32 %v3036, 0.7978846
        %v3039 = vtanh.pop %v3037
        %v3040 = vtanh.pop %v3038
        %v3041 = vadd.f32 %v3039, 1.0
        %v3042 = vadd.f32 %v3040, 1.0
        %v3043 = vmul.f32 %v3027, %v3041
        %v3044 = vmul.f32 %v3028, %v3042
        %v3045 = vpack.c.bf16 %v3044, %v3043
        %v3046 = vld [vmem:[%s5] sm:$0xff]
        %v3047 = vld [vmem:[%s5 + $0x8] sm:$0xff]
        %v3048 = vld [vmem:[%s5 + $0x10] sm:$0xff]
        %v3049 = vld [vmem:[%s5 + $0x18] sm:$0xff]
        %v3050 = vld [vmem:[%s5 + $0x20] sm:$0xff]
        %v3051 = vld [vmem:[%s5 + $0x28] sm:$0xff]
        %v3052 = vld [vmem:[%s5 + $0x30] sm:$0xff]
        %v3053 = vld [vmem:[%s5 + $0x38] sm:$0xff]
        %v3054 = vld [vmem:[%s6] sm:$0x3]
        %v3056 = vlaneseq
        %v3057 = vshrl.u32 %v3056, 7
        %v3058 = vsub.s32 0, %v3057
        %v3059 = vrot.slane %v3054, %v3058
        %v3060 = vlaneseq
        %v3061 = vshrl.u32 %v3060, 7
        %v3062 = vsub.s32 1, %v3061
        %v3063 = vrot.slane %v3054, %v3062
        %v3074 = vunpack.c.l.b16 %v3046
        %v3075 = vunpack.c.h.b16 %v3046
        %v3076 = vunpack.c.l.b16 %v3047
        %v3077 = vunpack.c.h.b16 %v3047
        %v3078 = vunpack.c.l.b16 %v3048
        %v3079 = vunpack.c.h.b16 %v3048
        %v3080 = vunpack.c.l.b16 %v3049
        %v3081 = vunpack.c.h.b16 %v3049
        %v3082 = vunpack.c.l.b16 %v3050
        %v3083 = vunpack.c.h.b16 %v3050
        %v3084 = vunpack.c.l.b16 %v3051
        %v3085 = vunpack.c.h.b16 %v3051
        %v3086 = vunpack.c.l.b16 %v3052
        %v3087 = vunpack.c.h.b16 %v3052
        %v3088 = vunpack.c.l.b16 %v3053
        %v3089 = vunpack.c.h.b16 %v3053
        %v3090 = vpack.c.b16 %v3076, %v3074
        %v3091 = vpack.c.b16 %v3077, %v3075
        %v3092 = vpack.c.b16 %v3080, %v3078
        %v3093 = vpack.c.b16 %v3081, %v3079
        %v3094 = vpack.c.b16 %v3084, %v3082
        %v3095 = vpack.c.b16 %v3085, %v3083
        %v3096 = vpack.c.b16 %v3088, %v3086
        %v3097 = vpack.c.b16 %v3089, %v3087
        %vm3106 = vcmask 523264
        %v3108 = vsel %vm3106, %v3045, 0
        %3110 = vmatprep.subr.bf16.mxu0 %v3091
        %3111 = vmatpush1.bf16.msra.mxu0 %v3090
        %3112 = vmatprep.subr.bf16.mxu0 %v3093
        %3113 = vmatpush1.bf16.msra.mxu0 %v3092
        %3114 = vmatprep.subr.bf16.mxu0 %v3095
        %3115 = vmatpush1.bf16.msra.mxu0 %v3094
        %3116 = vmatprep.subr.bf16.mxu0 %v3097
        %3117 = vmatpush1.bf16.msra.mxu0 %v3096
        %3118 = vmatprep.subr.bf16.mxu0 0
        %3119 = vmatpush1.bf16.msra.mxu0 0
        %3120 = vmatprep.subr.bf16.mxu0 0
        %3121 = vmatpush1.bf16.msra.mxu0 0
        %3122 = vmatprep.subr.bf16.mxu0 0
        %3123 = vmatpush1.bf16.msra.mxu0 0
        %3124 = vmatprep.subr.bf16.mxu0 0
        %3125 = vmatpush1.bf16.msra.mxu0 0
        %3126 = vmatprep.subr.bf16.mxu0 0
        %3127 = vmatpush1.bf16.msra.mxu0 0
        %3128 = vmatprep.subr.bf16.mxu0 0
        %3129 = vmatpush1.bf16.msra.mxu0 0
        %3130 = vmatprep.subr.bf16.mxu0 0
        %3131 = vmatpush1.bf16.msra.mxu0 0
        %3132 = vmatprep.subr.bf16.mxu0 0
        %3133 = vmatpush1.bf16.msra.mxu0 0
        %3134 = vmatprep.subr.bf16.mxu0 0
        %3135 = vmatpush1.bf16.msra.mxu0 0
        %3136 = vmatprep.subr.bf16.mxu0 0
        %3137 = vmatpush1.bf16.msra.mxu0 0
        %3138 = vmatprep.subr.bf16.mxu0 0
        %3139 = vmatpush1.bf16.msra.mxu0 0
        %3140 = vmatprep.subr.bf16.mxu0 0
        %3141 = vmatpush1.bf16.msra.mxu0 0
        %3142 = vmatprep.mubr.bf16.mxu0 0
        %3143 = vmatmul.mubr.bf16.gmra.mrb[0].mxu0 %v3108
        %v3144 = vpop.f32.mrb[0].mxu0
        %v3145 = vadd.f32 %v3059, %v3144
        %v3146 = vpop.f32.mrb[0].mxu0
        %v3147 = vadd.f32 %v3063, %v3146
        %v3148 = vpop.f32.mrb[0].mxu0
        %v3149 = vadd.f32 %v3059, %v3148
        %v3150 = vpop.f32.mrb[0].mxu0
        %v3151 = vadd.f32 %v3063, %v3150
        %3152 = vdwg.mxu0
        %v3153 = vpack.c.bf16 %v3149, %v3145
        %v3154 = vpack.c.bf16 %v3151, %v3147
        %v3157 = vunpack.c.l.b16 %v3153
        %v3158 = vunpack.c.l.b16 %v3154
        %v3159 = vunpack.c.h.b16 %v3153
        %v3160 = vunpack.c.h.b16 %v3154
        %v3161 = vpack.c.b16 %v3158, %v3157
        %v3162 = vpack.c.b16 %v3160, %v3159
        %3165 = vst [vmem:[%s282] sm:$0xff] %v3161
        %3166 = vst [vmem:[%s282 + $0x8] sm:$0xff] %v3162
        %s3167 = sand.u32 %s179, 1
        %s3168 = sand.u32 %s179, 1
        %s3169 = smul.addr %s3168, 16
        %s3170 = scalar_lea.vmem [#allocation5], %s3169
        // Predicated region
        $region53: #{noise_generator_forward.3} parent=47 // pred_check
          %p3171 = pneg %p189
        $region54: #{noise_generator_forward.3} parent=47 // pred_check_branch
          %3173 = sbr.rel (%p3171) target = $region56
        $region55: #{noise_generator_forward.3} parent=47 // pred_region
          %s3174 = smul.u32 2, %s19
          %s3175 = smul.addr %s3174, 4
          %s3176 = scalar_lea.vmem %s7, %s3175
          // Predicated region
          $region57: #{noise_generator_forward.3} parent=55 // pred_check
            _
          $region58: #{noise_generator_forward.3} parent=55 // pred_check_branch
            %3178 = sbr.rel (0) target = $region60
          $region59: #{noise_generator_forward.3} parent=55 // pred_region
            // Predicated region
            $region61: #{noise_generator_forward.3} parent=59 // pred_check
              _
            $region62: #{noise_generator_forward.3} parent=59 // pred_check_branch
              %3180 = sbr.rel (0) target = $region64
            $region63: #{noise_generator_forward.3} parent=59 // pred_region
              // Predicated region
              $region76: #{noise_generator_forward.3} parent=63 // pred_check
                _
              $region77: #{noise_generator_forward.3} parent=63 // pred_check_branch
                %3197 = sbr.rel (0) target = $region79
              $region78: #{noise_generator_forward.3} parent=63 // pred_region
                loop: start=0, step=1, limit=1
                $region80: #{noise_generator_forward.3} parent=78 // loop_pre_header
                  _
                $region81: #{noise_generator_forward.3} parent=78 // loop_header
                  %s3199 = sphi 0, %s3203
                  %p3200 = scmp.ge.s32.totalorder %s3199, 1
                  %s3204 = sphi %s3170, %s3170
                  %s3205 = sphi %s3176, %s3176
                $region82: #{noise_generator_forward.3} parent=78 // loop_header_branch
                  %3202 = sbr.rel (%p3200) target = $region86
                $region83: #{noise_generator_forward.3} parent=78 // loop_body
                  %v3206 = vld [vmem:[%s3204] sm:$0xff]
                  %3207 = vst [vmem:[%s3205] sm:$0xff] %v3206
                  %v3208 = vld [vmem:[%s3204 + $0x8] sm:$0xff]
                  %3209 = vst [vmem:[%s3205 + $0x10] sm:$0xff] %v3208
                $region84: #{noise_generator_forward.3} parent=78 // loop_footer
                  %s3203 = sadd.s32 1, %s3199
                $region85: #{noise_generator_forward.3} parent=78 // loop_footer_branch
                  %3198 = sbr.rel target = $region81
                $region86: #{noise_generator_forward.3} parent=78 // loop_exit
                  _
              $region79: #{noise_generator_forward.3} parent=63 // pred_fallthru
                _
              // Predicated region
              $region87: #{noise_generator_forward.3} parent=63 // pred_check
                _
              $region88: #{noise_generator_forward.3} parent=63 // pred_check_branch
                %3211 = sbr.rel target = $region90
              $region89: #{noise_generator_forward.3} parent=63 // pred_region
                _
              $region90: #{noise_generator_forward.3} parent=63 // pred_fallthru
                _
            $region64: #{noise_generator_forward.3} parent=59 // pred_fallthru
              _
            // Predicated region
            $region65: #{noise_generator_forward.3} parent=59 // pred_check
              _
            $region66: #{noise_generator_forward.3} parent=59 // pred_check_branch
              %3182 = sbr.rel target = $region68
            $region67: #{noise_generator_forward.3} parent=59 // pred_region
              loop: start=0, step=1, limit=1
              $region69: #{noise_generator_forward.3} parent=67 // loop_pre_header
                _
              $region70: #{noise_generator_forward.3} parent=67 // loop_header
                %s3185 = sphi 0, %s3189
                %p3186 = scmp.ge.s32.totalorder %s3185, 1
                %s3190 = sphi %s3170, %s3170
                %s3191 = sphi %s3176, %s3176
              $region71: #{noise_generator_forward.3} parent=67 // loop_header_branch
                %3188 = sbr.rel (%p3186) target = $region75
              $region72: #{noise_generator_forward.3} parent=67 // loop_body
                %v3192 = vld [vmem:[%s3190] sm:$0xff]
                %3193 = vst [vmem:[%s3191] sm:$0xff] %v3192
                %v3194 = vld [vmem:[%s3190 + $0x8] sm:$0xff]
                %3195 = vst [vmem:[%s3191 + $0x10] sm:$0xff] %v3194
              $region73: #{noise_generator_forward.3} parent=67 // loop_footer
                %s3189 = sadd.s32 1, %s3185
              $region74: #{noise_generator_forward.3} parent=67 // loop_footer_branch
                %3184 = sbr.rel target = $region70
              $region75: #{noise_generator_forward.3} parent=67 // loop_exit
                _
            $region68: #{noise_generator_forward.3} parent=59 // pred_fallthru
              _
          $region60: #{noise_generator_forward.3} parent=55 // pred_fallthru
            _
          %3212 = vnop
        $region56: #{noise_generator_forward.3} parent=47 // pred_fallthru
          _
      $region48: #{noise_generator_forward.3} parent=5 // pred_fallthru
        _
      %p3213 = scmp.le.s32.totalorder 2, %s14
      // Predicated region
      $region91: #{noise_generator_forward.3} parent=5 // pred_check
        %p3214 = pneg %p3213
      $region92: #{noise_generator_forward.3} parent=5 // pred_check_branch
        %3216 = sbr.rel (%p3214) target = $region94
      $region93: #{noise_generator_forward.3} parent=5 // pred_region
        %s3217 = ssub.s32 %s14, 2
        // Predicated region
        $region95: #{noise_generator_forward.3} parent=93 // pred_check
          %p3218 = pneg %p195
        $region96: #{noise_generator_forward.3} parent=93 // pred_check_branch
          %3220 = sbr.rel (%p3218) target = $region98
        $region97: #{noise_generator_forward.3} parent=93 // pred_region
          %s3221 = sand.u32 %s180, 1
          %s3222 = sand.u32 %s180, 1
          %s3223 = smul.addr %s3222, 16
          %s3224 = scalar_lea.vmem [#allocation5], %s3223
        $region98: #{noise_generator_forward.3} parent=93 // pred_fallthru
          _
      $region94: #{noise_generator_forward.3} parent=5 // pred_fallthru
        _
    $region6: #{noise_generator_forward.3} parent=1 // loop_footer
      %s18 = sadd.s32 1, %s14
    $region7: #{noise_generator_forward.3} parent=1 // loop_footer_branch
      %13 = sbr.rel target = $region3
    $region8: #{noise_generator_forward.3} parent=1 // loop_exit
      _
    %3225 = vsyncpa [#allocation4], 1
    %s3226 = scalar_lea.sflag [#allocation4], 1
    %3227 = vsyncpa %s3226, 1

</llo_original>
